<compile_context>
chip_gen: v6e
topology: v6e:2x2x1
jax: 0.10.0
libtpu: 0.0.40
codegen_flags: <defaults>
</compile_context>

<pallas_src>
import functools

import jax
import jax.numpy as jnp
from jax.experimental import pallas as pl
from jax.experimental.pallas import tpu as pltpu


# ----------------------------------------------------------------------------
# Pallas kernels (single K step: no scratch accumulator, no pl.when phases)
# ----------------------------------------------------------------------------
def _conv_bn_kernel(col_ref, w_ref, sc_ref, sh_ref, o_ref, *, relu):
    # [TM, K] @ [K, N] on the MXU (bf16 operands, f32 accumulate),
    # fused BN affine (+ optional ReLU), bf16 store.
    y = jnp.dot(col_ref[...], w_ref[...], preferred_element_type=jnp.float32)
    y = y * sc_ref[...] + sh_ref[...]
    if relu:
        y = jnp.maximum(y, 0.0)
    o_ref[...] = y.astype(o_ref.dtype)


def _conv_bn_addres_kernel(col_ref, w_ref, sc_ref, sh_ref, r_ref, o_ref, *, relu):
    # Same as above with a fused identity-residual add before the activation.
    y = jnp.dot(col_ref[...], w_ref[...], preferred_element_type=jnp.float32)
    y = y * sc_ref[...] + sh_ref[...] + r_ref[...].astype(jnp.float32)
    if relu:
        y = jnp.maximum(y, 0.0)
    o_ref[...] = y.astype(o_ref.dtype)


def _conv_bn_convres_kernel(col_ref, w_ref, sc_ref, sh_ref,
                            rin_ref, wr_ref, rsc_ref, rsh_ref, o_ref, *, relu):
    # conv2 + BN2 + (1x1 projection shortcut conv + BN) + ReLU, all in one
    # kernel: the shortcut never round-trips HBM and stays in f32.
    y = jnp.dot(col_ref[...], w_ref[...], preferred_element_type=jnp.float32)
    y = y * sc_ref[...] + sh_ref[...]
    r = jnp.dot(rin_ref[...], wr_ref[...], preferred_element_type=jnp.float32)
    r = r * rsc_ref[...] + rsh_ref[...]
    y = y + r
    if relu:
        y = jnp.maximum(y, 0.0)
    o_ref[...] = y.astype(o_ref.dtype)


def _head_kernel(f_ref, w_ref, b_ref, o_ref):
    # [B, HW*F] @ [HW*F, NCp] (spatial mean already folded into w) + bias,
    # fused log_softmax.  Padded class columns carry bias = -1e30.
    logits = jnp.dot(f_ref[...], w_ref[...],
                     preferred_element_type=jnp.float32) + b_ref[...]
    m = jnp.max(logits, axis=-1, keepdims=True)
    lse = jnp.log(jnp.sum(jnp.exp(logits - m), axis=-1, keepdims=True)) + m
    o_ref[...] = logits - lse


# ----------------------------------------------------------------------------
# Conv-as-GEMM wrapper (grid over M only)
# ----------------------------------------------------------------------------
def _pick_tm(M):
    # >=16 rows (bf16 native (16,128) tile), prefer 2 parallel M steps so both
    # TensorCores get work on megacore / v7x parts.
    for t in (256, 128, 64, 32, 16):
        if M % t == 0 and M // t >= 2:
            return t
    return M  # full-extent block (always legal)


def run_conv(col, prep, *, relu, residual=None, resproj=None,
             use_pallas=True, out_dtype=jnp.bfloat16):
    M, K = col.shape
    w2d = prep['w']
    N = w2d.shape[1]
    col = col.astype(jnp.bfloat16)
    scale = prep['sc'].reshape(1, N).astype(jnp.float32)
    shift = prep['sh'].reshape(1, N).astype(jnp.float32)

    if not use_pallas:
        # pure-JAX reference mirroring the kernel math (bf16 in, f32 accumulate)
        y = jnp.dot(col, w2d, preferred_element_type=jnp.float32) * scale + shift
        if residual is not None:
            y = y + residual.astype(jnp.float32)
        if resproj is not None:
            rin, rp = resproj
            r = jnp.dot(rin.astype(jnp.bfloat16), rp['w'],
                        preferred_element_type=jnp.float32)
            r = r * rp['sc'].reshape(1, -1) + rp['sh'].reshape(1, -1)
            y = y + r
        if relu:
            y = jnp.maximum(y, 0.0)
        return y.astype(out_dtype)

    TM = _pick_tm(M)
    grid = (M // TM,)

    col_spec = pl.BlockSpec((TM, K), lambda i: (i, 0))
    w_spec = pl.BlockSpec((K, N), lambda i: (0, 0))
    v_spec = pl.BlockSpec((1, N), lambda i: (0, 0))
    o_spec = pl.BlockSpec((TM, N), lambda i: (i, 0))

    flops = 2 * M * K * N
    bytes_accessed = (M * K + K * N) * 2 + M * N * 2 + 2 * N * 4

    if residual is not None:
        kern = functools.partial(_conv_bn_addres_kernel, relu=relu)
        in_specs = [col_spec, w_spec, v_spec, v_spec,
                    pl.BlockSpec((TM, N), lambda i: (i, 0))]
        args = (col, w2d, scale, shift, residual.astype(jnp.bfloat16))
        bytes_accessed += M * N * 2
    elif resproj is not None:
        rin, rp = resproj
        Kr = rin.shape[1]
        kern = functools.partial(_conv_bn_convres_kernel, relu=relu)
        in_specs = [col_spec, w_spec, v_spec, v_spec,
                    pl.BlockSpec((TM, Kr), lambda i: (i, 0)),
                    pl.BlockSpec((Kr, N), lambda i: (0, 0)),
                    v_spec, v_spec]
        args = (col, w2d, scale, shift,
                rin.astype(jnp.bfloat16), rp['w'],
                rp['sc'].reshape(1, N).astype(jnp.float32),
                rp['sh'].reshape(1, N).astype(jnp.float32))
        flops += 2 * M * Kr * N
        bytes_accessed += (M * Kr + Kr * N) * 2 + 2 * N * 4
    else:
        kern = functools.partial(_conv_bn_kernel, relu=relu)
        in_specs = [col_spec, w_spec, v_spec, v_spec]
        args = (col, w2d, scale, shift)

    return pl.pallas_call(
        kern,
        grid=grid,
        in_specs=in_specs,
        out_specs=o_spec,
        out_shape=jax.ShapeDtypeStruct((M, N), out_dtype),
        compiler_params=pltpu.CompilerParams(
            dimension_semantics=("parallel",)),
        cost_estimate=pl.CostEstimate(
            flops=flops, transcendentals=0, bytes_accessed=bytes_accessed),
    )(*args)


# ----------------------------------------------------------------------------
# NHWC im2col (tightly packed, no channel padding) + conv wrapper
# ----------------------------------------------------------------------------
def im2col_nhwc(a, k, stride, pad):
    # a: [B, H, W, C] -> [B*Ho*Wo, k*k*C], column order (kh, kw, c)
    B, H, W, C = a.shape
    ap = jnp.pad(a, ((0, 0), (pad, pad), (pad, pad), (0, 0)))
    Ho = (H + 2 * pad - k) // stride + 1
    Wo = (W + 2 * pad - k) // stride + 1
    cols = []
    for i in range(k):
        for j in range(k):
            cols.append(ap[:, i:i + stride * Ho:stride, j:j + stride * Wo:stride, :])
    col = jnp.concatenate(cols, axis=-1)
    return col.reshape(B * Ho * Wo, k * k * C), Ho, Wo


def conv_gemm(a, prep, *, stride, relu, residual=None, resproj=None,
              use_pallas=True):
    # a: [B, H, W, C] (bf16); prep: {'w','sc','sh','k'} (GEMM-ready weights)
    B, H, W, C = a.shape
    k = prep['k']
    col, Ho, Wo = im2col_nhwc(a, k, stride, (k - 1) // 2)
    Kw = prep['w'].shape[0]
    if col.shape[1] < Kw:                       # only the stem (K=27 -> 32)
        col = jnp.pad(col, ((0, 0), (0, Kw - col.shape[1])))
    M = B * Ho * Wo
    r2d = residual.reshape(M, -1) if residual is not None else None
    y = run_conv(col, prep, relu=relu, residual=r2d, resproj=resproj,
                 use_pallas=use_pallas)
    return y.reshape(B, Ho, Wo, -1)


# ----------------------------------------------------------------------------
# Head
# ----------------------------------------------------------------------------
def head(feat2d, w_big, b_pad, num_classes, use_pallas=True):
    B, FHW = feat2d.shape
    NCp = w_big.shape[1]
    if use_pallas:
        out = pl.pallas_call(
            _head_kernel,
            grid=(1,),
            in_specs=[pl.BlockSpec((B, FHW), lambda i: (0, 0)),
                      pl.BlockSpec((FHW, NCp), lambda i: (0, 0)),
                      pl.BlockSpec((1, NCp), lambda i: (0, 0))],
            out_specs=pl.BlockSpec((B, NCp), lambda i: (0, 0)),
            out_shape=jax.ShapeDtypeStruct((B, NCp), jnp.float32),
        )(feat2d, w_big, b_pad)
    else:
        logits = jnp.dot(feat2d, w_big, preferred_element_type=jnp.float32) + b_pad
        m = jnp.max(logits, axis=-1, keepdims=True)
        lse = jnp.log(jnp.sum(jnp.exp(logits - m), axis=-1, keepdims=True)) + m
        out = logits - lse
    return out[:, :num_classes]


# ----------------------------------------------------------------------------
# P4 BasicBlock and full model forward
# ----------------------------------------------------------------------------
def basic_block(a, blk, use_pallas=True):
    st = blk['stride']
    B, H, W, C = a.shape
    # conv1 (3x3, stride st) -> bn -> relu
    y1 = conv_gemm(a, blk['conv1'], stride=st, relu=True, use_pallas=use_pallas)
    _, Ho, Wo, _ = y1.shape
    if 'shortcut' in blk:
        # 1x1 stride-st projection shortcut, fused into the conv2 kernel.
        rin = a[:, ::st, ::st, :][:, :Ho, :Wo, :].reshape(B * Ho * Wo, C)
        return conv_gemm(y1, blk['conv2'], stride=1, relu=True,
                         resproj=(rin, blk['shortcut']), use_pallas=use_pallas)
    # identity shortcut, fused residual add in the conv2 kernel.
    return conv_gemm(y1, blk['conv2'], stride=1, relu=True,
                     residual=a, use_pallas=use_pallas)


def p4resnet_forward(x, params, use_pallas=True):
    # NCHW -> NHWC once at model entry, bf16 activations, tight channel dims.
    a = jnp.transpose(x, (0, 2, 3, 1)).astype(jnp.bfloat16)   # [B, H, W, 3]
    a = conv_gemm(a, params['stem'], stride=1, relu=True, use_pallas=use_pallas)
    for layer_name in ('layer1', 'layer2', 'layer3'):
        for blk in params[layer_name]:
            a = basic_block(a, blk, use_pallas=use_pallas)
    B, Ho, Wo, CP = a.shape
    feat = a.reshape(B, Ho * Wo * CP)       # order (h, w, (c, g)) matches head_w
    return head(feat, params['head_w'], params['head_b'],
                params['num_classes'], use_pallas=use_pallas)


# ----------------------------------------------------------------------------
# Parameter initialisation + one-time GEMM-ready preparation
# ----------------------------------------------------------------------------
def _init_bn(key, c):
    k1, k2, k3, k4 = jax.random.split(key, 4)
    gamma = 1.0 + 0.1 * jax.random.normal(k1, (c,), jnp.float32)
    beta = 0.1 * jax.random.normal(k2, (c,), jnp.float32)
    mean = 0.1 * jax.random.normal(k3, (c,), jnp.float32)
    var = 0.5 + jax.random.uniform(k4, (c,), jnp.float32)
    eps = 1e-5
    scale = gamma / jnp.sqrt(var + eps)
    shift = beta - mean * scale
    return scale, shift


def _init_conv_z2(key, cout, cin, k):
    fan_in = cin * k * k
    return jax.random.normal(key, (cout, cin, k, k), jnp.float32) * (2.0 / fan_in) ** 0.5


def _init_conv_p4(key, cout, cin, k):
    fan_in = cin * 4 * k * k
    return jax.random.normal(key, (cout, cin, 4, k, k), jnp.float32) * (2.0 / fan_in) ** 0.5


def _prep_conv_z2(w, bn_scale, bn_shift):
    # w: [Cout, Cin, k, k] -> GEMM weight [K, N], rows (kh,kw,cin), cols (cout,s).
    # K padded only up to a multiple of 8 (stem: 27 -> 32).
    cout, cin, k, _ = w.shape
    tw = jnp.stack([jnp.rot90(w, k=s, axes=(2, 3)) for s in range(4)], axis=1)
    w2 = tw.transpose(3, 4, 2, 0, 1).reshape(k * k * cin, cout * 4)
    kreal = k * k * cin
    kpad = -(-kreal // 8) * 8
    if kpad != kreal:
        w2 = jnp.pad(w2, ((0, kpad - kreal), (0, 0)))
    return {'w': w2.astype(jnp.bfloat16),
            'sc': jnp.repeat(bn_scale, 4).astype(jnp.float32),
            'sh': jnp.repeat(bn_shift, 4).astype(jnp.float32),
            'k': k}


def _prep_conv_p4(w, bn_scale, bn_shift):
    # w: [Cout, Cin, 4, k, k] -> GEMM weight [k*k*cin*4, cout*4],
    # rows (kh, kw, (cin, r)), cols (cout, s).  No zero padding.
    cout, cin, _, k, _ = w.shape
    outs = []
    for s in range(4):
        perm = [(r - s) % 4 for r in range(4)]
        outs.append(jnp.rot90(w[:, :, perm, :, :], k=s, axes=(3, 4)))
    tw = jnp.stack(outs, axis=1)                       # [cout, 4, cin, 4, k, k]
    w2 = tw.transpose(4, 5, 2, 3, 0, 1).reshape(k * k * cin * 4, cout * 4)
    return {'w': w2.astype(jnp.bfloat16),
            'sc': jnp.repeat(bn_scale, 4).astype(jnp.float32),
            'sh': jnp.repeat(bn_shift, 4).astype(jnp.float32),
            'k': k}


def _prep_head(lin_w, lin_b, hw, ncp=128):
    # Fold spatial mean into the linear: w_big[(h*W+w)*F + f, n] = lin_w[n,f]/HW.
    # Class columns padded to 128 lanes; padded classes get bias -1e30.
    nc, f = lin_w.shape
    wb = jnp.tile(lin_w.T / float(hw), (hw, 1))                  # [hw*F, nc]
    wb = jnp.pad(wb, ((0, 0), (0, ncp - nc))).astype(jnp.bfloat16)
    bb = jnp.pad(lin_b, (0, ncp - nc), constant_values=-1e30)
    return wb, bb.reshape(1, ncp).astype(jnp.float32)


def init_params(key, num_blocks=(1, 1, 1), num_classes=10, spatial=16):
    keys = iter(jax.random.split(key, 256))
    params = {'num_classes': num_classes}

    # stem: Z2 -> P4 conv (8 planes -> 32 real group-channels)
    w = _init_conv_z2(next(keys), 8, 3, 3)
    sc, sh = _init_bn(next(keys), 8)
    params['stem'] = _prep_conv_z2(w, sc, sh)

    in_planes = [8]

    def make_layer(planes, nblk, stride):
        blocks = []
        for st in [stride] + [1] * (nblk - 1):
            blk = {'stride': st}
            w1 = _init_conv_p4(next(keys), planes, in_planes[0], 3)
            s1, h1 = _init_bn(next(keys), planes)
            blk['conv1'] = _prep_conv_p4(w1, s1, h1)
            w2 = _init_conv_p4(next(keys), planes, planes, 3)
            s2, h2 = _init_bn(next(keys), planes)
            blk['conv2'] = _prep_conv_p4(w2, s2, h2)
            if st != 1 or in_planes[0] != planes:
                ws = _init_conv_p4(next(keys), planes, in_planes[0], 1)
                ss, hs = _init_bn(next(keys), planes)
                blk['shortcut'] = _prep_conv_p4(ws, ss, hs)
            blocks.append(blk)
            in_planes[0] = planes
        return blocks

    params['layer1'] = make_layer(8, num_blocks[0], 1)
    params['layer2'] = make_layer(16, num_blocks[1], 2)
    params['layer3'] = make_layer(32, num_blocks[2], 2)

    # classifier head (128 real features = 32 planes * 4 rotations)
    feat_dim = 32 * 4
    bound = 1.0 / (feat_dim ** 0.5)
    kw, kb = jax.random.split(next(keys))
    lin_w = jax.random.uniform(kw, (num_classes, feat_dim), jnp.float32,
                               minval=-bound, maxval=bound)
    lin_b = jax.random.uniform(kb, (num_classes,), jnp.float32,
                               minval=-bound, maxval=bound)
    h = spatial
    for s in (1, 2, 2):                     # layer strides (stem is stride 1)
        h = (h - 1) // s + 1
    params['head_w'], params['head_b'] = _prep_head(lin_w, lin_b, h * h)
    return params


# ----------------------------------------------------------------------------
# Main
# ----------------------------------------------------------------------------
if __name__ == "__main__":
    key = jax.random.PRNGKey(0)
    H = W = 16
    params = init_params(key, num_blocks=(1, 1, 1), num_classes=10, spatial=H)

    x = jax.random.normal(jax.random.fold_in(key, 123), (2, 3, H, W), jnp.float32)

    fwd = jax.jit(lambda xx: p4resnet_forward(xx, params))
    out = jax.block_until_ready(fwd(x))

    assert out.shape == (2, 10), out.shape
    assert bool(jnp.all(jnp.isfinite(out)))
    # log_softmax rows must exponentiate-sum to 1
    assert jnp.allclose(jnp.sum(jnp.exp(out), axis=1), 1.0, atol=1e-3)

    # pure-JAX reference (same bf16/f32-accumulate math, no Pallas)
    ref = p4resnet_forward(x, params, use_pallas=False)
    assert jnp.allclose(out, ref, atol=5e-2, rtol=0.0), float(jnp.max(jnp.abs(out - ref)))

    print("KERNEL_OK")
</pallas_src>

<mosaic_0001>
module attributes {stable_mosaic.version = 11 : i64} {
  func.func @_conv_bn_kernel(%arg0: i32, %arg1: memref<256x32xbf16, #tpu.memory_space<vmem>>, %arg2: memref<32x32xbf16, #tpu.memory_space<vmem>>, %arg3: memref<1x32xf32, #tpu.memory_space<vmem>>, %arg4: memref<1x32xf32, #tpu.memory_space<vmem>>, %arg5: memref<256x32xbf16, #tpu.memory_space<vmem>>) attributes {dimension_semantics = [#tpu.dimension_semantics<parallel>], iteration_bounds = array<i64: 2>, scalar_prefetch = 0 : i64, scratch_operands = 0 : i64, tpu.core_type = #tpu.core_type<tc>, window_params = [{transform_indices = @transform_0, window_bounds = array<i64: 256, 32>}, {pipeline_mode = #tpu.pipeline_mode<synchronous>, transform_indices = @transform_1, window_bounds = array<i64: 32, 32>}, {pipeline_mode = #tpu.pipeline_mode<synchronous>, transform_indices = @transform_2, window_bounds = array<i64: 1, 32>}, {pipeline_mode = #tpu.pipeline_mode<synchronous>, transform_indices = @transform_3, window_bounds = array<i64: 1, 32>}, {transform_indices = @transform_4, window_bounds = array<i64: 256, 32>}]} {
    %c0 = arith.constant 0 : index
    %c0_0 = arith.constant 0 : index
    %0 = vector.load %arg1[%c0, %c0_0] : memref<256x32xbf16, #tpu.memory_space<vmem>>, vector<256x32xbf16>
    %c0_1 = arith.constant 0 : index
    %c0_2 = arith.constant 0 : index
    %1 = vector.load %arg2[%c0_1, %c0_2] : memref<32x32xbf16, #tpu.memory_space<vmem>>, vector<32x32xbf16>
    %cst = arith.constant dense<0.000000e+00> : vector<256x32xf32>
    %2 = tpu.matmul %0, %1, %cst {dimension_numbers = #tpu.dot_dimension_numbers<[1], [0], [0], [1], [0, 0, 1, 1], [], []>} : vector<256x32xbf16>, vector<32x32xbf16>, vector<256x32xf32> -> vector<256x32xf32>
    %c0_3 = arith.constant 0 : index
    %c0_4 = arith.constant 0 : index
    %3 = vector.load %arg3[%c0_3, %c0_4] : memref<1x32xf32, #tpu.memory_space<vmem>>, vector<1x32xf32>
    %4 = vector.broadcast %3 : vector<1x32xf32> to vector<256x32xf32>
    %5 = arith.mulf %2, %4 : vector<256x32xf32>
    %c0_5 = arith.constant 0 : index
    %c0_6 = arith.constant 0 : index
    %6 = vector.load %arg4[%c0_5, %c0_6] : memref<1x32xf32, #tpu.memory_space<vmem>>, vector<1x32xf32>
    %7 = vector.broadcast %6 : vector<1x32xf32> to vector<256x32xf32>
    %8 = arith.addf %5, %7 : vector<256x32xf32>
    %cst_7 = arith.constant 0.000000e+00 : f32
    %9 = vector.broadcast %cst_7 : f32 to vector<256x32xf32>
    %10 = arith.maximumf %8, %9 : vector<256x32xf32>
    %11 = arith.truncf %10 : vector<256x32xf32> to vector<256x32xbf16>
    %c0_8 = arith.constant 0 : index
    %c0_9 = arith.constant 0 : index
    %12 = vector.load %arg5[%c0_8, %c0_9] : memref<256x32xbf16, #tpu.memory_space<vmem>>, vector<256x32xbf16>
    tpu.vector_store %arg5[%c0_8, %c0_9], %11 {strides = array<i32>} : memref<256x32xbf16, #tpu.memory_space<vmem>>, vector<256x32xbf16>,
    return
  }
  func.func @transform_0(%arg0: i32) -> (i32, i32) {
    %c0_i32 = arith.constant 0 : i32
    %c0_i32_0 = arith.constant 0 : i32
    return %arg0, %c0_i32 : i32, i32
  }
  func.func @transform_1(%arg0: i32) -> (i32, i32) {
    %c0_i32 = arith.constant 0 : i32
    %c0_i32_0 = arith.constant 0 : i32
    %c0_i32_1 = arith.constant 0 : i32
    return %c0_i32, %c0_i32_0 : i32, i32
  }
  func.func @transform_2(%arg0: i32) -> (i32, i32) {
    %c0_i32 = arith.constant 0 : i32
    %c0_i32_0 = arith.constant 0 : i32
    %c0_i32_1 = arith.constant 0 : i32
    return %c0_i32, %c0_i32_0 : i32, i32
  }
  func.func @transform_3(%arg0: i32) -> (i32, i32) {
    %c0_i32 = arith.constant 0 : i32
    %c0_i32_0 = arith.constant 0 : i32
    %c0_i32_1 = arith.constant 0 : i32
    return %c0_i32, %c0_i32_0 : i32, i32
  }
  func.func @transform_4(%arg0: i32) -> (i32, i32) {
    %c0_i32 = arith.constant 0 : i32
    %c0_i32_0 = arith.constant 0 : i32
    return %arg0, %c0_i32 : i32, i32
  }
}

module attributes {stable_mosaic.version = 11 : i64} {
  func.func @_conv_bn_kernel(%arg0: i32, %arg1: memref<256x288xbf16, #tpu.memory_space<vmem>>, %arg2: memref<288x32xbf16, #tpu.memory_space<vmem>>, %arg3: memref<1x32xf32, #tpu.memory_space<vmem>>, %arg4: memref<1x32xf32, #tpu.memory_space<vmem>>, %arg5: memref<256x32xbf16, #tpu.memory_space<vmem>>) attributes {dimension_semantics = [#tpu.dimension_semantics<parallel>], iteration_bounds = array<i64: 2>, scalar_prefetch = 0 : i64, scratch_operands = 0 : i64, tpu.core_type = #tpu.core_type<tc>, window_params = [{transform_indices = @transform_0, window_bounds = array<i64: 256, 288>}, {pipeline_mode = #tpu.pipeline_mode<synchronous>, transform_indices = @transform_1, window_bounds = array<i64: 288, 32>}, {pipeline_mode = #tpu.pipeline_mode<synchronous>, transform_indices = @transform_2, window_bounds = array<i64: 1, 32>}, {pipeline_mode = #tpu.pipeline_mode<synchronous>, transform_indices = @transform_3, window_bounds = array<i64: 1, 32>}, {transform_indices = @transform_4, window_bounds = array<i64: 256, 32>}]} {
    %c0 = arith.constant 0 : index
    %c0_0 = arith.constant 0 : index
    %0 = vector.load %arg1[%c0, %c0_0] : memref<256x288xbf16, #tpu.memory_space<vmem>>, vector<256x288xbf16>
    %c0_1 = arith.constant 0 : index
    %c0_2 = arith.constant 0 : index
    %1 = vector.load %arg2[%c0_1, %c0_2] : memref<288x32xbf16, #tpu.memory_space<vmem>>, vector<288x32xbf16>
    %cst = arith.constant dense<0.000000e+00> : vector<256x32xf32>
    %2 = tpu.matmul %0, %1, %cst {dimension_numbers = #tpu.dot_dimension_numbers<[1], [0], [0], [1], [0, 0, 1, 1], [], []>} : vector<256x288xbf16>, vector<288x32xbf16>, vector<256x32xf32> -> vector<256x32xf32>
    %c0_3 = arith.constant 0 : index
    %c0_4 = arith.constant 0 : index
    %3 = vector.load %arg3[%c0_3, %c0_4] : memref<1x32xf32, #tpu.memory_space<vmem>>, vector<1x32xf32>
    %4 = vector.broadcast %3 : vector<1x32xf32> to vector<256x32xf32>
    %5 = arith.mulf %2, %4 : vector<256x32xf32>
    %c0_5 = arith.constant 0 : index
    %c0_6 = arith.constant 0 : index
    %6 = vector.load %arg4[%c0_5, %c0_6] : memref<1x32xf32, #tpu.memory_space<vmem>>, vector<1x32xf32>
    %7 = vector.broadcast %6 : vector<1x32xf32> to vector<256x32xf32>
    %8 = arith.addf %5, %7 : vector<256x32xf32>
    %cst_7 = arith.constant 0.000000e+00 : f32
    %9 = vector.broadcast %cst_7 : f32 to vector<256x32xf32>
    %10 = arith.maximumf %8, %9 : vector<256x32xf32>
    %11 = arith.truncf %10 : vector<256x32xf32> to vector<256x32xbf16>
    %c0_8 = arith.constant 0 : index
    %c0_9 = arith.constant 0 : index
    %12 = vector.load %arg5[%c0_8, %c0_9] : memref<256x32xbf16, #tpu.memory_space<vmem>>, vector<256x32xbf16>
    tpu.vector_store %arg5[%c0_8, %c0_9], %11 {strides = array<i32>} : memref<256x32xbf16, #tpu.memory_space<vmem>>, vector<256x32xbf16>,
    return
  }
  func.func @transform_0(%arg0: i32) -> (i32, i32) {
    %c0_i32 = arith.constant 0 : i32
    %c0_i32_0 = arith.constant 0 : i32
    return %arg0, %c0_i32 : i32, i32
  }
  func.func @transform_1(%arg0: i32) -> (i32, i32) {
    %c0_i32 = arith.constant 0 : i32
    %c0_i32_0 = arith.constant 0 : i32
    %c0_i32_1 = arith.constant 0 : i32
    return %c0_i32, %c0_i32_0 : i32, i32
  }
  func.func @transform_2(%arg0: i32) -> (i32, i32) {
    %c0_i32 = arith.constant 0 : i32
    %c0_i32_0 = arith.constant 0 : i32
    %c0_i32_1 = arith.constant 0 : i32
    return %c0_i32, %c0_i32_0 : i32, i32
  }
  func.func @transform_3(%arg0: i32) -> (i32, i32) {
    %c0_i32 = arith.constant 0 : i32
    %c0_i32_0 = arith.constant 0 : i32
    %c0_i32_1 = arith.constant 0 : i32
    return %c0_i32, %c0_i32_0 : i32, i32
  }
  func.func @transform_4(%arg0: i32) -> (i32, i32) {
    %c0_i32 = arith.constant 0 : i32
    %c0_i32_0 = arith.constant 0 : i32
    return %arg0, %c0_i32 : i32, i32
  }
}

module attributes {stable_mosaic.version = 11 : i64} {
  func.func @_conv_bn_addres_kernel(%arg0: i32, %arg1: memref<256x288xbf16, #tpu.memory_space<vmem>>, %arg2: memref<288x32xbf16, #tpu.memory_space<vmem>>, %arg3: memref<1x32xf32, #tpu.memory_space<vmem>>, %arg4: memref<1x32xf32, #tpu.memory_space<vmem>>, %arg5: memref<256x32xbf16, #tpu.memory_space<vmem>>, %arg6: memref<256x32xbf16, #tpu.memory_space<vmem>>) attributes {dimension_semantics = [#tpu.dimension_semantics<parallel>], iteration_bounds = array<i64: 2>, scalar_prefetch = 0 : i64, scratch_operands = 0 : i64, tpu.core_type = #tpu.core_type<tc>, window_params = [{transform_indices = @transform_0, window_bounds = array<i64: 256, 288>}, {pipeline_mode = #tpu.pipeline_mode<synchronous>, transform_indices = @transform_1, window_bounds = array<i64: 288, 32>}, {pipeline_mode = #tpu.pipeline_mode<synchronous>, transform_indices = @transform_2, window_bounds = array<i64: 1, 32>}, {pipeline_mode = #tpu.pipeline_mode<synchronous>, transform_indices = @transform_3, window_bounds = array<i64: 1, 32>}, {transform_indices = @transform_4, window_bounds = array<i64: 256, 32>}, {transform_indices = @transform_5, window_bounds = array<i64: 256, 32>}]} {
    %c0 = arith.constant 0 : index
    %c0_0 = arith.constant 0 : index
    %0 = vector.load %arg1[%c0, %c0_0] : memref<256x288xbf16, #tpu.memory_space<vmem>>, vector<256x288xbf16>
    %c0_1 = arith.constant 0 : index
    %c0_2 = arith.constant 0 : index
    %1 = vector.load %arg2[%c0_1, %c0_2] : memref<288x32xbf16, #tpu.memory_space<vmem>>, vector<288x32xbf16>
    %cst = arith.constant dense<0.000000e+00> : vector<256x32xf32>
    %2 = tpu.matmul %0, %1, %cst {dimension_numbers = #tpu.dot_dimension_numbers<[1], [0], [0], [1], [0, 0, 1, 1], [], []>} : vector<256x288xbf16>, vector<288x32xbf16>, vector<256x32xf32> -> vector<256x32xf32>
    %c0_3 = arith.constant 0 : index
    %c0_4 = arith.constant 0 : index
    %3 = vector.load %arg3[%c0_3, %c0_4] : memref<1x32xf32, #tpu.memory_space<vmem>>, vector<1x32xf32>
    %4 = vector.broadcast %3 : vector<1x32xf32> to vector<256x32xf32>
    %5 = arith.mulf %2, %4 : vector<256x32xf32>
    %c0_5 = arith.constant 0 : index
    %c0_6 = arith.constant 0 : index
    %6 = vector.load %arg4[%c0_5, %c0_6] : memref<1x32xf32, #tpu.memory_space<vmem>>, vector<1x32xf32>
    %7 = vector.broadcast %6 : vector<1x32xf32> to vector<256x32xf32>
    %8 = arith.addf %5, %7 : vector<256x32xf32>
    %c0_7 = arith.constant 0 : index
    %c0_8 = arith.constant 0 : index
    %9 = vector.load %arg5[%c0_7, %c0_8] : memref<256x32xbf16, #tpu.memory_space<vmem>>, vector<256x32xbf16>
    %10 = arith.extf %9 : vector<256x32xbf16> to vector<256x32xf32>
    %11 = arith.addf %8, %10 : vector<256x32xf32>
    %cst_9 = arith.constant 0.000000e+00 : f32
    %12 = vector.broadcast %cst_9 : f32 to vector<256x32xf32>
    %13 = arith.maximumf %11, %12 : vector<256x32xf32>
    %14 = arith.truncf %13 : vector<256x32xf32> to vector<256x32xbf16>
    %c0_10 = arith.constant 0 : index
    %c0_11 = arith.constant 0 : index
    %15 = vector.load %arg6[%c0_10, %c0_11] : memref<256x32xbf16, #tpu.memory_space<vmem>>, vector<256x32xbf16>
    tpu.vector_store %arg6[%c0_10, %c0_11], %14 {strides = array<i32>} : memref<256x32xbf16, #tpu.memory_space<vmem>>, vector<256x32xbf16>,
    return
  }
  func.func @transform_0(%arg0: i32) -> (i32, i32) {
    %c0_i32 = arith.constant 0 : i32
    %c0_i32_0 = arith.constant 0 : i32
    return %arg0, %c0_i32 : i32, i32
  }
  func.func @transform_1(%arg0: i32) -> (i32, i32) {
    %c0_i32 = arith.constant 0 : i32
    %c0_i32_0 = arith.constant 0 : i32
    %c0_i32_1 = arith.constant 0 : i32
    return %c0_i32, %c0_i32_0 : i32, i32
  }
  func.func @transform_2(%arg0: i32) -> (i32, i32) {
    %c0_i32 = arith.constant 0 : i32
    %c0_i32_0 = arith.constant 0 : i32
    %c0_i32_1 = arith.constant 0 : i32
    return %c0_i32, %c0_i32_0 : i32, i32
  }
  func.func @transform_3(%arg0: i32) -> (i32, i32) {
    %c0_i32 = arith.constant 0 : i32
    %c0_i32_0 = arith.constant 0 : i32
    %c0_i32_1 = arith.constant 0 : i32
    return %c0_i32, %c0_i32_0 : i32, i32
  }
  func.func @transform_4(%arg0: i32) -> (i32, i32) {
    %c0_i32 = arith.constant 0 : i32
    %c0_i32_0 = arith.constant 0 : i32
    return %arg0, %c0_i32 : i32, i32
  }
  func.func @transform_5(%arg0: i32) -> (i32, i32) {
    %c0_i32 = arith.constant 0 : i32
    %c0_i32_0 = arith.constant 0 : i32
    return %arg0, %c0_i32 : i32, i32
  }
}

module attributes {stable_mosaic.version = 11 : i64} {
  func.func @_conv_bn_kernel(%arg0: i32, %arg1: memref<64x288xbf16, #tpu.memory_space<vmem>>, %arg2: memref<288x64xbf16, #tpu.memory_space<vmem>>, %arg3: memref<1x64xf32, #tpu.memory_space<vmem>>, %arg4: memref<1x64xf32, #tpu.memory_space<vmem>>, %arg5: memref<64x64xbf16, #tpu.memory_space<vmem>>) attributes {dimension_semantics = [#tpu.dimension_semantics<parallel>], iteration_bounds = array<i64: 2>, scalar_prefetch = 0 : i64, scratch_operands = 0 : i64, tpu.core_type = #tpu.core_type<tc>, window_params = [{transform_indices = @transform_0, window_bounds = array<i64: 64, 288>}, {pipeline_mode = #tpu.pipeline_mode<synchronous>, transform_indices = @transform_1, window_bounds = array<i64: 288, 64>}, {pipeline_mode = #tpu.pipeline_mode<synchronous>, transform_indices = @transform_2, window_bounds = array<i64: 1, 64>}, {pipeline_mode = #tpu.pipeline_mode<synchronous>, transform_indices = @transform_3, window_bounds = array<i64: 1, 64>}, {transform_indices = @transform_4, window_bounds = array<i64: 64, 64>}]} {
    %c0 = arith.constant 0 : index
    %c0_0 = arith.constant 0 : index
    %0 = vector.load %arg1[%c0, %c0_0] : memref<64x288xbf16, #tpu.memory_space<vmem>>, vector<64x288xbf16>
    %c0_1 = arith.constant 0 : index
    %c0_2 = arith.constant 0 : index
    %1 = vector.load %arg2[%c0_1, %c0_2] : memref<288x64xbf16, #tpu.memory_space<vmem>>, vector<288x64xbf16>
    %cst = arith.constant dense<0.000000e+00> : vector<64x64xf32>
    %2 = tpu.matmul %0, %1, %cst {dimension_numbers = #tpu.dot_dimension_numbers<[1], [0], [0], [1], [0, 0, 1, 1], [], []>} : vector<64x288xbf16>, vector<288x64xbf16>, vector<64x64xf32> -> vector<64x64xf32>
    %c0_3 = arith.constant 0 : index
    %c0_4 = arith.constant 0 : index
    %3 = vector.load %arg3[%c0_3, %c0_4] : memref<1x64xf32, #tpu.memory_space<vmem>>, vector<1x64xf32>
    %4 = vector.broadcast %3 : vector<1x64xf32> to vector<64x64xf32>
    %5 = arith.mulf %2, %4 : vector<64x64xf32>
    %c0_5 = arith.constant 0 : index
    %c0_6 = arith.constant 0 : index
    %6 = vector.load %arg4[%c0_5, %c0_6] : memref<1x64xf32, #tpu.memory_space<vmem>>, vector<1x64xf32>
    %7 = vector.broadcast %6 : vector<1x64xf32> to vector<64x64xf32>
    %8 = arith.addf %5, %7 : vector<64x64xf32>
    %cst_7 = arith.constant 0.000000e+00 : f32
    %9 = vector.broadcast %cst_7 : f32 to vector<64x64xf32>
    %10 = arith.maximumf %8, %9 : vector<64x64xf32>
    %11 = arith.truncf %10 : vector<64x64xf32> to vector<64x64xbf16>
    %c0_8 = arith.constant 0 : index
    %c0_9 = arith.constant 0 : index
    %12 = vector.load %arg5[%c0_8, %c0_9] : memref<64x64xbf16, #tpu.memory_space<vmem>>, vector<64x64xbf16>
    tpu.vector_store %arg5[%c0_8, %c0_9], %11 {strides = array<i32>} : memref<64x64xbf16, #tpu.memory_space<vmem>>, vector<64x64xbf16>,
    return
  }
  func.func @transform_0(%arg0: i32) -> (i32, i32) {
    %c0_i32 = arith.constant 0 : i32
    %c0_i32_0 = arith.constant 0 : i32
    return %arg0, %c0_i32 : i32, i32
  }
  func.func @transform_1(%arg0: i32) -> (i32, i32) {
    %c0_i32 = arith.constant 0 : i32
    %c0_i32_0 = arith.constant 0 : i32
    %c0_i32_1 = arith.constant 0 : i32
    return %c0_i32, %c0_i32_0 : i32, i32
  }
  func.func @transform_2(%arg0: i32) -> (i32, i32) {
    %c0_i32 = arith.constant 0 : i32
    %c0_i32_0 = arith.constant 0 : i32
    %c0_i32_1 = arith.constant 0 : i32
    return %c0_i32, %c0_i32_0 : i32, i32
  }
  func.func @transform_3(%arg0: i32) -> (i32, i32) {
    %c0_i32 = arith.constant 0 : i32
    %c0_i32_0 = arith.constant 0 : i32
    %c0_i32_1 = arith.constant 0 : i32
    return %c0_i32, %c0_i32_0 : i32, i32
  }
  func.func @transform_4(%arg0: i32) -> (i32, i32) {
    %c0_i32 = arith.constant 0 : i32
    %c0_i32_0 = arith.constant 0 : i32
    return %arg0, %c0_i32 : i32, i32
  }
}

module attributes {stable_mosaic.version = 11 : i64} {
  func.func @_conv_bn_convres_kernel(%arg0: i32, %arg1: memref<64x576xbf16, #tpu.memory_space<vmem>>, %arg2: memref<576x64xbf16, #tpu.memory_space<vmem>>, %arg3: memref<1x64xf32, #tpu.memory_space<vmem>>, %arg4: memref<1x64xf32, #tpu.memory_space<vmem>>, %arg5: memref<64x32xbf16, #tpu.memory_space<vmem>>, %arg6: memref<32x64xbf16, #tpu.memory_space<vmem>>, %arg7: memref<1x64xf32, #tpu.memory_space<vmem>>, %arg8: memref<1x64xf32, #tpu.memory_space<vmem>>, %arg9: memref<64x64xbf16, #tpu.memory_space<vmem>>) attributes {dimension_semantics = [#tpu.dimension_semantics<parallel>], iteration_bounds = array<i64: 2>, scalar_prefetch = 0 : i64, scratch_operands = 0 : i64, tpu.core_type = #tpu.core_type<tc>, window_params = [{transform_indices = @transform_0, window_bounds = array<i64: 64, 576>}, {pipeline_mode = #tpu.pipeline_mode<synchronous>, transform_indices = @transform_1, window_bounds = array<i64: 576, 64>}, {pipeline_mode = #tpu.pipeline_mode<synchronous>, transform_indices = @transform_2, window_bounds = array<i64: 1, 64>}, {pipeline_mode = #tpu.pipeline_mode<synchronous>, transform_indices = @transform_3, window_bounds = array<i64: 1, 64>}, {transform_indices = @transform_4, window_bounds = array<i64: 64, 32>}, {pipeline_mode = #tpu.pipeline_mode<synchronous>, transform_indices = @transform_5, window_bounds = array<i64: 32, 64>}, {pipeline_mode = #tpu.pipeline_mode<synchronous>, transform_indices = @transform_6, window_bounds = array<i64: 1, 64>}, {pipeline_mode = #tpu.pipeline_mode<synchronous>, transform_indices = @transform_7, window_bounds = array<i64: 1, 64>}, {transform_indices = @transform_8, window_bounds = array<i64: 64, 64>}]} {
    %c0 = arith.constant 0 : index
    %c0_0 = arith.constant 0 : index
    %0 = vector.load %arg1[%c0, %c0_0] : memref<64x576xbf16, #tpu.memory_space<vmem>>, vector<64x576xbf16>
    %c0_1 = arith.constant 0 : index
    %c0_2 = arith.constant 0 : index
    %1 = vector.load %arg2[%c0_1, %c0_2] : memref<576x64xbf16, #tpu.memory_space<vmem>>, vector<576x64xbf16>
    %cst = arith.constant dense<0.000000e+00> : vector<64x64xf32>
    %2 = tpu.matmul %0, %1, %cst {dimension_numbers = #tpu.dot_dimension_numbers<[1], [0], [0], [1], [0, 0, 1, 1], [], []>} : vector<64x576xbf16>, vector<576x64xbf16>, vector<64x64xf32> -> vector<64x64xf32>
    %c0_3 = arith.constant 0 : index
    %c0_4 = arith.constant 0 : index
    %3 = vector.load %arg3[%c0_3, %c0_4] : memref<1x64xf32, #tpu.memory_space<vmem>>, vector<1x64xf32>
    %4 = vector.broadcast %3 : vector<1x64xf32> to vector<64x64xf32>
    %5 = arith.mulf %2, %4 : vector<64x64xf32>
    %c0_5 = arith.constant 0 : index
    %c0_6 = arith.constant 0 : index
    %6 = vector.load %arg4[%c0_5, %c0_6] : memref<1x64xf32, #tpu.memory_space<vmem>>, vector<1x64xf32>
    %7 = vector.broadcast %6 : vector<1x64xf32> to vector<64x64xf32>
    %8 = arith.addf %5, %7 : vector<64x64xf32>
    %c0_7 = arith.constant 0 : index
    %c0_8 = arith.constant 0 : index
    %9 = vector.load %arg5[%c0_7, %c0_8] : memref<64x32xbf16, #tpu.memory_space<vmem>>, vector<64x32xbf16>
    %c0_9 = arith.constant 0 : index
    %c0_10 = arith.constant 0 : index
    %10 = vector.load %arg6[%c0_9, %c0_10] : memref<32x64xbf16, #tpu.memory_space<vmem>>, vector<32x64xbf16>
    %cst_11 = arith.constant dense<0.000000e+00> : vector<64x64xf32>
    %11 = tpu.matmul %9, %10, %cst_11 {dimension_numbers = #tpu.dot_dimension_numbers<[1], [0], [0], [1], [0, 0, 1, 1], [], []>} : vector<64x32xbf16>, vector<32x64xbf16>, vector<64x64xf32> -> vector<64x64xf32>
    %c0_12 = arith.constant 0 : index
    %c0_13 = arith.constant 0 : index
    %12 = vector.load %arg7[%c0_12, %c0_13] : memref<1x64xf32, #tpu.memory_space<vmem>>, vector<1x64xf32>
    %13 = vector.broadcast %12 : vector<1x64xf32> to vector<64x64xf32>
    %14 = arith.mulf %11, %13 : vector<64x64xf32>
    %c0_14 = arith.constant 0 : index
    %c0_15 = arith.constant 0 : index
    %15 = vector.load %arg8[%c0_14, %c0_15] : memref<1x64xf32, #tpu.memory_space<vmem>>, vector<1x64xf32>
    %16 = vector.broadcast %15 : vector<1x64xf32> to vector<64x64xf32>
    %17 = arith.addf %14, %16 : vector<64x64xf32>
    %18 = arith.addf %8, %17 : vector<64x64xf32>
    %cst_16 = arith.constant 0.000000e+00 : f32
    %19 = vector.broadcast %cst_16 : f32 to vector<64x64xf32>
    %20 = arith.maximumf %18, %19 : vector<64x64xf32>
    %21 = arith.truncf %20 : vector<64x64xf32> to vector<64x64xbf16>
    %c0_17 = arith.constant 0 : index
    %c0_18 = arith.constant 0 : index
    %22 = vector.load %arg9[%c0_17, %c0_18] : memref<64x64xbf16, #tpu.memory_space<vmem>>, vector<64x64xbf16>
    tpu.vector_store %arg9[%c0_17, %c0_18], %21 {strides = array<i32>} : memref<64x64xbf16, #tpu.memory_space<vmem>>, vector<64x64xbf16>,
    return
  }
  func.func @transform_0(%arg0: i32) -> (i32, i32) {
    %c0_i32 = arith.constant 0 : i32
    %c0_i32_0 = arith.constant 0 : i32
    return %arg0, %c0_i32 : i32, i32
  }
  func.func @transform_1(%arg0: i32) -> (i32, i32) {
    %c0_i32 = arith.constant 0 : i32
    %c0_i32_0 = arith.constant 0 : i32
    %c0_i32_1 = arith.constant 0 : i32
    return %c0_i32, %c0_i32_0 : i32, i32
  }
  func.func @transform_2(%arg0: i32) -> (i32, i32) {
    %c0_i32 = arith.constant 0 : i32
    %c0_i32_0 = arith.constant 0 : i32
    %c0_i32_1 = arith.constant 0 : i32
    return %c0_i32, %c0_i32_0 : i32, i32
  }
  func.func @transform_3(%arg0: i32) -> (i32, i32) {
    %c0_i32 = arith.constant 0 : i32
    %c0_i32_0 = arith.constant 0 : i32
    %c0_i32_1 = arith.constant 0 : i32
    return %c0_i32, %c0_i32_0 : i32, i32
  }
  func.func @transform_4(%arg0: i32) -> (i32, i32) {
    %c0_i32 = arith.constant 0 : i32
    %c0_i32_0 = arith.constant 0 : i32
    return %arg0, %c0_i32 : i32, i32
  }
  func.func @transform_5(%arg0: i32) -> (i32, i32) {
    %c0_i32 = arith.constant 0 : i32
    %c0_i32_0 = arith.constant 0 : i32
    %c0_i32_1 = arith.constant 0 : i32
    return %c0_i32, %c0_i32_0 : i32, i32
  }
  func.func @transform_6(%arg0: i32) -> (i32, i32) {
    %c0_i32 = arith.constant 0 : i32
    %c0_i32_0 = arith.constant 0 : i32
    %c0_i32_1 = arith.constant 0 : i32
    return %c0_i32, %c0_i32_0 : i32, i32
  }
  func.func @transform_7(%arg0: i32) -> (i32, i32) {
    %c0_i32 = arith.constant 0 : i32
    %c0_i32_0 = arith.constant 0 : i32
    %c0_i32_1 = arith.constant 0 : i32
    return %c0_i32, %c0_i32_0 : i32, i32
  }
  func.func @transform_8(%arg0: i32) -> (i32, i32) {
    %c0_i32 = arith.constant 0 : i32
    %c0_i32_0 = arith.constant 0 : i32
    return %arg0, %c0_i32 : i32, i32
  }
}

module attributes {stable_mosaic.version = 11 : i64} {
  func.func @_conv_bn_kernel(%arg0: i32, %arg1: memref<16x576xbf16, #tpu.memory_space<vmem>>, %arg2: memref<576x128xbf16, #tpu.memory_space<vmem>>, %arg3: memref<1x128xf32, #tpu.memory_space<vmem>>, %arg4: memref<1x128xf32, #tpu.memory_space<vmem>>, %arg5: memref<16x128xbf16, #tpu.memory_space<vmem>>) attributes {dimension_semantics = [#tpu.dimension_semantics<parallel>], iteration_bounds = array<i64: 2>, scalar_prefetch = 0 : i64, scratch_operands = 0 : i64, tpu.core_type = #tpu.core_type<tc>, window_params = [{transform_indices = @transform_0, window_bounds = array<i64: 16, 576>}, {pipeline_mode = #tpu.pipeline_mode<synchronous>, transform_indices = @transform_1, window_bounds = array<i64: 576, 128>}, {pipeline_mode = #tpu.pipeline_mode<synchronous>, transform_indices = @transform_2, window_bounds = array<i64: 1, 128>}, {pipeline_mode = #tpu.pipeline_mode<synchronous>, transform_indices = @transform_3, window_bounds = array<i64: 1, 128>}, {transform_indices = @transform_4, window_bounds = array<i64: 16, 128>}]} {
    %c0 = arith.constant 0 : index
    %c0_0 = arith.constant 0 : index
    %0 = vector.load %arg1[%c0, %c0_0] : memref<16x576xbf16, #tpu.memory_space<vmem>>, vector<16x576xbf16>
    %c0_1 = arith.constant 0 : index
    %c0_2 = arith.constant 0 : index
    %1 = vector.load %arg2[%c0_1, %c0_2] : memref<576x128xbf16, #tpu.memory_space<vmem>>, vector<576x128xbf16>
    %cst = arith.constant dense<0.000000e+00> : vector<16x128xf32>
    %2 = tpu.matmul %0, %1, %cst {dimension_numbers = #tpu.dot_dimension_numbers<[1], [0], [0], [1], [0, 0, 1, 1], [], []>} : vector<16x576xbf16>, vector<576x128xbf16>, vector<16x128xf32> -> vector<16x128xf32>
    %c0_3 = arith.constant 0 : index
    %c0_4 = arith.constant 0 : index
    %3 = vector.load %arg3[%c0_3, %c0_4] : memref<1x128xf32, #tpu.memory_space<vmem>>, vector<1x128xf32>
    %4 = vector.broadcast %3 : vector<1x128xf32> to vector<16x128xf32>
    %5 = arith.mulf %2, %4 : vector<16x128xf32>
    %c0_5 = arith.constant 0 : index
    %c0_6 = arith.constant 0 : index
    %6 = vector.load %arg4[%c0_5, %c0_6] : memref<1x128xf32, #tpu.memory_space<vmem>>, vector<1x128xf32>
    %7 = vector.broadcast %6 : vector<1x128xf32> to vector<16x128xf32>
    %8 = arith.addf %5, %7 : vector<16x128xf32>
    %cst_7 = arith.constant 0.000000e+00 : f32
    %9 = vector.broadcast %cst_7 : f32 to vector<16x128xf32>
    %10 = arith.maximumf %8, %9 : vector<16x128xf32>
    %11 = arith.truncf %10 : vector<16x128xf32> to vector<16x128xbf16>
    %c0_8 = arith.constant 0 : index
    %c0_9 = arith.constant 0 : index
    %12 = vector.load %arg5[%c0_8, %c0_9] : memref<16x128xbf16, #tpu.memory_space<vmem>>, vector<16x128xbf16>
    tpu.vector_store %arg5[%c0_8, %c0_9], %11 {strides = array<i32>} : memref<16x128xbf16, #tpu.memory_space<vmem>>, vector<16x128xbf16>,
    return
  }
  func.func @transform_0(%arg0: i32) -> (i32, i32) {
    %c0_i32 = arith.constant 0 : i32
    %c0_i32_0 = arith.constant 0 : i32
    return %arg0, %c0_i32 : i32, i32
  }
  func.func @transform_1(%arg0: i32) -> (i32, i32) {
    %c0_i32 = arith.constant 0 : i32
    %c0_i32_0 = arith.constant 0 : i32
    %c0_i32_1 = arith.constant 0 : i32
    return %c0_i32, %c0_i32_0 : i32, i32
  }
  func.func @transform_2(%arg0: i32) -> (i32, i32) {
    %c0_i32 = arith.constant 0 : i32
    %c0_i32_0 = arith.constant 0 : i32
    %c0_i32_1 = arith.constant 0 : i32
    return %c0_i32, %c0_i32_0 : i32, i32
  }
  func.func @transform_3(%arg0: i32) -> (i32, i32) {
    %c0_i32 = arith.constant 0 : i32
    %c0_i32_0 = arith.constant 0 : i32
    %c0_i32_1 = arith.constant 0 : i32
    return %c0_i32, %c0_i32_0 : i32, i32
  }
  func.func @transform_4(%arg0: i32) -> (i32, i32) {
    %c0_i32 = arith.constant 0 : i32
    %c0_i32_0 = arith.constant 0 : i32
    return %arg0, %c0_i32 : i32, i32
  }
}

module attributes {stable_mosaic.version = 11 : i64} {
  func.func @_head_kernel(%arg0: i32, %arg1: memref<2x2048xbf16, #tpu.memory_space<vmem>>, %arg2: memref<2048x128xbf16, #tpu.memory_space<vmem>>, %arg3: memref<1x128xf32, #tpu.memory_space<vmem>>, %arg4: memref<2x128xf32, #tpu.memory_space<vmem>>) attributes {dimension_semantics = [#tpu.dimension_semantics<arbitrary>], iteration_bounds = array<i64: 1>, scalar_prefetch = 0 : i64, scratch_operands = 0 : i64, tpu.core_type = #tpu.core_type<tc>, window_params = [{pipeline_mode = #tpu.pipeline_mode<synchronous>, transform_indices = @transform_0, window_bounds = array<i64: 2, 2048>}, {pipeline_mode = #tpu.pipeline_mode<synchronous>, transform_indices = @transform_1, window_bounds = array<i64: 2048, 128>}, {pipeline_mode = #tpu.pipeline_mode<synchronous>, transform_indices = @transform_2, window_bounds = array<i64: 1, 128>}, {pipeline_mode = #tpu.pipeline_mode<synchronous>, transform_indices = @transform_3, window_bounds = array<i64: 2, 128>}]} {
    %c0 = arith.constant 0 : index
    %c0_0 = arith.constant 0 : index
    %0 = vector.load %arg1[%c0, %c0_0] : memref<2x2048xbf16, #tpu.memory_space<vmem>>, vector<2x2048xbf16>
    %c0_1 = arith.constant 0 : index
    %c0_2 = arith.constant 0 : index
    %1 = vector.load %arg2[%c0_1, %c0_2] : memref<2048x128xbf16, #tpu.memory_space<vmem>>, vector<2048x128xbf16>
    %cst = arith.constant dense<0.000000e+00> : vector<2x128xf32>
    %2 = tpu.matmul %0, %1, %cst {dimension_numbers = #tpu.dot_dimension_numbers<[1], [0], [0], [1], [0, 0, 1, 1], [], []>} : vector<2x2048xbf16>, vector<2048x128xbf16>, vector<2x128xf32> -> vector<2x128xf32>
    %c0_3 = arith.constant 0 : index
    %c0_4 = arith.constant 0 : index
    %3 = vector.load %arg3[%c0_3, %c0_4] : memref<1x128xf32, #tpu.memory_space<vmem>>, vector<1x128xf32>
    %4 = vector.broadcast %3 : vector<1x128xf32> to vector<2x128xf32>
    %5 = arith.addf %2, %4 : vector<2x128xf32>
    %cst_5 = arith.constant dense<0xFF800000> : vector<2xf32>
    %6 = vector.multi_reduction <maximumf>, %5, %cst_5 [1] : vector<2x128xf32> to vector<2xf32>
    %7 = vector.shape_cast %6 : vector<2xf32> to vector<2x1xf32>
    %8 = vector.broadcast %7 : vector<2x1xf32> to vector<2x128xf32>
    %9 = arith.subf %5, %8 : vector<2x128xf32>
    %10 = math.exp %9 : vector<2x128xf32>
    %cst_6 = arith.constant dense<0.000000e+00> : vector<2xf32>
    %11 = vector.multi_reduction <add>, %10, %cst_6 [1] : vector<2x128xf32> to vector<2xf32>
    %12 = vector.shape_cast %11 : vector<2xf32> to vector<2x1xf32>
    %13 = math.log %12 : vector<2x1xf32>
    %14 = arith.addf %13, %7 : vector<2x1xf32>
    %15 = vector.broadcast %14 : vector<2x1xf32> to vector<2x128xf32>
    %16 = arith.subf %5, %15 : vector<2x128xf32>
    %c0_7 = arith.constant 0 : index
    %c0_8 = arith.constant 0 : index
    %17 = vector.load %arg4[%c0_7, %c0_8] : memref<2x128xf32, #tpu.memory_space<vmem>>, vector<2x128xf32>
    tpu.vector_store %arg4[%c0_7, %c0_8], %16 {strides = array<i32>} : memref<2x128xf32, #tpu.memory_space<vmem>>, vector<2x128xf32>,
    return
  }
  func.func @transform_0(%arg0: i32) -> (i32, i32) {
    %c0_i32 = arith.constant 0 : i32
    %c0_i32_0 = arith.constant 0 : i32
    %c0_i32_1 = arith.constant 0 : i32
    return %c0_i32, %c0_i32_0 : i32, i32
  }
  func.func @transform_1(%arg0: i32) -> (i32, i32) {
    %c0_i32 = arith.constant 0 : i32
    %c0_i32_0 = arith.constant 0 : i32
    %c0_i32_1 = arith.constant 0 : i32
    return %c0_i32, %c0_i32_0 : i32, i32
  }
  func.func @transform_2(%arg0: i32) -> (i32, i32) {
    %c0_i32 = arith.constant 0 : i32
    %c0_i32_0 = arith.constant 0 : i32
    %c0_i32_1 = arith.constant 0 : i32
    return %c0_i32, %c0_i32_0 : i32, i32
  }
  func.func @transform_3(%arg0: i32) -> (i32, i32) {
    %c0_i32 = arith.constant 0 : i32
    %c0_i32_0 = arith.constant 0 : i32
    %c0_i32_1 = arith.constant 0 : i32
    return %c0_i32, %c0_i32_0 : i32, i32
  }
}

module attributes {stable_mosaic.version = 11 : i64} {
  func.func @_conv_bn_convres_kernel(%arg0: i32, %arg1: memref<16x1152xbf16, #tpu.memory_space<vmem>>, %arg2: memref<1152x128xbf16, #tpu.memory_space<vmem>>, %arg3: memref<1x128xf32, #tpu.memory_space<vmem>>, %arg4: memref<1x128xf32, #tpu.memory_space<vmem>>, %arg5: memref<16x64xbf16, #tpu.memory_space<vmem>>, %arg6: memref<64x128xbf16, #tpu.memory_space<vmem>>, %arg7: memref<1x128xf32, #tpu.memory_space<vmem>>, %arg8: memref<1x128xf32, #tpu.memory_space<vmem>>, %arg9: memref<16x128xbf16, #tpu.memory_space<vmem>>) attributes {dimension_semantics = [#tpu.dimension_semantics<parallel>], iteration_bounds = array<i64: 2>, scalar_prefetch = 0 : i64, scratch_operands = 0 : i64, tpu.core_type = #tpu.core_type<tc>, window_params = [{transform_indices = @transform_0, window_bounds = array<i64: 16, 1152>}, {pipeline_mode = #tpu.pipeline_mode<synchronous>, transform_indices = @transform_1, window_bounds = array<i64: 1152, 128>}, {pipeline_mode = #tpu.pipeline_mode<synchronous>, transform_indices = @transform_2, window_bounds = array<i64: 1, 128>}, {pipeline_mode = #tpu.pipeline_mode<synchronous>, transform_indices = @transform_3, window_bounds = array<i64: 1, 128>}, {transform_indices = @transform_4, window_bounds = array<i64: 16, 64>}, {pipeline_mode = #tpu.pipeline_mode<synchronous>, transform_indices = @transform_5, window_bounds = array<i64: 64, 128>}, {pipeline_mode = #tpu.pipeline_mode<synchronous>, transform_indices = @transform_6, window_bounds = array<i64: 1, 128>}, {pipeline_mode = #tpu.pipeline_mode<synchronous>, transform_indices = @transform_7, window_bounds = array<i64: 1, 128>}, {transform_indices = @transform_8, window_bounds = array<i64: 16, 128>}]} {
    %c0 = arith.constant 0 : index
    %c0_0 = arith.constant 0 : index
    %0 = vector.load %arg1[%c0, %c0_0] : memref<16x1152xbf16, #tpu.memory_space<vmem>>, vector<16x1152xbf16>
    %c0_1 = arith.constant 0 : index
    %c0_2 = arith.constant 0 : index
    %1 = vector.load %arg2[%c0_1, %c0_2] : memref<1152x128xbf16, #tpu.memory_space<vmem>>, vector<1152x128xbf16>
    %cst = arith.constant dense<0.000000e+00> : vector<16x128xf32>
    %2 = tpu.matmul %0, %1, %cst {dimension_numbers = #tpu.dot_dimension_numbers<[1], [0], [0], [1], [0, 0, 1, 1], [], []>} : vector<16x1152xbf16>, vector<1152x128xbf16>, vector<16x128xf32> -> vector<16x128xf32>
    %c0_3 = arith.constant 0 : index
    %c0_4 = arith.constant 0 : index
    %3 = vector.load %arg3[%c0_3, %c0_4] : memref<1x128xf32, #tpu.memory_space<vmem>>, vector<1x128xf32>
    %4 = vector.broadcast %3 : vector<1x128xf32> to vector<16x128xf32>
    %5 = arith.mulf %2, %4 : vector<16x128xf32>
    %c0_5 = arith.constant 0 : index
    %c0_6 = arith.constant 0 : index
    %6 = vector.load %arg4[%c0_5, %c0_6] : memref<1x128xf32, #tpu.memory_space<vmem>>, vector<1x128xf32>
    %7 = vector.broadcast %6 : vector<1x128xf32> to vector<16x128xf32>
    %8 = arith.addf %5, %7 : vector<16x128xf32>
    %c0_7 = arith.constant 0 : index
    %c0_8 = arith.constant 0 : index
    %9 = vector.load %arg5[%c0_7, %c0_8] : memref<16x64xbf16, #tpu.memory_space<vmem>>, vector<16x64xbf16>
    %c0_9 = arith.constant 0 : index
    %c0_10 = arith.constant 0 : index
    %10 = vector.load %arg6[%c0_9, %c0_10] : memref<64x128xbf16, #tpu.memory_space<vmem>>, vector<64x128xbf16>
    %cst_11 = arith.constant dense<0.000000e+00> : vector<16x128xf32>
    %11 = tpu.matmul %9, %10, %cst_11 {dimension_numbers = #tpu.dot_dimension_numbers<[1], [0], [0], [1], [0, 0, 1, 1], [], []>} : vector<16x64xbf16>, vector<64x128xbf16>, vector<16x128xf32> -> vector<16x128xf32>
    %c0_12 = arith.constant 0 : index
    %c0_13 = arith.constant 0 : index
    %12 = vector.load %arg7[%c0_12, %c0_13] : memref<1x128xf32, #tpu.memory_space<vmem>>, vector<1x128xf32>
    %13 = vector.broadcast %12 : vector<1x128xf32> to vector<16x128xf32>
    %14 = arith.mulf %11, %13 : vector<16x128xf32>
    %c0_14 = arith.constant 0 : index
    %c0_15 = arith.constant 0 : index
    %15 = vector.load %arg8[%c0_14, %c0_15] : memref<1x128xf32, #tpu.memory_space<vmem>>, vector<1x128xf32>
    %16 = vector.broadcast %15 : vector<1x128xf32> to vector<16x128xf32>
    %17 = arith.addf %14, %16 : vector<16x128xf32>
    %18 = arith.addf %8, %17 : vector<16x128xf32>
    %cst_16 = arith.constant 0.000000e+00 : f32
    %19 = vector.broadcast %cst_16 : f32 to vector<16x128xf32>
    %20 = arith.maximumf %18, %19 : vector<16x128xf32>
    %21 = arith.truncf %20 : vector<16x128xf32> to vector<16x128xbf16>
    %c0_17 = arith.constant 0 : index
    %c0_18 = arith.constant 0 : index
    %22 = vector.load %arg9[%c0_17, %c0_18] : memref<16x128xbf16, #tpu.memory_space<vmem>>, vector<16x128xbf16>
    tpu.vector_store %arg9[%c0_17, %c0_18], %21 {strides = array<i32>} : memref<16x128xbf16, #tpu.memory_space<vmem>>, vector<16x128xbf16>,
    return
  }
  func.func @transform_0(%arg0: i32) -> (i32, i32) {
    %c0_i32 = arith.constant 0 : i32
    %c0_i32_0 = arith.constant 0 : i32
    return %arg0, %c0_i32 : i32, i32
  }
  func.func @transform_1(%arg0: i32) -> (i32, i32) {
    %c0_i32 = arith.constant 0 : i32
    %c0_i32_0 = arith.constant 0 : i32
    %c0_i32_1 = arith.constant 0 : i32
    return %c0_i32, %c0_i32_0 : i32, i32
  }
  func.func @transform_2(%arg0: i32) -> (i32, i32) {
    %c0_i32 = arith.constant 0 : i32
    %c0_i32_0 = arith.constant 0 : i32
    %c0_i32_1 = arith.constant 0 : i32
    return %c0_i32, %c0_i32_0 : i32, i32
  }
  func.func @transform_3(%arg0: i32) -> (i32, i32) {
    %c0_i32 = arith.constant 0 : i32
    %c0_i32_0 = arith.constant 0 : i32
    %c0_i32_1 = arith.constant 0 : i32
    return %c0_i32, %c0_i32_0 : i32, i32
  }
  func.func @transform_4(%arg0: i32) -> (i32, i32) {
    %c0_i32 = arith.constant 0 : i32
    %c0_i32_0 = arith.constant 0 : i32
    return %arg0, %c0_i32 : i32, i32
  }
  func.func @transform_5(%arg0: i32) -> (i32, i32) {
    %c0_i32 = arith.constant 0 : i32
    %c0_i32_0 = arith.constant 0 : i32
    %c0_i32_1 = arith.constant 0 : i32
    return %c0_i32, %c0_i32_0 : i32, i32
  }
  func.func @transform_6(%arg0: i32) -> (i32, i32) {
    %c0_i32 = arith.constant 0 : i32
    %c0_i32_0 = arith.constant 0 : i32
    %c0_i32_1 = arith.constant 0 : i32
    return %c0_i32, %c0_i32_0 : i32, i32
  }
  func.func @transform_7(%arg0: i32) -> (i32, i32) {
    %c0_i32 = arith.constant 0 : i32
    %c0_i32_0 = arith.constant 0 : i32
    %c0_i32_1 = arith.constant 0 : i32
    return %c0_i32, %c0_i32_0 : i32, i32
  }
  func.func @transform_8(%arg0: i32) -> (i32, i32) {
    %c0_i32 = arith.constant 0 : i32
    %c0_i32_0 = arith.constant 0 : i32
    return %arg0, %c0_i32 : i32, i32
  }
}

</mosaic_0001>

<llo_original>
// kernel: _lambda_.8
$region0: #{_lambda_.8}
  #allocation0 [shape = 'u32[]', space=smem, size = 0x4, offset = 0x4, fixed_abs, tag = 'smem constant byte address 0x4 - core index']
  #allocation1 [shape = 'u32[144,128]{1,0:T(1,128)}', space=vmem, size = 0x12000, scoped, tag = 'internal scratch']
  %s0 = inlined_call_operand.vmem [shape: bf16[512,32], index: 0, kind: input, shape index: {}]
  %s1 = inlined_call_operand.vmem [shape: bf16[32,32], index: 1, kind: input, shape index: {}]
  %s2 = inlined_call_operand.vmem [shape: f32[1,32], index: 2, kind: input, shape index: {}]
  %s3 = inlined_call_operand.vmem [shape: f32[1,32], index: 3, kind: input, shape index: {}]
  %s4 = inlined_call_operand.vmem [shape: bf16[512,32], index: 4, kind: output, shape index: {}]
  %s5 = sld [smem:[#allocation0]]
  $region49: #{_lambda_.8} parent=0
    _
  %s7 = ssub.s32 1, %s5
  %s8 = scalar_select 0, %s7, %s5
  loop: start=0, step=1, limit=4
  $region2: #{_lambda_.8} parent=0 // loop_pre_header
    _
  $region3: #{_lambda_.8} parent=0 // loop_header
    %s10 = sphi 0, %s14
    %p11 = scmp.ge.s32.totalorder %s10, 4
    %s20 = sphi 0, %s22
    %s23 = sphi 0, %s20
    %s24 = sphi 0, %s23
    %s40 = sphi 0, %s24
    %s44 = sphi 0, %s44
    %s46 = sphi 0, %s44
    %s47 = sphi 0, %s46
    %s61 = sphi 0, %s47
    %s65 = sphi 0, %s65
    %s67 = sphi 0, %s65
    %s68 = sphi 0, %s67
    %s82 = sphi 0, %s68
    %s86 = sphi 0, %s86
    %s88 = sphi 0, %s86
    %s89 = sphi 0, %s88
    %s103 = sphi 0, %s89
    %s109 = sphi 0, %s111
    %s112 = sphi 0, %s109
    %s113 = sphi 0, %s112
    %s129 = sphi 0, %s113
  $region4: #{_lambda_.8} parent=0 // loop_header_branch
    %13 = sbr.rel (%p11) target = $region8
  $region5: #{_lambda_.8} parent=0 // loop_body
    %s15 = ssub.s32 %s10, 1
    %s16 = ssub.s32 %s10, 2
    %s17 = sadd.s32 %s10, 1
    %s18 = ssub.s32 %s10, %s17
    %p19 = scmp.eq.s32.totalorder %s18, 0
    %s21 = sadd.s32 %s20, 1
    %s22 = scalar_select %p19, %s20, %s21
    %p25 = pneg %p19
    %p26 = scmp.eq.s32.totalorder %s10, 1
    %p27 = por %p25, %p26
    %p28 = scmp.ne.s32.totalorder %s20, %s23
    %p29 = scmp.eq.s32.totalorder %s10, 0
    %p30 = por %p28, %p29
    %p31 = scmp.ne.s32.totalorder %s20, %s23
    %p32 = scmp.eq.s32.totalorder %s15, 1
    %p33 = por %p31, %p32
    %p34 = scmp.ne.s32.totalorder %s23, %s24
    %p35 = scmp.eq.s32.totalorder %s15, 0
    %p36 = por %p34, %p35
    %p37 = scmp.ne.s32.totalorder %s23, %s24
    %p38 = scmp.eq.s32.totalorder %s16, 1
    %p39 = por %p37, %p38
    %p41 = scmp.ne.s32.totalorder %s24, %s40
    %p42 = scmp.eq.s32.totalorder %s16, 0
    %p43 = por %p41, %p42
    %s45 = sadd.s32 %s44, 1
    %p48 = scmp.eq.s32.totalorder %s10, 1
    %p49 = scmp.ne.s32.totalorder %s44, %s46
    %p50 = scmp.eq.s32.totalorder %s10, 0
    %p51 = por %p49, %p50
    %p52 = scmp.ne.s32.totalorder %s44, %s46
    %p53 = scmp.eq.s32.totalorder %s15, 1
    %p54 = por %p52, %p53
    %p55 = scmp.ne.s32.totalorder %s46, %s47
    %p56 = scmp.eq.s32.totalorder %s15, 0
    %p57 = por %p55, %p56
    %p58 = scmp.ne.s32.totalorder %s46, %s47
    %p59 = scmp.eq.s32.totalorder %s16, 1
    %p60 = por %p58, %p59
    %p62 = scmp.ne.s32.totalorder %s47, %s61
    %p63 = scmp.eq.s32.totalorder %s16, 0
    %p64 = por %p62, %p63
    %s66 = sadd.s32 %s65, 1
    %p69 = scmp.eq.s32.totalorder %s10, 1
    %p70 = scmp.ne.s32.totalorder %s65, %s67
    %p71 = scmp.eq.s32.totalorder %s10, 0
    %p72 = por %p70, %p71
    %p73 = scmp.ne.s32.totalorder %s65, %s67
    %p74 = scmp.eq.s32.totalorder %s15, 1
    %p75 = por %p73, %p74
    %p76 = scmp.ne.s32.totalorder %s67, %s68
    %p77 = scmp.eq.s32.totalorder %s15, 0
    %p78 = por %p76, %p77
    %p79 = scmp.ne.s32.totalorder %s67, %s68
    %p80 = scmp.eq.s32.totalorder %s16, 1
    %p81 = por %p79, %p80
    %p83 = scmp.ne.s32.totalorder %s68, %s82
    %p84 = scmp.eq.s32.totalorder %s16, 0
    %p85 = por %p83, %p84
    %s87 = sadd.s32 %s86, 1
    %p90 = scmp.eq.s32.totalorder %s10, 1
    %p91 = scmp.ne.s32.totalorder %s86, %s88
    %p92 = scmp.eq.s32.totalorder %s10, 0
    %p93 = por %p91, %p92
    %p94 = scmp.ne.s32.totalorder %s86, %s88
    %p95 = scmp.eq.s32.totalorder %s15, 1
    %p96 = por %p94, %p95
    %p97 = scmp.ne.s32.totalorder %s88, %s89
    %p98 = scmp.eq.s32.totalorder %s15, 0
    %p99 = por %p97, %p98
    %p100 = scmp.ne.s32.totalorder %s88, %s89
    %p101 = scmp.eq.s32.totalorder %s16, 1
    %p102 = por %p100, %p101
    %p104 = scmp.ne.s32.totalorder %s89, %s103
    %p105 = scmp.eq.s32.totalorder %s16, 0
    %p106 = por %p104, %p105
    %s107 = ssub.s32 %s10, %s17
    %p108 = scmp.eq.s32.totalorder %s107, 0
    %s110 = sadd.s32 %s109, 1
    %s111 = scalar_select %p108, %s109, %s110
    %p114 = pneg %p108
    %p115 = scmp.eq.s32.totalorder %s10, 1
    %p116 = por %p114, %p115
    %p117 = scmp.ne.s32.totalorder %s109, %s112
    %p118 = scmp.eq.s32.totalorder %s10, 0
    %p119 = por %p117, %p118
    %p120 = scmp.ne.s32.totalorder %s109, %s112
    %p121 = scmp.eq.s32.totalorder %s15, 1
    %p122 = por %p120, %p121
    %p123 = scmp.ne.s32.totalorder %s112, %s113
    %p124 = scmp.eq.s32.totalorder %s15, 0
    %p125 = por %p123, %p124
    %p126 = scmp.ne.s32.totalorder %s112, %s113
    %p127 = scmp.eq.s32.totalorder %s16, 1
    %p128 = por %p126, %p127
    %p130 = scmp.ne.s32.totalorder %s113, %s129
    %p131 = scmp.eq.s32.totalorder %s16, 0
    %p132 = por %p130, %p131
    %p133 = scmp.le.s32.totalorder 1, %s10
    %p134 = scmp.lt.s32.totalorder %s10, 3
    %p135 = pnand %p133, %p134
    %p136 = pneg %p135
    // Predicated region
    $region9: #{_lambda_.8} parent=5 // pred_check
      _
    $region10: #{_lambda_.8} parent=5 // pred_check_branch
      %138 = sbr.rel (%p135) target = $region12
    $region11: #{_lambda_.8} parent=5 // pred_region
      %s139 = ssub.s32 %s10, 1
      // Predicated region
      $region13: #{_lambda_.8} parent=11 // pred_check
        %p140 = pneg %p57
      $region14: #{_lambda_.8} parent=11 // pred_check_branch
        %142 = sbr.rel (%p140) target = $region16
      $region15: #{_lambda_.8} parent=11 // pred_region
        _
      $region16: #{_lambda_.8} parent=11 // pred_fallthru
        _
      // Predicated region
      $region17: #{_lambda_.8} parent=11 // pred_check
        %p143 = pneg %p78
      $region18: #{_lambda_.8} parent=11 // pred_check_branch
        %145 = sbr.rel (%p143) target = $region20
      $region19: #{_lambda_.8} parent=11 // pred_region
        _
      $region20: #{_lambda_.8} parent=11 // pred_fallthru
        _
      // Predicated region
      $region21: #{_lambda_.8} parent=11 // pred_check
        %p146 = pneg %p99
      $region22: #{_lambda_.8} parent=11 // pred_check_branch
        %148 = sbr.rel (%p146) target = $region24
      $region23: #{_lambda_.8} parent=11 // pred_region
        _
      $region24: #{_lambda_.8} parent=11 // pred_fallthru
        _
    $region12: #{_lambda_.8} parent=5 // pred_fallthru
      _
    %p149 = scmp.lt.s32.totalorder %s10, 2
    // Predicated region
    $region25: #{_lambda_.8} parent=5 // pred_check
      %p150 = pneg %p149
    $region26: #{_lambda_.8} parent=5 // pred_check_branch
      %152 = sbr.rel (%p150) target = $region28
    $region27: #{_lambda_.8} parent=5 // pred_region
      // Predicated region
      $region29: #{_lambda_.8} parent=27 // pred_check
        %p153 = pneg %p30
      $region30: #{_lambda_.8} parent=27 // pred_check_branch
        %155 = sbr.rel (%p153) target = $region32
      $region31: #{_lambda_.8} parent=27 // pred_region
        %s156 = smul.u32 32, %s10
        %p157 = scmp.lt.s32.totalorder %s156, 63
        %s158 = scalar_select %p157, %s156, 63
        %s159 = smul.addr %s158, 4
        %s160 = scalar_lea.vmem %s0, %s159
        %s161 = smul.u32 32, %s10
      $region32: #{_lambda_.8} parent=27 // pred_fallthru
        _
    $region28: #{_lambda_.8} parent=5 // pred_fallthru
      _
    %p162 = scmp.le.s32.totalorder 1, %s10
    %p163 = scmp.lt.s32.totalorder %s10, 3
    %p164 = pnand %p162, %p163
    %p165 = pneg %p164
    // Predicated region
    $region33: #{_lambda_.8} parent=5 // pred_check
      _
    $region34: #{_lambda_.8} parent=5 // pred_check_branch
      %167 = sbr.rel (%p164) target = $region36
    $region35: #{_lambda_.8} parent=5 // pred_region
      %s168 = ssub.s32 %s10, 1
      %s169 = smul.u32 32, %s15
      %p170 = scmp.lt.s32.totalorder %s169, 63
      %s171 = scalar_select %p170, %s169, 63
      %s172 = smul.addr %s171, 4
      %s173 = scalar_lea.vmem %s0, %s172
      %p174 = pneg %p36
      %p175 = pneg %p33
      %p176 = pneg %p57
      %p177 = pneg %p54
      %p178 = pneg %p78
      %p179 = pneg %p75
      %p180 = pneg %p99
      %p181 = pneg %p96
      %p182 = pneg %p125
      %p183 = pneg %p122
      %s184 = smul.u32 32, %s15
      %p185 = scmp.lt.s32.totalorder %s184, 63
      %s186 = scalar_select %p185, %s184, 63
      %s187 = smul.addr %s186, 4
      %s188 = scalar_lea.vmem %s4, %s187
      %s189 = smul.u32 32, %s15
      %p190 = scmp.lt.s32.totalorder %s189, 63
      %s191 = scalar_select %p190, %s189, 63
      %s192 = smul.addr %s191, 4
      %s193 = scalar_lea.vmem %s0, %s192
      %s194 = smul.u32 32, %s15
      %s195 = smul.u32 32, %s15
      %p196 = scmp.lt.s32.totalorder %s195, 63
      %s197 = scalar_select %p196, %s195, 63
      %s198 = smul.addr %s197, 4
      %s199 = scalar_lea.vmem %s4, %s198
      %s200 = smul.u32 32, %s15
      %v202 = vld [vmem:[%s193] sm:$0xf]
      %v203 = vld [vmem:[%s193 + $0x4] sm:$0xf]
      %v204 = vld [vmem:[%s193 + $0x8] sm:$0xf]
      %v205 = vld [vmem:[%s193 + $0xc] sm:$0xf]
      %v206 = vld [vmem:[%s193 + $0x10] sm:$0xf]
      %v207 = vld [vmem:[%s193 + $0x14] sm:$0xf]
      %v208 = vld [vmem:[%s193 + $0x18] sm:$0xf]
      %v209 = vld [vmem:[%s193 + $0x1c] sm:$0xf]
      %v210 = vld [vmem:[%s193 + $0x20] sm:$0xf]
      %v211 = vld [vmem:[%s193 + $0x24] sm:$0xf]
      %v212 = vld [vmem:[%s193 + $0x28] sm:$0xf]
      %v213 = vld [vmem:[%s193 + $0x2c] sm:$0xf]
      %v214 = vld [vmem:[%s193 + $0x30] sm:$0xf]
      %v215 = vld [vmem:[%s193 + $0x34] sm:$0xf]
      %v216 = vld [vmem:[%s193 + $0x38] sm:$0xf]
      %v217 = vld [vmem:[%s193 + $0x3c] sm:$0xf]
      %v218 = vld [vmem:[%s193 + $0x40] sm:$0xf]
      %v219 = vld [vmem:[%s193 + $0x44] sm:$0xf]
      %v220 = vld [vmem:[%s193 + $0x48] sm:$0xf]
      %v221 = vld [vmem:[%s193 + $0x4c] sm:$0xf]
      %v222 = vld [vmem:[%s193 + $0x50] sm:$0xf]
      %v223 = vld [vmem:[%s193 + $0x54] sm:$0xf]
      %v224 = vld [vmem:[%s193 + $0x58] sm:$0xf]
      %v225 = vld [vmem:[%s193 + $0x5c] sm:$0xf]
      %v226 = vld [vmem:[%s193 + $0x60] sm:$0xf]
      %v227 = vld [vmem:[%s193 + $0x64] sm:$0xf]
      %v228 = vld [vmem:[%s193 + $0x68] sm:$0xf]
      %v229 = vld [vmem:[%s193 + $0x6c] sm:$0xf]
      %v230 = vld [vmem:[%s193 + $0x70] sm:$0xf]
      %v231 = vld [vmem:[%s193 + $0x74] sm:$0xf]
      %v232 = vld [vmem:[%s193 + $0x78] sm:$0xf]
      %v233 = vld [vmem:[%s193 + $0x7c] sm:$0xf]
      %v234 = vld [vmem:[%s1] sm:$0xf]
      %v235 = vld [vmem:[%s1 + $0x4] sm:$0xf]
      %v236 = vld [vmem:[%s1 + $0x8] sm:$0xf]
      %v237 = vld [vmem:[%s1 + $0xc] sm:$0xf]
      %v270 = vunpack.c.l.b16 %v202
      %v271 = vunpack.c.l.b16 %v203
      %v272 = vunpack.c.l.b16 %v204
      %v273 = vunpack.c.l.b16 %v205
      %v274 = vunpack.c.l.b16 %v206
      %v275 = vunpack.c.l.b16 %v207
      %v276 = vunpack.c.l.b16 %v208
      %v277 = vunpack.c.l.b16 %v209
      %v278 = vunpack.c.l.b16 %v210
      %v279 = vunpack.c.l.b16 %v211
      %v280 = vunpack.c.l.b16 %v212
      %v281 = vunpack.c.l.b16 %v213
      %v282 = vunpack.c.l.b16 %v214
      %v283 = vunpack.c.l.b16 %v215
      %v284 = vunpack.c.l.b16 %v216
      %v285 = vunpack.c.l.b16 %v217
      %v286 = vunpack.c.l.b16 %v218
      %v287 = vunpack.c.l.b16 %v219
      %v288 = vunpack.c.l.b16 %v220
      %v289 = vunpack.c.l.b16 %v221
      %v290 = vunpack.c.l.b16 %v222
      %v291 = vunpack.c.l.b16 %v223
      %v292 = vunpack.c.l.b16 %v224
      %v293 = vunpack.c.l.b16 %v225
      %v294 = vunpack.c.l.b16 %v226
      %v295 = vunpack.c.l.b16 %v227
      %v296 = vunpack.c.l.b16 %v228
      %v297 = vunpack.c.l.b16 %v229
      %v298 = vunpack.c.l.b16 %v230
      %v299 = vunpack.c.l.b16 %v231
      %v300 = vunpack.c.l.b16 %v232
      %v301 = vunpack.c.l.b16 %v233
      %v302 = vpack.c.b16 %v271, %v270
      %v303 = vpack.c.b16 %v273, %v272
      %v304 = vpack.c.b16 %v275, %v274
      %v305 = vpack.c.b16 %v277, %v276
      %v306 = vpack.c.b16 %v279, %v278
      %v307 = vpack.c.b16 %v281, %v280
      %v308 = vpack.c.b16 %v283, %v282
      %v309 = vpack.c.b16 %v285, %v284
      %v310 = vpack.c.b16 %v287, %v286
      %v311 = vpack.c.b16 %v289, %v288
      %v312 = vpack.c.b16 %v291, %v290
      %v313 = vpack.c.b16 %v293, %v292
      %v314 = vpack.c.b16 %v295, %v294
      %v315 = vpack.c.b16 %v297, %v296
      %v316 = vpack.c.b16 %v299, %v298
      %v317 = vpack.c.b16 %v301, %v300
      %v322 = vunpack.c.l.b16 %v234
      %v323 = vunpack.c.l.b16 %v235
      %v324 = vunpack.c.l.b16 %v236
      %v325 = vunpack.c.l.b16 %v237
      %v326 = vpack.c.b16 %v323, %v322
      %v327 = vpack.c.b16 %v325, %v324
      %vm330 = vcmask 261120
      %v332 = vsel %vm330, %v302, 0
      %v335 = vsel %vm330, %v303, 0
      %v338 = vsel %vm330, %v304, 0
      %v341 = vsel %vm330, %v305, 0
      %v344 = vsel %vm330, %v306, 0
      %v347 = vsel %vm330, %v307, 0
      %v350 = vsel %vm330, %v308, 0
      %v353 = vsel %vm330, %v309, 0
      %v356 = vsel %vm330, %v310, 0
      %v359 = vsel %vm330, %v311, 0
      %v362 = vsel %vm330, %v312, 0
      %v365 = vsel %vm330, %v313, 0
      %v368 = vsel %vm330, %v314, 0
      %v371 = vsel %vm330, %v315, 0
      %v374 = vsel %vm330, %v316, 0
      %v377 = vsel %vm330, %v317, 0
      %379 = vmatprep.subr.bf16.mxu0 0
      %380 = vmatpush1.bf16.msra.mxu0 0
      %381 = vmatprep.subr.bf16.mxu0 0
      %382 = vmatpush1.bf16.msra.mxu0 0
      %383 = vmatprep.subr.bf16.mxu0 0
      %384 = vmatpush1.bf16.msra.mxu0 0
      %385 = vmatprep.subr.bf16.mxu0 0
      %386 = vmatpush1.bf16.msra.mxu0 0
      %387 = vmatprep.subr.bf16.mxu0 0
      %388 = vmatpush1.bf16.msra.mxu0 0
      %389 = vmatprep.subr.bf16.mxu0 0
      %390 = vmatpush1.bf16.msra.mxu0 0
      %391 = vmatprep.subr.bf16.mxu0 0
      %392 = vmatpush1.bf16.msra.mxu0 %v327
      %393 = vmatprep.subr.bf16.mxu0 0
      %394 = vmatpush1.bf16.msra.mxu0 %v326
      %395 = vmatprep.subr.bf16.mxu0 0
      %396 = vmatpush2.bf16.msra.mxu0 0
      %397 = vmatprep.subr.bf16.mxu0 0
      %398 = vmatpush2.bf16.msra.mxu0 0
      %399 = vmatprep.subr.bf16.mxu0 0
      %400 = vmatpush2.bf16.msra.mxu0 0
      %401 = vmatprep.subr.bf16.mxu0 0
      %402 = vmatpush2.bf16.msra.mxu0 0
      %403 = vmatprep.subr.bf16.mxu0 0
      %404 = vmatpush2.bf16.msra.mxu0 0
      %405 = vmatprep.subr.bf16.mxu0 0
      %406 = vmatpush2.bf16.msra.mxu0 0
      %407 = vmatprep.subr.bf16.mxu0 0
      %408 = vmatpush2.bf16.msra.mxu0 0
      %409 = vmatprep.subr.bf16.mxu0 0
      %410 = vmatpush2.bf16.msra.mxu0 0
      %411 = vmatprep.mubr.bf16.mxu0 0
      %412 = vmatmul.mubr.bf16.gmra.mxu0 %v332
      %v413 = vpop.f32.mrf.mxu0
      %v414 = vadd.f32 0.0, %v413
      %v415 = vpop.f32.mrf.mxu0
      %v416 = vpop.f32.mrf.mxu0
      %v417 = vadd.f32 0.0, %v416
      %v418 = vpop.f32.mrf.mxu0
      %419 = vmatprep.mubr.bf16.mxu0 0
      %420 = vmatmul.mubr.bf16.gmra.mxu0 %v335
      %v421 = vpop.f32.mrf.mxu0
      %v422 = vadd.f32 0.0, %v421
      %v423 = vpop.f32.mrf.mxu0
      %v424 = vpop.f32.mrf.mxu0
      %v425 = vadd.f32 0.0, %v424
      %v426 = vpop.f32.mrf.mxu0
      %427 = vmatprep.mubr.bf16.mxu0 0
      %428 = vmatmul.mubr.bf16.gmra.mxu0 %v338
      %v429 = vpop.f32.mrf.mxu0
      %v430 = vadd.f32 0.0, %v429
      %v431 = vpop.f32.mrf.mxu0
      %v432 = vpop.f32.mrf.mxu0
      %v433 = vadd.f32 0.0, %v432
      %v434 = vpop.f32.mrf.mxu0
      %435 = vmatprep.mubr.bf16.mxu0 0
      %436 = vmatmul.mubr.bf16.gmra.mxu0 %v341
      %v437 = vpop.f32.mrf.mxu0
      %v438 = vadd.f32 0.0, %v437
      %v439 = vpop.f32.mrf.mxu0
      %v440 = vpop.f32.mrf.mxu0
      %v441 = vadd.f32 0.0, %v440
      %v442 = vpop.f32.mrf.mxu0
      %443 = vmatprep.mubr.bf16.mxu0 0
      %444 = vmatmul.mubr.bf16.gmra.mxu0 %v344
      %v445 = vpop.f32.mrf.mxu0
      %v446 = vadd.f32 0.0, %v445
      %v447 = vpop.f32.mrf.mxu0
      %v448 = vpop.f32.mrf.mxu0
      %v449 = vadd.f32 0.0, %v448
      %v450 = vpop.f32.mrf.mxu0
      %451 = vmatprep.mubr.bf16.mxu0 0
      %452 = vmatmul.mubr.bf16.gmra.mxu0 %v347
      %v453 = vpop.f32.mrf.mxu0
      %v454 = vadd.f32 0.0, %v453
      %v455 = vpop.f32.mrf.mxu0
      %v456 = vpop.f32.mrf.mxu0
      %v457 = vadd.f32 0.0, %v456
      %v458 = vpop.f32.mrf.mxu0
      %459 = vmatprep.mubr.bf16.mxu0 0
      %460 = vmatmul.mubr.bf16.gmra.mxu0 %v350
      %v461 = vpop.f32.mrf.mxu0
      %v462 = vadd.f32 0.0, %v461
      %v463 = vpop.f32.mrf.mxu0
      %v464 = vpop.f32.mrf.mxu0
      %v465 = vadd.f32 0.0, %v464
      %v466 = vpop.f32.mrf.mxu0
      %467 = vmatprep.mubr.bf16.mxu0 0
      %468 = vmatmul.mubr.bf16.gmra.mxu0 %v353
      %v469 = vpop.f32.mrf.mxu0
      %v470 = vadd.f32 0.0, %v469
      %v471 = vpop.f32.mrf.mxu0
      %v472 = vpop.f32.mrf.mxu0
      %v473 = vadd.f32 0.0, %v472
      %v474 = vpop.f32.mrf.mxu0
      %475 = vmatprep.mubr.bf16.mxu0 0
      %476 = vmatmul.mubr.bf16.gmra.mxu0 %v356
      %v477 = vpop.f32.mrf.mxu0
      %v478 = vadd.f32 0.0, %v477
      %v479 = vpop.f32.mrf.mxu0
      %v480 = vpop.f32.mrf.mxu0
      %v481 = vadd.f32 0.0, %v480
      %v482 = vpop.f32.mrf.mxu0
      %483 = vmatprep.mubr.bf16.mxu0 0
      %484 = vmatmul.mubr.bf16.gmra.mxu0 %v359
      %v485 = vpop.f32.mrf.mxu0
      %v486 = vadd.f32 0.0, %v485
      %v487 = vpop.f32.mrf.mxu0
      %v488 = vpop.f32.mrf.mxu0
      %v489 = vadd.f32 0.0, %v488
      %v490 = vpop.f32.mrf.mxu0
      %491 = vmatprep.mubr.bf16.mxu0 0
      %492 = vmatmul.mubr.bf16.gmra.mxu0 %v362
      %v493 = vpop.f32.mrf.mxu0
      %v494 = vadd.f32 0.0, %v493
      %v495 = vpop.f32.mrf.mxu0
      %v496 = vpop.f32.mrf.mxu0
      %v497 = vadd.f32 0.0, %v496
      %v498 = vpop.f32.mrf.mxu0
      %499 = vmatprep.mubr.bf16.mxu0 0
      %500 = vmatmul.mubr.bf16.gmra.mxu0 %v365
      %v501 = vpop.f32.mrf.mxu0
      %v502 = vadd.f32 0.0, %v501
      %v503 = vpop.f32.mrf.mxu0
      %v504 = vpop.f32.mrf.mxu0
      %v505 = vadd.f32 0.0, %v504
      %v506 = vpop.f32.mrf.mxu0
      %507 = vmatprep.mubr.bf16.mxu0 0
      %508 = vmatmul.mubr.bf16.gmra.mxu0 %v368
      %v509 = vpop.f32.mrf.mxu0
      %v510 = vadd.f32 0.0, %v509
      %v511 = vpop.f32.mrf.mxu0
      %v512 = vpop.f32.mrf.mxu0
      %v513 = vadd.f32 0.0, %v512
      %v514 = vpop.f32.mrf.mxu0
      %515 = vmatprep.mubr.bf16.mxu0 0
      %516 = vmatmul.mubr.bf16.gmra.mxu0 %v371
      %v517 = vpop.f32.mrf.mxu0
      %v518 = vadd.f32 0.0, %v517
      %v519 = vpop.f32.mrf.mxu0
      %v520 = vpop.f32.mrf.mxu0
      %v521 = vadd.f32 0.0, %v520
      %v522 = vpop.f32.mrf.mxu0
      %523 = vmatprep.mubr.bf16.mxu0 0
      %524 = vmatmul.mubr.bf16.gmra.mxu0 %v374
      %v525 = vpop.f32.mrf.mxu0
      %v526 = vadd.f32 0.0, %v525
      %v527 = vpop.f32.mrf.mxu0
      %v528 = vpop.f32.mrf.mxu0
      %v529 = vadd.f32 0.0, %v528
      %v530 = vpop.f32.mrf.mxu0
      %531 = vmatprep.mubr.bf16.mxu0 0
      %532 = vmatmul.mubr.bf16.gmra.mxu0 %v377
      %v533 = vpop.f32.mrf.mxu0
      %v534 = vadd.f32 0.0, %v533
      %v535 = vpop.f32.mrf.mxu0
      %v536 = vpop.f32.mrf.mxu0
      %v537 = vadd.f32 0.0, %v536
      %v538 = vpop.f32.mrf.mxu0
      %539 = vdwg.mxu0
      %v540 = vld [vmem:[%s2] sm:$0x1]
      %v542 = vlaneseq
      %v543 = vshrl.u32 %v542, 7
      %v544 = vsub.s32 0, %v543
      %v545 = vrot.slane %v540, %v544
      %v547 = vmul.f32 %v414, %v545
      %v548 = vmul.f32 %v417, %v545
      %v549 = vmul.f32 %v422, %v545
      %v550 = vmul.f32 %v425, %v545
      %v551 = vmul.f32 %v430, %v545
      %v552 = vmul.f32 %v433, %v545
      %v553 = vmul.f32 %v438, %v545
      %v554 = vmul.f32 %v441, %v545
      %v555 = vmul.f32 %v446, %v545
      %v556 = vmul.f32 %v449, %v545
      %v557 = vmul.f32 %v454, %v545
      %v558 = vmul.f32 %v457, %v545
      %v559 = vmul.f32 %v462, %v545
      %v560 = vmul.f32 %v465, %v545
      %v561 = vmul.f32 %v470, %v545
      %v562 = vmul.f32 %v473, %v545
      %v563 = vmul.f32 %v478, %v545
      %v564 = vmul.f32 %v481, %v545
      %v565 = vmul.f32 %v486, %v545
      %v566 = vmul.f32 %v489, %v545
      %v567 = vmul.f32 %v494, %v545
      %v568 = vmul.f32 %v497, %v545
      %v569 = vmul.f32 %v502, %v545
      %v570 = vmul.f32 %v505, %v545
      %v571 = vmul.f32 %v510, %v545
      %v572 = vmul.f32 %v513, %v545
      %v573 = vmul.f32 %v518, %v545
      %v574 = vmul.f32 %v521, %v545
      %v575 = vmul.f32 %v526, %v545
      %v576 = vmul.f32 %v529, %v545
      %v577 = vmul.f32 %v534, %v545
      %v578 = vmul.f32 %v537, %v545
      %v579 = vld [vmem:[%s3] sm:$0x1]
      %v581 = vlaneseq
      %v582 = vshrl.u32 %v581, 7
      %v583 = vsub.s32 0, %v582
      %v584 = vrot.slane %v579, %v583
      %v586 = vadd.f32 %v547, %v584
      %v587 = vadd.f32 %v548, %v584
      %v588 = vadd.f32 %v549, %v584
      %v589 = vadd.f32 %v550, %v584
      %v590 = vadd.f32 %v551, %v584
      %v591 = vadd.f32 %v552, %v584
      %v592 = vadd.f32 %v553, %v584
      %v593 = vadd.f32 %v554, %v584
      %v594 = vadd.f32 %v555, %v584
      %v595 = vadd.f32 %v556, %v584
      %v596 = vadd.f32 %v557, %v584
      %v597 = vadd.f32 %v558, %v584
      %v598 = vadd.f32 %v559, %v584
      %v599 = vadd.f32 %v560, %v584
      %v600 = vadd.f32 %v561, %v584
      %v601 = vadd.f32 %v562, %v584
      %v602 = vadd.f32 %v563, %v584
      %v603 = vadd.f32 %v564, %v584
      %v604 = vadd.f32 %v565, %v584
      %v605 = vadd.f32 %v566, %v584
      %v606 = vadd.f32 %v567, %v584
      %v607 = vadd.f32 %v568, %v584
      %v608 = vadd.f32 %v569, %v584
      %v609 = vadd.f32 %v570, %v584
      %v610 = vadd.f32 %v571, %v584
      %v611 = vadd.f32 %v572, %v584
      %v612 = vadd.f32 %v573, %v584
      %v613 = vadd.f32 %v574, %v584
      %v614 = vadd.f32 %v575, %v584
      %v615 = vadd.f32 %v576, %v584
      %v616 = vadd.f32 %v577, %v584
      %v617 = vadd.f32 %v578, %v584
      %v618 = vmax.f32 %v586, 0.0
      %v619 = vmax.f32 %v587, 0.0
      %v620 = vmax.f32 %v588, 0.0
      %v621 = vmax.f32 %v589, 0.0
      %v622 = vmax.f32 %v590, 0.0
      %v623 = vmax.f32 %v591, 0.0
      %v624 = vmax.f32 %v592, 0.0
      %v625 = vmax.f32 %v593, 0.0
      %v626 = vmax.f32 %v594, 0.0
      %v627 = vmax.f32 %v595, 0.0
      %v628 = vmax.f32 %v596, 0.0
      %v629 = vmax.f32 %v597, 0.0
      %v630 = vmax.f32 %v598, 0.0
      %v631 = vmax.f32 %v599, 0.0
      %v632 = vmax.f32 %v600, 0.0
      %v633 = vmax.f32 %v601, 0.0
      %v634 = vmax.f32 %v602, 0.0
      %v635 = vmax.f32 %v603, 0.0
      %v636 = vmax.f32 %v604, 0.0
      %v637 = vmax.f32 %v605, 0.0
      %v638 = vmax.f32 %v606, 0.0
      %v639 = vmax.f32 %v607, 0.0
      %v640 = vmax.f32 %v608, 0.0
      %v641 = vmax.f32 %v609, 0.0
      %v642 = vmax.f32 %v610, 0.0
      %v643 = vmax.f32 %v611, 0.0
      %v644 = vmax.f32 %v612, 0.0
      %v645 = vmax.f32 %v613, 0.0
      %v646 = vmax.f32 %v614, 0.0
      %v647 = vmax.f32 %v615, 0.0
      %v648 = vmax.f32 %v616, 0.0
      %v649 = vmax.f32 %v617, 0.0
      %v650 = vpack.c.bf16 %v619, %v618
      %v651 = vpack.c.bf16 %v621, %v620
      %v652 = vpack.c.bf16 %v623, %v622
      %v653 = vpack.c.bf16 %v625, %v624
      %v654 = vpack.c.bf16 %v627, %v626
      %v655 = vpack.c.bf16 %v629, %v628
      %v656 = vpack.c.bf16 %v631, %v630
      %v657 = vpack.c.bf16 %v633, %v632
      %v658 = vpack.c.bf16 %v635, %v634
      %v659 = vpack.c.bf16 %v637, %v636
      %v660 = vpack.c.bf16 %v639, %v638
      %v661 = vpack.c.bf16 %v641, %v640
      %v662 = vpack.c.bf16 %v643, %v642
      %v663 = vpack.c.bf16 %v645, %v644
      %v664 = vpack.c.bf16 %v647, %v646
      %v665 = vpack.c.bf16 %v649, %v648
      %v682 = vunpack.c.l.b16 %v650
      %v683 = vunpack.c.h.b16 %v650
      %v684 = vunpack.c.l.b16 %v651
      %v685 = vunpack.c.h.b16 %v651
      %v686 = vunpack.c.l.b16 %v652
      %v687 = vunpack.c.h.b16 %v652
      %v688 = vunpack.c.l.b16 %v653
      %v689 = vunpack.c.h.b16 %v653
      %v690 = vunpack.c.l.b16 %v654
      %v691 = vunpack.c.h.b16 %v654
      %v692 = vunpack.c.l.b16 %v655
      %v693 = vunpack.c.h.b16 %v655
      %v694 = vunpack.c.l.b16 %v656
      %v695 = vunpack.c.h.b16 %v656
      %v696 = vunpack.c.l.b16 %v657
      %v697 = vunpack.c.h.b16 %v657
      %v698 = vunpack.c.l.b16 %v658
      %v699 = vunpack.c.h.b16 %v658
      %v700 = vunpack.c.l.b16 %v659
      %v701 = vunpack.c.h.b16 %v659
      %v702 = vunpack.c.l.b16 %v660
      %v703 = vunpack.c.h.b16 %v660
      %v704 = vunpack.c.l.b16 %v661
      %v705 = vunpack.c.h.b16 %v661
      %v706 = vunpack.c.l.b16 %v662
      %v707 = vunpack.c.h.b16 %v662
      %v708 = vunpack.c.l.b16 %v663
      %v709 = vunpack.c.h.b16 %v663
      %v710 = vunpack.c.l.b16 %v664
      %v711 = vunpack.c.h.b16 %v664
      %v712 = vunpack.c.l.b16 %v665
      %v713 = vunpack.c.h.b16 %v665
      %v714 = vpack.c.b16 %v682, %v682
      %v715 = vpack.c.b16 %v683, %v683
      %v716 = vpack.c.b16 %v684, %v684
      %v717 = vpack.c.b16 %v685, %v685
      %v718 = vpack.c.b16 %v686, %v686
      %v719 = vpack.c.b16 %v687, %v687
      %v720 = vpack.c.b16 %v688, %v688
      %v721 = vpack.c.b16 %v689, %v689
      %v722 = vpack.c.b16 %v690, %v690
      %v723 = vpack.c.b16 %v691, %v691
      %v724 = vpack.c.b16 %v692, %v692
      %v725 = vpack.c.b16 %v693, %v693
      %v726 = vpack.c.b16 %v694, %v694
      %v727 = vpack.c.b16 %v695, %v695
      %v728 = vpack.c.b16 %v696, %v696
      %v729 = vpack.c.b16 %v697, %v697
      %v730 = vpack.c.b16 %v698, %v698
      %v731 = vpack.c.b16 %v699, %v699
      %v732 = vpack.c.b16 %v700, %v700
      %v733 = vpack.c.b16 %v701, %v701
      %v734 = vpack.c.b16 %v702, %v702
      %v735 = vpack.c.b16 %v703, %v703
      %v736 = vpack.c.b16 %v704, %v704
      %v737 = vpack.c.b16 %v705, %v705
      %v738 = vpack.c.b16 %v706, %v706
      %v739 = vpack.c.b16 %v707, %v707
      %v740 = vpack.c.b16 %v708, %v708
      %v741 = vpack.c.b16 %v709, %v709
      %v742 = vpack.c.b16 %v710, %v710
      %v743 = vpack.c.b16 %v711, %v711
      %v744 = vpack.c.b16 %v712, %v712
      %v745 = vpack.c.b16 %v713, %v713
      %vm778 = vcmask 257024
      %779 = vst.msk [vmem:[%s199] sm:$0xf] %vm778, %v714
      %780 = vst.msk [vmem:[%s199 + $0x4] sm:$0xf] %vm778, %v715
      %781 = vst.msk [vmem:[%s199 + $0x8] sm:$0xf] %vm778, %v716
      %782 = vst.msk [vmem:[%s199 + $0xc] sm:$0xf] %vm778, %v717
      %783 = vst.msk [vmem:[%s199 + $0x10] sm:$0xf] %vm778, %v718
      %784 = vst.msk [vmem:[%s199 + $0x14] sm:$0xf] %vm778, %v719
      %785 = vst.msk [vmem:[%s199 + $0x18] sm:$0xf] %vm778, %v720
      %786 = vst.msk [vmem:[%s199 + $0x1c] sm:$0xf] %vm778, %v721
      %787 = vst.msk [vmem:[%s199 + $0x20] sm:$0xf] %vm778, %v722
      %788 = vst.msk [vmem:[%s199 + $0x24] sm:$0xf] %vm778, %v723
      %789 = vst.msk [vmem:[%s199 + $0x28] sm:$0xf] %vm778, %v724
      %790 = vst.msk [vmem:[%s199 + $0x2c] sm:$0xf] %vm778, %v725
      %791 = vst.msk [vmem:[%s199 + $0x30] sm:$0xf] %vm778, %v726
      %792 = vst.msk [vmem:[%s199 + $0x34] sm:$0xf] %vm778, %v727
      %793 = vst.msk [vmem:[%s199 + $0x38] sm:$0xf] %vm778, %v728
      %794 = vst.msk [vmem:[%s199 + $0x3c] sm:$0xf] %vm778, %v729
      %795 = vst.msk [vmem:[%s199 + $0x40] sm:$0xf] %vm778, %v730
      %796 = vst.msk [vmem:[%s199 + $0x44] sm:$0xf] %vm778, %v731
      %797 = vst.msk [vmem:[%s199 + $0x48] sm:$0xf] %vm778, %v732
      %798 = vst.msk [vmem:[%s199 + $0x4c] sm:$0xf] %vm778, %v733
      %799 = vst.msk [vmem:[%s199 + $0x50] sm:$0xf] %vm778, %v734
      %800 = vst.msk [vmem:[%s199 + $0x54] sm:$0xf] %vm778, %v735
      %801 = vst.msk [vmem:[%s199 + $0x58] sm:$0xf] %vm778, %v736
      %802 = vst.msk [vmem:[%s199 + $0x5c] sm:$0xf] %vm778, %v737
      %803 = vst.msk [vmem:[%s199 + $0x60] sm:$0xf] %vm778, %v738
      %804 = vst.msk [vmem:[%s199 + $0x64] sm:$0xf] %vm778, %v739
      %805 = vst.msk [vmem:[%s199 + $0x68] sm:$0xf] %vm778, %v740
      %806 = vst.msk [vmem:[%s199 + $0x6c] sm:$0xf] %vm778, %v741
      %807 = vst.msk [vmem:[%s199 + $0x70] sm:$0xf] %vm778, %v742
      %808 = vst.msk [vmem:[%s199 + $0x74] sm:$0xf] %vm778, %v743
      %809 = vst.msk [vmem:[%s199 + $0x78] sm:$0xf] %vm778, %v744
      %810 = vst.msk [vmem:[%s199 + $0x7c] sm:$0xf] %vm778, %v745
      %s811 = smul.u32 32, %s15
      %p812 = scmp.lt.s32.totalorder %s811, 63
      %s813 = scalar_select %p812, %s811, 63
      %s814 = smul.addr %s813, 4
      %s815 = scalar_lea.vmem %s4, %s814
      // Predicated region
      $region37: #{_lambda_.8} parent=35 // pred_check
        %p816 = pneg %p122
      $region38: #{_lambda_.8} parent=35 // pred_check_branch
        %818 = sbr.rel (%p816) target = $region40
      $region39: #{_lambda_.8} parent=35 // pred_region
        %s819 = smul.u32 32, %s15
      $region40: #{_lambda_.8} parent=35 // pred_fallthru
        _
    $region36: #{_lambda_.8} parent=5 // pred_fallthru
      _
    %p820 = scmp.le.s32.totalorder 2, %s10
    // Predicated region
    $region41: #{_lambda_.8} parent=5 // pred_check
      %p821 = pneg %p820
    $region42: #{_lambda_.8} parent=5 // pred_check_branch
      %823 = sbr.rel (%p821) target = $region44
    $region43: #{_lambda_.8} parent=5 // pred_region
      %s824 = ssub.s32 %s10, 2
      // Predicated region
      $region45: #{_lambda_.8} parent=43 // pred_check
        %p825 = pneg %p128
      $region46: #{_lambda_.8} parent=43 // pred_check_branch
        %827 = sbr.rel (%p825) target = $region48
      $region47: #{_lambda_.8} parent=43 // pred_region
        %s828 = smul.u32 32, %s16
        %p829 = scmp.lt.s32.totalorder %s828, 63
        %s830 = scalar_select %p829, %s828, 63
        %s831 = smul.addr %s830, 4
        %s832 = scalar_lea.vmem %s4, %s831
      $region48: #{_lambda_.8} parent=43 // pred_fallthru
        _
    $region44: #{_lambda_.8} parent=5 // pred_fallthru
      _
  $region6: #{_lambda_.8} parent=0 // loop_footer
    %s14 = sadd.s32 1, %s10
  $region7: #{_lambda_.8} parent=0 // loop_footer_branch
    %9 = sbr.rel target = $region3
  $region8: #{_lambda_.8} parent=0 // loop_exit
    _

// kernel: _lambda_.9
$region0: #{_lambda_.9}
  #allocation0 [shape = 'u32[]', space=smem, size = 0x4, offset = 0x4, fixed_abs, tag = 'smem constant byte address 0x4 - core index']
  #allocation1 [shape = 'u32[144,128]{1,0:T(1,128)}', space=vmem, size = 0x12000, scoped, tag = 'internal scratch']
  %s0 = inlined_call_operand.vmem [shape: bf16[512,288], index: 0, kind: input, shape index: {}]
  %s1 = inlined_call_operand.vmem [shape: bf16[288,32], index: 1, kind: input, shape index: {}]
  %s2 = inlined_call_operand.vmem [shape: f32[1,32], index: 2, kind: input, shape index: {}]
  %s3 = inlined_call_operand.vmem [shape: f32[1,32], index: 3, kind: input, shape index: {}]
  %s4 = inlined_call_operand.vmem [shape: bf16[512,32], index: 4, kind: output, shape index: {}]
  %s5 = sld [smem:[#allocation0]]
  $region49: #{_lambda_.9} parent=0
    _
  %s7 = ssub.s32 1, %s5
  %s8 = scalar_select 0, %s7, %s5
  loop: start=0, step=1, limit=4
  $region2: #{_lambda_.9} parent=0 // loop_pre_header
    _
  $region3: #{_lambda_.9} parent=0 // loop_header
    %s10 = sphi 0, %s14
    %p11 = scmp.ge.s32.totalorder %s10, 4
    %s20 = sphi 0, %s22
    %s23 = sphi 0, %s20
    %s24 = sphi 0, %s23
    %s40 = sphi 0, %s24
    %s44 = sphi 0, %s44
    %s46 = sphi 0, %s44
    %s47 = sphi 0, %s46
    %s61 = sphi 0, %s47
    %s65 = sphi 0, %s65
    %s67 = sphi 0, %s65
    %s68 = sphi 0, %s67
    %s82 = sphi 0, %s68
    %s86 = sphi 0, %s86
    %s88 = sphi 0, %s86
    %s89 = sphi 0, %s88
    %s103 = sphi 0, %s89
    %s109 = sphi 0, %s111
    %s112 = sphi 0, %s109
    %s113 = sphi 0, %s112
    %s129 = sphi 0, %s113
  $region4: #{_lambda_.9} parent=0 // loop_header_branch
    %13 = sbr.rel (%p11) target = $region8
  $region5: #{_lambda_.9} parent=0 // loop_body
    %s15 = ssub.s32 %s10, 1
    %s16 = ssub.s32 %s10, 2
    %s17 = sadd.s32 %s10, 1
    %s18 = ssub.s32 %s10, %s17
    %p19 = scmp.eq.s32.totalorder %s18, 0
    %s21 = sadd.s32 %s20, 1
    %s22 = scalar_select %p19, %s20, %s21
    %p25 = pneg %p19
    %p26 = scmp.eq.s32.totalorder %s10, 1
    %p27 = por %p25, %p26
    %p28 = scmp.ne.s32.totalorder %s20, %s23
    %p29 = scmp.eq.s32.totalorder %s10, 0
    %p30 = por %p28, %p29
    %p31 = scmp.ne.s32.totalorder %s20, %s23
    %p32 = scmp.eq.s32.totalorder %s15, 1
    %p33 = por %p31, %p32
    %p34 = scmp.ne.s32.totalorder %s23, %s24
    %p35 = scmp.eq.s32.totalorder %s15, 0
    %p36 = por %p34, %p35
    %p37 = scmp.ne.s32.totalorder %s23, %s24
    %p38 = scmp.eq.s32.totalorder %s16, 1
    %p39 = por %p37, %p38
    %p41 = scmp.ne.s32.totalorder %s24, %s40
    %p42 = scmp.eq.s32.totalorder %s16, 0
    %p43 = por %p41, %p42
    %s45 = sadd.s32 %s44, 1
    %p48 = scmp.eq.s32.totalorder %s10, 1
    %p49 = scmp.ne.s32.totalorder %s44, %s46
    %p50 = scmp.eq.s32.totalorder %s10, 0
    %p51 = por %p49, %p50
    %p52 = scmp.ne.s32.totalorder %s44, %s46
    %p53 = scmp.eq.s32.totalorder %s15, 1
    %p54 = por %p52, %p53
    %p55 = scmp.ne.s32.totalorder %s46, %s47
    %p56 = scmp.eq.s32.totalorder %s15, 0
    %p57 = por %p55, %p56
    %p58 = scmp.ne.s32.totalorder %s46, %s47
    %p59 = scmp.eq.s32.totalorder %s16, 1
    %p60 = por %p58, %p59
    %p62 = scmp.ne.s32.totalorder %s47, %s61
    %p63 = scmp.eq.s32.totalorder %s16, 0
    %p64 = por %p62, %p63
    %s66 = sadd.s32 %s65, 1
    %p69 = scmp.eq.s32.totalorder %s10, 1
    %p70 = scmp.ne.s32.totalorder %s65, %s67
    %p71 = scmp.eq.s32.totalorder %s10, 0
    %p72 = por %p70, %p71
    %p73 = scmp.ne.s32.totalorder %s65, %s67
    %p74 = scmp.eq.s32.totalorder %s15, 1
    %p75 = por %p73, %p74
    %p76 = scmp.ne.s32.totalorder %s67, %s68
    %p77 = scmp.eq.s32.totalorder %s15, 0
    %p78 = por %p76, %p77
    %p79 = scmp.ne.s32.totalorder %s67, %s68
    %p80 = scmp.eq.s32.totalorder %s16, 1
    %p81 = por %p79, %p80
    %p83 = scmp.ne.s32.totalorder %s68, %s82
    %p84 = scmp.eq.s32.totalorder %s16, 0
    %p85 = por %p83, %p84
    %s87 = sadd.s32 %s86, 1
    %p90 = scmp.eq.s32.totalorder %s10, 1
    %p91 = scmp.ne.s32.totalorder %s86, %s88
    %p92 = scmp.eq.s32.totalorder %s10, 0
    %p93 = por %p91, %p92
    %p94 = scmp.ne.s32.totalorder %s86, %s88
    %p95 = scmp.eq.s32.totalorder %s15, 1
    %p96 = por %p94, %p95
    %p97 = scmp.ne.s32.totalorder %s88, %s89
    %p98 = scmp.eq.s32.totalorder %s15, 0
    %p99 = por %p97, %p98
    %p100 = scmp.ne.s32.totalorder %s88, %s89
    %p101 = scmp.eq.s32.totalorder %s16, 1
    %p102 = por %p100, %p101
    %p104 = scmp.ne.s32.totalorder %s89, %s103
    %p105 = scmp.eq.s32.totalorder %s16, 0
    %p106 = por %p104, %p105
    %s107 = ssub.s32 %s10, %s17
    %p108 = scmp.eq.s32.totalorder %s107, 0
    %s110 = sadd.s32 %s109, 1
    %s111 = scalar_select %p108, %s109, %s110
    %p114 = pneg %p108
    %p115 = scmp.eq.s32.totalorder %s10, 1
    %p116 = por %p114, %p115
    %p117 = scmp.ne.s32.totalorder %s109, %s112
    %p118 = scmp.eq.s32.totalorder %s10, 0
    %p119 = por %p117, %p118
    %p120 = scmp.ne.s32.totalorder %s109, %s112
    %p121 = scmp.eq.s32.totalorder %s15, 1
    %p122 = por %p120, %p121
    %p123 = scmp.ne.s32.totalorder %s112, %s113
    %p124 = scmp.eq.s32.totalorder %s15, 0
    %p125 = por %p123, %p124
    %p126 = scmp.ne.s32.totalorder %s112, %s113
    %p127 = scmp.eq.s32.totalorder %s16, 1
    %p128 = por %p126, %p127
    %p130 = scmp.ne.s32.totalorder %s113, %s129
    %p131 = scmp.eq.s32.totalorder %s16, 0
    %p132 = por %p130, %p131
    %p133 = scmp.le.s32.totalorder 1, %s10
    %p134 = scmp.lt.s32.totalorder %s10, 3
    %p135 = pnand %p133, %p134
    %p136 = pneg %p135
    // Predicated region
    $region9: #{_lambda_.9} parent=5 // pred_check
      _
    $region10: #{_lambda_.9} parent=5 // pred_check_branch
      %138 = sbr.rel (%p135) target = $region12
    $region11: #{_lambda_.9} parent=5 // pred_region
      %s139 = ssub.s32 %s10, 1
      // Predicated region
      $region13: #{_lambda_.9} parent=11 // pred_check
        %p140 = pneg %p57
      $region14: #{_lambda_.9} parent=11 // pred_check_branch
        %142 = sbr.rel (%p140) target = $region16
      $region15: #{_lambda_.9} parent=11 // pred_region
        _
      $region16: #{_lambda_.9} parent=11 // pred_fallthru
        _
      // Predicated region
      $region17: #{_lambda_.9} parent=11 // pred_check
        %p143 = pneg %p78
      $region18: #{_lambda_.9} parent=11 // pred_check_branch
        %145 = sbr.rel (%p143) target = $region20
      $region19: #{_lambda_.9} parent=11 // pred_region
        _
      $region20: #{_lambda_.9} parent=11 // pred_fallthru
        _
      // Predicated region
      $region21: #{_lambda_.9} parent=11 // pred_check
        %p146 = pneg %p99
      $region22: #{_lambda_.9} parent=11 // pred_check_branch
        %148 = sbr.rel (%p146) target = $region24
      $region23: #{_lambda_.9} parent=11 // pred_region
        _
      $region24: #{_lambda_.9} parent=11 // pred_fallthru
        _
    $region12: #{_lambda_.9} parent=5 // pred_fallthru
      _
    %p149 = scmp.lt.s32.totalorder %s10, 2
    // Predicated region
    $region25: #{_lambda_.9} parent=5 // pred_check
      %p150 = pneg %p149
    $region26: #{_lambda_.9} parent=5 // pred_check_branch
      %152 = sbr.rel (%p150) target = $region28
    $region27: #{_lambda_.9} parent=5 // pred_region
      // Predicated region
      $region29: #{_lambda_.9} parent=27 // pred_check
        %p153 = pneg %p30
      $region30: #{_lambda_.9} parent=27 // pred_check_branch
        %155 = sbr.rel (%p153) target = $region32
      $region31: #{_lambda_.9} parent=27 // pred_region
        %s156 = smul.u32 32, %s10
        %p157 = scmp.lt.s32.totalorder %s156, 63
        %s158 = scalar_select %p157, %s156, 63
        %s159 = smul.addr %s158, 3
        %s160 = smul.addr %s159, 4
        %s161 = scalar_lea.vmem %s0, %s160
        %s162 = smul.u32 32, %s10
      $region32: #{_lambda_.9} parent=27 // pred_fallthru
        _
    $region28: #{_lambda_.9} parent=5 // pred_fallthru
      _
    %p163 = scmp.le.s32.totalorder 1, %s10
    %p164 = scmp.lt.s32.totalorder %s10, 3
    %p165 = pnand %p163, %p164
    %p166 = pneg %p165
    // Predicated region
    $region33: #{_lambda_.9} parent=5 // pred_check
      _
    $region34: #{_lambda_.9} parent=5 // pred_check_branch
      %168 = sbr.rel (%p165) target = $region36
    $region35: #{_lambda_.9} parent=5 // pred_region
      %s169 = ssub.s32 %s10, 1
      %s170 = smul.u32 32, %s15
      %p171 = scmp.lt.s32.totalorder %s170, 63
      %s172 = scalar_select %p171, %s170, 63
      %s173 = smul.addr %s172, 3
      %s174 = smul.addr %s173, 4
      %s175 = scalar_lea.vmem %s0, %s174
      %p176 = pneg %p36
      %p177 = pneg %p33
      %p178 = pneg %p57
      %p179 = pneg %p54
      %p180 = pneg %p78
      %p181 = pneg %p75
      %p182 = pneg %p99
      %p183 = pneg %p96
      %p184 = pneg %p125
      %p185 = pneg %p122
      %s186 = smul.u32 32, %s15
      %p187 = scmp.lt.s32.totalorder %s186, 63
      %s188 = scalar_select %p187, %s186, 63
      %s189 = smul.addr %s188, 4
      %s190 = scalar_lea.vmem %s4, %s189
      %s191 = smul.u32 32, %s15
      %p192 = scmp.lt.s32.totalorder %s191, 63
      %s193 = scalar_select %p192, %s191, 63
      %s194 = smul.addr %s193, 3
      %s195 = smul.addr %s194, 4
      %s196 = scalar_lea.vmem %s0, %s195
      %s197 = smul.u32 32, %s15
      %s198 = smul.u32 32, %s15
      %p199 = scmp.lt.s32.totalorder %s198, 63
      %s200 = scalar_select %p199, %s198, 63
      %s201 = smul.addr %s200, 4
      %s202 = scalar_lea.vmem %s4, %s201
      %s203 = smul.u32 32, %s15
      %v205 = vld [vmem:[%s196] sm:$0xff]
      %v206 = vld [vmem:[%s196 + $0x8] sm:$0xf]
      %v207 = vld [vmem:[%s196 + $0xc] sm:$0xff]
      %v208 = vld [vmem:[%s196 + $0x14] sm:$0xf]
      %v209 = vld [vmem:[%s196 + $0x18] sm:$0xff]
      %v210 = vld [vmem:[%s196 + $0x20] sm:$0xf]
      %v211 = vld [vmem:[%s196 + $0x24] sm:$0xff]
      %v212 = vld [vmem:[%s196 + $0x2c] sm:$0xf]
      %v213 = vld [vmem:[%s196 + $0x30] sm:$0xff]
      %v214 = vld [vmem:[%s196 + $0x38] sm:$0xf]
      %v215 = vld [vmem:[%s196 + $0x3c] sm:$0xff]
      %v216 = vld [vmem:[%s196 + $0x44] sm:$0xf]
      %v217 = vld [vmem:[%s196 + $0x48] sm:$0xff]
      %v218 = vld [vmem:[%s196 + $0x50] sm:$0xf]
      %v219 = vld [vmem:[%s196 + $0x54] sm:$0xff]
      %v220 = vld [vmem:[%s196 + $0x5c] sm:$0xf]
      %v221 = vld [vmem:[%s196 + $0x60] sm:$0xff]
      %v222 = vld [vmem:[%s196 + $0x68] sm:$0xf]
      %v223 = vld [vmem:[%s196 + $0x6c] sm:$0xff]
      %v224 = vld [vmem:[%s196 + $0x74] sm:$0xf]
      %v225 = vld [vmem:[%s196 + $0x78] sm:$0xff]
      %v226 = vld [vmem:[%s196 + $0x80] sm:$0xf]
      %v227 = vld [vmem:[%s196 + $0x84] sm:$0xff]
      %v228 = vld [vmem:[%s196 + $0x8c] sm:$0xf]
      %v229 = vld [vmem:[%s196 + $0x90] sm:$0xff]
      %v230 = vld [vmem:[%s196 + $0x98] sm:$0xf]
      %v231 = vld [vmem:[%s196 + $0x9c] sm:$0xff]
      %v232 = vld [vmem:[%s196 + $0xa4] sm:$0xf]
      %v233 = vld [vmem:[%s196 + $0xa8] sm:$0xff]
      %v234 = vld [vmem:[%s196 + $0xb0] sm:$0xf]
      %v235 = vld [vmem:[%s196 + $0xb4] sm:$0xff]
      %v236 = vld [vmem:[%s196 + $0xbc] sm:$0xf]
      %v237 = vld [vmem:[%s196 + $0xc0] sm:$0xff]
      %v238 = vld [vmem:[%s196 + $0xc8] sm:$0xf]
      %v239 = vld [vmem:[%s196 + $0xcc] sm:$0xff]
      %v240 = vld [vmem:[%s196 + $0xd4] sm:$0xf]
      %v241 = vld [vmem:[%s196 + $0xd8] sm:$0xff]
      %v242 = vld [vmem:[%s196 + $0xe0] sm:$0xf]
      %v243 = vld [vmem:[%s196 + $0xe4] sm:$0xff]
      %v244 = vld [vmem:[%s196 + $0xec] sm:$0xf]
      %v245 = vld [vmem:[%s196 + $0xf0] sm:$0xff]
      %v246 = vld [vmem:[%s196 + $0xf8] sm:$0xf]
      %v247 = vld [vmem:[%s196 + $0xfc] sm:$0xff]
      %v248 = vld [vmem:[%s196 + $0x104] sm:$0xf]
      %v249 = vld [vmem:[%s196 + $0x108] sm:$0xff]
      %v250 = vld [vmem:[%s196 + $0x110] sm:$0xf]
      %v251 = vld [vmem:[%s196 + $0x114] sm:$0xff]
      %v252 = vld [vmem:[%s196 + $0x11c] sm:$0xf]
      %v253 = vld [vmem:[%s196 + $0x120] sm:$0xff]
      %v254 = vld [vmem:[%s196 + $0x128] sm:$0xf]
      %v255 = vld [vmem:[%s196 + $0x12c] sm:$0xff]
      %v256 = vld [vmem:[%s196 + $0x134] sm:$0xf]
      %v257 = vld [vmem:[%s196 + $0x138] sm:$0xff]
      %v258 = vld [vmem:[%s196 + $0x140] sm:$0xf]
      %v259 = vld [vmem:[%s196 + $0x144] sm:$0xff]
      %v260 = vld [vmem:[%s196 + $0x14c] sm:$0xf]
      %v261 = vld [vmem:[%s196 + $0x150] sm:$0xff]
      %v262 = vld [vmem:[%s196 + $0x158] sm:$0xf]
      %v263 = vld [vmem:[%s196 + $0x15c] sm:$0xff]
      %v264 = vld [vmem:[%s196 + $0x164] sm:$0xf]
      %v265 = vld [vmem:[%s196 + $0x168] sm:$0xff]
      %v266 = vld [vmem:[%s196 + $0x170] sm:$0xf]
      %v267 = vld [vmem:[%s196 + $0x174] sm:$0xff]
      %v268 = vld [vmem:[%s196 + $0x17c] sm:$0xf]
      %v269 = vld [vmem:[%s1] sm:$0xf]
      %v270 = vld [vmem:[%s1 + $0x4] sm:$0xf]
      %v271 = vld [vmem:[%s1 + $0x8] sm:$0xf]
      %v272 = vld [vmem:[%s1 + $0xc] sm:$0xf]
      %v273 = vld [vmem:[%s1 + $0x10] sm:$0xf]
      %v274 = vld [vmem:[%s1 + $0x14] sm:$0xf]
      %v275 = vld [vmem:[%s1 + $0x18] sm:$0xf]
      %v276 = vld [vmem:[%s1 + $0x1c] sm:$0xf]
      %v277 = vld [vmem:[%s1 + $0x20] sm:$0xf]
      %v278 = vld [vmem:[%s1 + $0x24] sm:$0xf]
      %v279 = vld [vmem:[%s1 + $0x28] sm:$0xf]
      %v280 = vld [vmem:[%s1 + $0x2c] sm:$0xf]
      %v281 = vld [vmem:[%s1 + $0x30] sm:$0xf]
      %v282 = vld [vmem:[%s1 + $0x34] sm:$0xf]
      %v283 = vld [vmem:[%s1 + $0x38] sm:$0xf]
      %v284 = vld [vmem:[%s1 + $0x3c] sm:$0xf]
      %v285 = vld [vmem:[%s1 + $0x40] sm:$0xf]
      %v286 = vld [vmem:[%s1 + $0x44] sm:$0xf]
      %v287 = vld [vmem:[%s1 + $0x48] sm:$0xf]
      %v288 = vld [vmem:[%s1 + $0x4c] sm:$0xf]
      %v289 = vld [vmem:[%s1 + $0x50] sm:$0xf]
      %v290 = vld [vmem:[%s1 + $0x54] sm:$0xf]
      %v291 = vld [vmem:[%s1 + $0x58] sm:$0xf]
      %v292 = vld [vmem:[%s1 + $0x5c] sm:$0xf]
      %v293 = vld [vmem:[%s1 + $0x60] sm:$0xf]
      %v294 = vld [vmem:[%s1 + $0x64] sm:$0xf]
      %v295 = vld [vmem:[%s1 + $0x68] sm:$0xf]
      %v296 = vld [vmem:[%s1 + $0x6c] sm:$0xf]
      %v297 = vld [vmem:[%s1 + $0x70] sm:$0xf]
      %v298 = vld [vmem:[%s1 + $0x74] sm:$0xf]
      %v299 = vld [vmem:[%s1 + $0x78] sm:$0xf]
      %v300 = vld [vmem:[%s1 + $0x7c] sm:$0xf]
      %v301 = vld [vmem:[%s1 + $0x80] sm:$0xf]
      %v302 = vld [vmem:[%s1 + $0x84] sm:$0xf]
      %v303 = vld [vmem:[%s1 + $0x88] sm:$0xf]
      %v304 = vld [vmem:[%s1 + $0x8c] sm:$0xf]
      %v369 = vunpack.c.l.b16 %v205
      %v370 = vunpack.c.h.b16 %v205
      %v371 = vunpack.c.l.b16 %v206
      %v372 = vunpack.c.l.b16 %v207
      %v373 = vunpack.c.h.b16 %v207
      %v374 = vunpack.c.l.b16 %v208
      %v375 = vunpack.c.l.b16 %v209
      %v376 = vunpack.c.h.b16 %v209
      %v377 = vunpack.c.l.b16 %v210
      %v378 = vunpack.c.l.b16 %v211
      %v379 = vunpack.c.h.b16 %v211
      %v380 = vunpack.c.l.b16 %v212
      %v381 = vunpack.c.l.b16 %v213
      %v382 = vunpack.c.h.b16 %v213
      %v383 = vunpack.c.l.b16 %v214
      %v384 = vunpack.c.l.b16 %v215
      %v385 = vunpack.c.h.b16 %v215
      %v386 = vunpack.c.l.b16 %v216
      %v387 = vunpack.c.l.b16 %v217
      %v388 = vunpack.c.h.b16 %v217
      %v389 = vunpack.c.l.b16 %v218
      %v390 = vunpack.c.l.b16 %v219
      %v391 = vunpack.c.h.b16 %v219
      %v392 = vunpack.c.l.b16 %v220
      %v393 = vunpack.c.l.b16 %v221
      %v394 = vunpack.c.h.b16 %v221
      %v395 = vunpack.c.l.b16 %v222
      %v396 = vunpack.c.l.b16 %v223
      %v397 = vunpack.c.h.b16 %v223
      %v398 = vunpack.c.l.b16 %v224
      %v399 = vunpack.c.l.b16 %v225
      %v400 = vunpack.c.h.b16 %v225
      %v401 = vunpack.c.l.b16 %v226
      %v402 = vunpack.c.l.b16 %v227
      %v403 = vunpack.c.h.b16 %v227
      %v404 = vunpack.c.l.b16 %v228
      %v405 = vunpack.c.l.b16 %v229
      %v406 = vunpack.c.h.b16 %v229
      %v407 = vunpack.c.l.b16 %v230
      %v408 = vunpack.c.l.b16 %v231
      %v409 = vunpack.c.h.b16 %v231
      %v410 = vunpack.c.l.b16 %v232
      %v411 = vunpack.c.l.b16 %v233
      %v412 = vunpack.c.h.b16 %v233
      %v413 = vunpack.c.l.b16 %v234
      %v414 = vunpack.c.l.b16 %v235
      %v415 = vunpack.c.h.b16 %v235
      %v416 = vunpack.c.l.b16 %v236
      %v417 = vunpack.c.l.b16 %v237
      %v418 = vunpack.c.h.b16 %v237
      %v419 = vunpack.c.l.b16 %v238
      %v420 = vunpack.c.l.b16 %v239
      %v421 = vunpack.c.h.b16 %v239
      %v422 = vunpack.c.l.b16 %v240
      %v423 = vunpack.c.l.b16 %v241
      %v424 = vunpack.c.h.b16 %v241
      %v425 = vunpack.c.l.b16 %v242
      %v426 = vunpack.c.l.b16 %v243
      %v427 = vunpack.c.h.b16 %v243
      %v428 = vunpack.c.l.b16 %v244
      %v429 = vunpack.c.l.b16 %v245
      %v430 = vunpack.c.h.b16 %v245
      %v431 = vunpack.c.l.b16 %v246
      %v432 = vunpack.c.l.b16 %v247
      %v433 = vunpack.c.h.b16 %v247
      %v434 = vunpack.c.l.b16 %v248
      %v435 = vunpack.c.l.b16 %v249
      %v436 = vunpack.c.h.b16 %v249
      %v437 = vunpack.c.l.b16 %v250
      %v438 = vunpack.c.l.b16 %v251
      %v439 = vunpack.c.h.b16 %v251
      %v440 = vunpack.c.l.b16 %v252
      %v441 = vunpack.c.l.b16 %v253
      %v442 = vunpack.c.h.b16 %v253
      %v443 = vunpack.c.l.b16 %v254
      %v444 = vunpack.c.l.b16 %v255
      %v445 = vunpack.c.h.b16 %v255
      %v446 = vunpack.c.l.b16 %v256
      %v447 = vunpack.c.l.b16 %v257
      %v448 = vunpack.c.h.b16 %v257
      %v449 = vunpack.c.l.b16 %v258
      %v450 = vunpack.c.l.b16 %v259
      %v451 = vunpack.c.h.b16 %v259
      %v452 = vunpack.c.l.b16 %v260
      %v453 = vunpack.c.l.b16 %v261
      %v454 = vunpack.c.h.b16 %v261
      %v455 = vunpack.c.l.b16 %v262
      %v456 = vunpack.c.l.b16 %v263
      %v457 = vunpack.c.h.b16 %v263
      %v458 = vunpack.c.l.b16 %v264
      %v459 = vunpack.c.l.b16 %v265
      %v460 = vunpack.c.h.b16 %v265
      %v461 = vunpack.c.l.b16 %v266
      %v462 = vunpack.c.l.b16 %v267
      %v463 = vunpack.c.h.b16 %v267
      %v464 = vunpack.c.l.b16 %v268
      %v465 = vpack.c.b16 %v372, %v369
      %v466 = vpack.c.b16 %v373, %v370
      %v467 = vpack.c.b16 %v374, %v371
      %v468 = vpack.c.b16 %v378, %v375
      %v469 = vpack.c.b16 %v379, %v376
      %v470 = vpack.c.b16 %v380, %v377
      %v471 = vpack.c.b16 %v384, %v381
      %v472 = vpack.c.b16 %v385, %v382
      %v473 = vpack.c.b16 %v386, %v383
      %v474 = vpack.c.b16 %v390, %v387
      %v475 = vpack.c.b16 %v391, %v388
      %v476 = vpack.c.b16 %v392, %v389
      %v477 = vpack.c.b16 %v396, %v393
      %v478 = vpack.c.b16 %v397, %v394
      %v479 = vpack.c.b16 %v398, %v395
      %v480 = vpack.c.b16 %v402, %v399
      %v481 = vpack.c.b16 %v403, %v400
      %v482 = vpack.c.b16 %v404, %v401
      %v483 = vpack.c.b16 %v408, %v405
      %v484 = vpack.c.b16 %v409, %v406
      %v485 = vpack.c.b16 %v410, %v407
      %v486 = vpack.c.b16 %v414, %v411
      %v487 = vpack.c.b16 %v415, %v412
      %v488 = vpack.c.b16 %v416, %v413
      %v489 = vpack.c.b16 %v420, %v417
      %v490 = vpack.c.b16 %v421, %v418
      %v491 = vpack.c.b16 %v422, %v419
      %v492 = vpack.c.b16 %v426, %v423
      %v493 = vpack.c.b16 %v427, %v424
      %v494 = vpack.c.b16 %v428, %v425
      %v495 = vpack.c.b16 %v432, %v429
      %v496 = vpack.c.b16 %v433, %v430
      %v497 = vpack.c.b16 %v434, %v431
      %v498 = vpack.c.b16 %v438, %v435
      %v499 = vpack.c.b16 %v439, %v436
      %v500 = vpack.c.b16 %v440, %v437
      %v501 = vpack.c.b16 %v444, %v441
      %v502 = vpack.c.b16 %v445, %v442
      %v503 = vpack.c.b16 %v446, %v443
      %v504 = vpack.c.b16 %v450, %v447
      %v505 = vpack.c.b16 %v451, %v448
      %v506 = vpack.c.b16 %v452, %v449
      %v507 = vpack.c.b16 %v456, %v453
      %v508 = vpack.c.b16 %v457, %v454
      %v509 = vpack.c.b16 %v458, %v455
      %v510 = vpack.c.b16 %v462, %v459
      %v511 = vpack.c.b16 %v463, %v460
      %v512 = vpack.c.b16 %v464, %v461
      %v581 = vunpack.c.l.b16 %v269
      %v582 = vunpack.c.l.b16 %v270
      %v583 = vunpack.c.l.b16 %v271
      %v584 = vunpack.c.l.b16 %v272
      %v585 = vunpack.c.l.b16 %v273
      %v586 = vunpack.c.l.b16 %v274
      %v587 = vunpack.c.l.b16 %v275
      %v588 = vunpack.c.l.b16 %v276
      %v589 = vunpack.c.l.b16 %v277
      %v590 = vunpack.c.l.b16 %v278
      %v591 = vunpack.c.l.b16 %v279
      %v592 = vunpack.c.l.b16 %v280
      %v593 = vunpack.c.l.b16 %v281
      %v594 = vunpack.c.l.b16 %v282
      %v595 = vunpack.c.l.b16 %v283
      %v596 = vunpack.c.l.b16 %v284
      %v597 = vunpack.c.l.b16 %v285
      %v598 = vunpack.c.l.b16 %v286
      %v599 = vunpack.c.l.b16 %v287
      %v600 = vunpack.c.l.b16 %v288
      %v601 = vunpack.c.l.b16 %v289
      %v602 = vunpack.c.l.b16 %v290
      %v603 = vunpack.c.l.b16 %v291
      %v604 = vunpack.c.l.b16 %v292
      %v605 = vunpack.c.l.b16 %v293
      %v606 = vunpack.c.l.b16 %v294
      %v607 = vunpack.c.l.b16 %v295
      %v608 = vunpack.c.l.b16 %v296
      %v609 = vunpack.c.l.b16 %v297
      %v610 = vunpack.c.l.b16 %v298
      %v611 = vunpack.c.l.b16 %v299
      %v612 = vunpack.c.l.b16 %v300
      %v613 = vunpack.c.l.b16 %v301
      %v614 = vunpack.c.l.b16 %v302
      %v615 = vunpack.c.l.b16 %v303
      %v616 = vunpack.c.l.b16 %v304
      %v617 = vpack.c.b16 %v582, %v581
      %v618 = vpack.c.b16 %v584, %v583
      %v619 = vpack.c.b16 %v586, %v585
      %v620 = vpack.c.b16 %v588, %v587
      %v621 = vpack.c.b16 %v590, %v589
      %v622 = vpack.c.b16 %v592, %v591
      %v623 = vpack.c.b16 %v594, %v593
      %v624 = vpack.c.b16 %v596, %v595
      %v625 = vpack.c.b16 %v598, %v597
      %v626 = vpack.c.b16 %v600, %v599
      %v627 = vpack.c.b16 %v602, %v601
      %v628 = vpack.c.b16 %v604, %v603
      %v629 = vpack.c.b16 %v606, %v605
      %v630 = vpack.c.b16 %v608, %v607
      %v631 = vpack.c.b16 %v610, %v609
      %v632 = vpack.c.b16 %v612, %v611
      %v633 = vpack.c.b16 %v614, %v613
      %v634 = vpack.c.b16 %v616, %v615
      %vm653 = vcmask 261120
      %v655 = vsel %vm653, %v467, 0
      %v658 = vsel %vm653, %v470, 0
      %v661 = vsel %vm653, %v473, 0
      %v664 = vsel %vm653, %v476, 0
      %v667 = vsel %vm653, %v479, 0
      %v670 = vsel %vm653, %v482, 0
      %v673 = vsel %vm653, %v485, 0
      %v676 = vsel %vm653, %v488, 0
      %v679 = vsel %vm653, %v491, 0
      %v682 = vsel %vm653, %v494, 0
      %v685 = vsel %vm653, %v497, 0
      %v688 = vsel %vm653, %v500, 0
      %v691 = vsel %vm653, %v503, 0
      %v694 = vsel %vm653, %v506, 0
      %v697 = vsel %vm653, %v509, 0
      %v700 = vsel %vm653, %v512, 0
      %702 = vmatprep.subr.bf16.mxu0 0
      %703 = vmatpush1.bf16.msra.mxu0 %v624
      %704 = vmatprep.subr.bf16.mxu0 0
      %705 = vmatpush1.bf16.msra.mxu0 %v623
      %706 = vmatprep.subr.bf16.mxu0 0
      %707 = vmatpush1.bf16.msra.mxu0 %v622
      %708 = vmatprep.subr.bf16.mxu0 0
      %709 = vmatpush1.bf16.msra.mxu0 %v621
      %710 = vmatprep.subr.bf16.mxu0 0
      %711 = vmatpush1.bf16.msra.mxu0 %v620
      %712 = vmatprep.subr.bf16.mxu0 0
      %713 = vmatpush1.bf16.msra.mxu0 %v619
      %714 = vmatprep.subr.bf16.mxu0 0
      %715 = vmatpush1.bf16.msra.mxu0 %v618
      %716 = vmatprep.subr.bf16.mxu0 0
      %717 = vmatpush1.bf16.msra.mxu0 %v617
      %718 = vmatprep.subr.bf16.mxu0 0
      %719 = vmatpush2.bf16.msra.mxu0 %v632
      %720 = vmatprep.subr.bf16.mxu0 0
      %721 = vmatpush2.bf16.msra.mxu0 %v631
      %722 = vmatprep.subr.bf16.mxu0 0
      %723 = vmatpush2.bf16.msra.mxu0 %v630
      %724 = vmatprep.subr.bf16.mxu0 0
      %725 = vmatpush2.bf16.msra.mxu0 %v629
      %726 = vmatprep.subr.bf16.mxu0 0
      %727 = vmatpush2.bf16.msra.mxu0 %v628
      %728 = vmatprep.subr.bf16.mxu0 0
      %729 = vmatpush2.bf16.msra.mxu0 %v627
      %730 = vmatprep.subr.bf16.mxu0 0
      %731 = vmatpush2.bf16.msra.mxu0 %v626
      %732 = vmatprep.subr.bf16.mxu0 0
      %733 = vmatpush2.bf16.msra.mxu0 %v625
      %734 = vmatprep.mubr.bf16.mxu0 %v466
      %735 = vmatmul.mubr.bf16.gmra.mxu0 %v465
      %v736 = vpop.f32.mrf.mxu0
      %v737 = vadd.f32 0.0, %v736
      %v738 = vpop.f32.mrf.mxu0
      %v739 = vpop.f32.mrf.mxu0
      %v740 = vadd.f32 0.0, %v739
      %v741 = vpop.f32.mrf.mxu0
      %742 = vmatprep.mubr.bf16.mxu0 %v469
      %743 = vmatmul.mubr.bf16.gmra.mxu0 %v468
      %v744 = vpop.f32.mrf.mxu0
      %v745 = vadd.f32 0.0, %v744
      %v746 = vpop.f32.mrf.mxu0
      %v747 = vpop.f32.mrf.mxu0
      %v748 = vadd.f32 0.0, %v747
      %v749 = vpop.f32.mrf.mxu0
      %750 = vmatprep.mubr.bf16.mxu0 %v472
      %751 = vmatmul.mubr.bf16.gmra.mxu0 %v471
      %v752 = vpop.f32.mrf.mxu0
      %v753 = vadd.f32 0.0, %v752
      %v754 = vpop.f32.mrf.mxu0
      %v755 = vpop.f32.mrf.mxu0
      %v756 = vadd.f32 0.0, %v755
      %v757 = vpop.f32.mrf.mxu0
      %758 = vmatprep.mubr.bf16.mxu0 %v475
      %759 = vmatmul.mubr.bf16.gmra.mxu0 %v474
      %v760 = vpop.f32.mrf.mxu0
      %v761 = vadd.f32 0.0, %v760
      %v762 = vpop.f32.mrf.mxu0
      %v763 = vpop.f32.mrf.mxu0
      %v764 = vadd.f32 0.0, %v763
      %v765 = vpop.f32.mrf.mxu0
      %766 = vmatprep.mubr.bf16.mxu0 %v478
      %767 = vmatmul.mubr.bf16.gmra.mxu0 %v477
      %v768 = vpop.f32.mrf.mxu0
      %v769 = vadd.f32 0.0, %v768
      %v770 = vpop.f32.mrf.mxu0
      %v771 = vpop.f32.mrf.mxu0
      %v772 = vadd.f32 0.0, %v771
      %v773 = vpop.f32.mrf.mxu0
      %774 = vmatprep.mubr.bf16.mxu0 %v481
      %775 = vmatmul.mubr.bf16.gmra.mxu0 %v480
      %v776 = vpop.f32.mrf.mxu0
      %v777 = vadd.f32 0.0, %v776
      %v778 = vpop.f32.mrf.mxu0
      %v779 = vpop.f32.mrf.mxu0
      %v780 = vadd.f32 0.0, %v779
      %v781 = vpop.f32.mrf.mxu0
      %782 = vmatprep.mubr.bf16.mxu0 %v484
      %783 = vmatmul.mubr.bf16.gmra.mxu0 %v483
      %v784 = vpop.f32.mrf.mxu0
      %v785 = vadd.f32 0.0, %v784
      %v786 = vpop.f32.mrf.mxu0
      %v787 = vpop.f32.mrf.mxu0
      %v788 = vadd.f32 0.0, %v787
      %v789 = vpop.f32.mrf.mxu0
      %790 = vmatprep.mubr.bf16.mxu0 %v487
      %791 = vmatmul.mubr.bf16.gmra.mxu0 %v486
      %v792 = vpop.f32.mrf.mxu0
      %v793 = vadd.f32 0.0, %v792
      %v794 = vpop.f32.mrf.mxu0
      %v795 = vpop.f32.mrf.mxu0
      %v796 = vadd.f32 0.0, %v795
      %v797 = vpop.f32.mrf.mxu0
      %798 = vmatprep.mubr.bf16.mxu0 %v490
      %799 = vmatmul.mubr.bf16.gmra.mxu0 %v489
      %v800 = vpop.f32.mrf.mxu0
      %v801 = vadd.f32 0.0, %v800
      %v802 = vpop.f32.mrf.mxu0
      %v803 = vpop.f32.mrf.mxu0
      %v804 = vadd.f32 0.0, %v803
      %v805 = vpop.f32.mrf.mxu0
      %806 = vmatprep.mubr.bf16.mxu0 %v493
      %807 = vmatmul.mubr.bf16.gmra.mxu0 %v492
      %v808 = vpop.f32.mrf.mxu0
      %v809 = vadd.f32 0.0, %v808
      %v810 = vpop.f32.mrf.mxu0
      %v811 = vpop.f32.mrf.mxu0
      %v812 = vadd.f32 0.0, %v811
      %v813 = vpop.f32.mrf.mxu0
      %814 = vmatprep.mubr.bf16.mxu0 %v496
      %815 = vmatmul.mubr.bf16.gmra.mxu0 %v495
      %v816 = vpop.f32.mrf.mxu0
      %v817 = vadd.f32 0.0, %v816
      %v818 = vpop.f32.mrf.mxu0
      %v819 = vpop.f32.mrf.mxu0
      %v820 = vadd.f32 0.0, %v819
      %v821 = vpop.f32.mrf.mxu0
      %822 = vmatprep.mubr.bf16.mxu0 %v499
      %823 = vmatmul.mubr.bf16.gmra.mxu0 %v498
      %v824 = vpop.f32.mrf.mxu0
      %v825 = vadd.f32 0.0, %v824
      %v826 = vpop.f32.mrf.mxu0
      %v827 = vpop.f32.mrf.mxu0
      %v828 = vadd.f32 0.0, %v827
      %v829 = vpop.f32.mrf.mxu0
      %830 = vmatprep.mubr.bf16.mxu0 %v502
      %831 = vmatmul.mubr.bf16.gmra.mxu0 %v501
      %v832 = vpop.f32.mrf.mxu0
      %v833 = vadd.f32 0.0, %v832
      %v834 = vpop.f32.mrf.mxu0
      %v835 = vpop.f32.mrf.mxu0
      %v836 = vadd.f32 0.0, %v835
      %v837 = vpop.f32.mrf.mxu0
      %838 = vmatprep.mubr.bf16.mxu0 %v505
      %839 = vmatmul.mubr.bf16.gmra.mxu0 %v504
      %v840 = vpop.f32.mrf.mxu0
      %v841 = vadd.f32 0.0, %v840
      %v842 = vpop.f32.mrf.mxu0
      %v843 = vpop.f32.mrf.mxu0
      %v844 = vadd.f32 0.0, %v843
      %v845 = vpop.f32.mrf.mxu0
      %846 = vmatprep.mubr.bf16.mxu0 %v508
      %847 = vmatmul.mubr.bf16.gmra.mxu0 %v507
      %v848 = vpop.f32.mrf.mxu0
      %v849 = vadd.f32 0.0, %v848
      %v850 = vpop.f32.mrf.mxu0
      %v851 = vpop.f32.mrf.mxu0
      %v852 = vadd.f32 0.0, %v851
      %v853 = vpop.f32.mrf.mxu0
      %854 = vmatprep.mubr.bf16.mxu0 %v511
      %855 = vmatmul.mubr.bf16.gmra.mxu0 %v510
      %v856 = vpop.f32.mrf.mxu0
      %v857 = vadd.f32 0.0, %v856
      %v858 = vpop.f32.mrf.mxu0
      %v859 = vpop.f32.mrf.mxu0
      %v860 = vadd.f32 0.0, %v859
      %v861 = vpop.f32.mrf.mxu0
      %862 = vdwg.mxu0
      %863 = vmatprep.subr.bf16.mxu0 0
      %864 = vmatpush1.bf16.msra.mxu0 0
      %865 = vmatprep.subr.bf16.mxu0 0
      %866 = vmatpush1.bf16.msra.mxu0 0
      %867 = vmatprep.subr.bf16.mxu0 0
      %868 = vmatpush1.bf16.msra.mxu0 0
      %869 = vmatprep.subr.bf16.mxu0 0
      %870 = vmatpush1.bf16.msra.mxu0 0
      %871 = vmatprep.subr.bf16.mxu0 0
      %872 = vmatpush1.bf16.msra.mxu0 0
      %873 = vmatprep.subr.bf16.mxu0 0
      %874 = vmatpush1.bf16.msra.mxu0 0
      %875 = vmatprep.subr.bf16.mxu0 0
      %876 = vmatpush1.bf16.msra.mxu0 %v634
      %877 = vmatprep.subr.bf16.mxu0 0
      %878 = vmatpush1.bf16.msra.mxu0 %v633
      %879 = vmatprep.subr.bf16.mxu0 0
      %880 = vmatpush2.bf16.msra.mxu0 0
      %881 = vmatprep.subr.bf16.mxu0 0
      %882 = vmatpush2.bf16.msra.mxu0 0
      %883 = vmatprep.subr.bf16.mxu0 0
      %884 = vmatpush2.bf16.msra.mxu0 0
      %885 = vmatprep.subr.bf16.mxu0 0
      %886 = vmatpush2.bf16.msra.mxu0 0
      %887 = vmatprep.subr.bf16.mxu0 0
      %888 = vmatpush2.bf16.msra.mxu0 0
      %889 = vmatprep.subr.bf16.mxu0 0
      %890 = vmatpush2.bf16.msra.mxu0 0
      %891 = vmatprep.subr.bf16.mxu0 0
      %892 = vmatpush2.bf16.msra.mxu0 0
      %893 = vmatprep.subr.bf16.mxu0 0
      %894 = vmatpush2.bf16.msra.mxu0 0
      %895 = vmatprep.mubr.bf16.mxu0 0
      %896 = vmatmul.mubr.bf16.gmra.mxu0 %v655
      %v897 = vpop.f32.mrf.mxu0
      %v898 = vadd.f32 %v737, %v897
      %v899 = vpop.f32.mrf.mxu0
      %v900 = vpop.f32.mrf.mxu0
      %v901 = vadd.f32 %v740, %v900
      %v902 = vpop.f32.mrf.mxu0
      %903 = vmatprep.mubr.bf16.mxu0 0
      %904 = vmatmul.mubr.bf16.gmra.mxu0 %v658
      %v905 = vpop.f32.mrf.mxu0
      %v906 = vadd.f32 %v745, %v905
      %v907 = vpop.f32.mrf.mxu0
      %v908 = vpop.f32.mrf.mxu0
      %v909 = vadd.f32 %v748, %v908
      %v910 = vpop.f32.mrf.mxu0
      %911 = vmatprep.mubr.bf16.mxu0 0
      %912 = vmatmul.mubr.bf16.gmra.mxu0 %v661
      %v913 = vpop.f32.mrf.mxu0
      %v914 = vadd.f32 %v753, %v913
      %v915 = vpop.f32.mrf.mxu0
      %v916 = vpop.f32.mrf.mxu0
      %v917 = vadd.f32 %v756, %v916
      %v918 = vpop.f32.mrf.mxu0
      %919 = vmatprep.mubr.bf16.mxu0 0
      %920 = vmatmul.mubr.bf16.gmra.mxu0 %v664
      %v921 = vpop.f32.mrf.mxu0
      %v922 = vadd.f32 %v761, %v921
      %v923 = vpop.f32.mrf.mxu0
      %v924 = vpop.f32.mrf.mxu0
      %v925 = vadd.f32 %v764, %v924
      %v926 = vpop.f32.mrf.mxu0
      %927 = vmatprep.mubr.bf16.mxu0 0
      %928 = vmatmul.mubr.bf16.gmra.mxu0 %v667
      %v929 = vpop.f32.mrf.mxu0
      %v930 = vadd.f32 %v769, %v929
      %v931 = vpop.f32.mrf.mxu0
      %v932 = vpop.f32.mrf.mxu0
      %v933 = vadd.f32 %v772, %v932
      %v934 = vpop.f32.mrf.mxu0
      %935 = vmatprep.mubr.bf16.mxu0 0
      %936 = vmatmul.mubr.bf16.gmra.mxu0 %v670
      %v937 = vpop.f32.mrf.mxu0
      %v938 = vadd.f32 %v777, %v937
      %v939 = vpop.f32.mrf.mxu0
      %v940 = vpop.f32.mrf.mxu0
      %v941 = vadd.f32 %v780, %v940
      %v942 = vpop.f32.mrf.mxu0
      %943 = vmatprep.mubr.bf16.mxu0 0
      %944 = vmatmul.mubr.bf16.gmra.mxu0 %v673
      %v945 = vpop.f32.mrf.mxu0
      %v946 = vadd.f32 %v785, %v945
      %v947 = vpop.f32.mrf.mxu0
      %v948 = vpop.f32.mrf.mxu0
      %v949 = vadd.f32 %v788, %v948
      %v950 = vpop.f32.mrf.mxu0
      %951 = vmatprep.mubr.bf16.mxu0 0
      %952 = vmatmul.mubr.bf16.gmra.mxu0 %v676
      %v953 = vpop.f32.mrf.mxu0
      %v954 = vadd.f32 %v793, %v953
      %v955 = vpop.f32.mrf.mxu0
      %v956 = vpop.f32.mrf.mxu0
      %v957 = vadd.f32 %v796, %v956
      %v958 = vpop.f32.mrf.mxu0
      %959 = vmatprep.mubr.bf16.mxu0 0
      %960 = vmatmul.mubr.bf16.gmra.mxu0 %v679
      %v961 = vpop.f32.mrf.mxu0
      %v962 = vadd.f32 %v801, %v961
      %v963 = vpop.f32.mrf.mxu0
      %v964 = vpop.f32.mrf.mxu0
      %v965 = vadd.f32 %v804, %v964
      %v966 = vpop.f32.mrf.mxu0
      %967 = vmatprep.mubr.bf16.mxu0 0
      %968 = vmatmul.mubr.bf16.gmra.mxu0 %v682
      %v969 = vpop.f32.mrf.mxu0
      %v970 = vadd.f32 %v809, %v969
      %v971 = vpop.f32.mrf.mxu0
      %v972 = vpop.f32.mrf.mxu0
      %v973 = vadd.f32 %v812, %v972
      %v974 = vpop.f32.mrf.mxu0
      %975 = vmatprep.mubr.bf16.mxu0 0
      %976 = vmatmul.mubr.bf16.gmra.mxu0 %v685
      %v977 = vpop.f32.mrf.mxu0
      %v978 = vadd.f32 %v817, %v977
      %v979 = vpop.f32.mrf.mxu0
      %v980 = vpop.f32.mrf.mxu0
      %v981 = vadd.f32 %v820, %v980
      %v982 = vpop.f32.mrf.mxu0
      %983 = vmatprep.mubr.bf16.mxu0 0
      %984 = vmatmul.mubr.bf16.gmra.mxu0 %v688
      %v985 = vpop.f32.mrf.mxu0
      %v986 = vadd.f32 %v825, %v985
      %v987 = vpop.f32.mrf.mxu0
      %v988 = vpop.f32.mrf.mxu0
      %v989 = vadd.f32 %v828, %v988
      %v990 = vpop.f32.mrf.mxu0
      %991 = vmatprep.mubr.bf16.mxu0 0
      %992 = vmatmul.mubr.bf16.gmra.mxu0 %v691
      %v993 = vpop.f32.mrf.mxu0
      %v994 = vadd.f32 %v833, %v993
      %v995 = vpop.f32.mrf.mxu0
      %v996 = vpop.f32.mrf.mxu0
      %v997 = vadd.f32 %v836, %v996
      %v998 = vpop.f32.mrf.mxu0
      %999 = vmatprep.mubr.bf16.mxu0 0
      %1000 = vmatmul.mubr.bf16.gmra.mxu0 %v694
      %v1001 = vpop.f32.mrf.mxu0
      %v1002 = vadd.f32 %v841, %v1001
      %v1003 = vpop.f32.mrf.mxu0
      %v1004 = vpop.f32.mrf.mxu0
      %v1005 = vadd.f32 %v844, %v1004
      %v1006 = vpop.f32.mrf.mxu0
      %1007 = vmatprep.mubr.bf16.mxu0 0
      %1008 = vmatmul.mubr.bf16.gmra.mxu0 %v697
      %v1009 = vpop.f32.mrf.mxu0
      %v1010 = vadd.f32 %v849, %v1009
      %v1011 = vpop.f32.mrf.mxu0
      %v1012 = vpop.f32.mrf.mxu0
      %v1013 = vadd.f32 %v852, %v1012
      %v1014 = vpop.f32.mrf.mxu0
      %1015 = vmatprep.mubr.bf16.mxu0 0
      %1016 = vmatmul.mubr.bf16.gmra.mxu0 %v700
      %v1017 = vpop.f32.mrf.mxu0
      %v1018 = vadd.f32 %v857, %v1017
      %v1019 = vpop.f32.mrf.mxu0
      %v1020 = vpop.f32.mrf.mxu0
      %v1021 = vadd.f32 %v860, %v1020
      %v1022 = vpop.f32.mrf.mxu0
      %1023 = vdwg.mxu0
      %v1024 = vld [vmem:[%s2] sm:$0x1]
      %v1026 = vlaneseq
      %v1027 = vshrl.u32 %v1026, 7
      %v1028 = vsub.s32 0, %v1027
      %v1029 = vrot.slane %v1024, %v1028
      %v1031 = vmul.f32 %v898, %v1029
      %v1032 = vmul.f32 %v901, %v1029
      %v1033 = vmul.f32 %v906, %v1029
      %v1034 = vmul.f32 %v909, %v1029
      %v1035 = vmul.f32 %v914, %v1029
      %v1036 = vmul.f32 %v917, %v1029
      %v1037 = vmul.f32 %v922, %v1029
      %v1038 = vmul.f32 %v925, %v1029
      %v1039 = vmul.f32 %v930, %v1029
      %v1040 = vmul.f32 %v933, %v1029
      %v1041 = vmul.f32 %v938, %v1029
      %v1042 = vmul.f32 %v941, %v1029
      %v1043 = vmul.f32 %v946, %v1029
      %v1044 = vmul.f32 %v949, %v1029
      %v1045 = vmul.f32 %v954, %v1029
      %v1046 = vmul.f32 %v957, %v1029
      %v1047 = vmul.f32 %v962, %v1029
      %v1048 = vmul.f32 %v965, %v1029
      %v1049 = vmul.f32 %v970, %v1029
      %v1050 = vmul.f32 %v973, %v1029
      %v1051 = vmul.f32 %v978, %v1029
      %v1052 = vmul.f32 %v981, %v1029
      %v1053 = vmul.f32 %v986, %v1029
      %v1054 = vmul.f32 %v989, %v1029
      %v1055 = vmul.f32 %v994, %v1029
      %v1056 = vmul.f32 %v997, %v1029
      %v1057 = vmul.f32 %v1002, %v1029
      %v1058 = vmul.f32 %v1005, %v1029
      %v1059 = vmul.f32 %v1010, %v1029
      %v1060 = vmul.f32 %v1013, %v1029
      %v1061 = vmul.f32 %v1018, %v1029
      %v1062 = vmul.f32 %v1021, %v1029
      %v1063 = vld [vmem:[%s3] sm:$0x1]
      %v1065 = vlaneseq
      %v1066 = vshrl.u32 %v1065, 7
      %v1067 = vsub.s32 0, %v1066
      %v1068 = vrot.slane %v1063, %v1067
      %v1070 = vadd.f32 %v1031, %v1068
      %v1071 = vadd.f32 %v1032, %v1068
      %v1072 = vadd.f32 %v1033, %v1068
      %v1073 = vadd.f32 %v1034, %v1068
      %v1074 = vadd.f32 %v1035, %v1068
      %v1075 = vadd.f32 %v1036, %v1068
      %v1076 = vadd.f32 %v1037, %v1068
      %v1077 = vadd.f32 %v1038, %v1068
      %v1078 = vadd.f32 %v1039, %v1068
      %v1079 = vadd.f32 %v1040, %v1068
      %v1080 = vadd.f32 %v1041, %v1068
      %v1081 = vadd.f32 %v1042, %v1068
      %v1082 = vadd.f32 %v1043, %v1068
      %v1083 = vadd.f32 %v1044, %v1068
      %v1084 = vadd.f32 %v1045, %v1068
      %v1085 = vadd.f32 %v1046, %v1068
      %v1086 = vadd.f32 %v1047, %v1068
      %v1087 = vadd.f32 %v1048, %v1068
      %v1088 = vadd.f32 %v1049, %v1068
      %v1089 = vadd.f32 %v1050, %v1068
      %v1090 = vadd.f32 %v1051, %v1068
      %v1091 = vadd.f32 %v1052, %v1068
      %v1092 = vadd.f32 %v1053, %v1068
      %v1093 = vadd.f32 %v1054, %v1068
      %v1094 = vadd.f32 %v1055, %v1068
      %v1095 = vadd.f32 %v1056, %v1068
      %v1096 = vadd.f32 %v1057, %v1068
      %v1097 = vadd.f32 %v1058, %v1068
      %v1098 = vadd.f32 %v1059, %v1068
      %v1099 = vadd.f32 %v1060, %v1068
      %v1100 = vadd.f32 %v1061, %v1068
      %v1101 = vadd.f32 %v1062, %v1068
      %v1102 = vmax.f32 %v1070, 0.0
      %v1103 = vmax.f32 %v1071, 0.0
      %v1104 = vmax.f32 %v1072, 0.0
      %v1105 = vmax.f32 %v1073, 0.0
      %v1106 = vmax.f32 %v1074, 0.0
      %v1107 = vmax.f32 %v1075, 0.0
      %v1108 = vmax.f32 %v1076, 0.0
      %v1109 = vmax.f32 %v1077, 0.0
      %v1110 = vmax.f32 %v1078, 0.0
      %v1111 = vmax.f32 %v1079, 0.0
      %v1112 = vmax.f32 %v1080, 0.0
      %v1113 = vmax.f32 %v1081, 0.0
      %v1114 = vmax.f32 %v1082, 0.0
      %v1115 = vmax.f32 %v1083, 0.0
      %v1116 = vmax.f32 %v1084, 0.0
      %v1117 = vmax.f32 %v1085, 0.0
      %v1118 = vmax.f32 %v1086, 0.0
      %v1119 = vmax.f32 %v1087, 0.0
      %v1120 = vmax.f32 %v1088, 0.0
      %v1121 = vmax.f32 %v1089, 0.0
      %v1122 = vmax.f32 %v1090, 0.0
      %v1123 = vmax.f32 %v1091, 0.0
      %v1124 = vmax.f32 %v1092, 0.0
      %v1125 = vmax.f32 %v1093, 0.0
      %v1126 = vmax.f32 %v1094, 0.0
      %v1127 = vmax.f32 %v1095, 0.0
      %v1128 = vmax.f32 %v1096, 0.0
      %v1129 = vmax.f32 %v1097, 0.0
      %v1130 = vmax.f32 %v1098, 0.0
      %v1131 = vmax.f32 %v1099, 0.0
      %v1132 = vmax.f32 %v1100, 0.0
      %v1133 = vmax.f32 %v1101, 0.0
      %v1134 = vpack.c.bf16 %v1103, %v1102
      %v1135 = vpack.c.bf16 %v1105, %v1104
      %v1136 = vpack.c.bf16 %v1107, %v1106
      %v1137 = vpack.c.bf16 %v1109, %v1108
      %v1138 = vpack.c.bf16 %v1111, %v1110
      %v1139 = vpack.c.bf16 %v1113, %v1112
      %v1140 = vpack.c.bf16 %v1115, %v1114
      %v1141 = vpack.c.bf16 %v1117, %v1116
      %v1142 = vpack.c.bf16 %v1119, %v1118
      %v1143 = vpack.c.bf16 %v1121, %v1120
      %v1144 = vpack.c.bf16 %v1123, %v1122
      %v1145 = vpack.c.bf16 %v1125, %v1124
      %v1146 = vpack.c.bf16 %v1127, %v1126
      %v1147 = vpack.c.bf16 %v1129, %v1128
      %v1148 = vpack.c.bf16 %v1131, %v1130
      %v1149 = vpack.c.bf16 %v1133, %v1132
      %v1166 = vunpack.c.l.b16 %v1134
      %v1167 = vunpack.c.h.b16 %v1134
      %v1168 = vunpack.c.l.b16 %v1135
      %v1169 = vunpack.c.h.b16 %v1135
      %v1170 = vunpack.c.l.b16 %v1136
      %v1171 = vunpack.c.h.b16 %v1136
      %v1172 = vunpack.c.l.b16 %v1137
      %v1173 = vunpack.c.h.b16 %v1137
      %v1174 = vunpack.c.l.b16 %v1138
      %v1175 = vunpack.c.h.b16 %v1138
      %v1176 = vunpack.c.l.b16 %v1139
      %v1177 = vunpack.c.h.b16 %v1139
      %v1178 = vunpack.c.l.b16 %v1140
      %v1179 = vunpack.c.h.b16 %v1140
      %v1180 = vunpack.c.l.b16 %v1141
      %v1181 = vunpack.c.h.b16 %v1141
      %v1182 = vunpack.c.l.b16 %v1142
      %v1183 = vunpack.c.h.b16 %v1142
      %v1184 = vunpack.c.l.b16 %v1143
      %v1185 = vunpack.c.h.b16 %v1143
      %v1186 = vunpack.c.l.b16 %v1144
      %v1187 = vunpack.c.h.b16 %v1144
      %v1188 = vunpack.c.l.b16 %v1145
      %v1189 = vunpack.c.h.b16 %v1145
      %v1190 = vunpack.c.l.b16 %v1146
      %v1191 = vunpack.c.h.b16 %v1146
      %v1192 = vunpack.c.l.b16 %v1147
      %v1193 = vunpack.c.h.b16 %v1147
      %v1194 = vunpack.c.l.b16 %v1148
      %v1195 = vunpack.c.h.b16 %v1148
      %v1196 = vunpack.c.l.b16 %v1149
      %v1197 = vunpack.c.h.b16 %v1149
      %v1198 = vpack.c.b16 %v1166, %v1166
      %v1199 = vpack.c.b16 %v1167, %v1167
      %v1200 = vpack.c.b16 %v1168, %v1168
      %v1201 = vpack.c.b16 %v1169, %v1169
      %v1202 = vpack.c.b16 %v1170, %v1170
      %v1203 = vpack.c.b16 %v1171, %v1171
      %v1204 = vpack.c.b16 %v1172, %v1172
      %v1205 = vpack.c.b16 %v1173, %v1173
      %v1206 = vpack.c.b16 %v1174, %v1174
      %v1207 = vpack.c.b16 %v1175, %v1175
      %v1208 = vpack.c.b16 %v1176, %v1176
      %v1209 = vpack.c.b16 %v1177, %v1177
      %v1210 = vpack.c.b16 %v1178, %v1178
      %v1211 = vpack.c.b16 %v1179, %v1179
      %v1212 = vpack.c.b16 %v1180, %v1180
      %v1213 = vpack.c.b16 %v1181, %v1181
      %v1214 = vpack.c.b16 %v1182, %v1182
      %v1215 = vpack.c.b16 %v1183, %v1183
      %v1216 = vpack.c.b16 %v1184, %v1184
      %v1217 = vpack.c.b16 %v1185, %v1185
      %v1218 = vpack.c.b16 %v1186, %v1186
      %v1219 = vpack.c.b16 %v1187, %v1187
      %v1220 = vpack.c.b16 %v1188, %v1188
      %v1221 = vpack.c.b16 %v1189, %v1189
      %v1222 = vpack.c.b16 %v1190, %v1190
      %v1223 = vpack.c.b16 %v1191, %v1191
      %v1224 = vpack.c.b16 %v1192, %v1192
      %v1225 = vpack.c.b16 %v1193, %v1193
      %v1226 = vpack.c.b16 %v1194, %v1194
      %v1227 = vpack.c.b16 %v1195, %v1195
      %v1228 = vpack.c.b16 %v1196, %v1196
      %v1229 = vpack.c.b16 %v1197, %v1197
      %vm1262 = vcmask 257024
      %1263 = vst.msk [vmem:[%s202] sm:$0xf] %vm1262, %v1198
      %1264 = vst.msk [vmem:[%s202 + $0x4] sm:$0xf] %vm1262, %v1199
      %1265 = vst.msk [vmem:[%s202 + $0x8] sm:$0xf] %vm1262, %v1200
      %1266 = vst.msk [vmem:[%s202 + $0xc] sm:$0xf] %vm1262, %v1201
      %1267 = vst.msk [vmem:[%s202 + $0x10] sm:$0xf] %vm1262, %v1202
      %1268 = vst.msk [vmem:[%s202 + $0x14] sm:$0xf] %vm1262, %v1203
      %1269 = vst.msk [vmem:[%s202 + $0x18] sm:$0xf] %vm1262, %v1204
      %1270 = vst.msk [vmem:[%s202 + $0x1c] sm:$0xf] %vm1262, %v1205
      %1271 = vst.msk [vmem:[%s202 + $0x20] sm:$0xf] %vm1262, %v1206
      %1272 = vst.msk [vmem:[%s202 + $0x24] sm:$0xf] %vm1262, %v1207
      %1273 = vst.msk [vmem:[%s202 + $0x28] sm:$0xf] %vm1262, %v1208
      %1274 = vst.msk [vmem:[%s202 + $0x2c] sm:$0xf] %vm1262, %v1209
      %1275 = vst.msk [vmem:[%s202 + $0x30] sm:$0xf] %vm1262, %v1210
      %1276 = vst.msk [vmem:[%s202 + $0x34] sm:$0xf] %vm1262, %v1211
      %1277 = vst.msk [vmem:[%s202 + $0x38] sm:$0xf] %vm1262, %v1212
      %1278 = vst.msk [vmem:[%s202 + $0x3c] sm:$0xf] %vm1262, %v1213
      %1279 = vst.msk [vmem:[%s202 + $0x40] sm:$0xf] %vm1262, %v1214
      %1280 = vst.msk [vmem:[%s202 + $0x44] sm:$0xf] %vm1262, %v1215
      %1281 = vst.msk [vmem:[%s202 + $0x48] sm:$0xf] %vm1262, %v1216
      %1282 = vst.msk [vmem:[%s202 + $0x4c] sm:$0xf] %vm1262, %v1217
      %1283 = vst.msk [vmem:[%s202 + $0x50] sm:$0xf] %vm1262, %v1218
      %1284 = vst.msk [vmem:[%s202 + $0x54] sm:$0xf] %vm1262, %v1219
      %1285 = vst.msk [vmem:[%s202 + $0x58] sm:$0xf] %vm1262, %v1220
      %1286 = vst.msk [vmem:[%s202 + $0x5c] sm:$0xf] %vm1262, %v1221
      %1287 = vst.msk [vmem:[%s202 + $0x60] sm:$0xf] %vm1262, %v1222
      %1288 = vst.msk [vmem:[%s202 + $0x64] sm:$0xf] %vm1262, %v1223
      %1289 = vst.msk [vmem:[%s202 + $0x68] sm:$0xf] %vm1262, %v1224
      %1290 = vst.msk [vmem:[%s202 + $0x6c] sm:$0xf] %vm1262, %v1225
      %1291 = vst.msk [vmem:[%s202 + $0x70] sm:$0xf] %vm1262, %v1226
      %1292 = vst.msk [vmem:[%s202 + $0x74] sm:$0xf] %vm1262, %v1227
      %1293 = vst.msk [vmem:[%s202 + $0x78] sm:$0xf] %vm1262, %v1228
      %1294 = vst.msk [vmem:[%s202 + $0x7c] sm:$0xf] %vm1262, %v1229
      %s1295 = smul.u32 32, %s15
      %p1296 = scmp.lt.s32.totalorder %s1295, 63
      %s1297 = scalar_select %p1296, %s1295, 63
      %s1298 = smul.addr %s1297, 4
      %s1299 = scalar_lea.vmem %s4, %s1298
      // Predicated region
      $region37: #{_lambda_.9} parent=35 // pred_check
        %p1300 = pneg %p122
      $region38: #{_lambda_.9} parent=35 // pred_check_branch
        %1302 = sbr.rel (%p1300) target = $region40
      $region39: #{_lambda_.9} parent=35 // pred_region
        %s1303 = smul.u32 32, %s15
      $region40: #{_lambda_.9} parent=35 // pred_fallthru
        _
    $region36: #{_lambda_.9} parent=5 // pred_fallthru
      _
    %p1304 = scmp.le.s32.totalorder 2, %s10
    // Predicated region
    $region41: #{_lambda_.9} parent=5 // pred_check
      %p1305 = pneg %p1304
    $region42: #{_lambda_.9} parent=5 // pred_check_branch
      %1307 = sbr.rel (%p1305) target = $region44
    $region43: #{_lambda_.9} parent=5 // pred_region
      %s1308 = ssub.s32 %s10, 2
      // Predicated region
      $region45: #{_lambda_.9} parent=43 // pred_check
        %p1309 = pneg %p128
      $region46: #{_lambda_.9} parent=43 // pred_check_branch
        %1311 = sbr.rel (%p1309) target = $region48
      $region47: #{_lambda_.9} parent=43 // pred_region
        %s1312 = smul.u32 32, %s16
        %p1313 = scmp.lt.s32.totalorder %s1312, 63
        %s1314 = scalar_select %p1313, %s1312, 63
        %s1315 = smul.addr %s1314, 4
        %s1316 = scalar_lea.vmem %s4, %s1315
      $region48: #{_lambda_.9} parent=43 // pred_fallthru
        _
    $region44: #{_lambda_.9} parent=5 // pred_fallthru
      _
  $region6: #{_lambda_.9} parent=0 // loop_footer
    %s14 = sadd.s32 1, %s10
  $region7: #{_lambda_.9} parent=0 // loop_footer_branch
    %9 = sbr.rel target = $region3
  $region8: #{_lambda_.9} parent=0 // loop_exit
    _

// kernel: _lambda_.10
$region0: #{_lambda_.10}
  #allocation0 [shape = 'u32[]', space=smem, size = 0x4, offset = 0x4, fixed_abs, tag = 'smem constant byte address 0x4 - core index']
  #allocation1 [shape = 'u32[144,128]{1,0:T(1,128)}', space=vmem, size = 0x12000, scoped, tag = 'internal scratch']
  %s0 = inlined_call_operand.vmem [shape: bf16[512,288], index: 0, kind: input, shape index: {}]
  %s1 = inlined_call_operand.vmem [shape: bf16[288,32], index: 1, kind: input, shape index: {}]
  %s2 = inlined_call_operand.vmem [shape: f32[1,32], index: 2, kind: input, shape index: {}]
  %s3 = inlined_call_operand.vmem [shape: f32[1,32], index: 3, kind: input, shape index: {}]
  %s4 = inlined_call_operand.vmem [shape: bf16[512,32], index: 4, kind: input, shape index: {}]
  %s5 = inlined_call_operand.vmem [shape: bf16[512,32], index: 5, kind: output, shape index: {}]
  %s6 = sld [smem:[#allocation0]]
  $region53: #{_lambda_.10} parent=0
    _
  %s8 = ssub.s32 1, %s6
  %s9 = scalar_select 0, %s8, %s6
  loop: start=0, step=1, limit=4
  $region2: #{_lambda_.10} parent=0 // loop_pre_header
    _
  $region3: #{_lambda_.10} parent=0 // loop_header
    %s11 = sphi 0, %s15
    %p12 = scmp.ge.s32.totalorder %s11, 4
    %s21 = sphi 0, %s23
    %s24 = sphi 0, %s21
    %s25 = sphi 0, %s24
    %s41 = sphi 0, %s25
    %s45 = sphi 0, %s45
    %s47 = sphi 0, %s45
    %s48 = sphi 0, %s47
    %s62 = sphi 0, %s48
    %s66 = sphi 0, %s66
    %s68 = sphi 0, %s66
    %s69 = sphi 0, %s68
    %s83 = sphi 0, %s69
    %s87 = sphi 0, %s87
    %s89 = sphi 0, %s87
    %s90 = sphi 0, %s89
    %s104 = sphi 0, %s90
    %s110 = sphi 0, %s112
    %s113 = sphi 0, %s110
    %s114 = sphi 0, %s113
    %s130 = sphi 0, %s114
    %s136 = sphi 0, %s138
    %s139 = sphi 0, %s136
    %s140 = sphi 0, %s139
    %s156 = sphi 0, %s140
  $region4: #{_lambda_.10} parent=0 // loop_header_branch
    %14 = sbr.rel (%p12) target = $region8
  $region5: #{_lambda_.10} parent=0 // loop_body
    %s16 = ssub.s32 %s11, 1
    %s17 = ssub.s32 %s11, 2
    %s18 = sadd.s32 %s11, 1
    %s19 = ssub.s32 %s11, %s18
    %p20 = scmp.eq.s32.totalorder %s19, 0
    %s22 = sadd.s32 %s21, 1
    %s23 = scalar_select %p20, %s21, %s22
    %p26 = pneg %p20
    %p27 = scmp.eq.s32.totalorder %s11, 1
    %p28 = por %p26, %p27
    %p29 = scmp.ne.s32.totalorder %s21, %s24
    %p30 = scmp.eq.s32.totalorder %s11, 0
    %p31 = por %p29, %p30
    %p32 = scmp.ne.s32.totalorder %s21, %s24
    %p33 = scmp.eq.s32.totalorder %s16, 1
    %p34 = por %p32, %p33
    %p35 = scmp.ne.s32.totalorder %s24, %s25
    %p36 = scmp.eq.s32.totalorder %s16, 0
    %p37 = por %p35, %p36
    %p38 = scmp.ne.s32.totalorder %s24, %s25
    %p39 = scmp.eq.s32.totalorder %s17, 1
    %p40 = por %p38, %p39
    %p42 = scmp.ne.s32.totalorder %s25, %s41
    %p43 = scmp.eq.s32.totalorder %s17, 0
    %p44 = por %p42, %p43
    %s46 = sadd.s32 %s45, 1
    %p49 = scmp.eq.s32.totalorder %s11, 1
    %p50 = scmp.ne.s32.totalorder %s45, %s47
    %p51 = scmp.eq.s32.totalorder %s11, 0
    %p52 = por %p50, %p51
    %p53 = scmp.ne.s32.totalorder %s45, %s47
    %p54 = scmp.eq.s32.totalorder %s16, 1
    %p55 = por %p53, %p54
    %p56 = scmp.ne.s32.totalorder %s47, %s48
    %p57 = scmp.eq.s32.totalorder %s16, 0
    %p58 = por %p56, %p57
    %p59 = scmp.ne.s32.totalorder %s47, %s48
    %p60 = scmp.eq.s32.totalorder %s17, 1
    %p61 = por %p59, %p60
    %p63 = scmp.ne.s32.totalorder %s48, %s62
    %p64 = scmp.eq.s32.totalorder %s17, 0
    %p65 = por %p63, %p64
    %s67 = sadd.s32 %s66, 1
    %p70 = scmp.eq.s32.totalorder %s11, 1
    %p71 = scmp.ne.s32.totalorder %s66, %s68
    %p72 = scmp.eq.s32.totalorder %s11, 0
    %p73 = por %p71, %p72
    %p74 = scmp.ne.s32.totalorder %s66, %s68
    %p75 = scmp.eq.s32.totalorder %s16, 1
    %p76 = por %p74, %p75
    %p77 = scmp.ne.s32.totalorder %s68, %s69
    %p78 = scmp.eq.s32.totalorder %s16, 0
    %p79 = por %p77, %p78
    %p80 = scmp.ne.s32.totalorder %s68, %s69
    %p81 = scmp.eq.s32.totalorder %s17, 1
    %p82 = por %p80, %p81
    %p84 = scmp.ne.s32.totalorder %s69, %s83
    %p85 = scmp.eq.s32.totalorder %s17, 0
    %p86 = por %p84, %p85
    %s88 = sadd.s32 %s87, 1
    %p91 = scmp.eq.s32.totalorder %s11, 1
    %p92 = scmp.ne.s32.totalorder %s87, %s89
    %p93 = scmp.eq.s32.totalorder %s11, 0
    %p94 = por %p92, %p93
    %p95 = scmp.ne.s32.totalorder %s87, %s89
    %p96 = scmp.eq.s32.totalorder %s16, 1
    %p97 = por %p95, %p96
    %p98 = scmp.ne.s32.totalorder %s89, %s90
    %p99 = scmp.eq.s32.totalorder %s16, 0
    %p100 = por %p98, %p99
    %p101 = scmp.ne.s32.totalorder %s89, %s90
    %p102 = scmp.eq.s32.totalorder %s17, 1
    %p103 = por %p101, %p102
    %p105 = scmp.ne.s32.totalorder %s90, %s104
    %p106 = scmp.eq.s32.totalorder %s17, 0
    %p107 = por %p105, %p106
    %s108 = ssub.s32 %s11, %s18
    %p109 = scmp.eq.s32.totalorder %s108, 0
    %s111 = sadd.s32 %s110, 1
    %s112 = scalar_select %p109, %s110, %s111
    %p115 = pneg %p109
    %p116 = scmp.eq.s32.totalorder %s11, 1
    %p117 = por %p115, %p116
    %p118 = scmp.ne.s32.totalorder %s110, %s113
    %p119 = scmp.eq.s32.totalorder %s11, 0
    %p120 = por %p118, %p119
    %p121 = scmp.ne.s32.totalorder %s110, %s113
    %p122 = scmp.eq.s32.totalorder %s16, 1
    %p123 = por %p121, %p122
    %p124 = scmp.ne.s32.totalorder %s113, %s114
    %p125 = scmp.eq.s32.totalorder %s16, 0
    %p126 = por %p124, %p125
    %p127 = scmp.ne.s32.totalorder %s113, %s114
    %p128 = scmp.eq.s32.totalorder %s17, 1
    %p129 = por %p127, %p128
    %p131 = scmp.ne.s32.totalorder %s114, %s130
    %p132 = scmp.eq.s32.totalorder %s17, 0
    %p133 = por %p131, %p132
    %s134 = ssub.s32 %s11, %s18
    %p135 = scmp.eq.s32.totalorder %s134, 0
    %s137 = sadd.s32 %s136, 1
    %s138 = scalar_select %p135, %s136, %s137
    %p141 = pneg %p135
    %p142 = scmp.eq.s32.totalorder %s11, 1
    %p143 = por %p141, %p142
    %p144 = scmp.ne.s32.totalorder %s136, %s139
    %p145 = scmp.eq.s32.totalorder %s11, 0
    %p146 = por %p144, %p145
    %p147 = scmp.ne.s32.totalorder %s136, %s139
    %p148 = scmp.eq.s32.totalorder %s16, 1
    %p149 = por %p147, %p148
    %p150 = scmp.ne.s32.totalorder %s139, %s140
    %p151 = scmp.eq.s32.totalorder %s16, 0
    %p152 = por %p150, %p151
    %p153 = scmp.ne.s32.totalorder %s139, %s140
    %p154 = scmp.eq.s32.totalorder %s17, 1
    %p155 = por %p153, %p154
    %p157 = scmp.ne.s32.totalorder %s140, %s156
    %p158 = scmp.eq.s32.totalorder %s17, 0
    %p159 = por %p157, %p158
    %p160 = scmp.le.s32.totalorder 1, %s11
    %p161 = scmp.lt.s32.totalorder %s11, 3
    %p162 = pnand %p160, %p161
    %p163 = pneg %p162
    // Predicated region
    $region9: #{_lambda_.10} parent=5 // pred_check
      _
    $region10: #{_lambda_.10} parent=5 // pred_check_branch
      %165 = sbr.rel (%p162) target = $region12
    $region11: #{_lambda_.10} parent=5 // pred_region
      %s166 = ssub.s32 %s11, 1
      // Predicated region
      $region13: #{_lambda_.10} parent=11 // pred_check
        %p167 = pneg %p58
      $region14: #{_lambda_.10} parent=11 // pred_check_branch
        %169 = sbr.rel (%p167) target = $region16
      $region15: #{_lambda_.10} parent=11 // pred_region
        _
      $region16: #{_lambda_.10} parent=11 // pred_fallthru
        _
      // Predicated region
      $region17: #{_lambda_.10} parent=11 // pred_check
        %p170 = pneg %p79
      $region18: #{_lambda_.10} parent=11 // pred_check_branch
        %172 = sbr.rel (%p170) target = $region20
      $region19: #{_lambda_.10} parent=11 // pred_region
        _
      $region20: #{_lambda_.10} parent=11 // pred_fallthru
        _
      // Predicated region
      $region21: #{_lambda_.10} parent=11 // pred_check
        %p173 = pneg %p100
      $region22: #{_lambda_.10} parent=11 // pred_check_branch
        %175 = sbr.rel (%p173) target = $region24
      $region23: #{_lambda_.10} parent=11 // pred_region
        _
      $region24: #{_lambda_.10} parent=11 // pred_fallthru
        _
    $region12: #{_lambda_.10} parent=5 // pred_fallthru
      _
    %p176 = scmp.lt.s32.totalorder %s11, 2
    // Predicated region
    $region25: #{_lambda_.10} parent=5 // pred_check
      %p177 = pneg %p176
    $region26: #{_lambda_.10} parent=5 // pred_check_branch
      %179 = sbr.rel (%p177) target = $region28
    $region27: #{_lambda_.10} parent=5 // pred_region
      // Predicated region
      $region29: #{_lambda_.10} parent=27 // pred_check
        %p180 = pneg %p31
      $region30: #{_lambda_.10} parent=27 // pred_check_branch
        %182 = sbr.rel (%p180) target = $region32
      $region31: #{_lambda_.10} parent=27 // pred_region
        %s183 = smul.u32 32, %s11
        %p184 = scmp.lt.s32.totalorder %s183, 63
        %s185 = scalar_select %p184, %s183, 63
        %s186 = smul.addr %s185, 3
        %s187 = smul.addr %s186, 4
        %s188 = scalar_lea.vmem %s0, %s187
        %s189 = smul.u32 32, %s11
      $region32: #{_lambda_.10} parent=27 // pred_fallthru
        _
      // Predicated region
      $region33: #{_lambda_.10} parent=27 // pred_check
        %p190 = pneg %p120
      $region34: #{_lambda_.10} parent=27 // pred_check_branch
        %192 = sbr.rel (%p190) target = $region36
      $region35: #{_lambda_.10} parent=27 // pred_region
        %s193 = smul.u32 32, %s11
        %p194 = scmp.lt.s32.totalorder %s193, 63
        %s195 = scalar_select %p194, %s193, 63
        %s196 = smul.addr %s195, 4
        %s197 = scalar_lea.vmem %s4, %s196
        %s198 = smul.u32 32, %s11
      $region36: #{_lambda_.10} parent=27 // pred_fallthru
        _
    $region28: #{_lambda_.10} parent=5 // pred_fallthru
      _
    %p199 = scmp.le.s32.totalorder 1, %s11
    %p200 = scmp.lt.s32.totalorder %s11, 3
    %p201 = pnand %p199, %p200
    %p202 = pneg %p201
    // Predicated region
    $region37: #{_lambda_.10} parent=5 // pred_check
      _
    $region38: #{_lambda_.10} parent=5 // pred_check_branch
      %204 = sbr.rel (%p201) target = $region40
    $region39: #{_lambda_.10} parent=5 // pred_region
      %s205 = ssub.s32 %s11, 1
      %s206 = smul.u32 32, %s16
      %p207 = scmp.lt.s32.totalorder %s206, 63
      %s208 = scalar_select %p207, %s206, 63
      %s209 = smul.addr %s208, 3
      %s210 = smul.addr %s209, 4
      %s211 = scalar_lea.vmem %s0, %s210
      %p212 = pneg %p37
      %p213 = pneg %p34
      %p214 = pneg %p58
      %p215 = pneg %p55
      %p216 = pneg %p79
      %p217 = pneg %p76
      %p218 = pneg %p100
      %p219 = pneg %p97
      %s220 = smul.u32 32, %s16
      %p221 = scmp.lt.s32.totalorder %s220, 63
      %s222 = scalar_select %p221, %s220, 63
      %s223 = smul.addr %s222, 4
      %s224 = scalar_lea.vmem %s4, %s223
      %p225 = pneg %p126
      %p226 = pneg %p123
      %p227 = pneg %p152
      %p228 = pneg %p149
      %s229 = smul.u32 32, %s16
      %p230 = scmp.lt.s32.totalorder %s229, 63
      %s231 = scalar_select %p230, %s229, 63
      %s232 = smul.addr %s231, 4
      %s233 = scalar_lea.vmem %s5, %s232
      %s234 = smul.u32 32, %s16
      %p235 = scmp.lt.s32.totalorder %s234, 63
      %s236 = scalar_select %p235, %s234, 63
      %s237 = smul.addr %s236, 3
      %s238 = smul.addr %s237, 4
      %s239 = scalar_lea.vmem %s0, %s238
      %s240 = smul.u32 32, %s16
      %s241 = smul.u32 32, %s16
      %p242 = scmp.lt.s32.totalorder %s241, 63
      %s243 = scalar_select %p242, %s241, 63
      %s244 = smul.addr %s243, 4
      %s245 = scalar_lea.vmem %s4, %s244
      %s246 = smul.u32 32, %s16
      %s247 = smul.u32 32, %s16
      %p248 = scmp.lt.s32.totalorder %s247, 63
      %s249 = scalar_select %p248, %s247, 63
      %s250 = smul.addr %s249, 4
      %s251 = scalar_lea.vmem %s5, %s250
      %s252 = smul.u32 32, %s16
      %v254 = vld [vmem:[%s239] sm:$0xff]
      %v255 = vld [vmem:[%s239 + $0x8] sm:$0xf]
      %v256 = vld [vmem:[%s239 + $0xc] sm:$0xff]
      %v257 = vld [vmem:[%s239 + $0x14] sm:$0xf]
      %v258 = vld [vmem:[%s239 + $0x18] sm:$0xff]
      %v259 = vld [vmem:[%s239 + $0x20] sm:$0xf]
      %v260 = vld [vmem:[%s239 + $0x24] sm:$0xff]
      %v261 = vld [vmem:[%s239 + $0x2c] sm:$0xf]
      %v262 = vld [vmem:[%s239 + $0x30] sm:$0xff]
      %v263 = vld [vmem:[%s239 + $0x38] sm:$0xf]
      %v264 = vld [vmem:[%s239 + $0x3c] sm:$0xff]
      %v265 = vld [vmem:[%s239 + $0x44] sm:$0xf]
      %v266 = vld [vmem:[%s239 + $0x48] sm:$0xff]
      %v267 = vld [vmem:[%s239 + $0x50] sm:$0xf]
      %v268 = vld [vmem:[%s239 + $0x54] sm:$0xff]
      %v269 = vld [vmem:[%s239 + $0x5c] sm:$0xf]
      %v270 = vld [vmem:[%s239 + $0x60] sm:$0xff]
      %v271 = vld [vmem:[%s239 + $0x68] sm:$0xf]
      %v272 = vld [vmem:[%s239 + $0x6c] sm:$0xff]
      %v273 = vld [vmem:[%s239 + $0x74] sm:$0xf]
      %v274 = vld [vmem:[%s239 + $0x78] sm:$0xff]
      %v275 = vld [vmem:[%s239 + $0x80] sm:$0xf]
      %v276 = vld [vmem:[%s239 + $0x84] sm:$0xff]
      %v277 = vld [vmem:[%s239 + $0x8c] sm:$0xf]
      %v278 = vld [vmem:[%s239 + $0x90] sm:$0xff]
      %v279 = vld [vmem:[%s239 + $0x98] sm:$0xf]
      %v280 = vld [vmem:[%s239 + $0x9c] sm:$0xff]
      %v281 = vld [vmem:[%s239 + $0xa4] sm:$0xf]
      %v282 = vld [vmem:[%s239 + $0xa8] sm:$0xff]
      %v283 = vld [vmem:[%s239 + $0xb0] sm:$0xf]
      %v284 = vld [vmem:[%s239 + $0xb4] sm:$0xff]
      %v285 = vld [vmem:[%s239 + $0xbc] sm:$0xf]
      %v286 = vld [vmem:[%s239 + $0xc0] sm:$0xff]
      %v287 = vld [vmem:[%s239 + $0xc8] sm:$0xf]
      %v288 = vld [vmem:[%s239 + $0xcc] sm:$0xff]
      %v289 = vld [vmem:[%s239 + $0xd4] sm:$0xf]
      %v290 = vld [vmem:[%s239 + $0xd8] sm:$0xff]
      %v291 = vld [vmem:[%s239 + $0xe0] sm:$0xf]
      %v292 = vld [vmem:[%s239 + $0xe4] sm:$0xff]
      %v293 = vld [vmem:[%s239 + $0xec] sm:$0xf]
      %v294 = vld [vmem:[%s239 + $0xf0] sm:$0xff]
      %v295 = vld [vmem:[%s239 + $0xf8] sm:$0xf]
      %v296 = vld [vmem:[%s239 + $0xfc] sm:$0xff]
      %v297 = vld [vmem:[%s239 + $0x104] sm:$0xf]
      %v298 = vld [vmem:[%s239 + $0x108] sm:$0xff]
      %v299 = vld [vmem:[%s239 + $0x110] sm:$0xf]
      %v300 = vld [vmem:[%s239 + $0x114] sm:$0xff]
      %v301 = vld [vmem:[%s239 + $0x11c] sm:$0xf]
      %v302 = vld [vmem:[%s239 + $0x120] sm:$0xff]
      %v303 = vld [vmem:[%s239 + $0x128] sm:$0xf]
      %v304 = vld [vmem:[%s239 + $0x12c] sm:$0xff]
      %v305 = vld [vmem:[%s239 + $0x134] sm:$0xf]
      %v306 = vld [vmem:[%s239 + $0x138] sm:$0xff]
      %v307 = vld [vmem:[%s239 + $0x140] sm:$0xf]
      %v308 = vld [vmem:[%s239 + $0x144] sm:$0xff]
      %v309 = vld [vmem:[%s239 + $0x14c] sm:$0xf]
      %v310 = vld [vmem:[%s239 + $0x150] sm:$0xff]
      %v311 = vld [vmem:[%s239 + $0x158] sm:$0xf]
      %v312 = vld [vmem:[%s239 + $0x15c] sm:$0xff]
      %v313 = vld [vmem:[%s239 + $0x164] sm:$0xf]
      %v314 = vld [vmem:[%s239 + $0x168] sm:$0xff]
      %v315 = vld [vmem:[%s239 + $0x170] sm:$0xf]
      %v316 = vld [vmem:[%s239 + $0x174] sm:$0xff]
      %v317 = vld [vmem:[%s239 + $0x17c] sm:$0xf]
      %v318 = vld [vmem:[%s1] sm:$0xf]
      %v319 = vld [vmem:[%s1 + $0x4] sm:$0xf]
      %v320 = vld [vmem:[%s1 + $0x8] sm:$0xf]
      %v321 = vld [vmem:[%s1 + $0xc] sm:$0xf]
      %v322 = vld [vmem:[%s1 + $0x10] sm:$0xf]
      %v323 = vld [vmem:[%s1 + $0x14] sm:$0xf]
      %v324 = vld [vmem:[%s1 + $0x18] sm:$0xf]
      %v325 = vld [vmem:[%s1 + $0x1c] sm:$0xf]
      %v326 = vld [vmem:[%s1 + $0x20] sm:$0xf]
      %v327 = vld [vmem:[%s1 + $0x24] sm:$0xf]
      %v328 = vld [vmem:[%s1 + $0x28] sm:$0xf]
      %v329 = vld [vmem:[%s1 + $0x2c] sm:$0xf]
      %v330 = vld [vmem:[%s1 + $0x30] sm:$0xf]
      %v331 = vld [vmem:[%s1 + $0x34] sm:$0xf]
      %v332 = vld [vmem:[%s1 + $0x38] sm:$0xf]
      %v333 = vld [vmem:[%s1 + $0x3c] sm:$0xf]
      %v334 = vld [vmem:[%s1 + $0x40] sm:$0xf]
      %v335 = vld [vmem:[%s1 + $0x44] sm:$0xf]
      %v336 = vld [vmem:[%s1 + $0x48] sm:$0xf]
      %v337 = vld [vmem:[%s1 + $0x4c] sm:$0xf]
      %v338 = vld [vmem:[%s1 + $0x50] sm:$0xf]
      %v339 = vld [vmem:[%s1 + $0x54] sm:$0xf]
      %v340 = vld [vmem:[%s1 + $0x58] sm:$0xf]
      %v341 = vld [vmem:[%s1 + $0x5c] sm:$0xf]
      %v342 = vld [vmem:[%s1 + $0x60] sm:$0xf]
      %v343 = vld [vmem:[%s1 + $0x64] sm:$0xf]
      %v344 = vld [vmem:[%s1 + $0x68] sm:$0xf]
      %v345 = vld [vmem:[%s1 + $0x6c] sm:$0xf]
      %v346 = vld [vmem:[%s1 + $0x70] sm:$0xf]
      %v347 = vld [vmem:[%s1 + $0x74] sm:$0xf]
      %v348 = vld [vmem:[%s1 + $0x78] sm:$0xf]
      %v349 = vld [vmem:[%s1 + $0x7c] sm:$0xf]
      %v350 = vld [vmem:[%s1 + $0x80] sm:$0xf]
      %v351 = vld [vmem:[%s1 + $0x84] sm:$0xf]
      %v352 = vld [vmem:[%s1 + $0x88] sm:$0xf]
      %v353 = vld [vmem:[%s1 + $0x8c] sm:$0xf]
      %v418 = vunpack.c.l.b16 %v254
      %v419 = vunpack.c.h.b16 %v254
      %v420 = vunpack.c.l.b16 %v255
      %v421 = vunpack.c.l.b16 %v256
      %v422 = vunpack.c.h.b16 %v256
      %v423 = vunpack.c.l.b16 %v257
      %v424 = vunpack.c.l.b16 %v258
      %v425 = vunpack.c.h.b16 %v258
      %v426 = vunpack.c.l.b16 %v259
      %v427 = vunpack.c.l.b16 %v260
      %v428 = vunpack.c.h.b16 %v260
      %v429 = vunpack.c.l.b16 %v261
      %v430 = vunpack.c.l.b16 %v262
      %v431 = vunpack.c.h.b16 %v262
      %v432 = vunpack.c.l.b16 %v263
      %v433 = vunpack.c.l.b16 %v264
      %v434 = vunpack.c.h.b16 %v264
      %v435 = vunpack.c.l.b16 %v265
      %v436 = vunpack.c.l.b16 %v266
      %v437 = vunpack.c.h.b16 %v266
      %v438 = vunpack.c.l.b16 %v267
      %v439 = vunpack.c.l.b16 %v268
      %v440 = vunpack.c.h.b16 %v268
      %v441 = vunpack.c.l.b16 %v269
      %v442 = vunpack.c.l.b16 %v270
      %v443 = vunpack.c.h.b16 %v270
      %v444 = vunpack.c.l.b16 %v271
      %v445 = vunpack.c.l.b16 %v272
      %v446 = vunpack.c.h.b16 %v272
      %v447 = vunpack.c.l.b16 %v273
      %v448 = vunpack.c.l.b16 %v274
      %v449 = vunpack.c.h.b16 %v274
      %v450 = vunpack.c.l.b16 %v275
      %v451 = vunpack.c.l.b16 %v276
      %v452 = vunpack.c.h.b16 %v276
      %v453 = vunpack.c.l.b16 %v277
      %v454 = vunpack.c.l.b16 %v278
      %v455 = vunpack.c.h.b16 %v278
      %v456 = vunpack.c.l.b16 %v279
      %v457 = vunpack.c.l.b16 %v280
      %v458 = vunpack.c.h.b16 %v280
      %v459 = vunpack.c.l.b16 %v281
      %v460 = vunpack.c.l.b16 %v282
      %v461 = vunpack.c.h.b16 %v282
      %v462 = vunpack.c.l.b16 %v283
      %v463 = vunpack.c.l.b16 %v284
      %v464 = vunpack.c.h.b16 %v284
      %v465 = vunpack.c.l.b16 %v285
      %v466 = vunpack.c.l.b16 %v286
      %v467 = vunpack.c.h.b16 %v286
      %v468 = vunpack.c.l.b16 %v287
      %v469 = vunpack.c.l.b16 %v288
      %v470 = vunpack.c.h.b16 %v288
      %v471 = vunpack.c.l.b16 %v289
      %v472 = vunpack.c.l.b16 %v290
      %v473 = vunpack.c.h.b16 %v290
      %v474 = vunpack.c.l.b16 %v291
      %v475 = vunpack.c.l.b16 %v292
      %v476 = vunpack.c.h.b16 %v292
      %v477 = vunpack.c.l.b16 %v293
      %v478 = vunpack.c.l.b16 %v294
      %v479 = vunpack.c.h.b16 %v294
      %v480 = vunpack.c.l.b16 %v295
      %v481 = vunpack.c.l.b16 %v296
      %v482 = vunpack.c.h.b16 %v296
      %v483 = vunpack.c.l.b16 %v297
      %v484 = vunpack.c.l.b16 %v298
      %v485 = vunpack.c.h.b16 %v298
      %v486 = vunpack.c.l.b16 %v299
      %v487 = vunpack.c.l.b16 %v300
      %v488 = vunpack.c.h.b16 %v300
      %v489 = vunpack.c.l.b16 %v301
      %v490 = vunpack.c.l.b16 %v302
      %v491 = vunpack.c.h.b16 %v302
      %v492 = vunpack.c.l.b16 %v303
      %v493 = vunpack.c.l.b16 %v304
      %v494 = vunpack.c.h.b16 %v304
      %v495 = vunpack.c.l.b16 %v305
      %v496 = vunpack.c.l.b16 %v306
      %v497 = vunpack.c.h.b16 %v306
      %v498 = vunpack.c.l.b16 %v307
      %v499 = vunpack.c.l.b16 %v308
      %v500 = vunpack.c.h.b16 %v308
      %v501 = vunpack.c.l.b16 %v309
      %v502 = vunpack.c.l.b16 %v310
      %v503 = vunpack.c.h.b16 %v310
      %v504 = vunpack.c.l.b16 %v311
      %v505 = vunpack.c.l.b16 %v312
      %v506 = vunpack.c.h.b16 %v312
      %v507 = vunpack.c.l.b16 %v313
      %v508 = vunpack.c.l.b16 %v314
      %v509 = vunpack.c.h.b16 %v314
      %v510 = vunpack.c.l.b16 %v315
      %v511 = vunpack.c.l.b16 %v316
      %v512 = vunpack.c.h.b16 %v316
      %v513 = vunpack.c.l.b16 %v317
      %v514 = vpack.c.b16 %v421, %v418
      %v515 = vpack.c.b16 %v422, %v419
      %v516 = vpack.c.b16 %v423, %v420
      %v517 = vpack.c.b16 %v427, %v424
      %v518 = vpack.c.b16 %v428, %v425
      %v519 = vpack.c.b16 %v429, %v426
      %v520 = vpack.c.b16 %v433, %v430
      %v521 = vpack.c.b16 %v434, %v431
      %v522 = vpack.c.b16 %v435, %v432
      %v523 = vpack.c.b16 %v439, %v436
      %v524 = vpack.c.b16 %v440, %v437
      %v525 = vpack.c.b16 %v441, %v438
      %v526 = vpack.c.b16 %v445, %v442
      %v527 = vpack.c.b16 %v446, %v443
      %v528 = vpack.c.b16 %v447, %v444
      %v529 = vpack.c.b16 %v451, %v448
      %v530 = vpack.c.b16 %v452, %v449
      %v531 = vpack.c.b16 %v453, %v450
      %v532 = vpack.c.b16 %v457, %v454
      %v533 = vpack.c.b16 %v458, %v455
      %v534 = vpack.c.b16 %v459, %v456
      %v535 = vpack.c.b16 %v463, %v460
      %v536 = vpack.c.b16 %v464, %v461
      %v537 = vpack.c.b16 %v465, %v462
      %v538 = vpack.c.b16 %v469, %v466
      %v539 = vpack.c.b16 %v470, %v467
      %v540 = vpack.c.b16 %v471, %v468
      %v541 = vpack.c.b16 %v475, %v472
      %v542 = vpack.c.b16 %v476, %v473
      %v543 = vpack.c.b16 %v477, %v474
      %v544 = vpack.c.b16 %v481, %v478
      %v545 = vpack.c.b16 %v482, %v479
      %v546 = vpack.c.b16 %v483, %v480
      %v547 = vpack.c.b16 %v487, %v484
      %v548 = vpack.c.b16 %v488, %v485
      %v549 = vpack.c.b16 %v489, %v486
      %v550 = vpack.c.b16 %v493, %v490
      %v551 = vpack.c.b16 %v494, %v491
      %v552 = vpack.c.b16 %v495, %v492
      %v553 = vpack.c.b16 %v499, %v496
      %v554 = vpack.c.b16 %v500, %v497
      %v555 = vpack.c.b16 %v501, %v498
      %v556 = vpack.c.b16 %v505, %v502
      %v557 = vpack.c.b16 %v506, %v503
      %v558 = vpack.c.b16 %v507, %v504
      %v559 = vpack.c.b16 %v511, %v508
      %v560 = vpack.c.b16 %v512, %v509
      %v561 = vpack.c.b16 %v513, %v510
      %v630 = vunpack.c.l.b16 %v318
      %v631 = vunpack.c.l.b16 %v319
      %v632 = vunpack.c.l.b16 %v320
      %v633 = vunpack.c.l.b16 %v321
      %v634 = vunpack.c.l.b16 %v322
      %v635 = vunpack.c.l.b16 %v323
      %v636 = vunpack.c.l.b16 %v324
      %v637 = vunpack.c.l.b16 %v325
      %v638 = vunpack.c.l.b16 %v326
      %v639 = vunpack.c.l.b16 %v327
      %v640 = vunpack.c.l.b16 %v328
      %v641 = vunpack.c.l.b16 %v329
      %v642 = vunpack.c.l.b16 %v330
      %v643 = vunpack.c.l.b16 %v331
      %v644 = vunpack.c.l.b16 %v332
      %v645 = vunpack.c.l.b16 %v333
      %v646 = vunpack.c.l.b16 %v334
      %v647 = vunpack.c.l.b16 %v335
      %v648 = vunpack.c.l.b16 %v336
      %v649 = vunpack.c.l.b16 %v337
      %v650 = vunpack.c.l.b16 %v338
      %v651 = vunpack.c.l.b16 %v339
      %v652 = vunpack.c.l.b16 %v340
      %v653 = vunpack.c.l.b16 %v341
      %v654 = vunpack.c.l.b16 %v342
      %v655 = vunpack.c.l.b16 %v343
      %v656 = vunpack.c.l.b16 %v344
      %v657 = vunpack.c.l.b16 %v345
      %v658 = vunpack.c.l.b16 %v346
      %v659 = vunpack.c.l.b16 %v347
      %v660 = vunpack.c.l.b16 %v348
      %v661 = vunpack.c.l.b16 %v349
      %v662 = vunpack.c.l.b16 %v350
      %v663 = vunpack.c.l.b16 %v351
      %v664 = vunpack.c.l.b16 %v352
      %v665 = vunpack.c.l.b16 %v353
      %v666 = vpack.c.b16 %v631, %v630
      %v667 = vpack.c.b16 %v633, %v632
      %v668 = vpack.c.b16 %v635, %v634
      %v669 = vpack.c.b16 %v637, %v636
      %v670 = vpack.c.b16 %v639, %v638
      %v671 = vpack.c.b16 %v641, %v640
      %v672 = vpack.c.b16 %v643, %v642
      %v673 = vpack.c.b16 %v645, %v644
      %v674 = vpack.c.b16 %v647, %v646
      %v675 = vpack.c.b16 %v649, %v648
      %v676 = vpack.c.b16 %v651, %v650
      %v677 = vpack.c.b16 %v653, %v652
      %v678 = vpack.c.b16 %v655, %v654
      %v679 = vpack.c.b16 %v657, %v656
      %v680 = vpack.c.b16 %v659, %v658
      %v681 = vpack.c.b16 %v661, %v660
      %v682 = vpack.c.b16 %v663, %v662
      %v683 = vpack.c.b16 %v665, %v664
      %vm702 = vcmask 261120
      %v704 = vsel %vm702, %v516, 0
      %v707 = vsel %vm702, %v519, 0
      %v710 = vsel %vm702, %v522, 0
      %v713 = vsel %vm702, %v525, 0
      %v716 = vsel %vm702, %v528, 0
      %v719 = vsel %vm702, %v531, 0
      %v722 = vsel %vm702, %v534, 0
      %v725 = vsel %vm702, %v537, 0
      %v728 = vsel %vm702, %v540, 0
      %v731 = vsel %vm702, %v543, 0
      %v734 = vsel %vm702, %v546, 0
      %v737 = vsel %vm702, %v549, 0
      %v740 = vsel %vm702, %v552, 0
      %v743 = vsel %vm702, %v555, 0
      %v746 = vsel %vm702, %v558, 0
      %v749 = vsel %vm702, %v561, 0
      %751 = vmatprep.subr.bf16.mxu0 0
      %752 = vmatpush1.bf16.msra.mxu0 %v673
      %753 = vmatprep.subr.bf16.mxu0 0
      %754 = vmatpush1.bf16.msra.mxu0 %v672
      %755 = vmatprep.subr.bf16.mxu0 0
      %756 = vmatpush1.bf16.msra.mxu0 %v671
      %757 = vmatprep.subr.bf16.mxu0 0
      %758 = vmatpush1.bf16.msra.mxu0 %v670
      %759 = vmatprep.subr.bf16.mxu0 0
      %760 = vmatpush1.bf16.msra.mxu0 %v669
      %761 = vmatprep.subr.bf16.mxu0 0
      %762 = vmatpush1.bf16.msra.mxu0 %v668
      %763 = vmatprep.subr.bf16.mxu0 0
      %764 = vmatpush1.bf16.msra.mxu0 %v667
      %765 = vmatprep.subr.bf16.mxu0 0
      %766 = vmatpush1.bf16.msra.mxu0 %v666
      %767 = vmatprep.subr.bf16.mxu0 0
      %768 = vmatpush2.bf16.msra.mxu0 %v681
      %769 = vmatprep.subr.bf16.mxu0 0
      %770 = vmatpush2.bf16.msra.mxu0 %v680
      %771 = vmatprep.subr.bf16.mxu0 0
      %772 = vmatpush2.bf16.msra.mxu0 %v679
      %773 = vmatprep.subr.bf16.mxu0 0
      %774 = vmatpush2.bf16.msra.mxu0 %v678
      %775 = vmatprep.subr.bf16.mxu0 0
      %776 = vmatpush2.bf16.msra.mxu0 %v677
      %777 = vmatprep.subr.bf16.mxu0 0
      %778 = vmatpush2.bf16.msra.mxu0 %v676
      %779 = vmatprep.subr.bf16.mxu0 0
      %780 = vmatpush2.bf16.msra.mxu0 %v675
      %781 = vmatprep.subr.bf16.mxu0 0
      %782 = vmatpush2.bf16.msra.mxu0 %v674
      %783 = vmatprep.mubr.bf16.mxu0 %v515
      %784 = vmatmul.mubr.bf16.gmra.mxu0 %v514
      %v785 = vpop.f32.mrf.mxu0
      %v786 = vadd.f32 0.0, %v785
      %v787 = vpop.f32.mrf.mxu0
      %v788 = vpop.f32.mrf.mxu0
      %v789 = vadd.f32 0.0, %v788
      %v790 = vpop.f32.mrf.mxu0
      %791 = vmatprep.mubr.bf16.mxu0 %v518
      %792 = vmatmul.mubr.bf16.gmra.mxu0 %v517
      %v793 = vpop.f32.mrf.mxu0
      %v794 = vadd.f32 0.0, %v793
      %v795 = vpop.f32.mrf.mxu0
      %v796 = vpop.f32.mrf.mxu0
      %v797 = vadd.f32 0.0, %v796
      %v798 = vpop.f32.mrf.mxu0
      %799 = vmatprep.mubr.bf16.mxu0 %v521
      %800 = vmatmul.mubr.bf16.gmra.mxu0 %v520
      %v801 = vpop.f32.mrf.mxu0
      %v802 = vadd.f32 0.0, %v801
      %v803 = vpop.f32.mrf.mxu0
      %v804 = vpop.f32.mrf.mxu0
      %v805 = vadd.f32 0.0, %v804
      %v806 = vpop.f32.mrf.mxu0
      %807 = vmatprep.mubr.bf16.mxu0 %v524
      %808 = vmatmul.mubr.bf16.gmra.mxu0 %v523
      %v809 = vpop.f32.mrf.mxu0
      %v810 = vadd.f32 0.0, %v809
      %v811 = vpop.f32.mrf.mxu0
      %v812 = vpop.f32.mrf.mxu0
      %v813 = vadd.f32 0.0, %v812
      %v814 = vpop.f32.mrf.mxu0
      %815 = vmatprep.mubr.bf16.mxu0 %v527
      %816 = vmatmul.mubr.bf16.gmra.mxu0 %v526
      %v817 = vpop.f32.mrf.mxu0
      %v818 = vadd.f32 0.0, %v817
      %v819 = vpop.f32.mrf.mxu0
      %v820 = vpop.f32.mrf.mxu0
      %v821 = vadd.f32 0.0, %v820
      %v822 = vpop.f32.mrf.mxu0
      %823 = vmatprep.mubr.bf16.mxu0 %v530
      %824 = vmatmul.mubr.bf16.gmra.mxu0 %v529
      %v825 = vpop.f32.mrf.mxu0
      %v826 = vadd.f32 0.0, %v825
      %v827 = vpop.f32.mrf.mxu0
      %v828 = vpop.f32.mrf.mxu0
      %v829 = vadd.f32 0.0, %v828
      %v830 = vpop.f32.mrf.mxu0
      %831 = vmatprep.mubr.bf16.mxu0 %v533
      %832 = vmatmul.mubr.bf16.gmra.mxu0 %v532
      %v833 = vpop.f32.mrf.mxu0
      %v834 = vadd.f32 0.0, %v833
      %v835 = vpop.f32.mrf.mxu0
      %v836 = vpop.f32.mrf.mxu0
      %v837 = vadd.f32 0.0, %v836
      %v838 = vpop.f32.mrf.mxu0
      %839 = vmatprep.mubr.bf16.mxu0 %v536
      %840 = vmatmul.mubr.bf16.gmra.mxu0 %v535
      %v841 = vpop.f32.mrf.mxu0
      %v842 = vadd.f32 0.0, %v841
      %v843 = vpop.f32.mrf.mxu0
      %v844 = vpop.f32.mrf.mxu0
      %v845 = vadd.f32 0.0, %v844
      %v846 = vpop.f32.mrf.mxu0
      %847 = vmatprep.mubr.bf16.mxu0 %v539
      %848 = vmatmul.mubr.bf16.gmra.mxu0 %v538
      %v849 = vpop.f32.mrf.mxu0
      %v850 = vadd.f32 0.0, %v849
      %v851 = vpop.f32.mrf.mxu0
      %v852 = vpop.f32.mrf.mxu0
      %v853 = vadd.f32 0.0, %v852
      %v854 = vpop.f32.mrf.mxu0
      %855 = vmatprep.mubr.bf16.mxu0 %v542
      %856 = vmatmul.mubr.bf16.gmra.mxu0 %v541
      %v857 = vpop.f32.mrf.mxu0
      %v858 = vadd.f32 0.0, %v857
      %v859 = vpop.f32.mrf.mxu0
      %v860 = vpop.f32.mrf.mxu0
      %v861 = vadd.f32 0.0, %v860
      %v862 = vpop.f32.mrf.mxu0
      %863 = vmatprep.mubr.bf16.mxu0 %v545
      %864 = vmatmul.mubr.bf16.gmra.mxu0 %v544
      %v865 = vpop.f32.mrf.mxu0
      %v866 = vadd.f32 0.0, %v865
      %v867 = vpop.f32.mrf.mxu0
      %v868 = vpop.f32.mrf.mxu0
      %v869 = vadd.f32 0.0, %v868
      %v870 = vpop.f32.mrf.mxu0
      %871 = vmatprep.mubr.bf16.mxu0 %v548
      %872 = vmatmul.mubr.bf16.gmra.mxu0 %v547
      %v873 = vpop.f32.mrf.mxu0
      %v874 = vadd.f32 0.0, %v873
      %v875 = vpop.f32.mrf.mxu0
      %v876 = vpop.f32.mrf.mxu0
      %v877 = vadd.f32 0.0, %v876
      %v878 = vpop.f32.mrf.mxu0
      %879 = vmatprep.mubr.bf16.mxu0 %v551
      %880 = vmatmul.mubr.bf16.gmra.mxu0 %v550
      %v881 = vpop.f32.mrf.mxu0
      %v882 = vadd.f32 0.0, %v881
      %v883 = vpop.f32.mrf.mxu0
      %v884 = vpop.f32.mrf.mxu0
      %v885 = vadd.f32 0.0, %v884
      %v886 = vpop.f32.mrf.mxu0
      %887 = vmatprep.mubr.bf16.mxu0 %v554
      %888 = vmatmul.mubr.bf16.gmra.mxu0 %v553
      %v889 = vpop.f32.mrf.mxu0
      %v890 = vadd.f32 0.0, %v889
      %v891 = vpop.f32.mrf.mxu0
      %v892 = vpop.f32.mrf.mxu0
      %v893 = vadd.f32 0.0, %v892
      %v894 = vpop.f32.mrf.mxu0
      %895 = vmatprep.mubr.bf16.mxu0 %v557
      %896 = vmatmul.mubr.bf16.gmra.mxu0 %v556
      %v897 = vpop.f32.mrf.mxu0
      %v898 = vadd.f32 0.0, %v897
      %v899 = vpop.f32.mrf.mxu0
      %v900 = vpop.f32.mrf.mxu0
      %v901 = vadd.f32 0.0, %v900
      %v902 = vpop.f32.mrf.mxu0
      %903 = vmatprep.mubr.bf16.mxu0 %v560
      %904 = vmatmul.mubr.bf16.gmra.mxu0 %v559
      %v905 = vpop.f32.mrf.mxu0
      %v906 = vadd.f32 0.0, %v905
      %v907 = vpop.f32.mrf.mxu0
      %v908 = vpop.f32.mrf.mxu0
      %v909 = vadd.f32 0.0, %v908
      %v910 = vpop.f32.mrf.mxu0
      %911 = vdwg.mxu0
      %912 = vmatprep.subr.bf16.mxu0 0
      %913 = vmatpush1.bf16.msra.mxu0 0
      %914 = vmatprep.subr.bf16.mxu0 0
      %915 = vmatpush1.bf16.msra.mxu0 0
      %916 = vmatprep.subr.bf16.mxu0 0
      %917 = vmatpush1.bf16.msra.mxu0 0
      %918 = vmatprep.subr.bf16.mxu0 0
      %919 = vmatpush1.bf16.msra.mxu0 0
      %920 = vmatprep.subr.bf16.mxu0 0
      %921 = vmatpush1.bf16.msra.mxu0 0
      %922 = vmatprep.subr.bf16.mxu0 0
      %923 = vmatpush1.bf16.msra.mxu0 0
      %924 = vmatprep.subr.bf16.mxu0 0
      %925 = vmatpush1.bf16.msra.mxu0 %v683
      %926 = vmatprep.subr.bf16.mxu0 0
      %927 = vmatpush1.bf16.msra.mxu0 %v682
      %928 = vmatprep.subr.bf16.mxu0 0
      %929 = vmatpush2.bf16.msra.mxu0 0
      %930 = vmatprep.subr.bf16.mxu0 0
      %931 = vmatpush2.bf16.msra.mxu0 0
      %932 = vmatprep.subr.bf16.mxu0 0
      %933 = vmatpush2.bf16.msra.mxu0 0
      %934 = vmatprep.subr.bf16.mxu0 0
      %935 = vmatpush2.bf16.msra.mxu0 0
      %936 = vmatprep.subr.bf16.mxu0 0
      %937 = vmatpush2.bf16.msra.mxu0 0
      %938 = vmatprep.subr.bf16.mxu0 0
      %939 = vmatpush2.bf16.msra.mxu0 0
      %940 = vmatprep.subr.bf16.mxu0 0
      %941 = vmatpush2.bf16.msra.mxu0 0
      %942 = vmatprep.subr.bf16.mxu0 0
      %943 = vmatpush2.bf16.msra.mxu0 0
      %944 = vmatprep.mubr.bf16.mxu0 0
      %945 = vmatmul.mubr.bf16.gmra.mxu0 %v704
      %v946 = vpop.f32.mrf.mxu0
      %v947 = vadd.f32 %v786, %v946
      %v948 = vpop.f32.mrf.mxu0
      %v949 = vpop.f32.mrf.mxu0
      %v950 = vadd.f32 %v789, %v949
      %v951 = vpop.f32.mrf.mxu0
      %952 = vmatprep.mubr.bf16.mxu0 0
      %953 = vmatmul.mubr.bf16.gmra.mxu0 %v707
      %v954 = vpop.f32.mrf.mxu0
      %v955 = vadd.f32 %v794, %v954
      %v956 = vpop.f32.mrf.mxu0
      %v957 = vpop.f32.mrf.mxu0
      %v958 = vadd.f32 %v797, %v957
      %v959 = vpop.f32.mrf.mxu0
      %960 = vmatprep.mubr.bf16.mxu0 0
      %961 = vmatmul.mubr.bf16.gmra.mxu0 %v710
      %v962 = vpop.f32.mrf.mxu0
      %v963 = vadd.f32 %v802, %v962
      %v964 = vpop.f32.mrf.mxu0
      %v965 = vpop.f32.mrf.mxu0
      %v966 = vadd.f32 %v805, %v965
      %v967 = vpop.f32.mrf.mxu0
      %968 = vmatprep.mubr.bf16.mxu0 0
      %969 = vmatmul.mubr.bf16.gmra.mxu0 %v713
      %v970 = vpop.f32.mrf.mxu0
      %v971 = vadd.f32 %v810, %v970
      %v972 = vpop.f32.mrf.mxu0
      %v973 = vpop.f32.mrf.mxu0
      %v974 = vadd.f32 %v813, %v973
      %v975 = vpop.f32.mrf.mxu0
      %976 = vmatprep.mubr.bf16.mxu0 0
      %977 = vmatmul.mubr.bf16.gmra.mxu0 %v716
      %v978 = vpop.f32.mrf.mxu0
      %v979 = vadd.f32 %v818, %v978
      %v980 = vpop.f32.mrf.mxu0
      %v981 = vpop.f32.mrf.mxu0
      %v982 = vadd.f32 %v821, %v981
      %v983 = vpop.f32.mrf.mxu0
      %984 = vmatprep.mubr.bf16.mxu0 0
      %985 = vmatmul.mubr.bf16.gmra.mxu0 %v719
      %v986 = vpop.f32.mrf.mxu0
      %v987 = vadd.f32 %v826, %v986
      %v988 = vpop.f32.mrf.mxu0
      %v989 = vpop.f32.mrf.mxu0
      %v990 = vadd.f32 %v829, %v989
      %v991 = vpop.f32.mrf.mxu0
      %992 = vmatprep.mubr.bf16.mxu0 0
      %993 = vmatmul.mubr.bf16.gmra.mxu0 %v722
      %v994 = vpop.f32.mrf.mxu0
      %v995 = vadd.f32 %v834, %v994
      %v996 = vpop.f32.mrf.mxu0
      %v997 = vpop.f32.mrf.mxu0
      %v998 = vadd.f32 %v837, %v997
      %v999 = vpop.f32.mrf.mxu0
      %1000 = vmatprep.mubr.bf16.mxu0 0
      %1001 = vmatmul.mubr.bf16.gmra.mxu0 %v725
      %v1002 = vpop.f32.mrf.mxu0
      %v1003 = vadd.f32 %v842, %v1002
      %v1004 = vpop.f32.mrf.mxu0
      %v1005 = vpop.f32.mrf.mxu0
      %v1006 = vadd.f32 %v845, %v1005
      %v1007 = vpop.f32.mrf.mxu0
      %1008 = vmatprep.mubr.bf16.mxu0 0
      %1009 = vmatmul.mubr.bf16.gmra.mxu0 %v728
      %v1010 = vpop.f32.mrf.mxu0
      %v1011 = vadd.f32 %v850, %v1010
      %v1012 = vpop.f32.mrf.mxu0
      %v1013 = vpop.f32.mrf.mxu0
      %v1014 = vadd.f32 %v853, %v1013
      %v1015 = vpop.f32.mrf.mxu0
      %1016 = vmatprep.mubr.bf16.mxu0 0
      %1017 = vmatmul.mubr.bf16.gmra.mxu0 %v731
      %v1018 = vpop.f32.mrf.mxu0
      %v1019 = vadd.f32 %v858, %v1018
      %v1020 = vpop.f32.mrf.mxu0
      %v1021 = vpop.f32.mrf.mxu0
      %v1022 = vadd.f32 %v861, %v1021
      %v1023 = vpop.f32.mrf.mxu0
      %1024 = vmatprep.mubr.bf16.mxu0 0
      %1025 = vmatmul.mubr.bf16.gmra.mxu0 %v734
      %v1026 = vpop.f32.mrf.mxu0
      %v1027 = vadd.f32 %v866, %v1026
      %v1028 = vpop.f32.mrf.mxu0
      %v1029 = vpop.f32.mrf.mxu0
      %v1030 = vadd.f32 %v869, %v1029
      %v1031 = vpop.f32.mrf.mxu0
      %1032 = vmatprep.mubr.bf16.mxu0 0
      %1033 = vmatmul.mubr.bf16.gmra.mxu0 %v737
      %v1034 = vpop.f32.mrf.mxu0
      %v1035 = vadd.f32 %v874, %v1034
      %v1036 = vpop.f32.mrf.mxu0
      %v1037 = vpop.f32.mrf.mxu0
      %v1038 = vadd.f32 %v877, %v1037
      %v1039 = vpop.f32.mrf.mxu0
      %1040 = vmatprep.mubr.bf16.mxu0 0
      %1041 = vmatmul.mubr.bf16.gmra.mxu0 %v740
      %v1042 = vpop.f32.mrf.mxu0
      %v1043 = vadd.f32 %v882, %v1042
      %v1044 = vpop.f32.mrf.mxu0
      %v1045 = vpop.f32.mrf.mxu0
      %v1046 = vadd.f32 %v885, %v1045
      %v1047 = vpop.f32.mrf.mxu0
      %1048 = vmatprep.mubr.bf16.mxu0 0
      %1049 = vmatmul.mubr.bf16.gmra.mxu0 %v743
      %v1050 = vpop.f32.mrf.mxu0
      %v1051 = vadd.f32 %v890, %v1050
      %v1052 = vpop.f32.mrf.mxu0
      %v1053 = vpop.f32.mrf.mxu0
      %v1054 = vadd.f32 %v893, %v1053
      %v1055 = vpop.f32.mrf.mxu0
      %1056 = vmatprep.mubr.bf16.mxu0 0
      %1057 = vmatmul.mubr.bf16.gmra.mxu0 %v746
      %v1058 = vpop.f32.mrf.mxu0
      %v1059 = vadd.f32 %v898, %v1058
      %v1060 = vpop.f32.mrf.mxu0
      %v1061 = vpop.f32.mrf.mxu0
      %v1062 = vadd.f32 %v901, %v1061
      %v1063 = vpop.f32.mrf.mxu0
      %1064 = vmatprep.mubr.bf16.mxu0 0
      %1065 = vmatmul.mubr.bf16.gmra.mxu0 %v749
      %v1066 = vpop.f32.mrf.mxu0
      %v1067 = vadd.f32 %v906, %v1066
      %v1068 = vpop.f32.mrf.mxu0
      %v1069 = vpop.f32.mrf.mxu0
      %v1070 = vadd.f32 %v909, %v1069
      %v1071 = vpop.f32.mrf.mxu0
      %1072 = vdwg.mxu0
      %v1073 = vld [vmem:[%s2] sm:$0x1]
      %v1075 = vlaneseq
      %v1076 = vshrl.u32 %v1075, 7
      %v1077 = vsub.s32 0, %v1076
      %v1078 = vrot.slane %v1073, %v1077
      %v1080 = vmul.f32 %v947, %v1078
      %v1081 = vmul.f32 %v950, %v1078
      %v1082 = vmul.f32 %v955, %v1078
      %v1083 = vmul.f32 %v958, %v1078
      %v1084 = vmul.f32 %v963, %v1078
      %v1085 = vmul.f32 %v966, %v1078
      %v1086 = vmul.f32 %v971, %v1078
      %v1087 = vmul.f32 %v974, %v1078
      %v1088 = vmul.f32 %v979, %v1078
      %v1089 = vmul.f32 %v982, %v1078
      %v1090 = vmul.f32 %v987, %v1078
      %v1091 = vmul.f32 %v990, %v1078
      %v1092 = vmul.f32 %v995, %v1078
      %v1093 = vmul.f32 %v998, %v1078
      %v1094 = vmul.f32 %v1003, %v1078
      %v1095 = vmul.f32 %v1006, %v1078
      %v1096 = vmul.f32 %v1011, %v1078
      %v1097 = vmul.f32 %v1014, %v1078
      %v1098 = vmul.f32 %v1019, %v1078
      %v1099 = vmul.f32 %v1022, %v1078
      %v1100 = vmul.f32 %v1027, %v1078
      %v1101 = vmul.f32 %v1030, %v1078
      %v1102 = vmul.f32 %v1035, %v1078
      %v1103 = vmul.f32 %v1038, %v1078
      %v1104 = vmul.f32 %v1043, %v1078
      %v1105 = vmul.f32 %v1046, %v1078
      %v1106 = vmul.f32 %v1051, %v1078
      %v1107 = vmul.f32 %v1054, %v1078
      %v1108 = vmul.f32 %v1059, %v1078
      %v1109 = vmul.f32 %v1062, %v1078
      %v1110 = vmul.f32 %v1067, %v1078
      %v1111 = vmul.f32 %v1070, %v1078
      %v1112 = vld [vmem:[%s3] sm:$0x1]
      %v1114 = vlaneseq
      %v1115 = vshrl.u32 %v1114, 7
      %v1116 = vsub.s32 0, %v1115
      %v1117 = vrot.slane %v1112, %v1116
      %v1119 = vadd.f32 %v1080, %v1117
      %v1120 = vadd.f32 %v1081, %v1117
      %v1121 = vadd.f32 %v1082, %v1117
      %v1122 = vadd.f32 %v1083, %v1117
      %v1123 = vadd.f32 %v1084, %v1117
      %v1124 = vadd.f32 %v1085, %v1117
      %v1125 = vadd.f32 %v1086, %v1117
      %v1126 = vadd.f32 %v1087, %v1117
      %v1127 = vadd.f32 %v1088, %v1117
      %v1128 = vadd.f32 %v1089, %v1117
      %v1129 = vadd.f32 %v1090, %v1117
      %v1130 = vadd.f32 %v1091, %v1117
      %v1131 = vadd.f32 %v1092, %v1117
      %v1132 = vadd.f32 %v1093, %v1117
      %v1133 = vadd.f32 %v1094, %v1117
      %v1134 = vadd.f32 %v1095, %v1117
      %v1135 = vadd.f32 %v1096, %v1117
      %v1136 = vadd.f32 %v1097, %v1117
      %v1137 = vadd.f32 %v1098, %v1117
      %v1138 = vadd.f32 %v1099, %v1117
      %v1139 = vadd.f32 %v1100, %v1117
      %v1140 = vadd.f32 %v1101, %v1117
      %v1141 = vadd.f32 %v1102, %v1117
      %v1142 = vadd.f32 %v1103, %v1117
      %v1143 = vadd.f32 %v1104, %v1117
      %v1144 = vadd.f32 %v1105, %v1117
      %v1145 = vadd.f32 %v1106, %v1117
      %v1146 = vadd.f32 %v1107, %v1117
      %v1147 = vadd.f32 %v1108, %v1117
      %v1148 = vadd.f32 %v1109, %v1117
      %v1149 = vadd.f32 %v1110, %v1117
      %v1150 = vadd.f32 %v1111, %v1117
      %v1151 = vld [vmem:[%s245] sm:$0xf]
      %v1152 = vld [vmem:[%s245 + $0x4] sm:$0xf]
      %v1153 = vld [vmem:[%s245 + $0x8] sm:$0xf]
      %v1154 = vld [vmem:[%s245 + $0xc] sm:$0xf]
      %v1155 = vld [vmem:[%s245 + $0x10] sm:$0xf]
      %v1156 = vld [vmem:[%s245 + $0x14] sm:$0xf]
      %v1157 = vld [vmem:[%s245 + $0x18] sm:$0xf]
      %v1158 = vld [vmem:[%s245 + $0x1c] sm:$0xf]
      %v1159 = vld [vmem:[%s245 + $0x20] sm:$0xf]
      %v1160 = vld [vmem:[%s245 + $0x24] sm:$0xf]
      %v1161 = vld [vmem:[%s245 + $0x28] sm:$0xf]
      %v1162 = vld [vmem:[%s245 + $0x2c] sm:$0xf]
      %v1163 = vld [vmem:[%s245 + $0x30] sm:$0xf]
      %v1164 = vld [vmem:[%s245 + $0x34] sm:$0xf]
      %v1165 = vld [vmem:[%s245 + $0x38] sm:$0xf]
      %v1166 = vld [vmem:[%s245 + $0x3c] sm:$0xf]
      %v1167 = vld [vmem:[%s245 + $0x40] sm:$0xf]
      %v1168 = vld [vmem:[%s245 + $0x44] sm:$0xf]
      %v1169 = vld [vmem:[%s245 + $0x48] sm:$0xf]
      %v1170 = vld [vmem:[%s245 + $0x4c] sm:$0xf]
      %v1171 = vld [vmem:[%s245 + $0x50] sm:$0xf]
      %v1172 = vld [vmem:[%s245 + $0x54] sm:$0xf]
      %v1173 = vld [vmem:[%s245 + $0x58] sm:$0xf]
      %v1174 = vld [vmem:[%s245 + $0x5c] sm:$0xf]
      %v1175 = vld [vmem:[%s245 + $0x60] sm:$0xf]
      %v1176 = vld [vmem:[%s245 + $0x64] sm:$0xf]
      %v1177 = vld [vmem:[%s245 + $0x68] sm:$0xf]
      %v1178 = vld [vmem:[%s245 + $0x6c] sm:$0xf]
      %v1179 = vld [vmem:[%s245 + $0x70] sm:$0xf]
      %v1180 = vld [vmem:[%s245 + $0x74] sm:$0xf]
      %v1181 = vld [vmem:[%s245 + $0x78] sm:$0xf]
      %v1182 = vld [vmem:[%s245 + $0x7c] sm:$0xf]
      %v1183 = vunpack.c.l.bf16 %v1151
      %v1184 = vunpack.c.l.bf16 %v1152
      %v1185 = vunpack.c.l.bf16 %v1153
      %v1186 = vunpack.c.l.bf16 %v1154
      %v1187 = vunpack.c.l.bf16 %v1155
      %v1188 = vunpack.c.l.bf16 %v1156
      %v1189 = vunpack.c.l.bf16 %v1157
      %v1190 = vunpack.c.l.bf16 %v1158
      %v1191 = vunpack.c.l.bf16 %v1159
      %v1192 = vunpack.c.l.bf16 %v1160
      %v1193 = vunpack.c.l.bf16 %v1161
      %v1194 = vunpack.c.l.bf16 %v1162
      %v1195 = vunpack.c.l.bf16 %v1163
      %v1196 = vunpack.c.l.bf16 %v1164
      %v1197 = vunpack.c.l.bf16 %v1165
      %v1198 = vunpack.c.l.bf16 %v1166
      %v1199 = vunpack.c.l.bf16 %v1167
      %v1200 = vunpack.c.l.bf16 %v1168
      %v1201 = vunpack.c.l.bf16 %v1169
      %v1202 = vunpack.c.l.bf16 %v1170
      %v1203 = vunpack.c.l.bf16 %v1171
      %v1204 = vunpack.c.l.bf16 %v1172
      %v1205 = vunpack.c.l.bf16 %v1173
      %v1206 = vunpack.c.l.bf16 %v1174
      %v1207 = vunpack.c.l.bf16 %v1175
      %v1208 = vunpack.c.l.bf16 %v1176
      %v1209 = vunpack.c.l.bf16 %v1177
      %v1210 = vunpack.c.l.bf16 %v1178
      %v1211 = vunpack.c.l.bf16 %v1179
      %v1212 = vunpack.c.l.bf16 %v1180
      %v1213 = vunpack.c.l.bf16 %v1181
      %v1214 = vunpack.c.l.bf16 %v1182
      %v1215 = vadd.f32 %v1119, %v1183
      %v1216 = vadd.f32 %v1120, %v1184
      %v1217 = vadd.f32 %v1121, %v1185
      %v1218 = vadd.f32 %v1122, %v1186
      %v1219 = vadd.f32 %v1123, %v1187
      %v1220 = vadd.f32 %v1124, %v1188
      %v1221 = vadd.f32 %v1125, %v1189
      %v1222 = vadd.f32 %v1126, %v1190
      %v1223 = vadd.f32 %v1127, %v1191
      %v1224 = vadd.f32 %v1128, %v1192
      %v1225 = vadd.f32 %v1129, %v1193
      %v1226 = vadd.f32 %v1130, %v1194
      %v1227 = vadd.f32 %v1131, %v1195
      %v1228 = vadd.f32 %v1132, %v1196
      %v1229 = vadd.f32 %v1133, %v1197
      %v1230 = vadd.f32 %v1134, %v1198
      %v1231 = vadd.f32 %v1135, %v1199
      %v1232 = vadd.f32 %v1136, %v1200
      %v1233 = vadd.f32 %v1137, %v1201
      %v1234 = vadd.f32 %v1138, %v1202
      %v1235 = vadd.f32 %v1139, %v1203
      %v1236 = vadd.f32 %v1140, %v1204
      %v1237 = vadd.f32 %v1141, %v1205
      %v1238 = vadd.f32 %v1142, %v1206
      %v1239 = vadd.f32 %v1143, %v1207
      %v1240 = vadd.f32 %v1144, %v1208
      %v1241 = vadd.f32 %v1145, %v1209
      %v1242 = vadd.f32 %v1146, %v1210
      %v1243 = vadd.f32 %v1147, %v1211
      %v1244 = vadd.f32 %v1148, %v1212
      %v1245 = vadd.f32 %v1149, %v1213
      %v1246 = vadd.f32 %v1150, %v1214
      %v1247 = vmax.f32 %v1215, 0.0
      %v1248 = vmax.f32 %v1216, 0.0
      %v1249 = vmax.f32 %v1217, 0.0
      %v1250 = vmax.f32 %v1218, 0.0
      %v1251 = vmax.f32 %v1219, 0.0
      %v1252 = vmax.f32 %v1220, 0.0
      %v1253 = vmax.f32 %v1221, 0.0
      %v1254 = vmax.f32 %v1222, 0.0
      %v1255 = vmax.f32 %v1223, 0.0
      %v1256 = vmax.f32 %v1224, 0.0
      %v1257 = vmax.f32 %v1225, 0.0
      %v1258 = vmax.f32 %v1226, 0.0
      %v1259 = vmax.f32 %v1227, 0.0
      %v1260 = vmax.f32 %v1228, 0.0
      %v1261 = vmax.f32 %v1229, 0.0
      %v1262 = vmax.f32 %v1230, 0.0
      %v1263 = vmax.f32 %v1231, 0.0
      %v1264 = vmax.f32 %v1232, 0.0
      %v1265 = vmax.f32 %v1233, 0.0
      %v1266 = vmax.f32 %v1234, 0.0
      %v1267 = vmax.f32 %v1235, 0.0
      %v1268 = vmax.f32 %v1236, 0.0
      %v1269 = vmax.f32 %v1237, 0.0
      %v1270 = vmax.f32 %v1238, 0.0
      %v1271 = vmax.f32 %v1239, 0.0
      %v1272 = vmax.f32 %v1240, 0.0
      %v1273 = vmax.f32 %v1241, 0.0
      %v1274 = vmax.f32 %v1242, 0.0
      %v1275 = vmax.f32 %v1243, 0.0
      %v1276 = vmax.f32 %v1244, 0.0
      %v1277 = vmax.f32 %v1245, 0.0
      %v1278 = vmax.f32 %v1246, 0.0
      %v1279 = vpack.c.bf16 %v1248, %v1247
      %v1280 = vpack.c.bf16 %v1250, %v1249
      %v1281 = vpack.c.bf16 %v1252, %v1251
      %v1282 = vpack.c.bf16 %v1254, %v1253
      %v1283 = vpack.c.bf16 %v1256, %v1255
      %v1284 = vpack.c.bf16 %v1258, %v1257
      %v1285 = vpack.c.bf16 %v1260, %v1259
      %v1286 = vpack.c.bf16 %v1262, %v1261
      %v1287 = vpack.c.bf16 %v1264, %v1263
      %v1288 = vpack.c.bf16 %v1266, %v1265
      %v1289 = vpack.c.bf16 %v1268, %v1267
      %v1290 = vpack.c.bf16 %v1270, %v1269
      %v1291 = vpack.c.bf16 %v1272, %v1271
      %v1292 = vpack.c.bf16 %v1274, %v1273
      %v1293 = vpack.c.bf16 %v1276, %v1275
      %v1294 = vpack.c.bf16 %v1278, %v1277
      %v1311 = vunpack.c.l.b16 %v1279
      %v1312 = vunpack.c.h.b16 %v1279
      %v1313 = vunpack.c.l.b16 %v1280
      %v1314 = vunpack.c.h.b16 %v1280
      %v1315 = vunpack.c.l.b16 %v1281
      %v1316 = vunpack.c.h.b16 %v1281
      %v1317 = vunpack.c.l.b16 %v1282
      %v1318 = vunpack.c.h.b16 %v1282
      %v1319 = vunpack.c.l.b16 %v1283
      %v1320 = vunpack.c.h.b16 %v1283
      %v1321 = vunpack.c.l.b16 %v1284
      %v1322 = vunpack.c.h.b16 %v1284
      %v1323 = vunpack.c.l.b16 %v1285
      %v1324 = vunpack.c.h.b16 %v1285
      %v1325 = vunpack.c.l.b16 %v1286
      %v1326 = vunpack.c.h.b16 %v1286
      %v1327 = vunpack.c.l.b16 %v1287
      %v1328 = vunpack.c.h.b16 %v1287
      %v1329 = vunpack.c.l.b16 %v1288
      %v1330 = vunpack.c.h.b16 %v1288
      %v1331 = vunpack.c.l.b16 %v1289
      %v1332 = vunpack.c.h.b16 %v1289
      %v1333 = vunpack.c.l.b16 %v1290
      %v1334 = vunpack.c.h.b16 %v1290
      %v1335 = vunpack.c.l.b16 %v1291
      %v1336 = vunpack.c.h.b16 %v1291
      %v1337 = vunpack.c.l.b16 %v1292
      %v1338 = vunpack.c.h.b16 %v1292
      %v1339 = vunpack.c.l.b16 %v1293
      %v1340 = vunpack.c.h.b16 %v1293
      %v1341 = vunpack.c.l.b16 %v1294
      %v1342 = vunpack.c.h.b16 %v1294
      %v1343 = vpack.c.b16 %v1311, %v1311
      %v1344 = vpack.c.b16 %v1312, %v1312
      %v1345 = vpack.c.b16 %v1313, %v1313
      %v1346 = vpack.c.b16 %v1314, %v1314
      %v1347 = vpack.c.b16 %v1315, %v1315
      %v1348 = vpack.c.b16 %v1316, %v1316
      %v1349 = vpack.c.b16 %v1317, %v1317
      %v1350 = vpack.c.b16 %v1318, %v1318
      %v1351 = vpack.c.b16 %v1319, %v1319
      %v1352 = vpack.c.b16 %v1320, %v1320
      %v1353 = vpack.c.b16 %v1321, %v1321
      %v1354 = vpack.c.b16 %v1322, %v1322
      %v1355 = vpack.c.b16 %v1323, %v1323
      %v1356 = vpack.c.b16 %v1324, %v1324
      %v1357 = vpack.c.b16 %v1325, %v1325
      %v1358 = vpack.c.b16 %v1326, %v1326
      %v1359 = vpack.c.b16 %v1327, %v1327
      %v1360 = vpack.c.b16 %v1328, %v1328
      %v1361 = vpack.c.b16 %v1329, %v1329
      %v1362 = vpack.c.b16 %v1330, %v1330
      %v1363 = vpack.c.b16 %v1331, %v1331
      %v1364 = vpack.c.b16 %v1332, %v1332
      %v1365 = vpack.c.b16 %v1333, %v1333
      %v1366 = vpack.c.b16 %v1334, %v1334
      %v1367 = vpack.c.b16 %v1335, %v1335
      %v1368 = vpack.c.b16 %v1336, %v1336
      %v1369 = vpack.c.b16 %v1337, %v1337
      %v1370 = vpack.c.b16 %v1338, %v1338
      %v1371 = vpack.c.b16 %v1339, %v1339
      %v1372 = vpack.c.b16 %v1340, %v1340
      %v1373 = vpack.c.b16 %v1341, %v1341
      %v1374 = vpack.c.b16 %v1342, %v1342
      %vm1407 = vcmask 257024
      %1408 = vst.msk [vmem:[%s251] sm:$0xf] %vm1407, %v1343
      %1409 = vst.msk [vmem:[%s251 + $0x4] sm:$0xf] %vm1407, %v1344
      %1410 = vst.msk [vmem:[%s251 + $0x8] sm:$0xf] %vm1407, %v1345
      %1411 = vst.msk [vmem:[%s251 + $0xc] sm:$0xf] %vm1407, %v1346
      %1412 = vst.msk [vmem:[%s251 + $0x10] sm:$0xf] %vm1407, %v1347
      %1413 = vst.msk [vmem:[%s251 + $0x14] sm:$0xf] %vm1407, %v1348
      %1414 = vst.msk [vmem:[%s251 + $0x18] sm:$0xf] %vm1407, %v1349
      %1415 = vst.msk [vmem:[%s251 + $0x1c] sm:$0xf] %vm1407, %v1350
      %1416 = vst.msk [vmem:[%s251 + $0x20] sm:$0xf] %vm1407, %v1351
      %1417 = vst.msk [vmem:[%s251 + $0x24] sm:$0xf] %vm1407, %v1352
      %1418 = vst.msk [vmem:[%s251 + $0x28] sm:$0xf] %vm1407, %v1353
      %1419 = vst.msk [vmem:[%s251 + $0x2c] sm:$0xf] %vm1407, %v1354
      %1420 = vst.msk [vmem:[%s251 + $0x30] sm:$0xf] %vm1407, %v1355
      %1421 = vst.msk [vmem:[%s251 + $0x34] sm:$0xf] %vm1407, %v1356
      %1422 = vst.msk [vmem:[%s251 + $0x38] sm:$0xf] %vm1407, %v1357
      %1423 = vst.msk [vmem:[%s251 + $0x3c] sm:$0xf] %vm1407, %v1358
      %1424 = vst.msk [vmem:[%s251 + $0x40] sm:$0xf] %vm1407, %v1359
      %1425 = vst.msk [vmem:[%s251 + $0x44] sm:$0xf] %vm1407, %v1360
      %1426 = vst.msk [vmem:[%s251 + $0x48] sm:$0xf] %vm1407, %v1361
      %1427 = vst.msk [vmem:[%s251 + $0x4c] sm:$0xf] %vm1407, %v1362
      %1428 = vst.msk [vmem:[%s251 + $0x50] sm:$0xf] %vm1407, %v1363
      %1429 = vst.msk [vmem:[%s251 + $0x54] sm:$0xf] %vm1407, %v1364
      %1430 = vst.msk [vmem:[%s251 + $0x58] sm:$0xf] %vm1407, %v1365
      %1431 = vst.msk [vmem:[%s251 + $0x5c] sm:$0xf] %vm1407, %v1366
      %1432 = vst.msk [vmem:[%s251 + $0x60] sm:$0xf] %vm1407, %v1367
      %1433 = vst.msk [vmem:[%s251 + $0x64] sm:$0xf] %vm1407, %v1368
      %1434 = vst.msk [vmem:[%s251 + $0x68] sm:$0xf] %vm1407, %v1369
      %1435 = vst.msk [vmem:[%s251 + $0x6c] sm:$0xf] %vm1407, %v1370
      %1436 = vst.msk [vmem:[%s251 + $0x70] sm:$0xf] %vm1407, %v1371
      %1437 = vst.msk [vmem:[%s251 + $0x74] sm:$0xf] %vm1407, %v1372
      %1438 = vst.msk [vmem:[%s251 + $0x78] sm:$0xf] %vm1407, %v1373
      %1439 = vst.msk [vmem:[%s251 + $0x7c] sm:$0xf] %vm1407, %v1374
      %s1440 = smul.u32 32, %s16
      %p1441 = scmp.lt.s32.totalorder %s1440, 63
      %s1442 = scalar_select %p1441, %s1440, 63
      %s1443 = smul.addr %s1442, 4
      %s1444 = scalar_lea.vmem %s5, %s1443
      // Predicated region
      $region41: #{_lambda_.10} parent=39 // pred_check
        %p1445 = pneg %p149
      $region42: #{_lambda_.10} parent=39 // pred_check_branch
        %1447 = sbr.rel (%p1445) target = $region44
      $region43: #{_lambda_.10} parent=39 // pred_region
        %s1448 = smul.u32 32, %s16
      $region44: #{_lambda_.10} parent=39 // pred_fallthru
        _
    $region40: #{_lambda_.10} parent=5 // pred_fallthru
      _
    %p1449 = scmp.le.s32.totalorder 2, %s11
    // Predicated region
    $region45: #{_lambda_.10} parent=5 // pred_check
      %p1450 = pneg %p1449
    $region46: #{_lambda_.10} parent=5 // pred_check_branch
      %1452 = sbr.rel (%p1450) target = $region48
    $region47: #{_lambda_.10} parent=5 // pred_region
      %s1453 = ssub.s32 %s11, 2
      // Predicated region
      $region49: #{_lambda_.10} parent=47 // pred_check
        %p1454 = pneg %p155
      $region50: #{_lambda_.10} parent=47 // pred_check_branch
        %1456 = sbr.rel (%p1454) target = $region52
      $region51: #{_lambda_.10} parent=47 // pred_region
        %s1457 = smul.u32 32, %s17
        %p1458 = scmp.lt.s32.totalorder %s1457, 63
        %s1459 = scalar_select %p1458, %s1457, 63
        %s1460 = smul.addr %s1459, 4
        %s1461 = scalar_lea.vmem %s5, %s1460
      $region52: #{_lambda_.10} parent=47 // pred_fallthru
        _
    $region48: #{_lambda_.10} parent=5 // pred_fallthru
      _
  $region6: #{_lambda_.10} parent=0 // loop_footer
    %s15 = sadd.s32 1, %s11
  $region7: #{_lambda_.10} parent=0 // loop_footer_branch
    %10 = sbr.rel target = $region3
  $region8: #{_lambda_.10} parent=0 // loop_exit
    _

// kernel: _lambda_.11
$region0: #{_lambda_.11}
  #allocation0 [shape = 'u32[]', space=smem, size = 0x4, offset = 0x4, fixed_abs, tag = 'smem constant byte address 0x4 - core index']
  #allocation1 [shape = 'u32[144,128]{1,0:T(1,128)}', space=vmem, size = 0x12000, scoped, tag = 'internal scratch']
  %s0 = inlined_call_operand.vmem [shape: bf16[128,288], index: 0, kind: input, shape index: {}]
  %s1 = inlined_call_operand.vmem [shape: bf16[288,64], index: 1, kind: input, shape index: {}]
  %s2 = inlined_call_operand.vmem [shape: f32[1,64], index: 2, kind: input, shape index: {}]
  %s3 = inlined_call_operand.vmem [shape: f32[1,64], index: 3, kind: input, shape index: {}]
  %s4 = inlined_call_operand.vmem [shape: bf16[128,64], index: 4, kind: output, shape index: {}]
  %s5 = sld [smem:[#allocation0]]
  $region49: #{_lambda_.11} parent=0
    _
  %s7 = ssub.s32 1, %s5
  %s8 = scalar_select 0, %s7, %s5
  loop: start=0, step=1, limit=4
  $region2: #{_lambda_.11} parent=0 // loop_pre_header
    _
  $region3: #{_lambda_.11} parent=0 // loop_header
    %s10 = sphi 0, %s14
    %p11 = scmp.ge.s32.totalorder %s10, 4
    %s20 = sphi 0, %s22
    %s23 = sphi 0, %s20
    %s24 = sphi 0, %s23
    %s40 = sphi 0, %s24
    %s44 = sphi 0, %s44
    %s46 = sphi 0, %s44
    %s47 = sphi 0, %s46
    %s61 = sphi 0, %s47
    %s65 = sphi 0, %s65
    %s67 = sphi 0, %s65
    %s68 = sphi 0, %s67
    %s82 = sphi 0, %s68
    %s86 = sphi 0, %s86
    %s88 = sphi 0, %s86
    %s89 = sphi 0, %s88
    %s103 = sphi 0, %s89
    %s109 = sphi 0, %s111
    %s112 = sphi 0, %s109
    %s113 = sphi 0, %s112
    %s129 = sphi 0, %s113
  $region4: #{_lambda_.11} parent=0 // loop_header_branch
    %13 = sbr.rel (%p11) target = $region8
  $region5: #{_lambda_.11} parent=0 // loop_body
    %s15 = ssub.s32 %s10, 1
    %s16 = ssub.s32 %s10, 2
    %s17 = sadd.s32 %s10, 1
    %s18 = ssub.s32 %s10, %s17
    %p19 = scmp.eq.s32.totalorder %s18, 0
    %s21 = sadd.s32 %s20, 1
    %s22 = scalar_select %p19, %s20, %s21
    %p25 = pneg %p19
    %p26 = scmp.eq.s32.totalorder %s10, 1
    %p27 = por %p25, %p26
    %p28 = scmp.ne.s32.totalorder %s20, %s23
    %p29 = scmp.eq.s32.totalorder %s10, 0
    %p30 = por %p28, %p29
    %p31 = scmp.ne.s32.totalorder %s20, %s23
    %p32 = scmp.eq.s32.totalorder %s15, 1
    %p33 = por %p31, %p32
    %p34 = scmp.ne.s32.totalorder %s23, %s24
    %p35 = scmp.eq.s32.totalorder %s15, 0
    %p36 = por %p34, %p35
    %p37 = scmp.ne.s32.totalorder %s23, %s24
    %p38 = scmp.eq.s32.totalorder %s16, 1
    %p39 = por %p37, %p38
    %p41 = scmp.ne.s32.totalorder %s24, %s40
    %p42 = scmp.eq.s32.totalorder %s16, 0
    %p43 = por %p41, %p42
    %s45 = sadd.s32 %s44, 1
    %p48 = scmp.eq.s32.totalorder %s10, 1
    %p49 = scmp.ne.s32.totalorder %s44, %s46
    %p50 = scmp.eq.s32.totalorder %s10, 0
    %p51 = por %p49, %p50
    %p52 = scmp.ne.s32.totalorder %s44, %s46
    %p53 = scmp.eq.s32.totalorder %s15, 1
    %p54 = por %p52, %p53
    %p55 = scmp.ne.s32.totalorder %s46, %s47
    %p56 = scmp.eq.s32.totalorder %s15, 0
    %p57 = por %p55, %p56
    %p58 = scmp.ne.s32.totalorder %s46, %s47
    %p59 = scmp.eq.s32.totalorder %s16, 1
    %p60 = por %p58, %p59
    %p62 = scmp.ne.s32.totalorder %s47, %s61
    %p63 = scmp.eq.s32.totalorder %s16, 0
    %p64 = por %p62, %p63
    %s66 = sadd.s32 %s65, 1
    %p69 = scmp.eq.s32.totalorder %s10, 1
    %p70 = scmp.ne.s32.totalorder %s65, %s67
    %p71 = scmp.eq.s32.totalorder %s10, 0
    %p72 = por %p70, %p71
    %p73 = scmp.ne.s32.totalorder %s65, %s67
    %p74 = scmp.eq.s32.totalorder %s15, 1
    %p75 = por %p73, %p74
    %p76 = scmp.ne.s32.totalorder %s67, %s68
    %p77 = scmp.eq.s32.totalorder %s15, 0
    %p78 = por %p76, %p77
    %p79 = scmp.ne.s32.totalorder %s67, %s68
    %p80 = scmp.eq.s32.totalorder %s16, 1
    %p81 = por %p79, %p80
    %p83 = scmp.ne.s32.totalorder %s68, %s82
    %p84 = scmp.eq.s32.totalorder %s16, 0
    %p85 = por %p83, %p84
    %s87 = sadd.s32 %s86, 1
    %p90 = scmp.eq.s32.totalorder %s10, 1
    %p91 = scmp.ne.s32.totalorder %s86, %s88
    %p92 = scmp.eq.s32.totalorder %s10, 0
    %p93 = por %p91, %p92
    %p94 = scmp.ne.s32.totalorder %s86, %s88
    %p95 = scmp.eq.s32.totalorder %s15, 1
    %p96 = por %p94, %p95
    %p97 = scmp.ne.s32.totalorder %s88, %s89
    %p98 = scmp.eq.s32.totalorder %s15, 0
    %p99 = por %p97, %p98
    %p100 = scmp.ne.s32.totalorder %s88, %s89
    %p101 = scmp.eq.s32.totalorder %s16, 1
    %p102 = por %p100, %p101
    %p104 = scmp.ne.s32.totalorder %s89, %s103
    %p105 = scmp.eq.s32.totalorder %s16, 0
    %p106 = por %p104, %p105
    %s107 = ssub.s32 %s10, %s17
    %p108 = scmp.eq.s32.totalorder %s107, 0
    %s110 = sadd.s32 %s109, 1
    %s111 = scalar_select %p108, %s109, %s110
    %p114 = pneg %p108
    %p115 = scmp.eq.s32.totalorder %s10, 1
    %p116 = por %p114, %p115
    %p117 = scmp.ne.s32.totalorder %s109, %s112
    %p118 = scmp.eq.s32.totalorder %s10, 0
    %p119 = por %p117, %p118
    %p120 = scmp.ne.s32.totalorder %s109, %s112
    %p121 = scmp.eq.s32.totalorder %s15, 1
    %p122 = por %p120, %p121
    %p123 = scmp.ne.s32.totalorder %s112, %s113
    %p124 = scmp.eq.s32.totalorder %s15, 0
    %p125 = por %p123, %p124
    %p126 = scmp.ne.s32.totalorder %s112, %s113
    %p127 = scmp.eq.s32.totalorder %s16, 1
    %p128 = por %p126, %p127
    %p130 = scmp.ne.s32.totalorder %s113, %s129
    %p131 = scmp.eq.s32.totalorder %s16, 0
    %p132 = por %p130, %p131
    %p133 = scmp.le.s32.totalorder 1, %s10
    %p134 = scmp.lt.s32.totalorder %s10, 3
    %p135 = pnand %p133, %p134
    %p136 = pneg %p135
    // Predicated region
    $region9: #{_lambda_.11} parent=5 // pred_check
      _
    $region10: #{_lambda_.11} parent=5 // pred_check_branch
      %138 = sbr.rel (%p135) target = $region12
    $region11: #{_lambda_.11} parent=5 // pred_region
      %s139 = ssub.s32 %s10, 1
      // Predicated region
      $region13: #{_lambda_.11} parent=11 // pred_check
        %p140 = pneg %p57
      $region14: #{_lambda_.11} parent=11 // pred_check_branch
        %142 = sbr.rel (%p140) target = $region16
      $region15: #{_lambda_.11} parent=11 // pred_region
        _
      $region16: #{_lambda_.11} parent=11 // pred_fallthru
        _
      // Predicated region
      $region17: #{_lambda_.11} parent=11 // pred_check
        %p143 = pneg %p78
      $region18: #{_lambda_.11} parent=11 // pred_check_branch
        %145 = sbr.rel (%p143) target = $region20
      $region19: #{_lambda_.11} parent=11 // pred_region
        _
      $region20: #{_lambda_.11} parent=11 // pred_fallthru
        _
      // Predicated region
      $region21: #{_lambda_.11} parent=11 // pred_check
        %p146 = pneg %p99
      $region22: #{_lambda_.11} parent=11 // pred_check_branch
        %148 = sbr.rel (%p146) target = $region24
      $region23: #{_lambda_.11} parent=11 // pred_region
        _
      $region24: #{_lambda_.11} parent=11 // pred_fallthru
        _
    $region12: #{_lambda_.11} parent=5 // pred_fallthru
      _
    %p149 = scmp.lt.s32.totalorder %s10, 2
    // Predicated region
    $region25: #{_lambda_.11} parent=5 // pred_check
      %p150 = pneg %p149
    $region26: #{_lambda_.11} parent=5 // pred_check_branch
      %152 = sbr.rel (%p150) target = $region28
    $region27: #{_lambda_.11} parent=5 // pred_region
      // Predicated region
      $region29: #{_lambda_.11} parent=27 // pred_check
        %p153 = pneg %p30
      $region30: #{_lambda_.11} parent=27 // pred_check_branch
        %155 = sbr.rel (%p153) target = $region32
      $region31: #{_lambda_.11} parent=27 // pred_region
        %s156 = smul.u32 8, %s10
        %p157 = scmp.lt.s32.totalorder %s156, 15
        %s158 = scalar_select %p157, %s156, 15
        %s159 = smul.addr %s158, 3
        %s160 = smul.addr %s159, 4
        %s161 = scalar_lea.vmem %s0, %s160
        %s162 = smul.u32 8, %s10
      $region32: #{_lambda_.11} parent=27 // pred_fallthru
        _
    $region28: #{_lambda_.11} parent=5 // pred_fallthru
      _
    %p163 = scmp.le.s32.totalorder 1, %s10
    %p164 = scmp.lt.s32.totalorder %s10, 3
    %p165 = pnand %p163, %p164
    %p166 = pneg %p165
    // Predicated region
    $region33: #{_lambda_.11} parent=5 // pred_check
      _
    $region34: #{_lambda_.11} parent=5 // pred_check_branch
      %168 = sbr.rel (%p165) target = $region36
    $region35: #{_lambda_.11} parent=5 // pred_region
      %s169 = ssub.s32 %s10, 1
      %s170 = smul.u32 8, %s15
      %p171 = scmp.lt.s32.totalorder %s170, 15
      %s172 = scalar_select %p171, %s170, 15
      %s173 = smul.addr %s172, 3
      %s174 = smul.addr %s173, 4
      %s175 = scalar_lea.vmem %s0, %s174
      %p176 = pneg %p36
      %p177 = pneg %p33
      %p178 = pneg %p57
      %p179 = pneg %p54
      %p180 = pneg %p78
      %p181 = pneg %p75
      %p182 = pneg %p99
      %p183 = pneg %p96
      %p184 = pneg %p125
      %p185 = pneg %p122
      %s186 = smul.u32 8, %s15
      %p187 = scmp.lt.s32.totalorder %s186, 15
      %s188 = scalar_select %p187, %s186, 15
      %s189 = smul.addr %s188, 4
      %s190 = scalar_lea.vmem %s4, %s189
      %s191 = smul.u32 8, %s15
      %p192 = scmp.lt.s32.totalorder %s191, 15
      %s193 = scalar_select %p192, %s191, 15
      %s194 = smul.addr %s193, 3
      %s195 = smul.addr %s194, 4
      %s196 = scalar_lea.vmem %s0, %s195
      %s197 = smul.u32 8, %s15
      %s198 = smul.u32 8, %s15
      %p199 = scmp.lt.s32.totalorder %s198, 15
      %s200 = scalar_select %p199, %s198, 15
      %s201 = smul.addr %s200, 4
      %s202 = scalar_lea.vmem %s4, %s201
      %s203 = smul.u32 8, %s15
      %v205 = vld [vmem:[%s196] sm:$0xff]
      %v206 = vld [vmem:[%s196 + $0x8] sm:$0xf]
      %v207 = vld [vmem:[%s196 + $0xc] sm:$0xff]
      %v208 = vld [vmem:[%s196 + $0x14] sm:$0xf]
      %v209 = vld [vmem:[%s196 + $0x18] sm:$0xff]
      %v210 = vld [vmem:[%s196 + $0x20] sm:$0xf]
      %v211 = vld [vmem:[%s196 + $0x24] sm:$0xff]
      %v212 = vld [vmem:[%s196 + $0x2c] sm:$0xf]
      %v213 = vld [vmem:[%s196 + $0x30] sm:$0xff]
      %v214 = vld [vmem:[%s196 + $0x38] sm:$0xf]
      %v215 = vld [vmem:[%s196 + $0x3c] sm:$0xff]
      %v216 = vld [vmem:[%s196 + $0x44] sm:$0xf]
      %v217 = vld [vmem:[%s196 + $0x48] sm:$0xff]
      %v218 = vld [vmem:[%s196 + $0x50] sm:$0xf]
      %v219 = vld [vmem:[%s196 + $0x54] sm:$0xff]
      %v220 = vld [vmem:[%s196 + $0x5c] sm:$0xf]
      %v221 = vld [vmem:[%s1] sm:$0xf]
      %v222 = vld [vmem:[%s1 + $0x4] sm:$0xf]
      %v223 = vld [vmem:[%s1 + $0x8] sm:$0xf]
      %v224 = vld [vmem:[%s1 + $0xc] sm:$0xf]
      %v225 = vld [vmem:[%s1 + $0x10] sm:$0xf]
      %v226 = vld [vmem:[%s1 + $0x14] sm:$0xf]
      %v227 = vld [vmem:[%s1 + $0x18] sm:$0xf]
      %v228 = vld [vmem:[%s1 + $0x1c] sm:$0xf]
      %v229 = vld [vmem:[%s1 + $0x20] sm:$0xf]
      %v230 = vld [vmem:[%s1 + $0x24] sm:$0xf]
      %v231 = vld [vmem:[%s1 + $0x28] sm:$0xf]
      %v232 = vld [vmem:[%s1 + $0x2c] sm:$0xf]
      %v233 = vld [vmem:[%s1 + $0x30] sm:$0xf]
      %v234 = vld [vmem:[%s1 + $0x34] sm:$0xf]
      %v235 = vld [vmem:[%s1 + $0x38] sm:$0xf]
      %v236 = vld [vmem:[%s1 + $0x3c] sm:$0xf]
      %v237 = vld [vmem:[%s1 + $0x40] sm:$0xf]
      %v238 = vld [vmem:[%s1 + $0x44] sm:$0xf]
      %v239 = vld [vmem:[%s1 + $0x48] sm:$0xf]
      %v240 = vld [vmem:[%s1 + $0x4c] sm:$0xf]
      %v241 = vld [vmem:[%s1 + $0x50] sm:$0xf]
      %v242 = vld [vmem:[%s1 + $0x54] sm:$0xf]
      %v243 = vld [vmem:[%s1 + $0x58] sm:$0xf]
      %v244 = vld [vmem:[%s1 + $0x5c] sm:$0xf]
      %v245 = vld [vmem:[%s1 + $0x60] sm:$0xf]
      %v246 = vld [vmem:[%s1 + $0x64] sm:$0xf]
      %v247 = vld [vmem:[%s1 + $0x68] sm:$0xf]
      %v248 = vld [vmem:[%s1 + $0x6c] sm:$0xf]
      %v249 = vld [vmem:[%s1 + $0x70] sm:$0xf]
      %v250 = vld [vmem:[%s1 + $0x74] sm:$0xf]
      %v251 = vld [vmem:[%s1 + $0x78] sm:$0xf]
      %v252 = vld [vmem:[%s1 + $0x7c] sm:$0xf]
      %v253 = vld [vmem:[%s1 + $0x80] sm:$0xf]
      %v254 = vld [vmem:[%s1 + $0x84] sm:$0xf]
      %v255 = vld [vmem:[%s1 + $0x88] sm:$0xf]
      %v256 = vld [vmem:[%s1 + $0x8c] sm:$0xf]
      %v273 = vunpack.c.l.b16 %v205
      %v274 = vunpack.c.h.b16 %v205
      %v275 = vunpack.c.l.b16 %v206
      %v276 = vunpack.c.l.b16 %v207
      %v277 = vunpack.c.h.b16 %v207
      %v278 = vunpack.c.l.b16 %v208
      %v279 = vunpack.c.l.b16 %v209
      %v280 = vunpack.c.h.b16 %v209
      %v281 = vunpack.c.l.b16 %v210
      %v282 = vunpack.c.l.b16 %v211
      %v283 = vunpack.c.h.b16 %v211
      %v284 = vunpack.c.l.b16 %v212
      %v285 = vunpack.c.l.b16 %v213
      %v286 = vunpack.c.h.b16 %v213
      %v287 = vunpack.c.l.b16 %v214
      %v288 = vunpack.c.l.b16 %v215
      %v289 = vunpack.c.h.b16 %v215
      %v290 = vunpack.c.l.b16 %v216
      %v291 = vunpack.c.l.b16 %v217
      %v292 = vunpack.c.h.b16 %v217
      %v293 = vunpack.c.l.b16 %v218
      %v294 = vunpack.c.l.b16 %v219
      %v295 = vunpack.c.h.b16 %v219
      %v296 = vunpack.c.l.b16 %v220
      %v297 = vpack.c.b16 %v276, %v273
      %v298 = vpack.c.b16 %v277, %v274
      %v299 = vpack.c.b16 %v278, %v275
      %v300 = vpack.c.b16 %v282, %v279
      %v301 = vpack.c.b16 %v283, %v280
      %v302 = vpack.c.b16 %v284, %v281
      %v303 = vpack.c.b16 %v288, %v285
      %v304 = vpack.c.b16 %v289, %v286
      %v305 = vpack.c.b16 %v290, %v287
      %v306 = vpack.c.b16 %v294, %v291
      %v307 = vpack.c.b16 %v295, %v292
      %v308 = vpack.c.b16 %v296, %v293
      %v353 = vunpack.c.l.b16 %v221
      %v354 = vunpack.c.l.b16 %v222
      %v355 = vunpack.c.l.b16 %v223
      %v356 = vunpack.c.l.b16 %v224
      %v357 = vunpack.c.l.b16 %v225
      %v358 = vunpack.c.l.b16 %v226
      %v359 = vunpack.c.l.b16 %v227
      %v360 = vunpack.c.l.b16 %v228
      %v361 = vunpack.c.l.b16 %v229
      %v362 = vunpack.c.l.b16 %v230
      %v363 = vunpack.c.l.b16 %v231
      %v364 = vunpack.c.l.b16 %v232
      %v365 = vunpack.c.l.b16 %v233
      %v366 = vunpack.c.l.b16 %v234
      %v367 = vunpack.c.l.b16 %v235
      %v368 = vunpack.c.l.b16 %v236
      %v369 = vunpack.c.l.b16 %v237
      %v370 = vunpack.c.l.b16 %v238
      %v371 = vunpack.c.l.b16 %v239
      %v372 = vunpack.c.l.b16 %v240
      %v373 = vunpack.c.l.b16 %v241
      %v374 = vunpack.c.l.b16 %v242
      %v375 = vunpack.c.l.b16 %v243
      %v376 = vunpack.c.l.b16 %v244
      %v377 = vunpack.c.l.b16 %v245
      %v378 = vunpack.c.l.b16 %v246
      %v379 = vunpack.c.l.b16 %v247
      %v380 = vunpack.c.l.b16 %v248
      %v381 = vunpack.c.l.b16 %v249
      %v382 = vunpack.c.l.b16 %v250
      %v383 = vunpack.c.l.b16 %v251
      %v384 = vunpack.c.l.b16 %v252
      %v385 = vunpack.c.l.b16 %v253
      %v386 = vunpack.c.l.b16 %v254
      %v387 = vunpack.c.l.b16 %v255
      %v388 = vunpack.c.l.b16 %v256
      %v389 = vpack.c.b16 %v354, %v353
      %v390 = vpack.c.b16 %v356, %v355
      %v391 = vpack.c.b16 %v358, %v357
      %v392 = vpack.c.b16 %v360, %v359
      %v393 = vpack.c.b16 %v362, %v361
      %v394 = vpack.c.b16 %v364, %v363
      %v395 = vpack.c.b16 %v366, %v365
      %v396 = vpack.c.b16 %v368, %v367
      %v397 = vpack.c.b16 %v370, %v369
      %v398 = vpack.c.b16 %v372, %v371
      %v399 = vpack.c.b16 %v374, %v373
      %v400 = vpack.c.b16 %v376, %v375
      %v401 = vpack.c.b16 %v378, %v377
      %v402 = vpack.c.b16 %v380, %v379
      %v403 = vpack.c.b16 %v382, %v381
      %v404 = vpack.c.b16 %v384, %v383
      %v405 = vpack.c.b16 %v386, %v385
      %v406 = vpack.c.b16 %v388, %v387
      %vm425 = vcmask 261120
      %v427 = vsel %vm425, %v299, 0
      %v430 = vsel %vm425, %v302, 0
      %v433 = vsel %vm425, %v305, 0
      %v436 = vsel %vm425, %v308, 0
      %438 = vmatprep.subr.bf16.mxu0 0
      %439 = vmatpush1.bf16.msra.mxu0 %v396
      %440 = vmatprep.subr.bf16.mxu0 0
      %441 = vmatpush1.bf16.msra.mxu0 %v395
      %442 = vmatprep.subr.bf16.mxu0 0
      %443 = vmatpush1.bf16.msra.mxu0 %v394
      %444 = vmatprep.subr.bf16.mxu0 0
      %445 = vmatpush1.bf16.msra.mxu0 %v393
      %446 = vmatprep.subr.bf16.mxu0 0
      %447 = vmatpush1.bf16.msra.mxu0 %v392
      %448 = vmatprep.subr.bf16.mxu0 0
      %449 = vmatpush1.bf16.msra.mxu0 %v391
      %450 = vmatprep.subr.bf16.mxu0 0
      %451 = vmatpush1.bf16.msra.mxu0 %v390
      %452 = vmatprep.subr.bf16.mxu0 0
      %453 = vmatpush1.bf16.msra.mxu0 %v389
      %454 = vmatprep.subr.bf16.mxu0 0
      %455 = vmatpush2.bf16.msra.mxu0 %v404
      %456 = vmatprep.subr.bf16.mxu0 0
      %457 = vmatpush2.bf16.msra.mxu0 %v403
      %458 = vmatprep.subr.bf16.mxu0 0
      %459 = vmatpush2.bf16.msra.mxu0 %v402
      %460 = vmatprep.subr.bf16.mxu0 0
      %461 = vmatpush2.bf16.msra.mxu0 %v401
      %462 = vmatprep.subr.bf16.mxu0 0
      %463 = vmatpush2.bf16.msra.mxu0 %v400
      %464 = vmatprep.subr.bf16.mxu0 0
      %465 = vmatpush2.bf16.msra.mxu0 %v399
      %466 = vmatprep.subr.bf16.mxu0 0
      %467 = vmatpush2.bf16.msra.mxu0 %v398
      %468 = vmatprep.subr.bf16.mxu0 0
      %469 = vmatpush2.bf16.msra.mxu0 %v397
      %470 = vmatprep.mubr.bf16.mxu0 %v298
      %471 = vmatmul.mubr.bf16.gmra.mxu0 %v297
      %v472 = vpop.f32.mrf.mxu0
      %v473 = vadd.f32 0.0, %v472
      %v474 = vpop.f32.mrf.mxu0
      %v475 = vpop.f32.mrf.mxu0
      %v476 = vadd.f32 0.0, %v475
      %v477 = vpop.f32.mrf.mxu0
      %478 = vmatprep.mubr.bf16.mxu0 %v301
      %479 = vmatmul.mubr.bf16.gmra.mxu0 %v300
      %v480 = vpop.f32.mrf.mxu0
      %v481 = vadd.f32 0.0, %v480
      %v482 = vpop.f32.mrf.mxu0
      %v483 = vpop.f32.mrf.mxu0
      %v484 = vadd.f32 0.0, %v483
      %v485 = vpop.f32.mrf.mxu0
      %486 = vmatprep.mubr.bf16.mxu0 %v304
      %487 = vmatmul.mubr.bf16.gmra.mxu0 %v303
      %v488 = vpop.f32.mrf.mxu0
      %v489 = vadd.f32 0.0, %v488
      %v490 = vpop.f32.mrf.mxu0
      %v491 = vpop.f32.mrf.mxu0
      %v492 = vadd.f32 0.0, %v491
      %v493 = vpop.f32.mrf.mxu0
      %494 = vmatprep.mubr.bf16.mxu0 %v307
      %495 = vmatmul.mubr.bf16.gmra.mxu0 %v306
      %v496 = vpop.f32.mrf.mxu0
      %v497 = vadd.f32 0.0, %v496
      %v498 = vpop.f32.mrf.mxu0
      %v499 = vpop.f32.mrf.mxu0
      %v500 = vadd.f32 0.0, %v499
      %v501 = vpop.f32.mrf.mxu0
      %502 = vdwg.mxu0
      %503 = vmatprep.subr.bf16.mxu0 0
      %504 = vmatpush1.bf16.msra.mxu0 0
      %505 = vmatprep.subr.bf16.mxu0 0
      %506 = vmatpush1.bf16.msra.mxu0 0
      %507 = vmatprep.subr.bf16.mxu0 0
      %508 = vmatpush1.bf16.msra.mxu0 0
      %509 = vmatprep.subr.bf16.mxu0 0
      %510 = vmatpush1.bf16.msra.mxu0 0
      %511 = vmatprep.subr.bf16.mxu0 0
      %512 = vmatpush1.bf16.msra.mxu0 0
      %513 = vmatprep.subr.bf16.mxu0 0
      %514 = vmatpush1.bf16.msra.mxu0 0
      %515 = vmatprep.subr.bf16.mxu0 0
      %516 = vmatpush1.bf16.msra.mxu0 %v406
      %517 = vmatprep.subr.bf16.mxu0 0
      %518 = vmatpush1.bf16.msra.mxu0 %v405
      %519 = vmatprep.subr.bf16.mxu0 0
      %520 = vmatpush2.bf16.msra.mxu0 0
      %521 = vmatprep.subr.bf16.mxu0 0
      %522 = vmatpush2.bf16.msra.mxu0 0
      %523 = vmatprep.subr.bf16.mxu0 0
      %524 = vmatpush2.bf16.msra.mxu0 0
      %525 = vmatprep.subr.bf16.mxu0 0
      %526 = vmatpush2.bf16.msra.mxu0 0
      %527 = vmatprep.subr.bf16.mxu0 0
      %528 = vmatpush2.bf16.msra.mxu0 0
      %529 = vmatprep.subr.bf16.mxu0 0
      %530 = vmatpush2.bf16.msra.mxu0 0
      %531 = vmatprep.subr.bf16.mxu0 0
      %532 = vmatpush2.bf16.msra.mxu0 0
      %533 = vmatprep.subr.bf16.mxu0 0
      %534 = vmatpush2.bf16.msra.mxu0 0
      %535 = vmatprep.mubr.bf16.mxu0 0
      %536 = vmatmul.mubr.bf16.gmra.mxu0 %v427
      %v537 = vpop.f32.mrf.mxu0
      %v538 = vadd.f32 %v473, %v537
      %v539 = vpop.f32.mrf.mxu0
      %v540 = vpop.f32.mrf.mxu0
      %v541 = vadd.f32 %v476, %v540
      %v542 = vpop.f32.mrf.mxu0
      %543 = vmatprep.mubr.bf16.mxu0 0
      %544 = vmatmul.mubr.bf16.gmra.mxu0 %v430
      %v545 = vpop.f32.mrf.mxu0
      %v546 = vadd.f32 %v481, %v545
      %v547 = vpop.f32.mrf.mxu0
      %v548 = vpop.f32.mrf.mxu0
      %v549 = vadd.f32 %v484, %v548
      %v550 = vpop.f32.mrf.mxu0
      %551 = vmatprep.mubr.bf16.mxu0 0
      %552 = vmatmul.mubr.bf16.gmra.mxu0 %v433
      %v553 = vpop.f32.mrf.mxu0
      %v554 = vadd.f32 %v489, %v553
      %v555 = vpop.f32.mrf.mxu0
      %v556 = vpop.f32.mrf.mxu0
      %v557 = vadd.f32 %v492, %v556
      %v558 = vpop.f32.mrf.mxu0
      %559 = vmatprep.mubr.bf16.mxu0 0
      %560 = vmatmul.mubr.bf16.gmra.mxu0 %v436
      %v561 = vpop.f32.mrf.mxu0
      %v562 = vadd.f32 %v497, %v561
      %v563 = vpop.f32.mrf.mxu0
      %v564 = vpop.f32.mrf.mxu0
      %v565 = vadd.f32 %v500, %v564
      %v566 = vpop.f32.mrf.mxu0
      %567 = vdwg.mxu0
      %v568 = vld [vmem:[%s2] sm:$0x1]
      %v570 = vlaneseq
      %v571 = vshrl.u32 %v570, 7
      %v572 = vsub.s32 0, %v571
      %v573 = vrot.slane %v568, %v572
      %v575 = vmul.f32 %v538, %v573
      %v576 = vmul.f32 %v541, %v573
      %v577 = vmul.f32 %v546, %v573
      %v578 = vmul.f32 %v549, %v573
      %v579 = vmul.f32 %v554, %v573
      %v580 = vmul.f32 %v557, %v573
      %v581 = vmul.f32 %v562, %v573
      %v582 = vmul.f32 %v565, %v573
      %v583 = vld [vmem:[%s3] sm:$0x1]
      %v585 = vlaneseq
      %v586 = vshrl.u32 %v585, 7
      %v587 = vsub.s32 0, %v586
      %v588 = vrot.slane %v583, %v587
      %v590 = vadd.f32 %v575, %v588
      %v591 = vadd.f32 %v576, %v588
      %v592 = vadd.f32 %v577, %v588
      %v593 = vadd.f32 %v578, %v588
      %v594 = vadd.f32 %v579, %v588
      %v595 = vadd.f32 %v580, %v588
      %v596 = vadd.f32 %v581, %v588
      %v597 = vadd.f32 %v582, %v588
      %v598 = vmax.f32 %v590, 0.0
      %v599 = vmax.f32 %v591, 0.0
      %v600 = vmax.f32 %v592, 0.0
      %v601 = vmax.f32 %v593, 0.0
      %v602 = vmax.f32 %v594, 0.0
      %v603 = vmax.f32 %v595, 0.0
      %v604 = vmax.f32 %v596, 0.0
      %v605 = vmax.f32 %v597, 0.0
      %v606 = vpack.c.bf16 %v599, %v598
      %v607 = vpack.c.bf16 %v601, %v600
      %v608 = vpack.c.bf16 %v603, %v602
      %v609 = vpack.c.bf16 %v605, %v604
      %v614 = vunpack.c.l.b16 %v606
      %v615 = vunpack.c.h.b16 %v606
      %v616 = vunpack.c.l.b16 %v607
      %v617 = vunpack.c.h.b16 %v607
      %v618 = vunpack.c.l.b16 %v608
      %v619 = vunpack.c.h.b16 %v608
      %v620 = vunpack.c.l.b16 %v609
      %v621 = vunpack.c.h.b16 %v609
      %v622 = vpack.c.b16 %v614, %v614
      %v623 = vpack.c.b16 %v615, %v615
      %v624 = vpack.c.b16 %v616, %v616
      %v625 = vpack.c.b16 %v617, %v617
      %v626 = vpack.c.b16 %v618, %v618
      %v627 = vpack.c.b16 %v619, %v619
      %v628 = vpack.c.b16 %v620, %v620
      %v629 = vpack.c.b16 %v621, %v621
      %vm638 = vcmask 519168
      %639 = vst.msk [vmem:[%s202] sm:$0xf] %vm638, %v622
      %640 = vst.msk [vmem:[%s202 + $0x4] sm:$0xf] %vm638, %v623
      %641 = vst.msk [vmem:[%s202 + $0x8] sm:$0xf] %vm638, %v624
      %642 = vst.msk [vmem:[%s202 + $0xc] sm:$0xf] %vm638, %v625
      %643 = vst.msk [vmem:[%s202 + $0x10] sm:$0xf] %vm638, %v626
      %644 = vst.msk [vmem:[%s202 + $0x14] sm:$0xf] %vm638, %v627
      %645 = vst.msk [vmem:[%s202 + $0x18] sm:$0xf] %vm638, %v628
      %646 = vst.msk [vmem:[%s202 + $0x1c] sm:$0xf] %vm638, %v629
      %s647 = smul.u32 8, %s15
      %p648 = scmp.lt.s32.totalorder %s647, 15
      %s649 = scalar_select %p648, %s647, 15
      %s650 = smul.addr %s649, 4
      %s651 = scalar_lea.vmem %s4, %s650
      // Predicated region
      $region37: #{_lambda_.11} parent=35 // pred_check
        %p652 = pneg %p122
      $region38: #{_lambda_.11} parent=35 // pred_check_branch
        %654 = sbr.rel (%p652) target = $region40
      $region39: #{_lambda_.11} parent=35 // pred_region
        %s655 = smul.u32 8, %s15
      $region40: #{_lambda_.11} parent=35 // pred_fallthru
        _
    $region36: #{_lambda_.11} parent=5 // pred_fallthru
      _
    %p656 = scmp.le.s32.totalorder 2, %s10
    // Predicated region
    $region41: #{_lambda_.11} parent=5 // pred_check
      %p657 = pneg %p656
    $region42: #{_lambda_.11} parent=5 // pred_check_branch
      %659 = sbr.rel (%p657) target = $region44
    $region43: #{_lambda_.11} parent=5 // pred_region
      %s660 = ssub.s32 %s10, 2
      // Predicated region
      $region45: #{_lambda_.11} parent=43 // pred_check
        %p661 = pneg %p128
      $region46: #{_lambda_.11} parent=43 // pred_check_branch
        %663 = sbr.rel (%p661) target = $region48
      $region47: #{_lambda_.11} parent=43 // pred_region
        %s664 = smul.u32 8, %s16
        %p665 = scmp.lt.s32.totalorder %s664, 15
        %s666 = scalar_select %p665, %s664, 15
        %s667 = smul.addr %s666, 4
        %s668 = scalar_lea.vmem %s4, %s667
      $region48: #{_lambda_.11} parent=43 // pred_fallthru
        _
    $region44: #{_lambda_.11} parent=5 // pred_fallthru
      _
  $region6: #{_lambda_.11} parent=0 // loop_footer
    %s14 = sadd.s32 1, %s10
  $region7: #{_lambda_.11} parent=0 // loop_footer_branch
    %9 = sbr.rel target = $region3
  $region8: #{_lambda_.11} parent=0 // loop_exit
    _

// kernel: _lambda_.12
$region0: #{_lambda_.12}
  #allocation0 [shape = 'u32[]', space=smem, size = 0x4, offset = 0x4, fixed_abs, tag = 'smem constant byte address 0x4 - core index']
  #allocation1 [shape = 'u32[144,128]{1,0:T(1,128)}', space=vmem, size = 0x12000, scoped, tag = 'internal scratch']
  %s0 = inlined_call_operand.vmem [shape: bf16[128,576], index: 0, kind: input, shape index: {}]
  %s1 = inlined_call_operand.vmem [shape: bf16[576,64], index: 1, kind: input, shape index: {}]
  %s2 = inlined_call_operand.vmem [shape: f32[1,64], index: 2, kind: input, shape index: {}]
  %s3 = inlined_call_operand.vmem [shape: f32[1,64], index: 3, kind: input, shape index: {}]
  %s4 = inlined_call_operand.vmem [shape: bf16[128,32], index: 4, kind: input, shape index: {}]
  %s5 = inlined_call_operand.vmem [shape: bf16[32,64], index: 5, kind: input, shape index: {}]
  %s6 = inlined_call_operand.vmem [shape: f32[1,64], index: 6, kind: input, shape index: {}]
  %s7 = inlined_call_operand.vmem [shape: f32[1,64], index: 7, kind: input, shape index: {}]
  %s8 = inlined_call_operand.vmem [shape: bf16[128,64], index: 8, kind: output, shape index: {}]
  %s9 = sld [smem:[#allocation0]]
  $region65: #{_lambda_.12} parent=0
    _
  %s11 = ssub.s32 1, %s9
  %s12 = scalar_select 0, %s11, %s9
  loop: start=0, step=1, limit=4
  $region2: #{_lambda_.12} parent=0 // loop_pre_header
    _
  $region3: #{_lambda_.12} parent=0 // loop_header
    %s14 = sphi 0, %s18
    %p15 = scmp.ge.s32.totalorder %s14, 4
    %s24 = sphi 0, %s26
    %s27 = sphi 0, %s24
    %s28 = sphi 0, %s27
    %s44 = sphi 0, %s28
    %s48 = sphi 0, %s48
    %s50 = sphi 0, %s48
    %s51 = sphi 0, %s50
    %s65 = sphi 0, %s51
    %s69 = sphi 0, %s69
    %s71 = sphi 0, %s69
    %s72 = sphi 0, %s71
    %s86 = sphi 0, %s72
    %s90 = sphi 0, %s90
    %s92 = sphi 0, %s90
    %s93 = sphi 0, %s92
    %s107 = sphi 0, %s93
    %s113 = sphi 0, %s115
    %s116 = sphi 0, %s113
    %s117 = sphi 0, %s116
    %s133 = sphi 0, %s117
    %s137 = sphi 0, %s137
    %s139 = sphi 0, %s137
    %s140 = sphi 0, %s139
    %s154 = sphi 0, %s140
    %s158 = sphi 0, %s158
    %s160 = sphi 0, %s158
    %s161 = sphi 0, %s160
    %s175 = sphi 0, %s161
    %s179 = sphi 0, %s179
    %s181 = sphi 0, %s179
    %s182 = sphi 0, %s181
    %s196 = sphi 0, %s182
    %s202 = sphi 0, %s204
    %s205 = sphi 0, %s202
    %s206 = sphi 0, %s205
    %s222 = sphi 0, %s206
  $region4: #{_lambda_.12} parent=0 // loop_header_branch
    %17 = sbr.rel (%p15) target = $region8
  $region5: #{_lambda_.12} parent=0 // loop_body
    %s19 = ssub.s32 %s14, 1
    %s20 = ssub.s32 %s14, 2
    %s21 = sadd.s32 %s14, 1
    %s22 = ssub.s32 %s14, %s21
    %p23 = scmp.eq.s32.totalorder %s22, 0
    %s25 = sadd.s32 %s24, 1
    %s26 = scalar_select %p23, %s24, %s25
    %p29 = pneg %p23
    %p30 = scmp.eq.s32.totalorder %s14, 1
    %p31 = por %p29, %p30
    %p32 = scmp.ne.s32.totalorder %s24, %s27
    %p33 = scmp.eq.s32.totalorder %s14, 0
    %p34 = por %p32, %p33
    %p35 = scmp.ne.s32.totalorder %s24, %s27
    %p36 = scmp.eq.s32.totalorder %s19, 1
    %p37 = por %p35, %p36
    %p38 = scmp.ne.s32.totalorder %s27, %s28
    %p39 = scmp.eq.s32.totalorder %s19, 0
    %p40 = por %p38, %p39
    %p41 = scmp.ne.s32.totalorder %s27, %s28
    %p42 = scmp.eq.s32.totalorder %s20, 1
    %p43 = por %p41, %p42
    %p45 = scmp.ne.s32.totalorder %s28, %s44
    %p46 = scmp.eq.s32.totalorder %s20, 0
    %p47 = por %p45, %p46
    %s49 = sadd.s32 %s48, 1
    %p52 = scmp.eq.s32.totalorder %s14, 1
    %p53 = scmp.ne.s32.totalorder %s48, %s50
    %p54 = scmp.eq.s32.totalorder %s14, 0
    %p55 = por %p53, %p54
    %p56 = scmp.ne.s32.totalorder %s48, %s50
    %p57 = scmp.eq.s32.totalorder %s19, 1
    %p58 = por %p56, %p57
    %p59 = scmp.ne.s32.totalorder %s50, %s51
    %p60 = scmp.eq.s32.totalorder %s19, 0
    %p61 = por %p59, %p60
    %p62 = scmp.ne.s32.totalorder %s50, %s51
    %p63 = scmp.eq.s32.totalorder %s20, 1
    %p64 = por %p62, %p63
    %p66 = scmp.ne.s32.totalorder %s51, %s65
    %p67 = scmp.eq.s32.totalorder %s20, 0
    %p68 = por %p66, %p67
    %s70 = sadd.s32 %s69, 1
    %p73 = scmp.eq.s32.totalorder %s14, 1
    %p74 = scmp.ne.s32.totalorder %s69, %s71
    %p75 = scmp.eq.s32.totalorder %s14, 0
    %p76 = por %p74, %p75
    %p77 = scmp.ne.s32.totalorder %s69, %s71
    %p78 = scmp.eq.s32.totalorder %s19, 1
    %p79 = por %p77, %p78
    %p80 = scmp.ne.s32.totalorder %s71, %s72
    %p81 = scmp.eq.s32.totalorder %s19, 0
    %p82 = por %p80, %p81
    %p83 = scmp.ne.s32.totalorder %s71, %s72
    %p84 = scmp.eq.s32.totalorder %s20, 1
    %p85 = por %p83, %p84
    %p87 = scmp.ne.s32.totalorder %s72, %s86
    %p88 = scmp.eq.s32.totalorder %s20, 0
    %p89 = por %p87, %p88
    %s91 = sadd.s32 %s90, 1
    %p94 = scmp.eq.s32.totalorder %s14, 1
    %p95 = scmp.ne.s32.totalorder %s90, %s92
    %p96 = scmp.eq.s32.totalorder %s14, 0
    %p97 = por %p95, %p96
    %p98 = scmp.ne.s32.totalorder %s90, %s92
    %p99 = scmp.eq.s32.totalorder %s19, 1
    %p100 = por %p98, %p99
    %p101 = scmp.ne.s32.totalorder %s92, %s93
    %p102 = scmp.eq.s32.totalorder %s19, 0
    %p103 = por %p101, %p102
    %p104 = scmp.ne.s32.totalorder %s92, %s93
    %p105 = scmp.eq.s32.totalorder %s20, 1
    %p106 = por %p104, %p105
    %p108 = scmp.ne.s32.totalorder %s93, %s107
    %p109 = scmp.eq.s32.totalorder %s20, 0
    %p110 = por %p108, %p109
    %s111 = ssub.s32 %s14, %s21
    %p112 = scmp.eq.s32.totalorder %s111, 0
    %s114 = sadd.s32 %s113, 1
    %s115 = scalar_select %p112, %s113, %s114
    %p118 = pneg %p112
    %p119 = scmp.eq.s32.totalorder %s14, 1
    %p120 = por %p118, %p119
    %p121 = scmp.ne.s32.totalorder %s113, %s116
    %p122 = scmp.eq.s32.totalorder %s14, 0
    %p123 = por %p121, %p122
    %p124 = scmp.ne.s32.totalorder %s113, %s116
    %p125 = scmp.eq.s32.totalorder %s19, 1
    %p126 = por %p124, %p125
    %p127 = scmp.ne.s32.totalorder %s116, %s117
    %p128 = scmp.eq.s32.totalorder %s19, 0
    %p129 = por %p127, %p128
    %p130 = scmp.ne.s32.totalorder %s116, %s117
    %p131 = scmp.eq.s32.totalorder %s20, 1
    %p132 = por %p130, %p131
    %p134 = scmp.ne.s32.totalorder %s117, %s133
    %p135 = scmp.eq.s32.totalorder %s20, 0
    %p136 = por %p134, %p135
    %s138 = sadd.s32 %s137, 1
    %p141 = scmp.eq.s32.totalorder %s14, 1
    %p142 = scmp.ne.s32.totalorder %s137, %s139
    %p143 = scmp.eq.s32.totalorder %s14, 0
    %p144 = por %p142, %p143
    %p145 = scmp.ne.s32.totalorder %s137, %s139
    %p146 = scmp.eq.s32.totalorder %s19, 1
    %p147 = por %p145, %p146
    %p148 = scmp.ne.s32.totalorder %s139, %s140
    %p149 = scmp.eq.s32.totalorder %s19, 0
    %p150 = por %p148, %p149
    %p151 = scmp.ne.s32.totalorder %s139, %s140
    %p152 = scmp.eq.s32.totalorder %s20, 1
    %p153 = por %p151, %p152
    %p155 = scmp.ne.s32.totalorder %s140, %s154
    %p156 = scmp.eq.s32.totalorder %s20, 0
    %p157 = por %p155, %p156
    %s159 = sadd.s32 %s158, 1
    %p162 = scmp.eq.s32.totalorder %s14, 1
    %p163 = scmp.ne.s32.totalorder %s158, %s160
    %p164 = scmp.eq.s32.totalorder %s14, 0
    %p165 = por %p163, %p164
    %p166 = scmp.ne.s32.totalorder %s158, %s160
    %p167 = scmp.eq.s32.totalorder %s19, 1
    %p168 = por %p166, %p167
    %p169 = scmp.ne.s32.totalorder %s160, %s161
    %p170 = scmp.eq.s32.totalorder %s19, 0
    %p171 = por %p169, %p170
    %p172 = scmp.ne.s32.totalorder %s160, %s161
    %p173 = scmp.eq.s32.totalorder %s20, 1
    %p174 = por %p172, %p173
    %p176 = scmp.ne.s32.totalorder %s161, %s175
    %p177 = scmp.eq.s32.totalorder %s20, 0
    %p178 = por %p176, %p177
    %s180 = sadd.s32 %s179, 1
    %p183 = scmp.eq.s32.totalorder %s14, 1
    %p184 = scmp.ne.s32.totalorder %s179, %s181
    %p185 = scmp.eq.s32.totalorder %s14, 0
    %p186 = por %p184, %p185
    %p187 = scmp.ne.s32.totalorder %s179, %s181
    %p188 = scmp.eq.s32.totalorder %s19, 1
    %p189 = por %p187, %p188
    %p190 = scmp.ne.s32.totalorder %s181, %s182
    %p191 = scmp.eq.s32.totalorder %s19, 0
    %p192 = por %p190, %p191
    %p193 = scmp.ne.s32.totalorder %s181, %s182
    %p194 = scmp.eq.s32.totalorder %s20, 1
    %p195 = por %p193, %p194
    %p197 = scmp.ne.s32.totalorder %s182, %s196
    %p198 = scmp.eq.s32.totalorder %s20, 0
    %p199 = por %p197, %p198
    %s200 = ssub.s32 %s14, %s21
    %p201 = scmp.eq.s32.totalorder %s200, 0
    %s203 = sadd.s32 %s202, 1
    %s204 = scalar_select %p201, %s202, %s203
    %p207 = pneg %p201
    %p208 = scmp.eq.s32.totalorder %s14, 1
    %p209 = por %p207, %p208
    %p210 = scmp.ne.s32.totalorder %s202, %s205
    %p211 = scmp.eq.s32.totalorder %s14, 0
    %p212 = por %p210, %p211
    %p213 = scmp.ne.s32.totalorder %s202, %s205
    %p214 = scmp.eq.s32.totalorder %s19, 1
    %p215 = por %p213, %p214
    %p216 = scmp.ne.s32.totalorder %s205, %s206
    %p217 = scmp.eq.s32.totalorder %s19, 0
    %p218 = por %p216, %p217
    %p219 = scmp.ne.s32.totalorder %s205, %s206
    %p220 = scmp.eq.s32.totalorder %s20, 1
    %p221 = por %p219, %p220
    %p223 = scmp.ne.s32.totalorder %s206, %s222
    %p224 = scmp.eq.s32.totalorder %s20, 0
    %p225 = por %p223, %p224
    %p226 = scmp.le.s32.totalorder 1, %s14
    %p227 = scmp.lt.s32.totalorder %s14, 3
    %p228 = pnand %p226, %p227
    %p229 = pneg %p228
    // Predicated region
    $region9: #{_lambda_.12} parent=5 // pred_check
      _
    $region10: #{_lambda_.12} parent=5 // pred_check_branch
      %231 = sbr.rel (%p228) target = $region12
    $region11: #{_lambda_.12} parent=5 // pred_region
      %s232 = ssub.s32 %s14, 1
      // Predicated region
      $region13: #{_lambda_.12} parent=11 // pred_check
        %p233 = pneg %p61
      $region14: #{_lambda_.12} parent=11 // pred_check_branch
        %235 = sbr.rel (%p233) target = $region16
      $region15: #{_lambda_.12} parent=11 // pred_region
        _
      $region16: #{_lambda_.12} parent=11 // pred_fallthru
        _
      // Predicated region
      $region17: #{_lambda_.12} parent=11 // pred_check
        %p236 = pneg %p82
      $region18: #{_lambda_.12} parent=11 // pred_check_branch
        %238 = sbr.rel (%p236) target = $region20
      $region19: #{_lambda_.12} parent=11 // pred_region
        _
      $region20: #{_lambda_.12} parent=11 // pred_fallthru
        _
      // Predicated region
      $region21: #{_lambda_.12} parent=11 // pred_check
        %p239 = pneg %p103
      $region22: #{_lambda_.12} parent=11 // pred_check_branch
        %241 = sbr.rel (%p239) target = $region24
      $region23: #{_lambda_.12} parent=11 // pred_region
        _
      $region24: #{_lambda_.12} parent=11 // pred_fallthru
        _
      // Predicated region
      $region25: #{_lambda_.12} parent=11 // pred_check
        %p242 = pneg %p150
      $region26: #{_lambda_.12} parent=11 // pred_check_branch
        %244 = sbr.rel (%p242) target = $region28
      $region27: #{_lambda_.12} parent=11 // pred_region
        _
      $region28: #{_lambda_.12} parent=11 // pred_fallthru
        _
      // Predicated region
      $region29: #{_lambda_.12} parent=11 // pred_check
        %p245 = pneg %p171
      $region30: #{_lambda_.12} parent=11 // pred_check_branch
        %247 = sbr.rel (%p245) target = $region32
      $region31: #{_lambda_.12} parent=11 // pred_region
        _
      $region32: #{_lambda_.12} parent=11 // pred_fallthru
        _
      // Predicated region
      $region33: #{_lambda_.12} parent=11 // pred_check
        %p248 = pneg %p192
      $region34: #{_lambda_.12} parent=11 // pred_check_branch
        %250 = sbr.rel (%p248) target = $region36
      $region35: #{_lambda_.12} parent=11 // pred_region
        _
      $region36: #{_lambda_.12} parent=11 // pred_fallthru
        _
    $region12: #{_lambda_.12} parent=5 // pred_fallthru
      _
    %p251 = scmp.lt.s32.totalorder %s14, 2
    // Predicated region
    $region37: #{_lambda_.12} parent=5 // pred_check
      %p252 = pneg %p251
    $region38: #{_lambda_.12} parent=5 // pred_check_branch
      %254 = sbr.rel (%p252) target = $region40
    $region39: #{_lambda_.12} parent=5 // pred_region
      // Predicated region
      $region41: #{_lambda_.12} parent=39 // pred_check
        %p255 = pneg %p34
      $region42: #{_lambda_.12} parent=39 // pred_check_branch
        %257 = sbr.rel (%p255) target = $region44
      $region43: #{_lambda_.12} parent=39 // pred_region
        %s258 = smul.u32 8, %s14
        %p259 = scmp.lt.s32.totalorder %s258, 15
        %s260 = scalar_select %p259, %s258, 15
        %s261 = smul.addr %s260, 5
        %s262 = smul.addr %s261, 4
        %s263 = scalar_lea.vmem %s0, %s262
        %s264 = smul.u32 8, %s14
      $region44: #{_lambda_.12} parent=39 // pred_fallthru
        _
      // Predicated region
      $region45: #{_lambda_.12} parent=39 // pred_check
        %p265 = pneg %p123
      $region46: #{_lambda_.12} parent=39 // pred_check_branch
        %267 = sbr.rel (%p265) target = $region48
      $region47: #{_lambda_.12} parent=39 // pred_region
        %s268 = smul.u32 8, %s14
        %p269 = scmp.lt.s32.totalorder %s268, 15
        %s270 = scalar_select %p269, %s268, 15
        %s271 = smul.addr %s270, 4
        %s272 = scalar_lea.vmem %s4, %s271
        %s273 = smul.u32 8, %s14
      $region48: #{_lambda_.12} parent=39 // pred_fallthru
        _
    $region40: #{_lambda_.12} parent=5 // pred_fallthru
      _
    %p274 = scmp.le.s32.totalorder 1, %s14
    %p275 = scmp.lt.s32.totalorder %s14, 3
    %p276 = pnand %p274, %p275
    %p277 = pneg %p276
    // Predicated region
    $region49: #{_lambda_.12} parent=5 // pred_check
      _
    $region50: #{_lambda_.12} parent=5 // pred_check_branch
      %279 = sbr.rel (%p276) target = $region52
    $region51: #{_lambda_.12} parent=5 // pred_region
      %s280 = ssub.s32 %s14, 1
      %s281 = smul.u32 8, %s19
      %p282 = scmp.lt.s32.totalorder %s281, 15
      %s283 = scalar_select %p282, %s281, 15
      %s284 = smul.addr %s283, 5
      %s285 = smul.addr %s284, 4
      %s286 = scalar_lea.vmem %s0, %s285
      %p287 = pneg %p40
      %p288 = pneg %p37
      %p289 = pneg %p61
      %p290 = pneg %p58
      %p291 = pneg %p82
      %p292 = pneg %p79
      %p293 = pneg %p103
      %p294 = pneg %p100
      %s295 = smul.u32 8, %s19
      %p296 = scmp.lt.s32.totalorder %s295, 15
      %s297 = scalar_select %p296, %s295, 15
      %s298 = smul.addr %s297, 4
      %s299 = scalar_lea.vmem %s4, %s298
      %p300 = pneg %p129
      %p301 = pneg %p126
      %p302 = pneg %p150
      %p303 = pneg %p147
      %p304 = pneg %p171
      %p305 = pneg %p168
      %p306 = pneg %p192
      %p307 = pneg %p189
      %p308 = pneg %p218
      %p309 = pneg %p215
      %s310 = smul.u32 8, %s19
      %p311 = scmp.lt.s32.totalorder %s310, 15
      %s312 = scalar_select %p311, %s310, 15
      %s313 = smul.addr %s312, 4
      %s314 = scalar_lea.vmem %s8, %s313
      %s315 = smul.u32 8, %s19
      %p316 = scmp.lt.s32.totalorder %s315, 15
      %s317 = scalar_select %p316, %s315, 15
      %s318 = smul.addr %s317, 5
      %s319 = smul.addr %s318, 4
      %s320 = scalar_lea.vmem %s0, %s319
      %s321 = smul.u32 8, %s19
      %s322 = smul.u32 8, %s19
      %p323 = scmp.lt.s32.totalorder %s322, 15
      %s324 = scalar_select %p323, %s322, 15
      %s325 = smul.addr %s324, 4
      %s326 = scalar_lea.vmem %s4, %s325
      %s327 = smul.u32 8, %s19
      %s328 = smul.u32 8, %s19
      %p329 = scmp.lt.s32.totalorder %s328, 15
      %s330 = scalar_select %p329, %s328, 15
      %s331 = smul.addr %s330, 4
      %s332 = scalar_lea.vmem %s8, %s331
      %s333 = smul.u32 8, %s19
      %v335 = vld [vmem:[%s320] sm:$0xff]
      %v336 = vld [vmem:[%s320 + $0x8] sm:$0xff]
      %v337 = vld [vmem:[%s320 + $0x10] sm:$0xf]
      %v338 = vld [vmem:[%s320 + $0x14] sm:$0xff]
      %v339 = vld [vmem:[%s320 + $0x1c] sm:$0xff]
      %v340 = vld [vmem:[%s320 + $0x24] sm:$0xf]
      %v341 = vld [vmem:[%s320 + $0x28] sm:$0xff]
      %v342 = vld [vmem:[%s320 + $0x30] sm:$0xff]
      %v343 = vld [vmem:[%s320 + $0x38] sm:$0xf]
      %v344 = vld [vmem:[%s320 + $0x3c] sm:$0xff]
      %v345 = vld [vmem:[%s320 + $0x44] sm:$0xff]
      %v346 = vld [vmem:[%s320 + $0x4c] sm:$0xf]
      %v347 = vld [vmem:[%s320 + $0x50] sm:$0xff]
      %v348 = vld [vmem:[%s320 + $0x58] sm:$0xff]
      %v349 = vld [vmem:[%s320 + $0x60] sm:$0xf]
      %v350 = vld [vmem:[%s320 + $0x64] sm:$0xff]
      %v351 = vld [vmem:[%s320 + $0x6c] sm:$0xff]
      %v352 = vld [vmem:[%s320 + $0x74] sm:$0xf]
      %v353 = vld [vmem:[%s320 + $0x78] sm:$0xff]
      %v354 = vld [vmem:[%s320 + $0x80] sm:$0xff]
      %v355 = vld [vmem:[%s320 + $0x88] sm:$0xf]
      %v356 = vld [vmem:[%s320 + $0x8c] sm:$0xff]
      %v357 = vld [vmem:[%s320 + $0x94] sm:$0xff]
      %v358 = vld [vmem:[%s320 + $0x9c] sm:$0xf]
      %v359 = vld [vmem:[%s1] sm:$0xf]
      %v360 = vld [vmem:[%s1 + $0x4] sm:$0xf]
      %v361 = vld [vmem:[%s1 + $0x8] sm:$0xf]
      %v362 = vld [vmem:[%s1 + $0xc] sm:$0xf]
      %v363 = vld [vmem:[%s1 + $0x10] sm:$0xf]
      %v364 = vld [vmem:[%s1 + $0x14] sm:$0xf]
      %v365 = vld [vmem:[%s1 + $0x18] sm:$0xf]
      %v366 = vld [vmem:[%s1 + $0x1c] sm:$0xf]
      %v367 = vld [vmem:[%s1 + $0x20] sm:$0xf]
      %v368 = vld [vmem:[%s1 + $0x24] sm:$0xf]
      %v369 = vld [vmem:[%s1 + $0x28] sm:$0xf]
      %v370 = vld [vmem:[%s1 + $0x2c] sm:$0xf]
      %v371 = vld [vmem:[%s1 + $0x30] sm:$0xf]
      %v372 = vld [vmem:[%s1 + $0x34] sm:$0xf]
      %v373 = vld [vmem:[%s1 + $0x38] sm:$0xf]
      %v374 = vld [vmem:[%s1 + $0x3c] sm:$0xf]
      %v375 = vld [vmem:[%s1 + $0x40] sm:$0xf]
      %v376 = vld [vmem:[%s1 + $0x44] sm:$0xf]
      %v377 = vld [vmem:[%s1 + $0x48] sm:$0xf]
      %v378 = vld [vmem:[%s1 + $0x4c] sm:$0xf]
      %v379 = vld [vmem:[%s1 + $0x50] sm:$0xf]
      %v380 = vld [vmem:[%s1 + $0x54] sm:$0xf]
      %v381 = vld [vmem:[%s1 + $0x58] sm:$0xf]
      %v382 = vld [vmem:[%s1 + $0x5c] sm:$0xf]
      %v383 = vld [vmem:[%s1 + $0x60] sm:$0xf]
      %v384 = vld [vmem:[%s1 + $0x64] sm:$0xf]
      %v385 = vld [vmem:[%s1 + $0x68] sm:$0xf]
      %v386 = vld [vmem:[%s1 + $0x6c] sm:$0xf]
      %v387 = vld [vmem:[%s1 + $0x70] sm:$0xf]
      %v388 = vld [vmem:[%s1 + $0x74] sm:$0xf]
      %v389 = vld [vmem:[%s1 + $0x78] sm:$0xf]
      %v390 = vld [vmem:[%s1 + $0x7c] sm:$0xf]
      %v391 = vld [vmem:[%s1 + $0x80] sm:$0xf]
      %v392 = vld [vmem:[%s1 + $0x84] sm:$0xf]
      %v393 = vld [vmem:[%s1 + $0x88] sm:$0xf]
      %v394 = vld [vmem:[%s1 + $0x8c] sm:$0xf]
      %v395 = vld [vmem:[%s1 + $0x90] sm:$0xf]
      %v396 = vld [vmem:[%s1 + $0x94] sm:$0xf]
      %v397 = vld [vmem:[%s1 + $0x98] sm:$0xf]
      %v398 = vld [vmem:[%s1 + $0x9c] sm:$0xf]
      %v399 = vld [vmem:[%s1 + $0xa0] sm:$0xf]
      %v400 = vld [vmem:[%s1 + $0xa4] sm:$0xf]
      %v401 = vld [vmem:[%s1 + $0xa8] sm:$0xf]
      %v402 = vld [vmem:[%s1 + $0xac] sm:$0xf]
      %v403 = vld [vmem:[%s1 + $0xb0] sm:$0xf]
      %v404 = vld [vmem:[%s1 + $0xb4] sm:$0xf]
      %v405 = vld [vmem:[%s1 + $0xb8] sm:$0xf]
      %v406 = vld [vmem:[%s1 + $0xbc] sm:$0xf]
      %v407 = vld [vmem:[%s1 + $0xc0] sm:$0xf]
      %v408 = vld [vmem:[%s1 + $0xc4] sm:$0xf]
      %v409 = vld [vmem:[%s1 + $0xc8] sm:$0xf]
      %v410 = vld [vmem:[%s1 + $0xcc] sm:$0xf]
      %v411 = vld [vmem:[%s1 + $0xd0] sm:$0xf]
      %v412 = vld [vmem:[%s1 + $0xd4] sm:$0xf]
      %v413 = vld [vmem:[%s1 + $0xd8] sm:$0xf]
      %v414 = vld [vmem:[%s1 + $0xdc] sm:$0xf]
      %v415 = vld [vmem:[%s1 + $0xe0] sm:$0xf]
      %v416 = vld [vmem:[%s1 + $0xe4] sm:$0xf]
      %v417 = vld [vmem:[%s1 + $0xe8] sm:$0xf]
      %v418 = vld [vmem:[%s1 + $0xec] sm:$0xf]
      %v419 = vld [vmem:[%s1 + $0xf0] sm:$0xf]
      %v420 = vld [vmem:[%s1 + $0xf4] sm:$0xf]
      %v421 = vld [vmem:[%s1 + $0xf8] sm:$0xf]
      %v422 = vld [vmem:[%s1 + $0xfc] sm:$0xf]
      %v423 = vld [vmem:[%s1 + $0x100] sm:$0xf]
      %v424 = vld [vmem:[%s1 + $0x104] sm:$0xf]
      %v425 = vld [vmem:[%s1 + $0x108] sm:$0xf]
      %v426 = vld [vmem:[%s1 + $0x10c] sm:$0xf]
      %v427 = vld [vmem:[%s1 + $0x110] sm:$0xf]
      %v428 = vld [vmem:[%s1 + $0x114] sm:$0xf]
      %v429 = vld [vmem:[%s1 + $0x118] sm:$0xf]
      %v430 = vld [vmem:[%s1 + $0x11c] sm:$0xf]
      %v455 = vunpack.c.l.b16 %v335
      %v456 = vunpack.c.h.b16 %v335
      %v457 = vunpack.c.l.b16 %v336
      %v458 = vunpack.c.h.b16 %v336
      %v459 = vunpack.c.l.b16 %v337
      %v460 = vunpack.c.l.b16 %v338
      %v461 = vunpack.c.h.b16 %v338
      %v462 = vunpack.c.l.b16 %v339
      %v463 = vunpack.c.h.b16 %v339
      %v464 = vunpack.c.l.b16 %v340
      %v465 = vunpack.c.l.b16 %v341
      %v466 = vunpack.c.h.b16 %v341
      %v467 = vunpack.c.l.b16 %v342
      %v468 = vunpack.c.h.b16 %v342
      %v469 = vunpack.c.l.b16 %v343
      %v470 = vunpack.c.l.b16 %v344
      %v471 = vunpack.c.h.b16 %v344
      %v472 = vunpack.c.l.b16 %v345
      %v473 = vunpack.c.h.b16 %v345
      %v474 = vunpack.c.l.b16 %v346
      %v475 = vunpack.c.l.b16 %v347
      %v476 = vunpack.c.h.b16 %v347
      %v477 = vunpack.c.l.b16 %v348
      %v478 = vunpack.c.h.b16 %v348
      %v479 = vunpack.c.l.b16 %v349
      %v480 = vunpack.c.l.b16 %v350
      %v481 = vunpack.c.h.b16 %v350
      %v482 = vunpack.c.l.b16 %v351
      %v483 = vunpack.c.h.b16 %v351
      %v484 = vunpack.c.l.b16 %v352
      %v485 = vunpack.c.l.b16 %v353
      %v486 = vunpack.c.h.b16 %v353
      %v487 = vunpack.c.l.b16 %v354
      %v488 = vunpack.c.h.b16 %v354
      %v489 = vunpack.c.l.b16 %v355
      %v490 = vunpack.c.l.b16 %v356
      %v491 = vunpack.c.h.b16 %v356
      %v492 = vunpack.c.l.b16 %v357
      %v493 = vunpack.c.h.b16 %v357
      %v494 = vunpack.c.l.b16 %v358
      %v495 = vpack.c.b16 %v460, %v455
      %v496 = vpack.c.b16 %v461, %v456
      %v497 = vpack.c.b16 %v462, %v457
      %v498 = vpack.c.b16 %v463, %v458
      %v499 = vpack.c.b16 %v464, %v459
      %v500 = vpack.c.b16 %v470, %v465
      %v501 = vpack.c.b16 %v471, %v466
      %v502 = vpack.c.b16 %v472, %v467
      %v503 = vpack.c.b16 %v473, %v468
      %v504 = vpack.c.b16 %v474, %v469
      %v505 = vpack.c.b16 %v480, %v475
      %v506 = vpack.c.b16 %v481, %v476
      %v507 = vpack.c.b16 %v482, %v477
      %v508 = vpack.c.b16 %v483, %v478
      %v509 = vpack.c.b16 %v484, %v479
      %v510 = vpack.c.b16 %v490, %v485
      %v511 = vpack.c.b16 %v491, %v486
      %v512 = vpack.c.b16 %v492, %v487
      %v513 = vpack.c.b16 %v493, %v488
      %v514 = vpack.c.b16 %v494, %v489
      %v603 = vunpack.c.l.b16 %v359
      %v604 = vunpack.c.l.b16 %v360
      %v605 = vunpack.c.l.b16 %v361
      %v606 = vunpack.c.l.b16 %v362
      %v607 = vunpack.c.l.b16 %v363
      %v608 = vunpack.c.l.b16 %v364
      %v609 = vunpack.c.l.b16 %v365
      %v610 = vunpack.c.l.b16 %v366
      %v611 = vunpack.c.l.b16 %v367
      %v612 = vunpack.c.l.b16 %v368
      %v613 = vunpack.c.l.b16 %v369
      %v614 = vunpack.c.l.b16 %v370
      %v615 = vunpack.c.l.b16 %v371
      %v616 = vunpack.c.l.b16 %v372
      %v617 = vunpack.c.l.b16 %v373
      %v618 = vunpack.c.l.b16 %v374
      %v619 = vunpack.c.l.b16 %v375
      %v620 = vunpack.c.l.b16 %v376
      %v621 = vunpack.c.l.b16 %v377
      %v622 = vunpack.c.l.b16 %v378
      %v623 = vunpack.c.l.b16 %v379
      %v624 = vunpack.c.l.b16 %v380
      %v625 = vunpack.c.l.b16 %v381
      %v626 = vunpack.c.l.b16 %v382
      %v627 = vunpack.c.l.b16 %v383
      %v628 = vunpack.c.l.b16 %v384
      %v629 = vunpack.c.l.b16 %v385
      %v630 = vunpack.c.l.b16 %v386
      %v631 = vunpack.c.l.b16 %v387
      %v632 = vunpack.c.l.b16 %v388
      %v633 = vunpack.c.l.b16 %v389
      %v634 = vunpack.c.l.b16 %v390
      %v635 = vunpack.c.l.b16 %v391
      %v636 = vunpack.c.l.b16 %v392
      %v637 = vunpack.c.l.b16 %v393
      %v638 = vunpack.c.l.b16 %v394
      %v639 = vunpack.c.l.b16 %v395
      %v640 = vunpack.c.l.b16 %v396
      %v641 = vunpack.c.l.b16 %v397
      %v642 = vunpack.c.l.b16 %v398
      %v643 = vunpack.c.l.b16 %v399
      %v644 = vunpack.c.l.b16 %v400
      %v645 = vunpack.c.l.b16 %v401
      %v646 = vunpack.c.l.b16 %v402
      %v647 = vunpack.c.l.b16 %v403
      %v648 = vunpack.c.l.b16 %v404
      %v649 = vunpack.c.l.b16 %v405
      %v650 = vunpack.c.l.b16 %v406
      %v651 = vunpack.c.l.b16 %v407
      %v652 = vunpack.c.l.b16 %v408
      %v653 = vunpack.c.l.b16 %v409
      %v654 = vunpack.c.l.b16 %v410
      %v655 = vunpack.c.l.b16 %v411
      %v656 = vunpack.c.l.b16 %v412
      %v657 = vunpack.c.l.b16 %v413
      %v658 = vunpack.c.l.b16 %v414
      %v659 = vunpack.c.l.b16 %v415
      %v660 = vunpack.c.l.b16 %v416
      %v661 = vunpack.c.l.b16 %v417
      %v662 = vunpack.c.l.b16 %v418
      %v663 = vunpack.c.l.b16 %v419
      %v664 = vunpack.c.l.b16 %v420
      %v665 = vunpack.c.l.b16 %v421
      %v666 = vunpack.c.l.b16 %v422
      %v667 = vunpack.c.l.b16 %v423
      %v668 = vunpack.c.l.b16 %v424
      %v669 = vunpack.c.l.b16 %v425
      %v670 = vunpack.c.l.b16 %v426
      %v671 = vunpack.c.l.b16 %v427
      %v672 = vunpack.c.l.b16 %v428
      %v673 = vunpack.c.l.b16 %v429
      %v674 = vunpack.c.l.b16 %v430
      %v675 = vpack.c.b16 %v604, %v603
      %v676 = vpack.c.b16 %v606, %v605
      %v677 = vpack.c.b16 %v608, %v607
      %v678 = vpack.c.b16 %v610, %v609
      %v679 = vpack.c.b16 %v612, %v611
      %v680 = vpack.c.b16 %v614, %v613
      %v681 = vpack.c.b16 %v616, %v615
      %v682 = vpack.c.b16 %v618, %v617
      %v683 = vpack.c.b16 %v620, %v619
      %v684 = vpack.c.b16 %v622, %v621
      %v685 = vpack.c.b16 %v624, %v623
      %v686 = vpack.c.b16 %v626, %v625
      %v687 = vpack.c.b16 %v628, %v627
      %v688 = vpack.c.b16 %v630, %v629
      %v689 = vpack.c.b16 %v632, %v631
      %v690 = vpack.c.b16 %v634, %v633
      %v691 = vpack.c.b16 %v636, %v635
      %v692 = vpack.c.b16 %v638, %v637
      %v693 = vpack.c.b16 %v640, %v639
      %v694 = vpack.c.b16 %v642, %v641
      %v695 = vpack.c.b16 %v644, %v643
      %v696 = vpack.c.b16 %v646, %v645
      %v697 = vpack.c.b16 %v648, %v647
      %v698 = vpack.c.b16 %v650, %v649
      %v699 = vpack.c.b16 %v652, %v651
      %v700 = vpack.c.b16 %v654, %v653
      %v701 = vpack.c.b16 %v656, %v655
      %v702 = vpack.c.b16 %v658, %v657
      %v703 = vpack.c.b16 %v660, %v659
      %v704 = vpack.c.b16 %v662, %v661
      %v705 = vpack.c.b16 %v664, %v663
      %v706 = vpack.c.b16 %v666, %v665
      %v707 = vpack.c.b16 %v668, %v667
      %v708 = vpack.c.b16 %v670, %v669
      %v709 = vpack.c.b16 %v672, %v671
      %v710 = vpack.c.b16 %v674, %v673
      %vm747 = vcmask 523264
      %v749 = vsel %vm747, %v499, 0
      %v752 = vsel %vm747, %v504, 0
      %v755 = vsel %vm747, %v509, 0
      %v758 = vsel %vm747, %v514, 0
      %760 = vmatprep.subr.bf16.mxu0 0
      %761 = vmatpush1.bf16.msra.mxu0 %v682
      %762 = vmatprep.subr.bf16.mxu0 0
      %763 = vmatpush1.bf16.msra.mxu0 %v681
      %764 = vmatprep.subr.bf16.mxu0 0
      %765 = vmatpush1.bf16.msra.mxu0 %v680
      %766 = vmatprep.subr.bf16.mxu0 0
      %767 = vmatpush1.bf16.msra.mxu0 %v679
      %768 = vmatprep.subr.bf16.mxu0 0
      %769 = vmatpush1.bf16.msra.mxu0 %v678
      %770 = vmatprep.subr.bf16.mxu0 0
      %771 = vmatpush1.bf16.msra.mxu0 %v677
      %772 = vmatprep.subr.bf16.mxu0 0
      %773 = vmatpush1.bf16.msra.mxu0 %v676
      %774 = vmatprep.subr.bf16.mxu0 0
      %775 = vmatpush1.bf16.msra.mxu0 %v675
      %776 = vmatprep.subr.bf16.mxu0 0
      %777 = vmatpush2.bf16.msra.mxu0 %v690
      %778 = vmatprep.subr.bf16.mxu0 0
      %779 = vmatpush2.bf16.msra.mxu0 %v689
      %780 = vmatprep.subr.bf16.mxu0 0
      %781 = vmatpush2.bf16.msra.mxu0 %v688
      %782 = vmatprep.subr.bf16.mxu0 0
      %783 = vmatpush2.bf16.msra.mxu0 %v687
      %784 = vmatprep.subr.bf16.mxu0 0
      %785 = vmatpush2.bf16.msra.mxu0 %v686
      %786 = vmatprep.subr.bf16.mxu0 0
      %787 = vmatpush2.bf16.msra.mxu0 %v685
      %788 = vmatprep.subr.bf16.mxu0 0
      %789 = vmatpush2.bf16.msra.mxu0 %v684
      %790 = vmatprep.subr.bf16.mxu0 0
      %791 = vmatpush2.bf16.msra.mxu0 %v683
      %792 = vmatprep.mubr.bf16.mxu0 %v496
      %793 = vmatmul.mubr.bf16.gmra.mxu0 %v495
      %v794 = vpop.f32.mrf.mxu0
      %v795 = vadd.f32 0.0, %v794
      %v796 = vpop.f32.mrf.mxu0
      %v797 = vpop.f32.mrf.mxu0
      %v798 = vadd.f32 0.0, %v797
      %v799 = vpop.f32.mrf.mxu0
      %800 = vmatprep.mubr.bf16.mxu0 %v501
      %801 = vmatmul.mubr.bf16.gmra.mxu0 %v500
      %v802 = vpop.f32.mrf.mxu0
      %v803 = vadd.f32 0.0, %v802
      %v804 = vpop.f32.mrf.mxu0
      %v805 = vpop.f32.mrf.mxu0
      %v806 = vadd.f32 0.0, %v805
      %v807 = vpop.f32.mrf.mxu0
      %808 = vmatprep.mubr.bf16.mxu0 %v506
      %809 = vmatmul.mubr.bf16.gmra.mxu0 %v505
      %v810 = vpop.f32.mrf.mxu0
      %v811 = vadd.f32 0.0, %v810
      %v812 = vpop.f32.mrf.mxu0
      %v813 = vpop.f32.mrf.mxu0
      %v814 = vadd.f32 0.0, %v813
      %v815 = vpop.f32.mrf.mxu0
      %816 = vmatprep.mubr.bf16.mxu0 %v511
      %817 = vmatmul.mubr.bf16.gmra.mxu0 %v510
      %v818 = vpop.f32.mrf.mxu0
      %v819 = vadd.f32 0.0, %v818
      %v820 = vpop.f32.mrf.mxu0
      %v821 = vpop.f32.mrf.mxu0
      %v822 = vadd.f32 0.0, %v821
      %v823 = vpop.f32.mrf.mxu0
      %824 = vdwg.mxu0
      %825 = vmatprep.subr.bf16.mxu0 0
      %826 = vmatpush1.bf16.msra.mxu0 %v698
      %827 = vmatprep.subr.bf16.mxu0 0
      %828 = vmatpush1.bf16.msra.mxu0 %v697
      %829 = vmatprep.subr.bf16.mxu0 0
      %830 = vmatpush1.bf16.msra.mxu0 %v696
      %831 = vmatprep.subr.bf16.mxu0 0
      %832 = vmatpush1.bf16.msra.mxu0 %v695
      %833 = vmatprep.subr.bf16.mxu0 0
      %834 = vmatpush1.bf16.msra.mxu0 %v694
      %835 = vmatprep.subr.bf16.mxu0 0
      %836 = vmatpush1.bf16.msra.mxu0 %v693
      %837 = vmatprep.subr.bf16.mxu0 0
      %838 = vmatpush1.bf16.msra.mxu0 %v692
      %839 = vmatprep.subr.bf16.mxu0 0
      %840 = vmatpush1.bf16.msra.mxu0 %v691
      %841 = vmatprep.subr.bf16.mxu0 0
      %842 = vmatpush2.bf16.msra.mxu0 %v706
      %843 = vmatprep.subr.bf16.mxu0 0
      %844 = vmatpush2.bf16.msra.mxu0 %v705
      %845 = vmatprep.subr.bf16.mxu0 0
      %846 = vmatpush2.bf16.msra.mxu0 %v704
      %847 = vmatprep.subr.bf16.mxu0 0
      %848 = vmatpush2.bf16.msra.mxu0 %v703
      %849 = vmatprep.subr.bf16.mxu0 0
      %850 = vmatpush2.bf16.msra.mxu0 %v702
      %851 = vmatprep.subr.bf16.mxu0 0
      %852 = vmatpush2.bf16.msra.mxu0 %v701
      %853 = vmatprep.subr.bf16.mxu0 0
      %854 = vmatpush2.bf16.msra.mxu0 %v700
      %855 = vmatprep.subr.bf16.mxu0 0
      %856 = vmatpush2.bf16.msra.mxu0 %v699
      %857 = vmatprep.mubr.bf16.mxu0 %v498
      %858 = vmatmul.mubr.bf16.gmra.mxu0 %v497
      %v859 = vpop.f32.mrf.mxu0
      %v860 = vadd.f32 %v795, %v859
      %v861 = vpop.f32.mrf.mxu0
      %v862 = vpop.f32.mrf.mxu0
      %v863 = vadd.f32 %v798, %v862
      %v864 = vpop.f32.mrf.mxu0
      %865 = vmatprep.mubr.bf16.mxu0 %v503
      %866 = vmatmul.mubr.bf16.gmra.mxu0 %v502
      %v867 = vpop.f32.mrf.mxu0
      %v868 = vadd.f32 %v803, %v867
      %v869 = vpop.f32.mrf.mxu0
      %v870 = vpop.f32.mrf.mxu0
      %v871 = vadd.f32 %v806, %v870
      %v872 = vpop.f32.mrf.mxu0
      %873 = vmatprep.mubr.bf16.mxu0 %v508
      %874 = vmatmul.mubr.bf16.gmra.mxu0 %v507
      %v875 = vpop.f32.mrf.mxu0
      %v876 = vadd.f32 %v811, %v875
      %v877 = vpop.f32.mrf.mxu0
      %v878 = vpop.f32.mrf.mxu0
      %v879 = vadd.f32 %v814, %v878
      %v880 = vpop.f32.mrf.mxu0
      %881 = vmatprep.mubr.bf16.mxu0 %v513
      %882 = vmatmul.mubr.bf16.gmra.mxu0 %v512
      %v883 = vpop.f32.mrf.mxu0
      %v884 = vadd.f32 %v819, %v883
      %v885 = vpop.f32.mrf.mxu0
      %v886 = vpop.f32.mrf.mxu0
      %v887 = vadd.f32 %v822, %v886
      %v888 = vpop.f32.mrf.mxu0
      %889 = vdwg.mxu0
      %890 = vmatprep.subr.bf16.mxu0 0
      %891 = vmatpush1.bf16.msra.mxu0 0
      %892 = vmatprep.subr.bf16.mxu0 0
      %893 = vmatpush1.bf16.msra.mxu0 0
      %894 = vmatprep.subr.bf16.mxu0 0
      %895 = vmatpush1.bf16.msra.mxu0 0
      %896 = vmatprep.subr.bf16.mxu0 0
      %897 = vmatpush1.bf16.msra.mxu0 0
      %898 = vmatprep.subr.bf16.mxu0 0
      %899 = vmatpush1.bf16.msra.mxu0 %v710
      %900 = vmatprep.subr.bf16.mxu0 0
      %901 = vmatpush1.bf16.msra.mxu0 %v709
      %902 = vmatprep.subr.bf16.mxu0 0
      %903 = vmatpush1.bf16.msra.mxu0 %v708
      %904 = vmatprep.subr.bf16.mxu0 0
      %905 = vmatpush1.bf16.msra.mxu0 %v707
      %906 = vmatprep.subr.bf16.mxu0 0
      %907 = vmatpush2.bf16.msra.mxu0 0
      %908 = vmatprep.subr.bf16.mxu0 0
      %909 = vmatpush2.bf16.msra.mxu0 0
      %910 = vmatprep.subr.bf16.mxu0 0
      %911 = vmatpush2.bf16.msra.mxu0 0
      %912 = vmatprep.subr.bf16.mxu0 0
      %913 = vmatpush2.bf16.msra.mxu0 0
      %914 = vmatprep.subr.bf16.mxu0 0
      %915 = vmatpush2.bf16.msra.mxu0 0
      %916 = vmatprep.subr.bf16.mxu0 0
      %917 = vmatpush2.bf16.msra.mxu0 0
      %918 = vmatprep.subr.bf16.mxu0 0
      %919 = vmatpush2.bf16.msra.mxu0 0
      %920 = vmatprep.subr.bf16.mxu0 0
      %921 = vmatpush2.bf16.msra.mxu0 0
      %922 = vmatprep.mubr.bf16.mxu0 0
      %923 = vmatmul.mubr.bf16.gmra.mxu0 %v749
      %v924 = vpop.f32.mrf.mxu0
      %v925 = vadd.f32 %v860, %v924
      %v926 = vpop.f32.mrf.mxu0
      %v927 = vpop.f32.mrf.mxu0
      %v928 = vadd.f32 %v863, %v927
      %v929 = vpop.f32.mrf.mxu0
      %930 = vmatprep.mubr.bf16.mxu0 0
      %931 = vmatmul.mubr.bf16.gmra.mxu0 %v752
      %v932 = vpop.f32.mrf.mxu0
      %v933 = vadd.f32 %v868, %v932
      %v934 = vpop.f32.mrf.mxu0
      %v935 = vpop.f32.mrf.mxu0
      %v936 = vadd.f32 %v871, %v935
      %v937 = vpop.f32.mrf.mxu0
      %938 = vmatprep.mubr.bf16.mxu0 0
      %939 = vmatmul.mubr.bf16.gmra.mxu0 %v755
      %v940 = vpop.f32.mrf.mxu0
      %v941 = vadd.f32 %v876, %v940
      %v942 = vpop.f32.mrf.mxu0
      %v943 = vpop.f32.mrf.mxu0
      %v944 = vadd.f32 %v879, %v943
      %v945 = vpop.f32.mrf.mxu0
      %946 = vmatprep.mubr.bf16.mxu0 0
      %947 = vmatmul.mubr.bf16.gmra.mxu0 %v758
      %v948 = vpop.f32.mrf.mxu0
      %v949 = vadd.f32 %v884, %v948
      %v950 = vpop.f32.mrf.mxu0
      %v951 = vpop.f32.mrf.mxu0
      %v952 = vadd.f32 %v887, %v951
      %v953 = vpop.f32.mrf.mxu0
      %954 = vdwg.mxu0
      %v955 = vld [vmem:[%s2] sm:$0x1]
      %v957 = vlaneseq
      %v958 = vshrl.u32 %v957, 7
      %v959 = vsub.s32 0, %v958
      %v960 = vrot.slane %v955, %v959
      %v962 = vmul.f32 %v925, %v960
      %v963 = vmul.f32 %v928, %v960
      %v964 = vmul.f32 %v933, %v960
      %v965 = vmul.f32 %v936, %v960
      %v966 = vmul.f32 %v941, %v960
      %v967 = vmul.f32 %v944, %v960
      %v968 = vmul.f32 %v949, %v960
      %v969 = vmul.f32 %v952, %v960
      %v970 = vld [vmem:[%s3] sm:$0x1]
      %v972 = vlaneseq
      %v973 = vshrl.u32 %v972, 7
      %v974 = vsub.s32 0, %v973
      %v975 = vrot.slane %v970, %v974
      %v977 = vadd.f32 %v962, %v975
      %v978 = vadd.f32 %v963, %v975
      %v979 = vadd.f32 %v964, %v975
      %v980 = vadd.f32 %v965, %v975
      %v981 = vadd.f32 %v966, %v975
      %v982 = vadd.f32 %v967, %v975
      %v983 = vadd.f32 %v968, %v975
      %v984 = vadd.f32 %v969, %v975
      %v985 = vld [vmem:[%s326] sm:$0xf]
      %v986 = vld [vmem:[%s326 + $0x4] sm:$0xf]
      %v987 = vld [vmem:[%s326 + $0x8] sm:$0xf]
      %v988 = vld [vmem:[%s326 + $0xc] sm:$0xf]
      %v989 = vld [vmem:[%s326 + $0x10] sm:$0xf]
      %v990 = vld [vmem:[%s326 + $0x14] sm:$0xf]
      %v991 = vld [vmem:[%s326 + $0x18] sm:$0xf]
      %v992 = vld [vmem:[%s326 + $0x1c] sm:$0xf]
      %v993 = vld [vmem:[%s5] sm:$0xf]
      %v994 = vld [vmem:[%s5 + $0x4] sm:$0xf]
      %v995 = vld [vmem:[%s5 + $0x8] sm:$0xf]
      %v996 = vld [vmem:[%s5 + $0xc] sm:$0xf]
      %v1005 = vunpack.c.l.b16 %v985
      %v1006 = vunpack.c.l.b16 %v986
      %v1007 = vunpack.c.l.b16 %v987
      %v1008 = vunpack.c.l.b16 %v988
      %v1009 = vunpack.c.l.b16 %v989
      %v1010 = vunpack.c.l.b16 %v990
      %v1011 = vunpack.c.l.b16 %v991
      %v1012 = vunpack.c.l.b16 %v992
      %v1013 = vpack.c.b16 %v1006, %v1005
      %v1014 = vpack.c.b16 %v1008, %v1007
      %v1015 = vpack.c.b16 %v1010, %v1009
      %v1016 = vpack.c.b16 %v1012, %v1011
      %v1021 = vunpack.c.l.b16 %v993
      %v1022 = vunpack.c.l.b16 %v994
      %v1023 = vunpack.c.l.b16 %v995
      %v1024 = vunpack.c.l.b16 %v996
      %v1025 = vpack.c.b16 %v1022, %v1021
      %v1026 = vpack.c.b16 %v1024, %v1023
      %vm1029 = vcmask 261120
      %v1031 = vsel %vm1029, %v1013, 0
      %v1034 = vsel %vm1029, %v1014, 0
      %v1037 = vsel %vm1029, %v1015, 0
      %v1040 = vsel %vm1029, %v1016, 0
      %1042 = vmatprep.subr.bf16.mxu0 0
      %1043 = vmatpush1.bf16.msra.mxu0 0
      %1044 = vmatprep.subr.bf16.mxu0 0
      %1045 = vmatpush1.bf16.msra.mxu0 0
      %1046 = vmatprep.subr.bf16.mxu0 0
      %1047 = vmatpush1.bf16.msra.mxu0 0
      %1048 = vmatprep.subr.bf16.mxu0 0
      %1049 = vmatpush1.bf16.msra.mxu0 0
      %1050 = vmatprep.subr.bf16.mxu0 0
      %1051 = vmatpush1.bf16.msra.mxu0 0
      %1052 = vmatprep.subr.bf16.mxu0 0
      %1053 = vmatpush1.bf16.msra.mxu0 0
      %1054 = vmatprep.subr.bf16.mxu0 0
      %1055 = vmatpush1.bf16.msra.mxu0 %v1026
      %1056 = vmatprep.subr.bf16.mxu0 0
      %1057 = vmatpush1.bf16.msra.mxu0 %v1025
      %1058 = vmatprep.subr.bf16.mxu0 0
      %1059 = vmatpush2.bf16.msra.mxu0 0
      %1060 = vmatprep.subr.bf16.mxu0 0
      %1061 = vmatpush2.bf16.msra.mxu0 0
      %1062 = vmatprep.subr.bf16.mxu0 0
      %1063 = vmatpush2.bf16.msra.mxu0 0
      %1064 = vmatprep.subr.bf16.mxu0 0
      %1065 = vmatpush2.bf16.msra.mxu0 0
      %1066 = vmatprep.subr.bf16.mxu0 0
      %1067 = vmatpush2.bf16.msra.mxu0 0
      %1068 = vmatprep.subr.bf16.mxu0 0
      %1069 = vmatpush2.bf16.msra.mxu0 0
      %1070 = vmatprep.subr.bf16.mxu0 0
      %1071 = vmatpush2.bf16.msra.mxu0 0
      %1072 = vmatprep.subr.bf16.mxu0 0
      %1073 = vmatpush2.bf16.msra.mxu0 0
      %1074 = vmatprep.mubr.bf16.mxu0 0
      %1075 = vmatmul.mubr.bf16.gmra.mxu0 %v1031
      %v1076 = vpop.f32.mrf.mxu0
      %v1077 = vadd.f32 0.0, %v1076
      %v1078 = vpop.f32.mrf.mxu0
      %v1079 = vpop.f32.mrf.mxu0
      %v1080 = vadd.f32 0.0, %v1079
      %v1081 = vpop.f32.mrf.mxu0
      %1082 = vmatprep.mubr.bf16.mxu0 0
      %1083 = vmatmul.mubr.bf16.gmra.mxu0 %v1034
      %v1084 = vpop.f32.mrf.mxu0
      %v1085 = vadd.f32 0.0, %v1084
      %v1086 = vpop.f32.mrf.mxu0
      %v1087 = vpop.f32.mrf.mxu0
      %v1088 = vadd.f32 0.0, %v1087
      %v1089 = vpop.f32.mrf.mxu0
      %1090 = vmatprep.mubr.bf16.mxu0 0
      %1091 = vmatmul.mubr.bf16.gmra.mxu0 %v1037
      %v1092 = vpop.f32.mrf.mxu0
      %v1093 = vadd.f32 0.0, %v1092
      %v1094 = vpop.f32.mrf.mxu0
      %v1095 = vpop.f32.mrf.mxu0
      %v1096 = vadd.f32 0.0, %v1095
      %v1097 = vpop.f32.mrf.mxu0
      %1098 = vmatprep.mubr.bf16.mxu0 0
      %1099 = vmatmul.mubr.bf16.gmra.mxu0 %v1040
      %v1100 = vpop.f32.mrf.mxu0
      %v1101 = vadd.f32 0.0, %v1100
      %v1102 = vpop.f32.mrf.mxu0
      %v1103 = vpop.f32.mrf.mxu0
      %v1104 = vadd.f32 0.0, %v1103
      %v1105 = vpop.f32.mrf.mxu0
      %1106 = vdwg.mxu0
      %v1107 = vld [vmem:[%s6] sm:$0x1]
      %v1109 = vlaneseq
      %v1110 = vshrl.u32 %v1109, 7
      %v1111 = vsub.s32 0, %v1110
      %v1112 = vrot.slane %v1107, %v1111
      %v1114 = vmul.f32 %v1077, %v1112
      %v1115 = vmul.f32 %v1080, %v1112
      %v1116 = vmul.f32 %v1085, %v1112
      %v1117 = vmul.f32 %v1088, %v1112
      %v1118 = vmul.f32 %v1093, %v1112
      %v1119 = vmul.f32 %v1096, %v1112
      %v1120 = vmul.f32 %v1101, %v1112
      %v1121 = vmul.f32 %v1104, %v1112
      %v1122 = vld [vmem:[%s7] sm:$0x1]
      %v1124 = vlaneseq
      %v1125 = vshrl.u32 %v1124, 7
      %v1126 = vsub.s32 0, %v1125
      %v1127 = vrot.slane %v1122, %v1126
      %v1129 = vadd.f32 %v1114, %v1127
      %v1130 = vadd.f32 %v1115, %v1127
      %v1131 = vadd.f32 %v1116, %v1127
      %v1132 = vadd.f32 %v1117, %v1127
      %v1133 = vadd.f32 %v1118, %v1127
      %v1134 = vadd.f32 %v1119, %v1127
      %v1135 = vadd.f32 %v1120, %v1127
      %v1136 = vadd.f32 %v1121, %v1127
      %v1137 = vadd.f32 %v977, %v1129
      %v1138 = vadd.f32 %v978, %v1130
      %v1139 = vadd.f32 %v979, %v1131
      %v1140 = vadd.f32 %v980, %v1132
      %v1141 = vadd.f32 %v981, %v1133
      %v1142 = vadd.f32 %v982, %v1134
      %v1143 = vadd.f32 %v983, %v1135
      %v1144 = vadd.f32 %v984, %v1136
      %v1145 = vmax.f32 %v1137, 0.0
      %v1146 = vmax.f32 %v1138, 0.0
      %v1147 = vmax.f32 %v1139, 0.0
      %v1148 = vmax.f32 %v1140, 0.0
      %v1149 = vmax.f32 %v1141, 0.0
      %v1150 = vmax.f32 %v1142, 0.0
      %v1151 = vmax.f32 %v1143, 0.0
      %v1152 = vmax.f32 %v1144, 0.0
      %v1153 = vpack.c.bf16 %v1146, %v1145
      %v1154 = vpack.c.bf16 %v1148, %v1147
      %v1155 = vpack.c.bf16 %v1150, %v1149
      %v1156 = vpack.c.bf16 %v1152, %v1151
      %v1161 = vunpack.c.l.b16 %v1153
      %v1162 = vunpack.c.h.b16 %v1153
      %v1163 = vunpack.c.l.b16 %v1154
      %v1164 = vunpack.c.h.b16 %v1154
      %v1165 = vunpack.c.l.b16 %v1155
      %v1166 = vunpack.c.h.b16 %v1155
      %v1167 = vunpack.c.l.b16 %v1156
      %v1168 = vunpack.c.h.b16 %v1156
      %v1169 = vpack.c.b16 %v1161, %v1161
      %v1170 = vpack.c.b16 %v1162, %v1162
      %v1171 = vpack.c.b16 %v1163, %v1163
      %v1172 = vpack.c.b16 %v1164, %v1164
      %v1173 = vpack.c.b16 %v1165, %v1165
      %v1174 = vpack.c.b16 %v1166, %v1166
      %v1175 = vpack.c.b16 %v1167, %v1167
      %v1176 = vpack.c.b16 %v1168, %v1168
      %vm1185 = vcmask 519168
      %1186 = vst.msk [vmem:[%s332] sm:$0xf] %vm1185, %v1169
      %1187 = vst.msk [vmem:[%s332 + $0x4] sm:$0xf] %vm1185, %v1170
      %1188 = vst.msk [vmem:[%s332 + $0x8] sm:$0xf] %vm1185, %v1171
      %1189 = vst.msk [vmem:[%s332 + $0xc] sm:$0xf] %vm1185, %v1172
      %1190 = vst.msk [vmem:[%s332 + $0x10] sm:$0xf] %vm1185, %v1173
      %1191 = vst.msk [vmem:[%s332 + $0x14] sm:$0xf] %vm1185, %v1174
      %1192 = vst.msk [vmem:[%s332 + $0x18] sm:$0xf] %vm1185, %v1175
      %1193 = vst.msk [vmem:[%s332 + $0x1c] sm:$0xf] %vm1185, %v1176
      %s1194 = smul.u32 8, %s19
      %p1195 = scmp.lt.s32.totalorder %s1194, 15
      %s1196 = scalar_select %p1195, %s1194, 15
      %s1197 = smul.addr %s1196, 4
      %s1198 = scalar_lea.vmem %s8, %s1197
      // Predicated region
      $region53: #{_lambda_.12} parent=51 // pred_check
        %p1199 = pneg %p215
      $region54: #{_lambda_.12} parent=51 // pred_check_branch
        %1201 = sbr.rel (%p1199) target = $region56
      $region55: #{_lambda_.12} parent=51 // pred_region
        %s1202 = smul.u32 8, %s19
      $region56: #{_lambda_.12} parent=51 // pred_fallthru
        _
    $region52: #{_lambda_.12} parent=5 // pred_fallthru
      _
    %p1203 = scmp.le.s32.totalorder 2, %s14
    // Predicated region
    $region57: #{_lambda_.12} parent=5 // pred_check
      %p1204 = pneg %p1203
    $region58: #{_lambda_.12} parent=5 // pred_check_branch
      %1206 = sbr.rel (%p1204) target = $region60
    $region59: #{_lambda_.12} parent=5 // pred_region
      %s1207 = ssub.s32 %s14, 2
      // Predicated region
      $region61: #{_lambda_.12} parent=59 // pred_check
        %p1208 = pneg %p221
      $region62: #{_lambda_.12} parent=59 // pred_check_branch
        %1210 = sbr.rel (%p1208) target = $region64
      $region63: #{_lambda_.12} parent=59 // pred_region
        %s1211 = smul.u32 8, %s20
        %p1212 = scmp.lt.s32.totalorder %s1211, 15
        %s1213 = scalar_select %p1212, %s1211, 15
        %s1214 = smul.addr %s1213, 4
        %s1215 = scalar_lea.vmem %s8, %s1214
      $region64: #{_lambda_.12} parent=59 // pred_fallthru
        _
    $region60: #{_lambda_.12} parent=5 // pred_fallthru
      _
  $region6: #{_lambda_.12} parent=0 // loop_footer
    %s18 = sadd.s32 1, %s14
  $region7: #{_lambda_.12} parent=0 // loop_footer_branch
    %13 = sbr.rel target = $region3
  $region8: #{_lambda_.12} parent=0 // loop_exit
    _

// kernel: _lambda_.13
$region0: #{_lambda_.13}
  #allocation0 [shape = 'u32[]', space=smem, size = 0x4, offset = 0x4, fixed_abs, tag = 'smem constant byte address 0x4 - core index']
  #allocation1 [shape = 'u32[144,128]{1,0:T(1,128)}', space=vmem, size = 0x12000, scoped, tag = 'internal scratch']
  %s0 = inlined_call_operand.vmem [shape: bf16[32,576], index: 0, kind: input, shape index: {}]
  %s1 = inlined_call_operand.vmem [shape: bf16[576,128], index: 1, kind: input, shape index: {}]
  %s2 = inlined_call_operand.vmem [shape: f32[1,128], index: 2, kind: input, shape index: {}]
  %s3 = inlined_call_operand.vmem [shape: f32[1,128], index: 3, kind: input, shape index: {}]
  %s4 = inlined_call_operand.vmem [shape: bf16[32,128], index: 4, kind: output, shape index: {}]
  %s5 = sld [smem:[#allocation0]]
  $region49: #{_lambda_.13} parent=0
    _
  %s7 = ssub.s32 1, %s5
  %s8 = scalar_select 0, %s7, %s5
  loop: start=0, step=1, limit=4
  $region2: #{_lambda_.13} parent=0 // loop_pre_header
    _
  $region3: #{_lambda_.13} parent=0 // loop_header
    %s10 = sphi 0, %s14
    %p11 = scmp.ge.s32.totalorder %s10, 4
    %s20 = sphi 0, %s22
    %s23 = sphi 0, %s20
    %s24 = sphi 0, %s23
    %s40 = sphi 0, %s24
    %s44 = sphi 0, %s44
    %s46 = sphi 0, %s44
    %s47 = sphi 0, %s46
    %s61 = sphi 0, %s47
    %s65 = sphi 0, %s65
    %s67 = sphi 0, %s65
    %s68 = sphi 0, %s67
    %s82 = sphi 0, %s68
    %s86 = sphi 0, %s86
    %s88 = sphi 0, %s86
    %s89 = sphi 0, %s88
    %s103 = sphi 0, %s89
    %s109 = sphi 0, %s111
    %s112 = sphi 0, %s109
    %s113 = sphi 0, %s112
    %s129 = sphi 0, %s113
  $region4: #{_lambda_.13} parent=0 // loop_header_branch
    %13 = sbr.rel (%p11) target = $region8
  $region5: #{_lambda_.13} parent=0 // loop_body
    %s15 = ssub.s32 %s10, 1
    %s16 = ssub.s32 %s10, 2
    %s17 = sadd.s32 %s10, 1
    %s18 = ssub.s32 %s10, %s17
    %p19 = scmp.eq.s32.totalorder %s18, 0
    %s21 = sadd.s32 %s20, 1
    %s22 = scalar_select %p19, %s20, %s21
    %p25 = pneg %p19
    %p26 = scmp.eq.s32.totalorder %s10, 1
    %p27 = por %p25, %p26
    %p28 = scmp.ne.s32.totalorder %s20, %s23
    %p29 = scmp.eq.s32.totalorder %s10, 0
    %p30 = por %p28, %p29
    %p31 = scmp.ne.s32.totalorder %s20, %s23
    %p32 = scmp.eq.s32.totalorder %s15, 1
    %p33 = por %p31, %p32
    %p34 = scmp.ne.s32.totalorder %s23, %s24
    %p35 = scmp.eq.s32.totalorder %s15, 0
    %p36 = por %p34, %p35
    %p37 = scmp.ne.s32.totalorder %s23, %s24
    %p38 = scmp.eq.s32.totalorder %s16, 1
    %p39 = por %p37, %p38
    %p41 = scmp.ne.s32.totalorder %s24, %s40
    %p42 = scmp.eq.s32.totalorder %s16, 0
    %p43 = por %p41, %p42
    %s45 = sadd.s32 %s44, 1
    %p48 = scmp.eq.s32.totalorder %s10, 1
    %p49 = scmp.ne.s32.totalorder %s44, %s46
    %p50 = scmp.eq.s32.totalorder %s10, 0
    %p51 = por %p49, %p50
    %p52 = scmp.ne.s32.totalorder %s44, %s46
    %p53 = scmp.eq.s32.totalorder %s15, 1
    %p54 = por %p52, %p53
    %p55 = scmp.ne.s32.totalorder %s46, %s47
    %p56 = scmp.eq.s32.totalorder %s15, 0
    %p57 = por %p55, %p56
    %p58 = scmp.ne.s32.totalorder %s46, %s47
    %p59 = scmp.eq.s32.totalorder %s16, 1
    %p60 = por %p58, %p59
    %p62 = scmp.ne.s32.totalorder %s47, %s61
    %p63 = scmp.eq.s32.totalorder %s16, 0
    %p64 = por %p62, %p63
    %s66 = sadd.s32 %s65, 1
    %p69 = scmp.eq.s32.totalorder %s10, 1
    %p70 = scmp.ne.s32.totalorder %s65, %s67
    %p71 = scmp.eq.s32.totalorder %s10, 0
    %p72 = por %p70, %p71
    %p73 = scmp.ne.s32.totalorder %s65, %s67
    %p74 = scmp.eq.s32.totalorder %s15, 1
    %p75 = por %p73, %p74
    %p76 = scmp.ne.s32.totalorder %s67, %s68
    %p77 = scmp.eq.s32.totalorder %s15, 0
    %p78 = por %p76, %p77
    %p79 = scmp.ne.s32.totalorder %s67, %s68
    %p80 = scmp.eq.s32.totalorder %s16, 1
    %p81 = por %p79, %p80
    %p83 = scmp.ne.s32.totalorder %s68, %s82
    %p84 = scmp.eq.s32.totalorder %s16, 0
    %p85 = por %p83, %p84
    %s87 = sadd.s32 %s86, 1
    %p90 = scmp.eq.s32.totalorder %s10, 1
    %p91 = scmp.ne.s32.totalorder %s86, %s88
    %p92 = scmp.eq.s32.totalorder %s10, 0
    %p93 = por %p91, %p92
    %p94 = scmp.ne.s32.totalorder %s86, %s88
    %p95 = scmp.eq.s32.totalorder %s15, 1
    %p96 = por %p94, %p95
    %p97 = scmp.ne.s32.totalorder %s88, %s89
    %p98 = scmp.eq.s32.totalorder %s15, 0
    %p99 = por %p97, %p98
    %p100 = scmp.ne.s32.totalorder %s88, %s89
    %p101 = scmp.eq.s32.totalorder %s16, 1
    %p102 = por %p100, %p101
    %p104 = scmp.ne.s32.totalorder %s89, %s103
    %p105 = scmp.eq.s32.totalorder %s16, 0
    %p106 = por %p104, %p105
    %s107 = ssub.s32 %s10, %s17
    %p108 = scmp.eq.s32.totalorder %s107, 0
    %s110 = sadd.s32 %s109, 1
    %s111 = scalar_select %p108, %s109, %s110
    %p114 = pneg %p108
    %p115 = scmp.eq.s32.totalorder %s10, 1
    %p116 = por %p114, %p115
    %p117 = scmp.ne.s32.totalorder %s109, %s112
    %p118 = scmp.eq.s32.totalorder %s10, 0
    %p119 = por %p117, %p118
    %p120 = scmp.ne.s32.totalorder %s109, %s112
    %p121 = scmp.eq.s32.totalorder %s15, 1
    %p122 = por %p120, %p121
    %p123 = scmp.ne.s32.totalorder %s112, %s113
    %p124 = scmp.eq.s32.totalorder %s15, 0
    %p125 = por %p123, %p124
    %p126 = scmp.ne.s32.totalorder %s112, %s113
    %p127 = scmp.eq.s32.totalorder %s16, 1
    %p128 = por %p126, %p127
    %p130 = scmp.ne.s32.totalorder %s113, %s129
    %p131 = scmp.eq.s32.totalorder %s16, 0
    %p132 = por %p130, %p131
    %p133 = scmp.le.s32.totalorder 1, %s10
    %p134 = scmp.lt.s32.totalorder %s10, 3
    %p135 = pnand %p133, %p134
    %p136 = pneg %p135
    // Predicated region
    $region9: #{_lambda_.13} parent=5 // pred_check
      _
    $region10: #{_lambda_.13} parent=5 // pred_check_branch
      %138 = sbr.rel (%p135) target = $region12
    $region11: #{_lambda_.13} parent=5 // pred_region
      %s139 = ssub.s32 %s10, 1
      // Predicated region
      $region13: #{_lambda_.13} parent=11 // pred_check
        %p140 = pneg %p57
      $region14: #{_lambda_.13} parent=11 // pred_check_branch
        %142 = sbr.rel (%p140) target = $region16
      $region15: #{_lambda_.13} parent=11 // pred_region
        _
      $region16: #{_lambda_.13} parent=11 // pred_fallthru
        _
      // Predicated region
      $region17: #{_lambda_.13} parent=11 // pred_check
        %p143 = pneg %p78
      $region18: #{_lambda_.13} parent=11 // pred_check_branch
        %145 = sbr.rel (%p143) target = $region20
      $region19: #{_lambda_.13} parent=11 // pred_region
        _
      $region20: #{_lambda_.13} parent=11 // pred_fallthru
        _
      // Predicated region
      $region21: #{_lambda_.13} parent=11 // pred_check
        %p146 = pneg %p99
      $region22: #{_lambda_.13} parent=11 // pred_check_branch
        %148 = sbr.rel (%p146) target = $region24
      $region23: #{_lambda_.13} parent=11 // pred_region
        _
      $region24: #{_lambda_.13} parent=11 // pred_fallthru
        _
    $region12: #{_lambda_.13} parent=5 // pred_fallthru
      _
    %p149 = scmp.lt.s32.totalorder %s10, 2
    // Predicated region
    $region25: #{_lambda_.13} parent=5 // pred_check
      %p150 = pneg %p149
    $region26: #{_lambda_.13} parent=5 // pred_check_branch
      %152 = sbr.rel (%p150) target = $region28
    $region27: #{_lambda_.13} parent=5 // pred_region
      // Predicated region
      $region29: #{_lambda_.13} parent=27 // pred_check
        %p153 = pneg %p30
      $region30: #{_lambda_.13} parent=27 // pred_check_branch
        %155 = sbr.rel (%p153) target = $region32
      $region31: #{_lambda_.13} parent=27 // pred_region
        %s156 = smul.u32 2, %s10
        %p157 = scmp.lt.s32.totalorder %s156, 3
        %s158 = scalar_select %p157, %s156, 3
        %s159 = smul.addr %s158, 5
        %s160 = smul.addr %s159, 4
        %s161 = scalar_lea.vmem %s0, %s160
        %s162 = smul.u32 2, %s10
      $region32: #{_lambda_.13} parent=27 // pred_fallthru
        _
    $region28: #{_lambda_.13} parent=5 // pred_fallthru
      _
    %p163 = scmp.le.s32.totalorder 1, %s10
    %p164 = scmp.lt.s32.totalorder %s10, 3
    %p165 = pnand %p163, %p164
    %p166 = pneg %p165
    // Predicated region
    $region33: #{_lambda_.13} parent=5 // pred_check
      _
    $region34: #{_lambda_.13} parent=5 // pred_check_branch
      %168 = sbr.rel (%p165) target = $region36
    $region35: #{_lambda_.13} parent=5 // pred_region
      %s169 = ssub.s32 %s10, 1
      %s170 = smul.u32 2, %s15
      %p171 = scmp.lt.s32.totalorder %s170, 3
      %s172 = scalar_select %p171, %s170, 3
      %s173 = smul.addr %s172, 5
      %s174 = smul.addr %s173, 4
      %s175 = scalar_lea.vmem %s0, %s174
      %p176 = pneg %p36
      %p177 = pneg %p33
      %p178 = pneg %p57
      %p179 = pneg %p54
      %p180 = pneg %p78
      %p181 = pneg %p75
      %p182 = pneg %p99
      %p183 = pneg %p96
      %p184 = pneg %p125
      %p185 = pneg %p122
      %s186 = smul.u32 2, %s15
      %p187 = scmp.lt.s32.totalorder %s186, 3
      %s188 = scalar_select %p187, %s186, 3
      %s189 = smul.addr %s188, 4
      %s190 = scalar_lea.vmem %s4, %s189
      %s191 = smul.u32 2, %s15
      %p192 = scmp.lt.s32.totalorder %s191, 3
      %s193 = scalar_select %p192, %s191, 3
      %s194 = smul.addr %s193, 5
      %s195 = smul.addr %s194, 4
      %s196 = scalar_lea.vmem %s0, %s195
      %s197 = smul.u32 2, %s15
      %s198 = smul.u32 2, %s15
      %p199 = scmp.lt.s32.totalorder %s198, 3
      %s200 = scalar_select %p199, %s198, 3
      %s201 = smul.addr %s200, 4
      %s202 = scalar_lea.vmem %s4, %s201
      %s203 = smul.u32 2, %s15
      %v205 = vld [vmem:[%s196] sm:$0xff]
      %v206 = vld [vmem:[%s196 + $0x8] sm:$0xff]
      %v207 = vld [vmem:[%s196 + $0x10] sm:$0xf]
      %v208 = vld [vmem:[%s196 + $0x14] sm:$0xff]
      %v209 = vld [vmem:[%s196 + $0x1c] sm:$0xff]
      %v210 = vld [vmem:[%s196 + $0x24] sm:$0xf]
      %v211 = vld [vmem:[%s1] sm:$0xf]
      %v212 = vld [vmem:[%s1 + $0x4] sm:$0xf]
      %v213 = vld [vmem:[%s1 + $0x8] sm:$0xf]
      %v214 = vld [vmem:[%s1 + $0xc] sm:$0xf]
      %v215 = vld [vmem:[%s1 + $0x10] sm:$0xf]
      %v216 = vld [vmem:[%s1 + $0x14] sm:$0xf]
      %v217 = vld [vmem:[%s1 + $0x18] sm:$0xf]
      %v218 = vld [vmem:[%s1 + $0x1c] sm:$0xf]
      %v219 = vld [vmem:[%s1 + $0x20] sm:$0xf]
      %v220 = vld [vmem:[%s1 + $0x24] sm:$0xf]
      %v221 = vld [vmem:[%s1 + $0x28] sm:$0xf]
      %v222 = vld [vmem:[%s1 + $0x2c] sm:$0xf]
      %v223 = vld [vmem:[%s1 + $0x30] sm:$0xf]
      %v224 = vld [vmem:[%s1 + $0x34] sm:$0xf]
      %v225 = vld [vmem:[%s1 + $0x38] sm:$0xf]
      %v226 = vld [vmem:[%s1 + $0x3c] sm:$0xf]
      %v227 = vld [vmem:[%s1 + $0x40] sm:$0xf]
      %v228 = vld [vmem:[%s1 + $0x44] sm:$0xf]
      %v229 = vld [vmem:[%s1 + $0x48] sm:$0xf]
      %v230 = vld [vmem:[%s1 + $0x4c] sm:$0xf]
      %v231 = vld [vmem:[%s1 + $0x50] sm:$0xf]
      %v232 = vld [vmem:[%s1 + $0x54] sm:$0xf]
      %v233 = vld [vmem:[%s1 + $0x58] sm:$0xf]
      %v234 = vld [vmem:[%s1 + $0x5c] sm:$0xf]
      %v235 = vld [vmem:[%s1 + $0x60] sm:$0xf]
      %v236 = vld [vmem:[%s1 + $0x64] sm:$0xf]
      %v237 = vld [vmem:[%s1 + $0x68] sm:$0xf]
      %v238 = vld [vmem:[%s1 + $0x6c] sm:$0xf]
      %v239 = vld [vmem:[%s1 + $0x70] sm:$0xf]
      %v240 = vld [vmem:[%s1 + $0x74] sm:$0xf]
      %v241 = vld [vmem:[%s1 + $0x78] sm:$0xf]
      %v242 = vld [vmem:[%s1 + $0x7c] sm:$0xf]
      %v243 = vld [vmem:[%s1 + $0x80] sm:$0xf]
      %v244 = vld [vmem:[%s1 + $0x84] sm:$0xf]
      %v245 = vld [vmem:[%s1 + $0x88] sm:$0xf]
      %v246 = vld [vmem:[%s1 + $0x8c] sm:$0xf]
      %v247 = vld [vmem:[%s1 + $0x90] sm:$0xf]
      %v248 = vld [vmem:[%s1 + $0x94] sm:$0xf]
      %v249 = vld [vmem:[%s1 + $0x98] sm:$0xf]
      %v250 = vld [vmem:[%s1 + $0x9c] sm:$0xf]
      %v251 = vld [vmem:[%s1 + $0xa0] sm:$0xf]
      %v252 = vld [vmem:[%s1 + $0xa4] sm:$0xf]
      %v253 = vld [vmem:[%s1 + $0xa8] sm:$0xf]
      %v254 = vld [vmem:[%s1 + $0xac] sm:$0xf]
      %v255 = vld [vmem:[%s1 + $0xb0] sm:$0xf]
      %v256 = vld [vmem:[%s1 + $0xb4] sm:$0xf]
      %v257 = vld [vmem:[%s1 + $0xb8] sm:$0xf]
      %v258 = vld [vmem:[%s1 + $0xbc] sm:$0xf]
      %v259 = vld [vmem:[%s1 + $0xc0] sm:$0xf]
      %v260 = vld [vmem:[%s1 + $0xc4] sm:$0xf]
      %v261 = vld [vmem:[%s1 + $0xc8] sm:$0xf]
      %v262 = vld [vmem:[%s1 + $0xcc] sm:$0xf]
      %v263 = vld [vmem:[%s1 + $0xd0] sm:$0xf]
      %v264 = vld [vmem:[%s1 + $0xd4] sm:$0xf]
      %v265 = vld [vmem:[%s1 + $0xd8] sm:$0xf]
      %v266 = vld [vmem:[%s1 + $0xdc] sm:$0xf]
      %v267 = vld [vmem:[%s1 + $0xe0] sm:$0xf]
      %v268 = vld [vmem:[%s1 + $0xe4] sm:$0xf]
      %v269 = vld [vmem:[%s1 + $0xe8] sm:$0xf]
      %v270 = vld [vmem:[%s1 + $0xec] sm:$0xf]
      %v271 = vld [vmem:[%s1 + $0xf0] sm:$0xf]
      %v272 = vld [vmem:[%s1 + $0xf4] sm:$0xf]
      %v273 = vld [vmem:[%s1 + $0xf8] sm:$0xf]
      %v274 = vld [vmem:[%s1 + $0xfc] sm:$0xf]
      %v275 = vld [vmem:[%s1 + $0x100] sm:$0xf]
      %v276 = vld [vmem:[%s1 + $0x104] sm:$0xf]
      %v277 = vld [vmem:[%s1 + $0x108] sm:$0xf]
      %v278 = vld [vmem:[%s1 + $0x10c] sm:$0xf]
      %v279 = vld [vmem:[%s1 + $0x110] sm:$0xf]
      %v280 = vld [vmem:[%s1 + $0x114] sm:$0xf]
      %v281 = vld [vmem:[%s1 + $0x118] sm:$0xf]
      %v282 = vld [vmem:[%s1 + $0x11c] sm:$0xf]
      %v289 = vunpack.c.l.b16 %v205
      %v290 = vunpack.c.h.b16 %v205
      %v291 = vunpack.c.l.b16 %v206
      %v292 = vunpack.c.h.b16 %v206
      %v293 = vunpack.c.l.b16 %v207
      %v294 = vunpack.c.l.b16 %v208
      %v295 = vunpack.c.h.b16 %v208
      %v296 = vunpack.c.l.b16 %v209
      %v297 = vunpack.c.h.b16 %v209
      %v298 = vunpack.c.l.b16 %v210
      %v299 = vpack.c.b16 %v294, %v289
      %v300 = vpack.c.b16 %v295, %v290
      %v301 = vpack.c.b16 %v296, %v291
      %v302 = vpack.c.b16 %v297, %v292
      %v303 = vpack.c.b16 %v298, %v293
      %v380 = vunpack.c.l.b16 %v211
      %v381 = vunpack.c.l.b16 %v212
      %v382 = vunpack.c.l.b16 %v213
      %v383 = vunpack.c.l.b16 %v214
      %v384 = vunpack.c.l.b16 %v215
      %v385 = vunpack.c.l.b16 %v216
      %v386 = vunpack.c.l.b16 %v217
      %v387 = vunpack.c.l.b16 %v218
      %v388 = vunpack.c.l.b16 %v219
      %v389 = vunpack.c.l.b16 %v220
      %v390 = vunpack.c.l.b16 %v221
      %v391 = vunpack.c.l.b16 %v222
      %v392 = vunpack.c.l.b16 %v223
      %v393 = vunpack.c.l.b16 %v224
      %v394 = vunpack.c.l.b16 %v225
      %v395 = vunpack.c.l.b16 %v226
      %v396 = vunpack.c.l.b16 %v227
      %v397 = vunpack.c.l.b16 %v228
      %v398 = vunpack.c.l.b16 %v229
      %v399 = vunpack.c.l.b16 %v230
      %v400 = vunpack.c.l.b16 %v231
      %v401 = vunpack.c.l.b16 %v232
      %v402 = vunpack.c.l.b16 %v233
      %v403 = vunpack.c.l.b16 %v234
      %v404 = vunpack.c.l.b16 %v235
      %v405 = vunpack.c.l.b16 %v236
      %v406 = vunpack.c.l.b16 %v237
      %v407 = vunpack.c.l.b16 %v238
      %v408 = vunpack.c.l.b16 %v239
      %v409 = vunpack.c.l.b16 %v240
      %v410 = vunpack.c.l.b16 %v241
      %v411 = vunpack.c.l.b16 %v242
      %v412 = vunpack.c.l.b16 %v243
      %v413 = vunpack.c.l.b16 %v244
      %v414 = vunpack.c.l.b16 %v245
      %v415 = vunpack.c.l.b16 %v246
      %v416 = vunpack.c.l.b16 %v247
      %v417 = vunpack.c.l.b16 %v248
      %v418 = vunpack.c.l.b16 %v249
      %v419 = vunpack.c.l.b16 %v250
      %v420 = vunpack.c.l.b16 %v251
      %v421 = vunpack.c.l.b16 %v252
      %v422 = vunpack.c.l.b16 %v253
      %v423 = vunpack.c.l.b16 %v254
      %v424 = vunpack.c.l.b16 %v255
      %v425 = vunpack.c.l.b16 %v256
      %v426 = vunpack.c.l.b16 %v257
      %v427 = vunpack.c.l.b16 %v258
      %v428 = vunpack.c.l.b16 %v259
      %v429 = vunpack.c.l.b16 %v260
      %v430 = vunpack.c.l.b16 %v261
      %v431 = vunpack.c.l.b16 %v262
      %v432 = vunpack.c.l.b16 %v263
      %v433 = vunpack.c.l.b16 %v264
      %v434 = vunpack.c.l.b16 %v265
      %v435 = vunpack.c.l.b16 %v266
      %v436 = vunpack.c.l.b16 %v267
      %v437 = vunpack.c.l.b16 %v268
      %v438 = vunpack.c.l.b16 %v269
      %v439 = vunpack.c.l.b16 %v270
      %v440 = vunpack.c.l.b16 %v271
      %v441 = vunpack.c.l.b16 %v272
      %v442 = vunpack.c.l.b16 %v273
      %v443 = vunpack.c.l.b16 %v274
      %v444 = vunpack.c.l.b16 %v275
      %v445 = vunpack.c.l.b16 %v276
      %v446 = vunpack.c.l.b16 %v277
      %v447 = vunpack.c.l.b16 %v278
      %v448 = vunpack.c.l.b16 %v279
      %v449 = vunpack.c.l.b16 %v280
      %v450 = vunpack.c.l.b16 %v281
      %v451 = vunpack.c.l.b16 %v282
      %v452 = vpack.c.b16 %v381, %v380
      %v453 = vpack.c.b16 %v383, %v382
      %v454 = vpack.c.b16 %v385, %v384
      %v455 = vpack.c.b16 %v387, %v386
      %v456 = vpack.c.b16 %v389, %v388
      %v457 = vpack.c.b16 %v391, %v390
      %v458 = vpack.c.b16 %v393, %v392
      %v459 = vpack.c.b16 %v395, %v394
      %v460 = vpack.c.b16 %v397, %v396
      %v461 = vpack.c.b16 %v399, %v398
      %v462 = vpack.c.b16 %v401, %v400
      %v463 = vpack.c.b16 %v403, %v402
      %v464 = vpack.c.b16 %v405, %v404
      %v465 = vpack.c.b16 %v407, %v406
      %v466 = vpack.c.b16 %v409, %v408
      %v467 = vpack.c.b16 %v411, %v410
      %v468 = vpack.c.b16 %v413, %v412
      %v469 = vpack.c.b16 %v415, %v414
      %v470 = vpack.c.b16 %v417, %v416
      %v471 = vpack.c.b16 %v419, %v418
      %v472 = vpack.c.b16 %v421, %v420
      %v473 = vpack.c.b16 %v423, %v422
      %v474 = vpack.c.b16 %v425, %v424
      %v475 = vpack.c.b16 %v427, %v426
      %v476 = vpack.c.b16 %v429, %v428
      %v477 = vpack.c.b16 %v431, %v430
      %v478 = vpack.c.b16 %v433, %v432
      %v479 = vpack.c.b16 %v435, %v434
      %v480 = vpack.c.b16 %v437, %v436
      %v481 = vpack.c.b16 %v439, %v438
      %v482 = vpack.c.b16 %v441, %v440
      %v483 = vpack.c.b16 %v443, %v442
      %v484 = vpack.c.b16 %v445, %v444
      %v485 = vpack.c.b16 %v447, %v446
      %v486 = vpack.c.b16 %v449, %v448
      %v487 = vpack.c.b16 %v451, %v450
      %vm524 = vcmask 523264
      %v526 = vsel %vm524, %v303, 0
      %528 = vmatprep.subr.bf16.mxu0 0
      %529 = vmatpush1.bf16.msra.mxu0 %v459
      %530 = vmatprep.subr.bf16.mxu0 0
      %531 = vmatpush1.bf16.msra.mxu0 %v458
      %532 = vmatprep.subr.bf16.mxu0 0
      %533 = vmatpush1.bf16.msra.mxu0 %v457
      %534 = vmatprep.subr.bf16.mxu0 0
      %535 = vmatpush1.bf16.msra.mxu0 %v456
      %536 = vmatprep.subr.bf16.mxu0 0
      %537 = vmatpush1.bf16.msra.mxu0 %v455
      %538 = vmatprep.subr.bf16.mxu0 0
      %539 = vmatpush1.bf16.msra.mxu0 %v454
      %540 = vmatprep.subr.bf16.mxu0 0
      %541 = vmatpush1.bf16.msra.mxu0 %v453
      %542 = vmatprep.subr.bf16.mxu0 0
      %543 = vmatpush1.bf16.msra.mxu0 %v452
      %544 = vmatprep.subr.bf16.mxu0 0
      %545 = vmatpush2.bf16.msra.mxu0 %v467
      %546 = vmatprep.subr.bf16.mxu0 0
      %547 = vmatpush2.bf16.msra.mxu0 %v466
      %548 = vmatprep.subr.bf16.mxu0 0
      %549 = vmatpush2.bf16.msra.mxu0 %v465
      %550 = vmatprep.subr.bf16.mxu0 0
      %551 = vmatpush2.bf16.msra.mxu0 %v464
      %552 = vmatprep.subr.bf16.mxu0 0
      %553 = vmatpush2.bf16.msra.mxu0 %v463
      %554 = vmatprep.subr.bf16.mxu0 0
      %555 = vmatpush2.bf16.msra.mxu0 %v462
      %556 = vmatprep.subr.bf16.mxu0 0
      %557 = vmatpush2.bf16.msra.mxu0 %v461
      %558 = vmatprep.subr.bf16.mxu0 0
      %559 = vmatpush2.bf16.msra.mxu0 %v460
      %560 = vmatprep.mubr.bf16.mxu0 %v300
      %561 = vmatmul.mubr.bf16.gmra.mxu0 %v299
      %v562 = vpop.f32.mrf.mxu0
      %v563 = vadd.f32 0.0, %v562
      %v564 = vpop.f32.mrf.mxu0
      %v565 = vpop.f32.mrf.mxu0
      %v566 = vadd.f32 0.0, %v565
      %v567 = vpop.f32.mrf.mxu0
      %568 = vdwg.mxu0
      %569 = vmatprep.subr.bf16.mxu0 0
      %570 = vmatpush1.bf16.msra.mxu0 %v475
      %571 = vmatprep.subr.bf16.mxu0 0
      %572 = vmatpush1.bf16.msra.mxu0 %v474
      %573 = vmatprep.subr.bf16.mxu0 0
      %574 = vmatpush1.bf16.msra.mxu0 %v473
      %575 = vmatprep.subr.bf16.mxu0 0
      %576 = vmatpush1.bf16.msra.mxu0 %v472
      %577 = vmatprep.subr.bf16.mxu0 0
      %578 = vmatpush1.bf16.msra.mxu0 %v471
      %579 = vmatprep.subr.bf16.mxu0 0
      %580 = vmatpush1.bf16.msra.mxu0 %v470
      %581 = vmatprep.subr.bf16.mxu0 0
      %582 = vmatpush1.bf16.msra.mxu0 %v469
      %583 = vmatprep.subr.bf16.mxu0 0
      %584 = vmatpush1.bf16.msra.mxu0 %v468
      %585 = vmatprep.subr.bf16.mxu0 0
      %586 = vmatpush2.bf16.msra.mxu0 %v483
      %587 = vmatprep.subr.bf16.mxu0 0
      %588 = vmatpush2.bf16.msra.mxu0 %v482
      %589 = vmatprep.subr.bf16.mxu0 0
      %590 = vmatpush2.bf16.msra.mxu0 %v481
      %591 = vmatprep.subr.bf16.mxu0 0
      %592 = vmatpush2.bf16.msra.mxu0 %v480
      %593 = vmatprep.subr.bf16.mxu0 0
      %594 = vmatpush2.bf16.msra.mxu0 %v479
      %595 = vmatprep.subr.bf16.mxu0 0
      %596 = vmatpush2.bf16.msra.mxu0 %v478
      %597 = vmatprep.subr.bf16.mxu0 0
      %598 = vmatpush2.bf16.msra.mxu0 %v477
      %599 = vmatprep.subr.bf16.mxu0 0
      %600 = vmatpush2.bf16.msra.mxu0 %v476
      %601 = vmatprep.mubr.bf16.mxu0 %v302
      %602 = vmatmul.mubr.bf16.gmra.mxu0 %v301
      %v603 = vpop.f32.mrf.mxu0
      %v604 = vadd.f32 %v563, %v603
      %v605 = vpop.f32.mrf.mxu0
      %v606 = vpop.f32.mrf.mxu0
      %v607 = vadd.f32 %v566, %v606
      %v608 = vpop.f32.mrf.mxu0
      %609 = vdwg.mxu0
      %610 = vmatprep.subr.bf16.mxu0 0
      %611 = vmatpush1.bf16.msra.mxu0 0
      %612 = vmatprep.subr.bf16.mxu0 0
      %613 = vmatpush1.bf16.msra.mxu0 0
      %614 = vmatprep.subr.bf16.mxu0 0
      %615 = vmatpush1.bf16.msra.mxu0 0
      %616 = vmatprep.subr.bf16.mxu0 0
      %617 = vmatpush1.bf16.msra.mxu0 0
      %618 = vmatprep.subr.bf16.mxu0 0
      %619 = vmatpush1.bf16.msra.mxu0 %v487
      %620 = vmatprep.subr.bf16.mxu0 0
      %621 = vmatpush1.bf16.msra.mxu0 %v486
      %622 = vmatprep.subr.bf16.mxu0 0
      %623 = vmatpush1.bf16.msra.mxu0 %v485
      %624 = vmatprep.subr.bf16.mxu0 0
      %625 = vmatpush1.bf16.msra.mxu0 %v484
      %626 = vmatprep.subr.bf16.mxu0 0
      %627 = vmatpush2.bf16.msra.mxu0 0
      %628 = vmatprep.subr.bf16.mxu0 0
      %629 = vmatpush2.bf16.msra.mxu0 0
      %630 = vmatprep.subr.bf16.mxu0 0
      %631 = vmatpush2.bf16.msra.mxu0 0
      %632 = vmatprep.subr.bf16.mxu0 0
      %633 = vmatpush2.bf16.msra.mxu0 0
      %634 = vmatprep.subr.bf16.mxu0 0
      %635 = vmatpush2.bf16.msra.mxu0 0
      %636 = vmatprep.subr.bf16.mxu0 0
      %637 = vmatpush2.bf16.msra.mxu0 0
      %638 = vmatprep.subr.bf16.mxu0 0
      %639 = vmatpush2.bf16.msra.mxu0 0
      %640 = vmatprep.subr.bf16.mxu0 0
      %641 = vmatpush2.bf16.msra.mxu0 0
      %642 = vmatprep.mubr.bf16.mxu0 0
      %643 = vmatmul.mubr.bf16.gmra.mxu0 %v526
      %v644 = vpop.f32.mrf.mxu0
      %v645 = vadd.f32 %v604, %v644
      %v646 = vpop.f32.mrf.mxu0
      %v647 = vpop.f32.mrf.mxu0
      %v648 = vadd.f32 %v607, %v647
      %v649 = vpop.f32.mrf.mxu0
      %650 = vdwg.mxu0
      %v651 = vld [vmem:[%s2] sm:$0x1]
      %v653 = vlaneseq
      %v654 = vshrl.u32 %v653, 7
      %v655 = vsub.s32 0, %v654
      %v656 = vrot.slane %v651, %v655
      %v658 = vmul.f32 %v645, %v656
      %v659 = vmul.f32 %v648, %v656
      %v660 = vld [vmem:[%s3] sm:$0x1]
      %v662 = vlaneseq
      %v663 = vshrl.u32 %v662, 7
      %v664 = vsub.s32 0, %v663
      %v665 = vrot.slane %v660, %v664
      %v667 = vadd.f32 %v658, %v665
      %v668 = vadd.f32 %v659, %v665
      %v669 = vmax.f32 %v667, 0.0
      %v670 = vmax.f32 %v668, 0.0
      %v671 = vpack.c.bf16 %v670, %v669
      %v673 = vunpack.c.l.b16 %v671
      %v674 = vunpack.c.h.b16 %v671
      %v675 = vpack.c.b16 %v673, %v673
      %v676 = vpack.c.b16 %v674, %v674
      %679 = vst [vmem:[%s202] sm:$0xf] %v675
      %680 = vst [vmem:[%s202 + $0x4] sm:$0xf] %v676
      %s681 = smul.u32 2, %s15
      %p682 = scmp.lt.s32.totalorder %s681, 3
      %s683 = scalar_select %p682, %s681, 3
      %s684 = smul.addr %s683, 4
      %s685 = scalar_lea.vmem %s4, %s684
      // Predicated region
      $region37: #{_lambda_.13} parent=35 // pred_check
        %p686 = pneg %p122
      $region38: #{_lambda_.13} parent=35 // pred_check_branch
        %688 = sbr.rel (%p686) target = $region40
      $region39: #{_lambda_.13} parent=35 // pred_region
        %s689 = smul.u32 2, %s15
      $region40: #{_lambda_.13} parent=35 // pred_fallthru
        _
    $region36: #{_lambda_.13} parent=5 // pred_fallthru
      _
    %p690 = scmp.le.s32.totalorder 2, %s10
    // Predicated region
    $region41: #{_lambda_.13} parent=5 // pred_check
      %p691 = pneg %p690
    $region42: #{_lambda_.13} parent=5 // pred_check_branch
      %693 = sbr.rel (%p691) target = $region44
    $region43: #{_lambda_.13} parent=5 // pred_region
      %s694 = ssub.s32 %s10, 2
      // Predicated region
      $region45: #{_lambda_.13} parent=43 // pred_check
        %p695 = pneg %p128
      $region46: #{_lambda_.13} parent=43 // pred_check_branch
        %697 = sbr.rel (%p695) target = $region48
      $region47: #{_lambda_.13} parent=43 // pred_region
        %s698 = smul.u32 2, %s16
        %p699 = scmp.lt.s32.totalorder %s698, 3
        %s700 = scalar_select %p699, %s698, 3
        %s701 = smul.addr %s700, 4
        %s702 = scalar_lea.vmem %s4, %s701
      $region48: #{_lambda_.13} parent=43 // pred_fallthru
        _
    $region44: #{_lambda_.13} parent=5 // pred_fallthru
      _
  $region6: #{_lambda_.13} parent=0 // loop_footer
    %s14 = sadd.s32 1, %s10
  $region7: #{_lambda_.13} parent=0 // loop_footer_branch
    %9 = sbr.rel target = $region3
  $region8: #{_lambda_.13} parent=0 // loop_exit
    _

// kernel: _lambda_.14
$region0: #{_lambda_.14}
  #allocation0 [shape = 'u32[]', space=smem, size = 0x4, offset = 0x4, fixed_abs, tag = 'smem constant byte address 0x4 - core index']
  #allocation1 [shape = 'u32[144,128]{1,0:T(1,128)}', space=vmem, size = 0x12000, scoped, tag = 'internal scratch']
  %s0 = inlined_call_operand.vmem [shape: bf16[32,1152], index: 0, kind: input, shape index: {}]
  %s1 = inlined_call_operand.vmem [shape: bf16[1152,128], index: 1, kind: input, shape index: {}]
  %s2 = inlined_call_operand.vmem [shape: f32[1,128], index: 2, kind: input, shape index: {}]
  %s3 = inlined_call_operand.vmem [shape: f32[1,128], index: 3, kind: input, shape index: {}]
  %s4 = inlined_call_operand.vmem [shape: bf16[32,64], index: 4, kind: input, shape index: {}]
  %s5 = inlined_call_operand.vmem [shape: bf16[64,128], index: 5, kind: input, shape index: {}]
  %s6 = inlined_call_operand.vmem [shape: f32[1,128], index: 6, kind: input, shape index: {}]
  %s7 = inlined_call_operand.vmem [shape: f32[1,128], index: 7, kind: input, shape index: {}]
  %s8 = inlined_call_operand.vmem [shape: bf16[32,128], index: 8, kind: output, shape index: {}]
  %s9 = sld [smem:[#allocation0]]
  $region65: #{_lambda_.14} parent=0
    _
  %s11 = ssub.s32 1, %s9
  %s12 = scalar_select 0, %s11, %s9
  loop: start=0, step=1, limit=4
  $region2: #{_lambda_.14} parent=0 // loop_pre_header
    _
  $region3: #{_lambda_.14} parent=0 // loop_header
    %s14 = sphi 0, %s18
    %p15 = scmp.ge.s32.totalorder %s14, 4
    %s24 = sphi 0, %s26
    %s27 = sphi 0, %s24
    %s28 = sphi 0, %s27
    %s44 = sphi 0, %s28
    %s48 = sphi 0, %s48
    %s50 = sphi 0, %s48
    %s51 = sphi 0, %s50
    %s65 = sphi 0, %s51
    %s69 = sphi 0, %s69
    %s71 = sphi 0, %s69
    %s72 = sphi 0, %s71
    %s86 = sphi 0, %s72
    %s90 = sphi 0, %s90
    %s92 = sphi 0, %s90
    %s93 = sphi 0, %s92
    %s107 = sphi 0, %s93
    %s113 = sphi 0, %s115
    %s116 = sphi 0, %s113
    %s117 = sphi 0, %s116
    %s133 = sphi 0, %s117
    %s137 = sphi 0, %s137
    %s139 = sphi 0, %s137
    %s140 = sphi 0, %s139
    %s154 = sphi 0, %s140
    %s158 = sphi 0, %s158
    %s160 = sphi 0, %s158
    %s161 = sphi 0, %s160
    %s175 = sphi 0, %s161
    %s179 = sphi 0, %s179
    %s181 = sphi 0, %s179
    %s182 = sphi 0, %s181
    %s196 = sphi 0, %s182
    %s202 = sphi 0, %s204
    %s205 = sphi 0, %s202
    %s206 = sphi 0, %s205
    %s222 = sphi 0, %s206
  $region4: #{_lambda_.14} parent=0 // loop_header_branch
    %17 = sbr.rel (%p15) target = $region8
  $region5: #{_lambda_.14} parent=0 // loop_body
    %s19 = ssub.s32 %s14, 1
    %s20 = ssub.s32 %s14, 2
    %s21 = sadd.s32 %s14, 1
    %s22 = ssub.s32 %s14, %s21
    %p23 = scmp.eq.s32.totalorder %s22, 0
    %s25 = sadd.s32 %s24, 1
    %s26 = scalar_select %p23, %s24, %s25
    %p29 = pneg %p23
    %p30 = scmp.eq.s32.totalorder %s14, 1
    %p31 = por %p29, %p30
    %p32 = scmp.ne.s32.totalorder %s24, %s27
    %p33 = scmp.eq.s32.totalorder %s14, 0
    %p34 = por %p32, %p33
    %p35 = scmp.ne.s32.totalorder %s24, %s27
    %p36 = scmp.eq.s32.totalorder %s19, 1
    %p37 = por %p35, %p36
    %p38 = scmp.ne.s32.totalorder %s27, %s28
    %p39 = scmp.eq.s32.totalorder %s19, 0
    %p40 = por %p38, %p39
    %p41 = scmp.ne.s32.totalorder %s27, %s28
    %p42 = scmp.eq.s32.totalorder %s20, 1
    %p43 = por %p41, %p42
    %p45 = scmp.ne.s32.totalorder %s28, %s44
    %p46 = scmp.eq.s32.totalorder %s20, 0
    %p47 = por %p45, %p46
    %s49 = sadd.s32 %s48, 1
    %p52 = scmp.eq.s32.totalorder %s14, 1
    %p53 = scmp.ne.s32.totalorder %s48, %s50
    %p54 = scmp.eq.s32.totalorder %s14, 0
    %p55 = por %p53, %p54
    %p56 = scmp.ne.s32.totalorder %s48, %s50
    %p57 = scmp.eq.s32.totalorder %s19, 1
    %p58 = por %p56, %p57
    %p59 = scmp.ne.s32.totalorder %s50, %s51
    %p60 = scmp.eq.s32.totalorder %s19, 0
    %p61 = por %p59, %p60
    %p62 = scmp.ne.s32.totalorder %s50, %s51
    %p63 = scmp.eq.s32.totalorder %s20, 1
    %p64 = por %p62, %p63
    %p66 = scmp.ne.s32.totalorder %s51, %s65
    %p67 = scmp.eq.s32.totalorder %s20, 0
    %p68 = por %p66, %p67
    %s70 = sadd.s32 %s69, 1
    %p73 = scmp.eq.s32.totalorder %s14, 1
    %p74 = scmp.ne.s32.totalorder %s69, %s71
    %p75 = scmp.eq.s32.totalorder %s14, 0
    %p76 = por %p74, %p75
    %p77 = scmp.ne.s32.totalorder %s69, %s71
    %p78 = scmp.eq.s32.totalorder %s19, 1
    %p79 = por %p77, %p78
    %p80 = scmp.ne.s32.totalorder %s71, %s72
    %p81 = scmp.eq.s32.totalorder %s19, 0
    %p82 = por %p80, %p81
    %p83 = scmp.ne.s32.totalorder %s71, %s72
    %p84 = scmp.eq.s32.totalorder %s20, 1
    %p85 = por %p83, %p84
    %p87 = scmp.ne.s32.totalorder %s72, %s86
    %p88 = scmp.eq.s32.totalorder %s20, 0
    %p89 = por %p87, %p88
    %s91 = sadd.s32 %s90, 1
    %p94 = scmp.eq.s32.totalorder %s14, 1
    %p95 = scmp.ne.s32.totalorder %s90, %s92
    %p96 = scmp.eq.s32.totalorder %s14, 0
    %p97 = por %p95, %p96
    %p98 = scmp.ne.s32.totalorder %s90, %s92
    %p99 = scmp.eq.s32.totalorder %s19, 1
    %p100 = por %p98, %p99
    %p101 = scmp.ne.s32.totalorder %s92, %s93
    %p102 = scmp.eq.s32.totalorder %s19, 0
    %p103 = por %p101, %p102
    %p104 = scmp.ne.s32.totalorder %s92, %s93
    %p105 = scmp.eq.s32.totalorder %s20, 1
    %p106 = por %p104, %p105
    %p108 = scmp.ne.s32.totalorder %s93, %s107
    %p109 = scmp.eq.s32.totalorder %s20, 0
    %p110 = por %p108, %p109
    %s111 = ssub.s32 %s14, %s21
    %p112 = scmp.eq.s32.totalorder %s111, 0
    %s114 = sadd.s32 %s113, 1
    %s115 = scalar_select %p112, %s113, %s114
    %p118 = pneg %p112
    %p119 = scmp.eq.s32.totalorder %s14, 1
    %p120 = por %p118, %p119
    %p121 = scmp.ne.s32.totalorder %s113, %s116
    %p122 = scmp.eq.s32.totalorder %s14, 0
    %p123 = por %p121, %p122
    %p124 = scmp.ne.s32.totalorder %s113, %s116
    %p125 = scmp.eq.s32.totalorder %s19, 1
    %p126 = por %p124, %p125
    %p127 = scmp.ne.s32.totalorder %s116, %s117
    %p128 = scmp.eq.s32.totalorder %s19, 0
    %p129 = por %p127, %p128
    %p130 = scmp.ne.s32.totalorder %s116, %s117
    %p131 = scmp.eq.s32.totalorder %s20, 1
    %p132 = por %p130, %p131
    %p134 = scmp.ne.s32.totalorder %s117, %s133
    %p135 = scmp.eq.s32.totalorder %s20, 0
    %p136 = por %p134, %p135
    %s138 = sadd.s32 %s137, 1
    %p141 = scmp.eq.s32.totalorder %s14, 1
    %p142 = scmp.ne.s32.totalorder %s137, %s139
    %p143 = scmp.eq.s32.totalorder %s14, 0
    %p144 = por %p142, %p143
    %p145 = scmp.ne.s32.totalorder %s137, %s139
    %p146 = scmp.eq.s32.totalorder %s19, 1
    %p147 = por %p145, %p146
    %p148 = scmp.ne.s32.totalorder %s139, %s140
    %p149 = scmp.eq.s32.totalorder %s19, 0
    %p150 = por %p148, %p149
    %p151 = scmp.ne.s32.totalorder %s139, %s140
    %p152 = scmp.eq.s32.totalorder %s20, 1
    %p153 = por %p151, %p152
    %p155 = scmp.ne.s32.totalorder %s140, %s154
    %p156 = scmp.eq.s32.totalorder %s20, 0
    %p157 = por %p155, %p156
    %s159 = sadd.s32 %s158, 1
    %p162 = scmp.eq.s32.totalorder %s14, 1
    %p163 = scmp.ne.s32.totalorder %s158, %s160
    %p164 = scmp.eq.s32.totalorder %s14, 0
    %p165 = por %p163, %p164
    %p166 = scmp.ne.s32.totalorder %s158, %s160
    %p167 = scmp.eq.s32.totalorder %s19, 1
    %p168 = por %p166, %p167
    %p169 = scmp.ne.s32.totalorder %s160, %s161
    %p170 = scmp.eq.s32.totalorder %s19, 0
    %p171 = por %p169, %p170
    %p172 = scmp.ne.s32.totalorder %s160, %s161
    %p173 = scmp.eq.s32.totalorder %s20, 1
    %p174 = por %p172, %p173
    %p176 = scmp.ne.s32.totalorder %s161, %s175
    %p177 = scmp.eq.s32.totalorder %s20, 0
    %p178 = por %p176, %p177
    %s180 = sadd.s32 %s179, 1
    %p183 = scmp.eq.s32.totalorder %s14, 1
    %p184 = scmp.ne.s32.totalorder %s179, %s181
    %p185 = scmp.eq.s32.totalorder %s14, 0
    %p186 = por %p184, %p185
    %p187 = scmp.ne.s32.totalorder %s179, %s181
    %p188 = scmp.eq.s32.totalorder %s19, 1
    %p189 = por %p187, %p188
    %p190 = scmp.ne.s32.totalorder %s181, %s182
    %p191 = scmp.eq.s32.totalorder %s19, 0
    %p192 = por %p190, %p191
    %p193 = scmp.ne.s32.totalorder %s181, %s182
    %p194 = scmp.eq.s32.totalorder %s20, 1
    %p195 = por %p193, %p194
    %p197 = scmp.ne.s32.totalorder %s182, %s196
    %p198 = scmp.eq.s32.totalorder %s20, 0
    %p199 = por %p197, %p198
    %s200 = ssub.s32 %s14, %s21
    %p201 = scmp.eq.s32.totalorder %s200, 0
    %s203 = sadd.s32 %s202, 1
    %s204 = scalar_select %p201, %s202, %s203
    %p207 = pneg %p201
    %p208 = scmp.eq.s32.totalorder %s14, 1
    %p209 = por %p207, %p208
    %p210 = scmp.ne.s32.totalorder %s202, %s205
    %p211 = scmp.eq.s32.totalorder %s14, 0
    %p212 = por %p210, %p211
    %p213 = scmp.ne.s32.totalorder %s202, %s205
    %p214 = scmp.eq.s32.totalorder %s19, 1
    %p215 = por %p213, %p214
    %p216 = scmp.ne.s32.totalorder %s205, %s206
    %p217 = scmp.eq.s32.totalorder %s19, 0
    %p218 = por %p216, %p217
    %p219 = scmp.ne.s32.totalorder %s205, %s206
    %p220 = scmp.eq.s32.totalorder %s20, 1
    %p221 = por %p219, %p220
    %p223 = scmp.ne.s32.totalorder %s206, %s222
    %p224 = scmp.eq.s32.totalorder %s20, 0
    %p225 = por %p223, %p224
    %p226 = scmp.le.s32.totalorder 1, %s14
    %p227 = scmp.lt.s32.totalorder %s14, 3
    %p228 = pnand %p226, %p227
    %p229 = pneg %p228
    // Predicated region
    $region9: #{_lambda_.14} parent=5 // pred_check
      _
    $region10: #{_lambda_.14} parent=5 // pred_check_branch
      %231 = sbr.rel (%p228) target = $region12
    $region11: #{_lambda_.14} parent=5 // pred_region
      %s232 = ssub.s32 %s14, 1
      // Predicated region
      $region13: #{_lambda_.14} parent=11 // pred_check
        %p233 = pneg %p61
      $region14: #{_lambda_.14} parent=11 // pred_check_branch
        %235 = sbr.rel (%p233) target = $region16
      $region15: #{_lambda_.14} parent=11 // pred_region
        _
      $region16: #{_lambda_.14} parent=11 // pred_fallthru
        _
      // Predicated region
      $region17: #{_lambda_.14} parent=11 // pred_check
        %p236 = pneg %p82
      $region18: #{_lambda_.14} parent=11 // pred_check_branch
        %238 = sbr.rel (%p236) target = $region20
      $region19: #{_lambda_.14} parent=11 // pred_region
        _
      $region20: #{_lambda_.14} parent=11 // pred_fallthru
        _
      // Predicated region
      $region21: #{_lambda_.14} parent=11 // pred_check
        %p239 = pneg %p103
      $region22: #{_lambda_.14} parent=11 // pred_check_branch
        %241 = sbr.rel (%p239) target = $region24
      $region23: #{_lambda_.14} parent=11 // pred_region
        _
      $region24: #{_lambda_.14} parent=11 // pred_fallthru
        _
      // Predicated region
      $region25: #{_lambda_.14} parent=11 // pred_check
        %p242 = pneg %p150
      $region26: #{_lambda_.14} parent=11 // pred_check_branch
        %244 = sbr.rel (%p242) target = $region28
      $region27: #{_lambda_.14} parent=11 // pred_region
        _
      $region28: #{_lambda_.14} parent=11 // pred_fallthru
        _
      // Predicated region
      $region29: #{_lambda_.14} parent=11 // pred_check
        %p245 = pneg %p171
      $region30: #{_lambda_.14} parent=11 // pred_check_branch
        %247 = sbr.rel (%p245) target = $region32
      $region31: #{_lambda_.14} parent=11 // pred_region
        _
      $region32: #{_lambda_.14} parent=11 // pred_fallthru
        _
      // Predicated region
      $region33: #{_lambda_.14} parent=11 // pred_check
        %p248 = pneg %p192
      $region34: #{_lambda_.14} parent=11 // pred_check_branch
        %250 = sbr.rel (%p248) target = $region36
      $region35: #{_lambda_.14} parent=11 // pred_region
        _
      $region36: #{_lambda_.14} parent=11 // pred_fallthru
        _
    $region12: #{_lambda_.14} parent=5 // pred_fallthru
      _
    %p251 = scmp.lt.s32.totalorder %s14, 2
    // Predicated region
    $region37: #{_lambda_.14} parent=5 // pred_check
      %p252 = pneg %p251
    $region38: #{_lambda_.14} parent=5 // pred_check_branch
      %254 = sbr.rel (%p252) target = $region40
    $region39: #{_lambda_.14} parent=5 // pred_region
      // Predicated region
      $region41: #{_lambda_.14} parent=39 // pred_check
        %p255 = pneg %p34
      $region42: #{_lambda_.14} parent=39 // pred_check_branch
        %257 = sbr.rel (%p255) target = $region44
      $region43: #{_lambda_.14} parent=39 // pred_region
        %s258 = smul.u32 2, %s14
        %p259 = scmp.lt.s32.totalorder %s258, 3
        %s260 = scalar_select %p259, %s258, 3
        %s261 = smul.addr %s260, 9
        %s262 = smul.addr %s261, 4
        %s263 = scalar_lea.vmem %s0, %s262
        %s264 = smul.u32 2, %s14
      $region44: #{_lambda_.14} parent=39 // pred_fallthru
        _
      // Predicated region
      $region45: #{_lambda_.14} parent=39 // pred_check
        %p265 = pneg %p123
      $region46: #{_lambda_.14} parent=39 // pred_check_branch
        %267 = sbr.rel (%p265) target = $region48
      $region47: #{_lambda_.14} parent=39 // pred_region
        %s268 = smul.u32 2, %s14
        %p269 = scmp.lt.s32.totalorder %s268, 3
        %s270 = scalar_select %p269, %s268, 3
        %s271 = smul.addr %s270, 4
        %s272 = scalar_lea.vmem %s4, %s271
        %s273 = smul.u32 2, %s14
      $region48: #{_lambda_.14} parent=39 // pred_fallthru
        _
    $region40: #{_lambda_.14} parent=5 // pred_fallthru
      _
    %p274 = scmp.le.s32.totalorder 1, %s14
    %p275 = scmp.lt.s32.totalorder %s14, 3
    %p276 = pnand %p274, %p275
    %p277 = pneg %p276
    // Predicated region
    $region49: #{_lambda_.14} parent=5 // pred_check
      _
    $region50: #{_lambda_.14} parent=5 // pred_check_branch
      %279 = sbr.rel (%p276) target = $region52
    $region51: #{_lambda_.14} parent=5 // pred_region
      %s280 = ssub.s32 %s14, 1
      %s281 = smul.u32 2, %s19
      %p282 = scmp.lt.s32.totalorder %s281, 3
      %s283 = scalar_select %p282, %s281, 3
      %s284 = smul.addr %s283, 9
      %s285 = smul.addr %s284, 4
      %s286 = scalar_lea.vmem %s0, %s285
      %p287 = pneg %p40
      %p288 = pneg %p37
      %p289 = pneg %p61
      %p290 = pneg %p58
      %p291 = pneg %p82
      %p292 = pneg %p79
      %p293 = pneg %p103
      %p294 = pneg %p100
      %s295 = smul.u32 2, %s19
      %p296 = scmp.lt.s32.totalorder %s295, 3
      %s297 = scalar_select %p296, %s295, 3
      %s298 = smul.addr %s297, 4
      %s299 = scalar_lea.vmem %s4, %s298
      %p300 = pneg %p129
      %p301 = pneg %p126
      %p302 = pneg %p150
      %p303 = pneg %p147
      %p304 = pneg %p171
      %p305 = pneg %p168
      %p306 = pneg %p192
      %p307 = pneg %p189
      %p308 = pneg %p218
      %p309 = pneg %p215
      %s310 = smul.u32 2, %s19
      %p311 = scmp.lt.s32.totalorder %s310, 3
      %s312 = scalar_select %p311, %s310, 3
      %s313 = smul.addr %s312, 4
      %s314 = scalar_lea.vmem %s8, %s313
      %s315 = smul.u32 2, %s19
      %p316 = scmp.lt.s32.totalorder %s315, 3
      %s317 = scalar_select %p316, %s315, 3
      %s318 = smul.addr %s317, 9
      %s319 = smul.addr %s318, 4
      %s320 = scalar_lea.vmem %s0, %s319
      %s321 = smul.u32 2, %s19
      %s322 = smul.u32 2, %s19
      %p323 = scmp.lt.s32.totalorder %s322, 3
      %s324 = scalar_select %p323, %s322, 3
      %s325 = smul.addr %s324, 4
      %s326 = scalar_lea.vmem %s4, %s325
      %s327 = smul.u32 2, %s19
      %s328 = smul.u32 2, %s19
      %p329 = scmp.lt.s32.totalorder %s328, 3
      %s330 = scalar_select %p329, %s328, 3
      %s331 = smul.addr %s330, 4
      %s332 = scalar_lea.vmem %s8, %s331
      %s333 = smul.u32 2, %s19
      %v335 = vld [vmem:[%s320] sm:$0xff]
      %v336 = vld [vmem:[%s320 + $0x8] sm:$0xff]
      %v337 = vld [vmem:[%s320 + $0x10] sm:$0xff]
      %v338 = vld [vmem:[%s320 + $0x18] sm:$0xff]
      %v339 = vld [vmem:[%s320 + $0x20] sm:$0xf]
      %v340 = vld [vmem:[%s320 + $0x24] sm:$0xff]
      %v341 = vld [vmem:[%s320 + $0x2c] sm:$0xff]
      %v342 = vld [vmem:[%s320 + $0x34] sm:$0xff]
      %v343 = vld [vmem:[%s320 + $0x3c] sm:$0xff]
      %v344 = vld [vmem:[%s320 + $0x44] sm:$0xf]
      %v345 = vld [vmem:[%s1] sm:$0xf]
      %v346 = vld [vmem:[%s1 + $0x4] sm:$0xf]
      %v347 = vld [vmem:[%s1 + $0x8] sm:$0xf]
      %v348 = vld [vmem:[%s1 + $0xc] sm:$0xf]
      %v349 = vld [vmem:[%s1 + $0x10] sm:$0xf]
      %v350 = vld [vmem:[%s1 + $0x14] sm:$0xf]
      %v351 = vld [vmem:[%s1 + $0x18] sm:$0xf]
      %v352 = vld [vmem:[%s1 + $0x1c] sm:$0xf]
      %v353 = vld [vmem:[%s1 + $0x20] sm:$0xf]
      %v354 = vld [vmem:[%s1 + $0x24] sm:$0xf]
      %v355 = vld [vmem:[%s1 + $0x28] sm:$0xf]
      %v356 = vld [vmem:[%s1 + $0x2c] sm:$0xf]
      %v357 = vld [vmem:[%s1 + $0x30] sm:$0xf]
      %v358 = vld [vmem:[%s1 + $0x34] sm:$0xf]
      %v359 = vld [vmem:[%s1 + $0x38] sm:$0xf]
      %v360 = vld [vmem:[%s1 + $0x3c] sm:$0xf]
      %v361 = vld [vmem:[%s1 + $0x40] sm:$0xf]
      %v362 = vld [vmem:[%s1 + $0x44] sm:$0xf]
      %v363 = vld [vmem:[%s1 + $0x48] sm:$0xf]
      %v364 = vld [vmem:[%s1 + $0x4c] sm:$0xf]
      %v365 = vld [vmem:[%s1 + $0x50] sm:$0xf]
      %v366 = vld [vmem:[%s1 + $0x54] sm:$0xf]
      %v367 = vld [vmem:[%s1 + $0x58] sm:$0xf]
      %v368 = vld [vmem:[%s1 + $0x5c] sm:$0xf]
      %v369 = vld [vmem:[%s1 + $0x60] sm:$0xf]
      %v370 = vld [vmem:[%s1 + $0x64] sm:$0xf]
      %v371 = vld [vmem:[%s1 + $0x68] sm:$0xf]
      %v372 = vld [vmem:[%s1 + $0x6c] sm:$0xf]
      %v373 = vld [vmem:[%s1 + $0x70] sm:$0xf]
      %v374 = vld [vmem:[%s1 + $0x74] sm:$0xf]
      %v375 = vld [vmem:[%s1 + $0x78] sm:$0xf]
      %v376 = vld [vmem:[%s1 + $0x7c] sm:$0xf]
      %v377 = vld [vmem:[%s1 + $0x80] sm:$0xf]
      %v378 = vld [vmem:[%s1 + $0x84] sm:$0xf]
      %v379 = vld [vmem:[%s1 + $0x88] sm:$0xf]
      %v380 = vld [vmem:[%s1 + $0x8c] sm:$0xf]
      %v381 = vld [vmem:[%s1 + $0x90] sm:$0xf]
      %v382 = vld [vmem:[%s1 + $0x94] sm:$0xf]
      %v383 = vld [vmem:[%s1 + $0x98] sm:$0xf]
      %v384 = vld [vmem:[%s1 + $0x9c] sm:$0xf]
      %v385 = vld [vmem:[%s1 + $0xa0] sm:$0xf]
      %v386 = vld [vmem:[%s1 + $0xa4] sm:$0xf]
      %v387 = vld [vmem:[%s1 + $0xa8] sm:$0xf]
      %v388 = vld [vmem:[%s1 + $0xac] sm:$0xf]
      %v389 = vld [vmem:[%s1 + $0xb0] sm:$0xf]
      %v390 = vld [vmem:[%s1 + $0xb4] sm:$0xf]
      %v391 = vld [vmem:[%s1 + $0xb8] sm:$0xf]
      %v392 = vld [vmem:[%s1 + $0xbc] sm:$0xf]
      %v393 = vld [vmem:[%s1 + $0xc0] sm:$0xf]
      %v394 = vld [vmem:[%s1 + $0xc4] sm:$0xf]
      %v395 = vld [vmem:[%s1 + $0xc8] sm:$0xf]
      %v396 = vld [vmem:[%s1 + $0xcc] sm:$0xf]
      %v397 = vld [vmem:[%s1 + $0xd0] sm:$0xf]
      %v398 = vld [vmem:[%s1 + $0xd4] sm:$0xf]
      %v399 = vld [vmem:[%s1 + $0xd8] sm:$0xf]
      %v400 = vld [vmem:[%s1 + $0xdc] sm:$0xf]
      %v401 = vld [vmem:[%s1 + $0xe0] sm:$0xf]
      %v402 = vld [vmem:[%s1 + $0xe4] sm:$0xf]
      %v403 = vld [vmem:[%s1 + $0xe8] sm:$0xf]
      %v404 = vld [vmem:[%s1 + $0xec] sm:$0xf]
      %v405 = vld [vmem:[%s1 + $0xf0] sm:$0xf]
      %v406 = vld [vmem:[%s1 + $0xf4] sm:$0xf]
      %v407 = vld [vmem:[%s1 + $0xf8] sm:$0xf]
      %v408 = vld [vmem:[%s1 + $0xfc] sm:$0xf]
      %v409 = vld [vmem:[%s1 + $0x100] sm:$0xf]
      %v410 = vld [vmem:[%s1 + $0x104] sm:$0xf]
      %v411 = vld [vmem:[%s1 + $0x108] sm:$0xf]
      %v412 = vld [vmem:[%s1 + $0x10c] sm:$0xf]
      %v413 = vld [vmem:[%s1 + $0x110] sm:$0xf]
      %v414 = vld [vmem:[%s1 + $0x114] sm:$0xf]
      %v415 = vld [vmem:[%s1 + $0x118] sm:$0xf]
      %v416 = vld [vmem:[%s1 + $0x11c] sm:$0xf]
      %v417 = vld [vmem:[%s1 + $0x120] sm:$0xf]
      %v418 = vld [vmem:[%s1 + $0x124] sm:$0xf]
      %v419 = vld [vmem:[%s1 + $0x128] sm:$0xf]
      %v420 = vld [vmem:[%s1 + $0x12c] sm:$0xf]
      %v421 = vld [vmem:[%s1 + $0x130] sm:$0xf]
      %v422 = vld [vmem:[%s1 + $0x134] sm:$0xf]
      %v423 = vld [vmem:[%s1 + $0x138] sm:$0xf]
      %v424 = vld [vmem:[%s1 + $0x13c] sm:$0xf]
      %v425 = vld [vmem:[%s1 + $0x140] sm:$0xf]
      %v426 = vld [vmem:[%s1 + $0x144] sm:$0xf]
      %v427 = vld [vmem:[%s1 + $0x148] sm:$0xf]
      %v428 = vld [vmem:[%s1 + $0x14c] sm:$0xf]
      %v429 = vld [vmem:[%s1 + $0x150] sm:$0xf]
      %v430 = vld [vmem:[%s1 + $0x154] sm:$0xf]
      %v431 = vld [vmem:[%s1 + $0x158] sm:$0xf]
      %v432 = vld [vmem:[%s1 + $0x15c] sm:$0xf]
      %v433 = vld [vmem:[%s1 + $0x160] sm:$0xf]
      %v434 = vld [vmem:[%s1 + $0x164] sm:$0xf]
      %v435 = vld [vmem:[%s1 + $0x168] sm:$0xf]
      %v436 = vld [vmem:[%s1 + $0x16c] sm:$0xf]
      %v437 = vld [vmem:[%s1 + $0x170] sm:$0xf]
      %v438 = vld [vmem:[%s1 + $0x174] sm:$0xf]
      %v439 = vld [vmem:[%s1 + $0x178] sm:$0xf]
      %v440 = vld [vmem:[%s1 + $0x17c] sm:$0xf]
      %v441 = vld [vmem:[%s1 + $0x180] sm:$0xf]
      %v442 = vld [vmem:[%s1 + $0x184] sm:$0xf]
      %v443 = vld [vmem:[%s1 + $0x188] sm:$0xf]
      %v444 = vld [vmem:[%s1 + $0x18c] sm:$0xf]
      %v445 = vld [vmem:[%s1 + $0x190] sm:$0xf]
      %v446 = vld [vmem:[%s1 + $0x194] sm:$0xf]
      %v447 = vld [vmem:[%s1 + $0x198] sm:$0xf]
      %v448 = vld [vmem:[%s1 + $0x19c] sm:$0xf]
      %v449 = vld [vmem:[%s1 + $0x1a0] sm:$0xf]
      %v450 = vld [vmem:[%s1 + $0x1a4] sm:$0xf]
      %v451 = vld [vmem:[%s1 + $0x1a8] sm:$0xf]
      %v452 = vld [vmem:[%s1 + $0x1ac] sm:$0xf]
      %v453 = vld [vmem:[%s1 + $0x1b0] sm:$0xf]
      %v454 = vld [vmem:[%s1 + $0x1b4] sm:$0xf]
      %v455 = vld [vmem:[%s1 + $0x1b8] sm:$0xf]
      %v456 = vld [vmem:[%s1 + $0x1bc] sm:$0xf]
      %v457 = vld [vmem:[%s1 + $0x1c0] sm:$0xf]
      %v458 = vld [vmem:[%s1 + $0x1c4] sm:$0xf]
      %v459 = vld [vmem:[%s1 + $0x1c8] sm:$0xf]
      %v460 = vld [vmem:[%s1 + $0x1cc] sm:$0xf]
      %v461 = vld [vmem:[%s1 + $0x1d0] sm:$0xf]
      %v462 = vld [vmem:[%s1 + $0x1d4] sm:$0xf]
      %v463 = vld [vmem:[%s1 + $0x1d8] sm:$0xf]
      %v464 = vld [vmem:[%s1 + $0x1dc] sm:$0xf]
      %v465 = vld [vmem:[%s1 + $0x1e0] sm:$0xf]
      %v466 = vld [vmem:[%s1 + $0x1e4] sm:$0xf]
      %v467 = vld [vmem:[%s1 + $0x1e8] sm:$0xf]
      %v468 = vld [vmem:[%s1 + $0x1ec] sm:$0xf]
      %v469 = vld [vmem:[%s1 + $0x1f0] sm:$0xf]
      %v470 = vld [vmem:[%s1 + $0x1f4] sm:$0xf]
      %v471 = vld [vmem:[%s1 + $0x1f8] sm:$0xf]
      %v472 = vld [vmem:[%s1 + $0x1fc] sm:$0xf]
      %v473 = vld [vmem:[%s1 + $0x200] sm:$0xf]
      %v474 = vld [vmem:[%s1 + $0x204] sm:$0xf]
      %v475 = vld [vmem:[%s1 + $0x208] sm:$0xf]
      %v476 = vld [vmem:[%s1 + $0x20c] sm:$0xf]
      %v477 = vld [vmem:[%s1 + $0x210] sm:$0xf]
      %v478 = vld [vmem:[%s1 + $0x214] sm:$0xf]
      %v479 = vld [vmem:[%s1 + $0x218] sm:$0xf]
      %v480 = vld [vmem:[%s1 + $0x21c] sm:$0xf]
      %v481 = vld [vmem:[%s1 + $0x220] sm:$0xf]
      %v482 = vld [vmem:[%s1 + $0x224] sm:$0xf]
      %v483 = vld [vmem:[%s1 + $0x228] sm:$0xf]
      %v484 = vld [vmem:[%s1 + $0x22c] sm:$0xf]
      %v485 = vld [vmem:[%s1 + $0x230] sm:$0xf]
      %v486 = vld [vmem:[%s1 + $0x234] sm:$0xf]
      %v487 = vld [vmem:[%s1 + $0x238] sm:$0xf]
      %v488 = vld [vmem:[%s1 + $0x23c] sm:$0xf]
      %v499 = vunpack.c.l.b16 %v335
      %v500 = vunpack.c.h.b16 %v335
      %v501 = vunpack.c.l.b16 %v336
      %v502 = vunpack.c.h.b16 %v336
      %v503 = vunpack.c.l.b16 %v337
      %v504 = vunpack.c.h.b16 %v337
      %v505 = vunpack.c.l.b16 %v338
      %v506 = vunpack.c.h.b16 %v338
      %v507 = vunpack.c.l.b16 %v339
      %v508 = vunpack.c.l.b16 %v340
      %v509 = vunpack.c.h.b16 %v340
      %v510 = vunpack.c.l.b16 %v341
      %v511 = vunpack.c.h.b16 %v341
      %v512 = vunpack.c.l.b16 %v342
      %v513 = vunpack.c.h.b16 %v342
      %v514 = vunpack.c.l.b16 %v343
      %v515 = vunpack.c.h.b16 %v343
      %v516 = vunpack.c.l.b16 %v344
      %v517 = vpack.c.b16 %v508, %v499
      %v518 = vpack.c.b16 %v509, %v500
      %v519 = vpack.c.b16 %v510, %v501
      %v520 = vpack.c.b16 %v511, %v502
      %v521 = vpack.c.b16 %v512, %v503
      %v522 = vpack.c.b16 %v513, %v504
      %v523 = vpack.c.b16 %v514, %v505
      %v524 = vpack.c.b16 %v515, %v506
      %v525 = vpack.c.b16 %v516, %v507
      %v679 = vunpack.c.l.b16 %v345
      %v680 = vunpack.c.l.b16 %v346
      %v681 = vunpack.c.l.b16 %v347
      %v682 = vunpack.c.l.b16 %v348
      %v683 = vunpack.c.l.b16 %v349
      %v684 = vunpack.c.l.b16 %v350
      %v685 = vunpack.c.l.b16 %v351
      %v686 = vunpack.c.l.b16 %v352
      %v687 = vunpack.c.l.b16 %v353
      %v688 = vunpack.c.l.b16 %v354
      %v689 = vunpack.c.l.b16 %v355
      %v690 = vunpack.c.l.b16 %v356
      %v691 = vunpack.c.l.b16 %v357
      %v692 = vunpack.c.l.b16 %v358
      %v693 = vunpack.c.l.b16 %v359
      %v694 = vunpack.c.l.b16 %v360
      %v695 = vunpack.c.l.b16 %v361
      %v696 = vunpack.c.l.b16 %v362
      %v697 = vunpack.c.l.b16 %v363
      %v698 = vunpack.c.l.b16 %v364
      %v699 = vunpack.c.l.b16 %v365
      %v700 = vunpack.c.l.b16 %v366
      %v701 = vunpack.c.l.b16 %v367
      %v702 = vunpack.c.l.b16 %v368
      %v703 = vunpack.c.l.b16 %v369
      %v704 = vunpack.c.l.b16 %v370
      %v705 = vunpack.c.l.b16 %v371
      %v706 = vunpack.c.l.b16 %v372
      %v707 = vunpack.c.l.b16 %v373
      %v708 = vunpack.c.l.b16 %v374
      %v709 = vunpack.c.l.b16 %v375
      %v710 = vunpack.c.l.b16 %v376
      %v711 = vunpack.c.l.b16 %v377
      %v712 = vunpack.c.l.b16 %v378
      %v713 = vunpack.c.l.b16 %v379
      %v714 = vunpack.c.l.b16 %v380
      %v715 = vunpack.c.l.b16 %v381
      %v716 = vunpack.c.l.b16 %v382
      %v717 = vunpack.c.l.b16 %v383
      %v718 = vunpack.c.l.b16 %v384
      %v719 = vunpack.c.l.b16 %v385
      %v720 = vunpack.c.l.b16 %v386
      %v721 = vunpack.c.l.b16 %v387
      %v722 = vunpack.c.l.b16 %v388
      %v723 = vunpack.c.l.b16 %v389
      %v724 = vunpack.c.l.b16 %v390
      %v725 = vunpack.c.l.b16 %v391
      %v726 = vunpack.c.l.b16 %v392
      %v727 = vunpack.c.l.b16 %v393
      %v728 = vunpack.c.l.b16 %v394
      %v729 = vunpack.c.l.b16 %v395
      %v730 = vunpack.c.l.b16 %v396
      %v731 = vunpack.c.l.b16 %v397
      %v732 = vunpack.c.l.b16 %v398
      %v733 = vunpack.c.l.b16 %v399
      %v734 = vunpack.c.l.b16 %v400
      %v735 = vunpack.c.l.b16 %v401
      %v736 = vunpack.c.l.b16 %v402
      %v737 = vunpack.c.l.b16 %v403
      %v738 = vunpack.c.l.b16 %v404
      %v739 = vunpack.c.l.b16 %v405
      %v740 = vunpack.c.l.b16 %v406
      %v741 = vunpack.c.l.b16 %v407
      %v742 = vunpack.c.l.b16 %v408
      %v743 = vunpack.c.l.b16 %v409
      %v744 = vunpack.c.l.b16 %v410
      %v745 = vunpack.c.l.b16 %v411
      %v746 = vunpack.c.l.b16 %v412
      %v747 = vunpack.c.l.b16 %v413
      %v748 = vunpack.c.l.b16 %v414
      %v749 = vunpack.c.l.b16 %v415
      %v750 = vunpack.c.l.b16 %v416
      %v751 = vunpack.c.l.b16 %v417
      %v752 = vunpack.c.l.b16 %v418
      %v753 = vunpack.c.l.b16 %v419
      %v754 = vunpack.c.l.b16 %v420
      %v755 = vunpack.c.l.b16 %v421
      %v756 = vunpack.c.l.b16 %v422
      %v757 = vunpack.c.l.b16 %v423
      %v758 = vunpack.c.l.b16 %v424
      %v759 = vunpack.c.l.b16 %v425
      %v760 = vunpack.c.l.b16 %v426
      %v761 = vunpack.c.l.b16 %v427
      %v762 = vunpack.c.l.b16 %v428
      %v763 = vunpack.c.l.b16 %v429
      %v764 = vunpack.c.l.b16 %v430
      %v765 = vunpack.c.l.b16 %v431
      %v766 = vunpack.c.l.b16 %v432
      %v767 = vunpack.c.l.b16 %v433
      %v768 = vunpack.c.l.b16 %v434
      %v769 = vunpack.c.l.b16 %v435
      %v770 = vunpack.c.l.b16 %v436
      %v771 = vunpack.c.l.b16 %v437
      %v772 = vunpack.c.l.b16 %v438
      %v773 = vunpack.c.l.b16 %v439
      %v774 = vunpack.c.l.b16 %v440
      %v775 = vunpack.c.l.b16 %v441
      %v776 = vunpack.c.l.b16 %v442
      %v777 = vunpack.c.l.b16 %v443
      %v778 = vunpack.c.l.b16 %v444
      %v779 = vunpack.c.l.b16 %v445
      %v780 = vunpack.c.l.b16 %v446
      %v781 = vunpack.c.l.b16 %v447
      %v782 = vunpack.c.l.b16 %v448
      %v783 = vunpack.c.l.b16 %v449
      %v784 = vunpack.c.l.b16 %v450
      %v785 = vunpack.c.l.b16 %v451
      %v786 = vunpack.c.l.b16 %v452
      %v787 = vunpack.c.l.b16 %v453
      %v788 = vunpack.c.l.b16 %v454
      %v789 = vunpack.c.l.b16 %v455
      %v790 = vunpack.c.l.b16 %v456
      %v791 = vunpack.c.l.b16 %v457
      %v792 = vunpack.c.l.b16 %v458
      %v793 = vunpack.c.l.b16 %v459
      %v794 = vunpack.c.l.b16 %v460
      %v795 = vunpack.c.l.b16 %v461
      %v796 = vunpack.c.l.b16 %v462
      %v797 = vunpack.c.l.b16 %v463
      %v798 = vunpack.c.l.b16 %v464
      %v799 = vunpack.c.l.b16 %v465
      %v800 = vunpack.c.l.b16 %v466
      %v801 = vunpack.c.l.b16 %v467
      %v802 = vunpack.c.l.b16 %v468
      %v803 = vunpack.c.l.b16 %v469
      %v804 = vunpack.c.l.b16 %v470
      %v805 = vunpack.c.l.b16 %v471
      %v806 = vunpack.c.l.b16 %v472
      %v807 = vunpack.c.l.b16 %v473
      %v808 = vunpack.c.l.b16 %v474
      %v809 = vunpack.c.l.b16 %v475
      %v810 = vunpack.c.l.b16 %v476
      %v811 = vunpack.c.l.b16 %v477
      %v812 = vunpack.c.l.b16 %v478
      %v813 = vunpack.c.l.b16 %v479
      %v814 = vunpack.c.l.b16 %v480
      %v815 = vunpack.c.l.b16 %v481
      %v816 = vunpack.c.l.b16 %v482
      %v817 = vunpack.c.l.b16 %v483
      %v818 = vunpack.c.l.b16 %v484
      %v819 = vunpack.c.l.b16 %v485
      %v820 = vunpack.c.l.b16 %v486
      %v821 = vunpack.c.l.b16 %v487
      %v822 = vunpack.c.l.b16 %v488
      %v823 = vpack.c.b16 %v680, %v679
      %v824 = vpack.c.b16 %v682, %v681
      %v825 = vpack.c.b16 %v684, %v683
      %v826 = vpack.c.b16 %v686, %v685
      %v827 = vpack.c.b16 %v688, %v687
      %v828 = vpack.c.b16 %v690, %v689
      %v829 = vpack.c.b16 %v692, %v691
      %v830 = vpack.c.b16 %v694, %v693
      %v831 = vpack.c.b16 %v696, %v695
      %v832 = vpack.c.b16 %v698, %v697
      %v833 = vpack.c.b16 %v700, %v699
      %v834 = vpack.c.b16 %v702, %v701
      %v835 = vpack.c.b16 %v704, %v703
      %v836 = vpack.c.b16 %v706, %v705
      %v837 = vpack.c.b16 %v708, %v707
      %v838 = vpack.c.b16 %v710, %v709
      %v839 = vpack.c.b16 %v712, %v711
      %v840 = vpack.c.b16 %v714, %v713
      %v841 = vpack.c.b16 %v716, %v715
      %v842 = vpack.c.b16 %v718, %v717
      %v843 = vpack.c.b16 %v720, %v719
      %v844 = vpack.c.b16 %v722, %v721
      %v845 = vpack.c.b16 %v724, %v723
      %v846 = vpack.c.b16 %v726, %v725
      %v847 = vpack.c.b16 %v728, %v727
      %v848 = vpack.c.b16 %v730, %v729
      %v849 = vpack.c.b16 %v732, %v731
      %v850 = vpack.c.b16 %v734, %v733
      %v851 = vpack.c.b16 %v736, %v735
      %v852 = vpack.c.b16 %v738, %v737
      %v853 = vpack.c.b16 %v740, %v739
      %v854 = vpack.c.b16 %v742, %v741
      %v855 = vpack.c.b16 %v744, %v743
      %v856 = vpack.c.b16 %v746, %v745
      %v857 = vpack.c.b16 %v748, %v747
      %v858 = vpack.c.b16 %v750, %v749
      %v859 = vpack.c.b16 %v752, %v751
      %v860 = vpack.c.b16 %v754, %v753
      %v861 = vpack.c.b16 %v756, %v755
      %v862 = vpack.c.b16 %v758, %v757
      %v863 = vpack.c.b16 %v760, %v759
      %v864 = vpack.c.b16 %v762, %v761
      %v865 = vpack.c.b16 %v764, %v763
      %v866 = vpack.c.b16 %v766, %v765
      %v867 = vpack.c.b16 %v768, %v767
      %v868 = vpack.c.b16 %v770, %v769
      %v869 = vpack.c.b16 %v772, %v771
      %v870 = vpack.c.b16 %v774, %v773
      %v871 = vpack.c.b16 %v776, %v775
      %v872 = vpack.c.b16 %v778, %v777
      %v873 = vpack.c.b16 %v780, %v779
      %v874 = vpack.c.b16 %v782, %v781
      %v875 = vpack.c.b16 %v784, %v783
      %v876 = vpack.c.b16 %v786, %v785
      %v877 = vpack.c.b16 %v788, %v787
      %v878 = vpack.c.b16 %v790, %v789
      %v879 = vpack.c.b16 %v792, %v791
      %v880 = vpack.c.b16 %v794, %v793
      %v881 = vpack.c.b16 %v796, %v795
      %v882 = vpack.c.b16 %v798, %v797
      %v883 = vpack.c.b16 %v800, %v799
      %v884 = vpack.c.b16 %v802, %v801
      %v885 = vpack.c.b16 %v804, %v803
      %v886 = vpack.c.b16 %v806, %v805
      %v887 = vpack.c.b16 %v808, %v807
      %v888 = vpack.c.b16 %v810, %v809
      %v889 = vpack.c.b16 %v812, %v811
      %v890 = vpack.c.b16 %v814, %v813
      %v891 = vpack.c.b16 %v816, %v815
      %v892 = vpack.c.b16 %v818, %v817
      %v893 = vpack.c.b16 %v820, %v819
      %v894 = vpack.c.b16 %v822, %v821
      %967 = vmatprep.subr.bf16.mxu0 0
      %968 = vmatpush1.bf16.msra.mxu0 %v830
      %969 = vmatprep.subr.bf16.mxu0 0
      %970 = vmatpush1.bf16.msra.mxu0 %v829
      %971 = vmatprep.subr.bf16.mxu0 0
      %972 = vmatpush1.bf16.msra.mxu0 %v828
      %973 = vmatprep.subr.bf16.mxu0 0
      %974 = vmatpush1.bf16.msra.mxu0 %v827
      %975 = vmatprep.subr.bf16.mxu0 0
      %976 = vmatpush1.bf16.msra.mxu0 %v826
      %977 = vmatprep.subr.bf16.mxu0 0
      %978 = vmatpush1.bf16.msra.mxu0 %v825
      %979 = vmatprep.subr.bf16.mxu0 0
      %980 = vmatpush1.bf16.msra.mxu0 %v824
      %981 = vmatprep.subr.bf16.mxu0 0
      %982 = vmatpush1.bf16.msra.mxu0 %v823
      %983 = vmatprep.subr.bf16.mxu0 0
      %984 = vmatpush2.bf16.msra.mxu0 %v838
      %985 = vmatprep.subr.bf16.mxu0 0
      %986 = vmatpush2.bf16.msra.mxu0 %v837
      %987 = vmatprep.subr.bf16.mxu0 0
      %988 = vmatpush2.bf16.msra.mxu0 %v836
      %989 = vmatprep.subr.bf16.mxu0 0
      %990 = vmatpush2.bf16.msra.mxu0 %v835
      %991 = vmatprep.subr.bf16.mxu0 0
      %992 = vmatpush2.bf16.msra.mxu0 %v834
      %993 = vmatprep.subr.bf16.mxu0 0
      %994 = vmatpush2.bf16.msra.mxu0 %v833
      %995 = vmatprep.subr.bf16.mxu0 0
      %996 = vmatpush2.bf16.msra.mxu0 %v832
      %997 = vmatprep.subr.bf16.mxu0 0
      %998 = vmatpush2.bf16.msra.mxu0 %v831
      %999 = vmatprep.mubr.bf16.mxu0 %v518
      %1000 = vmatmul.mubr.bf16.gmra.mxu0 %v517
      %v1001 = vpop.f32.mrf.mxu0
      %v1002 = vadd.f32 0.0, %v1001
      %v1003 = vpop.f32.mrf.mxu0
      %v1004 = vpop.f32.mrf.mxu0
      %v1005 = vadd.f32 0.0, %v1004
      %v1006 = vpop.f32.mrf.mxu0
      %1007 = vdwg.mxu0
      %1008 = vmatprep.subr.bf16.mxu0 0
      %1009 = vmatpush1.bf16.msra.mxu0 %v846
      %1010 = vmatprep.subr.bf16.mxu0 0
      %1011 = vmatpush1.bf16.msra.mxu0 %v845
      %1012 = vmatprep.subr.bf16.mxu0 0
      %1013 = vmatpush1.bf16.msra.mxu0 %v844
      %1014 = vmatprep.subr.bf16.mxu0 0
      %1015 = vmatpush1.bf16.msra.mxu0 %v843
      %1016 = vmatprep.subr.bf16.mxu0 0
      %1017 = vmatpush1.bf16.msra.mxu0 %v842
      %1018 = vmatprep.subr.bf16.mxu0 0
      %1019 = vmatpush1.bf16.msra.mxu0 %v841
      %1020 = vmatprep.subr.bf16.mxu0 0
      %1021 = vmatpush1.bf16.msra.mxu0 %v840
      %1022 = vmatprep.subr.bf16.mxu0 0
      %1023 = vmatpush1.bf16.msra.mxu0 %v839
      %1024 = vmatprep.subr.bf16.mxu0 0
      %1025 = vmatpush2.bf16.msra.mxu0 %v854
      %1026 = vmatprep.subr.bf16.mxu0 0
      %1027 = vmatpush2.bf16.msra.mxu0 %v853
      %1028 = vmatprep.subr.bf16.mxu0 0
      %1029 = vmatpush2.bf16.msra.mxu0 %v852
      %1030 = vmatprep.subr.bf16.mxu0 0
      %1031 = vmatpush2.bf16.msra.mxu0 %v851
      %1032 = vmatprep.subr.bf16.mxu0 0
      %1033 = vmatpush2.bf16.msra.mxu0 %v850
      %1034 = vmatprep.subr.bf16.mxu0 0
      %1035 = vmatpush2.bf16.msra.mxu0 %v849
      %1036 = vmatprep.subr.bf16.mxu0 0
      %1037 = vmatpush2.bf16.msra.mxu0 %v848
      %1038 = vmatprep.subr.bf16.mxu0 0
      %1039 = vmatpush2.bf16.msra.mxu0 %v847
      %1040 = vmatprep.mubr.bf16.mxu0 %v520
      %1041 = vmatmul.mubr.bf16.gmra.mxu0 %v519
      %v1042 = vpop.f32.mrf.mxu0
      %v1043 = vadd.f32 %v1002, %v1042
      %v1044 = vpop.f32.mrf.mxu0
      %v1045 = vpop.f32.mrf.mxu0
      %v1046 = vadd.f32 %v1005, %v1045
      %v1047 = vpop.f32.mrf.mxu0
      %1048 = vdwg.mxu0
      %1049 = vmatprep.subr.bf16.mxu0 0
      %1050 = vmatpush1.bf16.msra.mxu0 %v862
      %1051 = vmatprep.subr.bf16.mxu0 0
      %1052 = vmatpush1.bf16.msra.mxu0 %v861
      %1053 = vmatprep.subr.bf16.mxu0 0
      %1054 = vmatpush1.bf16.msra.mxu0 %v860
      %1055 = vmatprep.subr.bf16.mxu0 0
      %1056 = vmatpush1.bf16.msra.mxu0 %v859
      %1057 = vmatprep.subr.bf16.mxu0 0
      %1058 = vmatpush1.bf16.msra.mxu0 %v858
      %1059 = vmatprep.subr.bf16.mxu0 0
      %1060 = vmatpush1.bf16.msra.mxu0 %v857
      %1061 = vmatprep.subr.bf16.mxu0 0
      %1062 = vmatpush1.bf16.msra.mxu0 %v856
      %1063 = vmatprep.subr.bf16.mxu0 0
      %1064 = vmatpush1.bf16.msra.mxu0 %v855
      %1065 = vmatprep.subr.bf16.mxu0 0
      %1066 = vmatpush2.bf16.msra.mxu0 %v870
      %1067 = vmatprep.subr.bf16.mxu0 0
      %1068 = vmatpush2.bf16.msra.mxu0 %v869
      %1069 = vmatprep.subr.bf16.mxu0 0
      %1070 = vmatpush2.bf16.msra.mxu0 %v868
      %1071 = vmatprep.subr.bf16.mxu0 0
      %1072 = vmatpush2.bf16.msra.mxu0 %v867
      %1073 = vmatprep.subr.bf16.mxu0 0
      %1074 = vmatpush2.bf16.msra.mxu0 %v866
      %1075 = vmatprep.subr.bf16.mxu0 0
      %1076 = vmatpush2.bf16.msra.mxu0 %v865
      %1077 = vmatprep.subr.bf16.mxu0 0
      %1078 = vmatpush2.bf16.msra.mxu0 %v864
      %1079 = vmatprep.subr.bf16.mxu0 0
      %1080 = vmatpush2.bf16.msra.mxu0 %v863
      %1081 = vmatprep.mubr.bf16.mxu0 %v522
      %1082 = vmatmul.mubr.bf16.gmra.mxu0 %v521
      %v1083 = vpop.f32.mrf.mxu0
      %v1084 = vadd.f32 %v1043, %v1083
      %v1085 = vpop.f32.mrf.mxu0
      %v1086 = vpop.f32.mrf.mxu0
      %v1087 = vadd.f32 %v1046, %v1086
      %v1088 = vpop.f32.mrf.mxu0
      %1089 = vdwg.mxu0
      %1090 = vmatprep.subr.bf16.mxu0 0
      %1091 = vmatpush1.bf16.msra.mxu0 %v878
      %1092 = vmatprep.subr.bf16.mxu0 0
      %1093 = vmatpush1.bf16.msra.mxu0 %v877
      %1094 = vmatprep.subr.bf16.mxu0 0
      %1095 = vmatpush1.bf16.msra.mxu0 %v876
      %1096 = vmatprep.subr.bf16.mxu0 0
      %1097 = vmatpush1.bf16.msra.mxu0 %v875
      %1098 = vmatprep.subr.bf16.mxu0 0
      %1099 = vmatpush1.bf16.msra.mxu0 %v874
      %1100 = vmatprep.subr.bf16.mxu0 0
      %1101 = vmatpush1.bf16.msra.mxu0 %v873
      %1102 = vmatprep.subr.bf16.mxu0 0
      %1103 = vmatpush1.bf16.msra.mxu0 %v872
      %1104 = vmatprep.subr.bf16.mxu0 0
      %1105 = vmatpush1.bf16.msra.mxu0 %v871
      %1106 = vmatprep.subr.bf16.mxu0 0
      %1107 = vmatpush2.bf16.msra.mxu0 %v886
      %1108 = vmatprep.subr.bf16.mxu0 0
      %1109 = vmatpush2.bf16.msra.mxu0 %v885
      %1110 = vmatprep.subr.bf16.mxu0 0
      %1111 = vmatpush2.bf16.msra.mxu0 %v884
      %1112 = vmatprep.subr.bf16.mxu0 0
      %1113 = vmatpush2.bf16.msra.mxu0 %v883
      %1114 = vmatprep.subr.bf16.mxu0 0
      %1115 = vmatpush2.bf16.msra.mxu0 %v882
      %1116 = vmatprep.subr.bf16.mxu0 0
      %1117 = vmatpush2.bf16.msra.mxu0 %v881
      %1118 = vmatprep.subr.bf16.mxu0 0
      %1119 = vmatpush2.bf16.msra.mxu0 %v880
      %1120 = vmatprep.subr.bf16.mxu0 0
      %1121 = vmatpush2.bf16.msra.mxu0 %v879
      %1122 = vmatprep.mubr.bf16.mxu0 %v524
      %1123 = vmatmul.mubr.bf16.gmra.mxu0 %v523
      %v1124 = vpop.f32.mrf.mxu0
      %v1125 = vadd.f32 %v1084, %v1124
      %v1126 = vpop.f32.mrf.mxu0
      %v1127 = vpop.f32.mrf.mxu0
      %v1128 = vadd.f32 %v1087, %v1127
      %v1129 = vpop.f32.mrf.mxu0
      %1130 = vdwg.mxu0
      %1131 = vmatprep.subr.bf16.mxu0 0
      %1132 = vmatpush1.bf16.msra.mxu0 %v894
      %1133 = vmatprep.subr.bf16.mxu0 0
      %1134 = vmatpush1.bf16.msra.mxu0 %v893
      %1135 = vmatprep.subr.bf16.mxu0 0
      %1136 = vmatpush1.bf16.msra.mxu0 %v892
      %1137 = vmatprep.subr.bf16.mxu0 0
      %1138 = vmatpush1.bf16.msra.mxu0 %v891
      %1139 = vmatprep.subr.bf16.mxu0 0
      %1140 = vmatpush1.bf16.msra.mxu0 %v890
      %1141 = vmatprep.subr.bf16.mxu0 0
      %1142 = vmatpush1.bf16.msra.mxu0 %v889
      %1143 = vmatprep.subr.bf16.mxu0 0
      %1144 = vmatpush1.bf16.msra.mxu0 %v888
      %1145 = vmatprep.subr.bf16.mxu0 0
      %1146 = vmatpush1.bf16.msra.mxu0 %v887
      %1147 = vmatprep.subr.bf16.mxu0 0
      %1148 = vmatpush2.bf16.msra.mxu0 0
      %1149 = vmatprep.subr.bf16.mxu0 0
      %1150 = vmatpush2.bf16.msra.mxu0 0
      %1151 = vmatprep.subr.bf16.mxu0 0
      %1152 = vmatpush2.bf16.msra.mxu0 0
      %1153 = vmatprep.subr.bf16.mxu0 0
      %1154 = vmatpush2.bf16.msra.mxu0 0
      %1155 = vmatprep.subr.bf16.mxu0 0
      %1156 = vmatpush2.bf16.msra.mxu0 0
      %1157 = vmatprep.subr.bf16.mxu0 0
      %1158 = vmatpush2.bf16.msra.mxu0 0
      %1159 = vmatprep.subr.bf16.mxu0 0
      %1160 = vmatpush2.bf16.msra.mxu0 0
      %1161 = vmatprep.subr.bf16.mxu0 0
      %1162 = vmatpush2.bf16.msra.mxu0 0
      %1163 = vmatprep.mubr.bf16.mxu0 0
      %1164 = vmatmul.mubr.bf16.gmra.mxu0 %v525
      %v1165 = vpop.f32.mrf.mxu0
      %v1166 = vadd.f32 %v1125, %v1165
      %v1167 = vpop.f32.mrf.mxu0
      %v1168 = vpop.f32.mrf.mxu0
      %v1169 = vadd.f32 %v1128, %v1168
      %v1170 = vpop.f32.mrf.mxu0
      %1171 = vdwg.mxu0
      %v1172 = vld [vmem:[%s2] sm:$0x1]
      %v1174 = vlaneseq
      %v1175 = vshrl.u32 %v1174, 7
      %v1176 = vsub.s32 0, %v1175
      %v1177 = vrot.slane %v1172, %v1176
      %v1179 = vmul.f32 %v1166, %v1177
      %v1180 = vmul.f32 %v1169, %v1177
      %v1181 = vld [vmem:[%s3] sm:$0x1]
      %v1183 = vlaneseq
      %v1184 = vshrl.u32 %v1183, 7
      %v1185 = vsub.s32 0, %v1184
      %v1186 = vrot.slane %v1181, %v1185
      %v1188 = vadd.f32 %v1179, %v1186
      %v1189 = vadd.f32 %v1180, %v1186
      %v1190 = vld [vmem:[%s326] sm:$0xf]
      %v1191 = vld [vmem:[%s326 + $0x4] sm:$0xf]
      %v1192 = vld [vmem:[%s5] sm:$0xf]
      %v1193 = vld [vmem:[%s5 + $0x4] sm:$0xf]
      %v1194 = vld [vmem:[%s5 + $0x8] sm:$0xf]
      %v1195 = vld [vmem:[%s5 + $0xc] sm:$0xf]
      %v1196 = vld [vmem:[%s5 + $0x10] sm:$0xf]
      %v1197 = vld [vmem:[%s5 + $0x14] sm:$0xf]
      %v1198 = vld [vmem:[%s5 + $0x18] sm:$0xf]
      %v1199 = vld [vmem:[%s5 + $0x1c] sm:$0xf]
      %v1202 = vunpack.c.l.b16 %v1190
      %v1203 = vunpack.c.l.b16 %v1191
      %v1204 = vpack.c.b16 %v1203, %v1202
      %v1213 = vunpack.c.l.b16 %v1192
      %v1214 = vunpack.c.l.b16 %v1193
      %v1215 = vunpack.c.l.b16 %v1194
      %v1216 = vunpack.c.l.b16 %v1195
      %v1217 = vunpack.c.l.b16 %v1196
      %v1218 = vunpack.c.l.b16 %v1197
      %v1219 = vunpack.c.l.b16 %v1198
      %v1220 = vunpack.c.l.b16 %v1199
      %v1221 = vpack.c.b16 %v1214, %v1213
      %v1222 = vpack.c.b16 %v1216, %v1215
      %v1223 = vpack.c.b16 %v1218, %v1217
      %v1224 = vpack.c.b16 %v1220, %v1219
      %vm1229 = vcmask 523264
      %v1231 = vsel %vm1229, %v1204, 0
      %1233 = vmatprep.subr.bf16.mxu0 0
      %1234 = vmatpush1.bf16.msra.mxu0 0
      %1235 = vmatprep.subr.bf16.mxu0 0
      %1236 = vmatpush1.bf16.msra.mxu0 0
      %1237 = vmatprep.subr.bf16.mxu0 0
      %1238 = vmatpush1.bf16.msra.mxu0 0
      %1239 = vmatprep.subr.bf16.mxu0 0
      %1240 = vmatpush1.bf16.msra.mxu0 0
      %1241 = vmatprep.subr.bf16.mxu0 0
      %1242 = vmatpush1.bf16.msra.mxu0 %v1224
      %1243 = vmatprep.subr.bf16.mxu0 0
      %1244 = vmatpush1.bf16.msra.mxu0 %v1223
      %1245 = vmatprep.subr.bf16.mxu0 0
      %1246 = vmatpush1.bf16.msra.mxu0 %v1222
      %1247 = vmatprep.subr.bf16.mxu0 0
      %1248 = vmatpush1.bf16.msra.mxu0 %v1221
      %1249 = vmatprep.subr.bf16.mxu0 0
      %1250 = vmatpush2.bf16.msra.mxu0 0
      %1251 = vmatprep.subr.bf16.mxu0 0
      %1252 = vmatpush2.bf16.msra.mxu0 0
      %1253 = vmatprep.subr.bf16.mxu0 0
      %1254 = vmatpush2.bf16.msra.mxu0 0
      %1255 = vmatprep.subr.bf16.mxu0 0
      %1256 = vmatpush2.bf16.msra.mxu0 0
      %1257 = vmatprep.subr.bf16.mxu0 0
      %1258 = vmatpush2.bf16.msra.mxu0 0
      %1259 = vmatprep.subr.bf16.mxu0 0
      %1260 = vmatpush2.bf16.msra.mxu0 0
      %1261 = vmatprep.subr.bf16.mxu0 0
      %1262 = vmatpush2.bf16.msra.mxu0 0
      %1263 = vmatprep.subr.bf16.mxu0 0
      %1264 = vmatpush2.bf16.msra.mxu0 0
      %1265 = vmatprep.mubr.bf16.mxu0 0
      %1266 = vmatmul.mubr.bf16.gmra.mxu0 %v1231
      %v1267 = vpop.f32.mrf.mxu0
      %v1268 = vadd.f32 0.0, %v1267
      %v1269 = vpop.f32.mrf.mxu0
      %v1270 = vpop.f32.mrf.mxu0
      %v1271 = vadd.f32 0.0, %v1270
      %v1272 = vpop.f32.mrf.mxu0
      %1273 = vdwg.mxu0
      %v1274 = vld [vmem:[%s6] sm:$0x1]
      %v1276 = vlaneseq
      %v1277 = vshrl.u32 %v1276, 7
      %v1278 = vsub.s32 0, %v1277
      %v1279 = vrot.slane %v1274, %v1278
      %v1281 = vmul.f32 %v1268, %v1279
      %v1282 = vmul.f32 %v1271, %v1279
      %v1283 = vld [vmem:[%s7] sm:$0x1]
      %v1285 = vlaneseq
      %v1286 = vshrl.u32 %v1285, 7
      %v1287 = vsub.s32 0, %v1286
      %v1288 = vrot.slane %v1283, %v1287
      %v1290 = vadd.f32 %v1281, %v1288
      %v1291 = vadd.f32 %v1282, %v1288
      %v1292 = vadd.f32 %v1188, %v1290
      %v1293 = vadd.f32 %v1189, %v1291
      %v1294 = vmax.f32 %v1292, 0.0
      %v1295 = vmax.f32 %v1293, 0.0
      %v1296 = vpack.c.bf16 %v1295, %v1294
      %v1298 = vunpack.c.l.b16 %v1296
      %v1299 = vunpack.c.h.b16 %v1296
      %v1300 = vpack.c.b16 %v1298, %v1298
      %v1301 = vpack.c.b16 %v1299, %v1299
      %1304 = vst [vmem:[%s332] sm:$0xf] %v1300
      %1305 = vst [vmem:[%s332 + $0x4] sm:$0xf] %v1301
      %s1306 = smul.u32 2, %s19
      %p1307 = scmp.lt.s32.totalorder %s1306, 3
      %s1308 = scalar_select %p1307, %s1306, 3
      %s1309 = smul.addr %s1308, 4
      %s1310 = scalar_lea.vmem %s8, %s1309
      // Predicated region
      $region53: #{_lambda_.14} parent=51 // pred_check
        %p1311 = pneg %p215
      $region54: #{_lambda_.14} parent=51 // pred_check_branch
        %1313 = sbr.rel (%p1311) target = $region56
      $region55: #{_lambda_.14} parent=51 // pred_region
        %s1314 = smul.u32 2, %s19
      $region56: #{_lambda_.14} parent=51 // pred_fallthru
        _
    $region52: #{_lambda_.14} parent=5 // pred_fallthru
      _
    %p1315 = scmp.le.s32.totalorder 2, %s14
    // Predicated region
    $region57: #{_lambda_.14} parent=5 // pred_check
      %p1316 = pneg %p1315
    $region58: #{_lambda_.14} parent=5 // pred_check_branch
      %1318 = sbr.rel (%p1316) target = $region60
    $region59: #{_lambda_.14} parent=5 // pred_region
      %s1319 = ssub.s32 %s14, 2
      // Predicated region
      $region61: #{_lambda_.14} parent=59 // pred_check
        %p1320 = pneg %p221
      $region62: #{_lambda_.14} parent=59 // pred_check_branch
        %1322 = sbr.rel (%p1320) target = $region64
      $region63: #{_lambda_.14} parent=59 // pred_region
        %s1323 = smul.u32 2, %s20
        %p1324 = scmp.lt.s32.totalorder %s1323, 3
        %s1325 = scalar_select %p1324, %s1323, 3
        %s1326 = smul.addr %s1325, 4
        %s1327 = scalar_lea.vmem %s8, %s1326
      $region64: #{_lambda_.14} parent=59 // pred_fallthru
        _
    $region60: #{_lambda_.14} parent=5 // pred_fallthru
      _
  $region6: #{_lambda_.14} parent=0 // loop_footer
    %s18 = sadd.s32 1, %s14
  $region7: #{_lambda_.14} parent=0 // loop_footer_branch
    %13 = sbr.rel target = $region3
  $region8: #{_lambda_.14} parent=0 // loop_exit
    _

// kernel: _lambda_.15
$region0: #{_lambda_.15}
  #allocation0 [shape = 'u32[]', space=smem, size = 0x4, offset = 0x4, fixed_abs, tag = 'smem constant byte address 0x4 - core index']
  #allocation1 [shape = 'u32[144,128]{1,0:T(1,128)}', space=vmem, size = 0x12000, scoped, tag = 'internal scratch']
  %s0 = inlined_call_operand.vmem [shape: bf16[2,2048], index: 0, kind: input, shape index: {}]
  %s1 = inlined_call_operand.vmem [shape: bf16[2048,128], index: 1, kind: input, shape index: {}]
  %s2 = inlined_call_operand.vmem [shape: f32[1,128], index: 2, kind: input, shape index: {}]
  %s3 = inlined_call_operand.hbm [shape: f32[2,128], index: 3, kind: output, shape index: {}]
  %s4 = sld [smem:[#allocation0]]
  $region22: #{_lambda_.15} parent=0
    _
  %s6 = ssub.s32 1, %s4
  %s7 = scalar_select 0, %s6, %s4
  $region1: #{_lambda_.15} parent=0
    #allocation2 [shape = 'u8[1024]{0}', space=vmem, size = 0x400, scoped, tag = 'output window, operand 0, single buffered']
    #allocation3 [shape = 's32[1]{0}', space=sflag, size = 0x4, scoped, tag = 'scoped memory for _lambda_.15']
    %8 = vsyncpa [#allocation3], 0
    // Predicated region
    $region2: #{_lambda_.15} parent=1 // pred_check
      _
    $region3: #{_lambda_.15} parent=1 // pred_check_branch
      %10 = sbr.rel (0) target = $region5
    $region4: #{_lambda_.15} parent=1 // pred_region
      _
    $region5: #{_lambda_.15} parent=1 // pred_fallthru
      _
    // Predicated region
    $region6: #{_lambda_.15} parent=1 // pred_check
      _
    $region7: #{_lambda_.15} parent=1 // pred_check_branch
      %12 = sbr.rel (0) target = $region9
    $region8: #{_lambda_.15} parent=1 // pred_region
      _
    $region9: #{_lambda_.15} parent=1 // pred_fallthru
      _
    // Predicated region
    $region10: #{_lambda_.15} parent=1 // pred_check
      _
    $region11: #{_lambda_.15} parent=1 // pred_check_branch
      %14 = sbr.rel (0) target = $region13
    $region12: #{_lambda_.15} parent=1 // pred_region
      _
    $region13: #{_lambda_.15} parent=1 // pred_fallthru
      _
    %v16 = vld [vmem:[%s0] sm:$0xff]
    %v17 = vld [vmem:[%s0 + $0x8] sm:$0xff]
    %v18 = vld [vmem:[%s1] sm:$0xf]
    %v19 = vld [vmem:[%s1 + $0x4] sm:$0xf]
    %v20 = vld [vmem:[%s1 + $0x8] sm:$0xf]
    %v21 = vld [vmem:[%s1 + $0xc] sm:$0xf]
    %v22 = vld [vmem:[%s1 + $0x10] sm:$0xf]
    %v23 = vld [vmem:[%s1 + $0x14] sm:$0xf]
    %v24 = vld [vmem:[%s1 + $0x18] sm:$0xf]
    %v25 = vld [vmem:[%s1 + $0x1c] sm:$0xf]
    %v26 = vld [vmem:[%s1 + $0x20] sm:$0xf]
    %v27 = vld [vmem:[%s1 + $0x24] sm:$0xf]
    %v28 = vld [vmem:[%s1 + $0x28] sm:$0xf]
    %v29 = vld [vmem:[%s1 + $0x2c] sm:$0xf]
    %v30 = vld [vmem:[%s1 + $0x30] sm:$0xf]
    %v31 = vld [vmem:[%s1 + $0x34] sm:$0xf]
    %v32 = vld [vmem:[%s1 + $0x38] sm:$0xf]
    %v33 = vld [vmem:[%s1 + $0x3c] sm:$0xf]
    %v34 = vld [vmem:[%s1 + $0x40] sm:$0xf]
    %v35 = vld [vmem:[%s1 + $0x44] sm:$0xf]
    %v36 = vld [vmem:[%s1 + $0x48] sm:$0xf]
    %v37 = vld [vmem:[%s1 + $0x4c] sm:$0xf]
    %v38 = vld [vmem:[%s1 + $0x50] sm:$0xf]
    %v39 = vld [vmem:[%s1 + $0x54] sm:$0xf]
    %v40 = vld [vmem:[%s1 + $0x58] sm:$0xf]
    %v41 = vld [vmem:[%s1 + $0x5c] sm:$0xf]
    %v42 = vld [vmem:[%s1 + $0x60] sm:$0xf]
    %v43 = vld [vmem:[%s1 + $0x64] sm:$0xf]
    %v44 = vld [vmem:[%s1 + $0x68] sm:$0xf]
    %v45 = vld [vmem:[%s1 + $0x6c] sm:$0xf]
    %v46 = vld [vmem:[%s1 + $0x70] sm:$0xf]
    %v47 = vld [vmem:[%s1 + $0x74] sm:$0xf]
    %v48 = vld [vmem:[%s1 + $0x78] sm:$0xf]
    %v49 = vld [vmem:[%s1 + $0x7c] sm:$0xf]
    %v50 = vld [vmem:[%s1 + $0x80] sm:$0xf]
    %v51 = vld [vmem:[%s1 + $0x84] sm:$0xf]
    %v52 = vld [vmem:[%s1 + $0x88] sm:$0xf]
    %v53 = vld [vmem:[%s1 + $0x8c] sm:$0xf]
    %v54 = vld [vmem:[%s1 + $0x90] sm:$0xf]
    %v55 = vld [vmem:[%s1 + $0x94] sm:$0xf]
    %v56 = vld [vmem:[%s1 + $0x98] sm:$0xf]
    %v57 = vld [vmem:[%s1 + $0x9c] sm:$0xf]
    %v58 = vld [vmem:[%s1 + $0xa0] sm:$0xf]
    %v59 = vld [vmem:[%s1 + $0xa4] sm:$0xf]
    %v60 = vld [vmem:[%s1 + $0xa8] sm:$0xf]
    %v61 = vld [vmem:[%s1 + $0xac] sm:$0xf]
    %v62 = vld [vmem:[%s1 + $0xb0] sm:$0xf]
    %v63 = vld [vmem:[%s1 + $0xb4] sm:$0xf]
    %v64 = vld [vmem:[%s1 + $0xb8] sm:$0xf]
    %v65 = vld [vmem:[%s1 + $0xbc] sm:$0xf]
    %v66 = vld [vmem:[%s1 + $0xc0] sm:$0xf]
    %v67 = vld [vmem:[%s1 + $0xc4] sm:$0xf]
    %v68 = vld [vmem:[%s1 + $0xc8] sm:$0xf]
    %v69 = vld [vmem:[%s1 + $0xcc] sm:$0xf]
    %v70 = vld [vmem:[%s1 + $0xd0] sm:$0xf]
    %v71 = vld [vmem:[%s1 + $0xd4] sm:$0xf]
    %v72 = vld [vmem:[%s1 + $0xd8] sm:$0xf]
    %v73 = vld [vmem:[%s1 + $0xdc] sm:$0xf]
    %v74 = vld [vmem:[%s1 + $0xe0] sm:$0xf]
    %v75 = vld [vmem:[%s1 + $0xe4] sm:$0xf]
    %v76 = vld [vmem:[%s1 + $0xe8] sm:$0xf]
    %v77 = vld [vmem:[%s1 + $0xec] sm:$0xf]
    %v78 = vld [vmem:[%s1 + $0xf0] sm:$0xf]
    %v79 = vld [vmem:[%s1 + $0xf4] sm:$0xf]
    %v80 = vld [vmem:[%s1 + $0xf8] sm:$0xf]
    %v81 = vld [vmem:[%s1 + $0xfc] sm:$0xf]
    %v82 = vld [vmem:[%s1 + $0x100] sm:$0xf]
    %v83 = vld [vmem:[%s1 + $0x104] sm:$0xf]
    %v84 = vld [vmem:[%s1 + $0x108] sm:$0xf]
    %v85 = vld [vmem:[%s1 + $0x10c] sm:$0xf]
    %v86 = vld [vmem:[%s1 + $0x110] sm:$0xf]
    %v87 = vld [vmem:[%s1 + $0x114] sm:$0xf]
    %v88 = vld [vmem:[%s1 + $0x118] sm:$0xf]
    %v89 = vld [vmem:[%s1 + $0x11c] sm:$0xf]
    %v90 = vld [vmem:[%s1 + $0x120] sm:$0xf]
    %v91 = vld [vmem:[%s1 + $0x124] sm:$0xf]
    %v92 = vld [vmem:[%s1 + $0x128] sm:$0xf]
    %v93 = vld [vmem:[%s1 + $0x12c] sm:$0xf]
    %v94 = vld [vmem:[%s1 + $0x130] sm:$0xf]
    %v95 = vld [vmem:[%s1 + $0x134] sm:$0xf]
    %v96 = vld [vmem:[%s1 + $0x138] sm:$0xf]
    %v97 = vld [vmem:[%s1 + $0x13c] sm:$0xf]
    %v98 = vld [vmem:[%s1 + $0x140] sm:$0xf]
    %v99 = vld [vmem:[%s1 + $0x144] sm:$0xf]
    %v100 = vld [vmem:[%s1 + $0x148] sm:$0xf]
    %v101 = vld [vmem:[%s1 + $0x14c] sm:$0xf]
    %v102 = vld [vmem:[%s1 + $0x150] sm:$0xf]
    %v103 = vld [vmem:[%s1 + $0x154] sm:$0xf]
    %v104 = vld [vmem:[%s1 + $0x158] sm:$0xf]
    %v105 = vld [vmem:[%s1 + $0x15c] sm:$0xf]
    %v106 = vld [vmem:[%s1 + $0x160] sm:$0xf]
    %v107 = vld [vmem:[%s1 + $0x164] sm:$0xf]
    %v108 = vld [vmem:[%s1 + $0x168] sm:$0xf]
    %v109 = vld [vmem:[%s1 + $0x16c] sm:$0xf]
    %v110 = vld [vmem:[%s1 + $0x170] sm:$0xf]
    %v111 = vld [vmem:[%s1 + $0x174] sm:$0xf]
    %v112 = vld [vmem:[%s1 + $0x178] sm:$0xf]
    %v113 = vld [vmem:[%s1 + $0x17c] sm:$0xf]
    %v114 = vld [vmem:[%s1 + $0x180] sm:$0xf]
    %v115 = vld [vmem:[%s1 + $0x184] sm:$0xf]
    %v116 = vld [vmem:[%s1 + $0x188] sm:$0xf]
    %v117 = vld [vmem:[%s1 + $0x18c] sm:$0xf]
    %v118 = vld [vmem:[%s1 + $0x190] sm:$0xf]
    %v119 = vld [vmem:[%s1 + $0x194] sm:$0xf]
    %v120 = vld [vmem:[%s1 + $0x198] sm:$0xf]
    %v121 = vld [vmem:[%s1 + $0x19c] sm:$0xf]
    %v122 = vld [vmem:[%s1 + $0x1a0] sm:$0xf]
    %v123 = vld [vmem:[%s1 + $0x1a4] sm:$0xf]
    %v124 = vld [vmem:[%s1 + $0x1a8] sm:$0xf]
    %v125 = vld [vmem:[%s1 + $0x1ac] sm:$0xf]
    %v126 = vld [vmem:[%s1 + $0x1b0] sm:$0xf]
    %v127 = vld [vmem:[%s1 + $0x1b4] sm:$0xf]
    %v128 = vld [vmem:[%s1 + $0x1b8] sm:$0xf]
    %v129 = vld [vmem:[%s1 + $0x1bc] sm:$0xf]
    %v130 = vld [vmem:[%s1 + $0x1c0] sm:$0xf]
    %v131 = vld [vmem:[%s1 + $0x1c4] sm:$0xf]
    %v132 = vld [vmem:[%s1 + $0x1c8] sm:$0xf]
    %v133 = vld [vmem:[%s1 + $0x1cc] sm:$0xf]
    %v134 = vld [vmem:[%s1 + $0x1d0] sm:$0xf]
    %v135 = vld [vmem:[%s1 + $0x1d4] sm:$0xf]
    %v136 = vld [vmem:[%s1 + $0x1d8] sm:$0xf]
    %v137 = vld [vmem:[%s1 + $0x1dc] sm:$0xf]
    %v138 = vld [vmem:[%s1 + $0x1e0] sm:$0xf]
    %v139 = vld [vmem:[%s1 + $0x1e4] sm:$0xf]
    %v140 = vld [vmem:[%s1 + $0x1e8] sm:$0xf]
    %v141 = vld [vmem:[%s1 + $0x1ec] sm:$0xf]
    %v142 = vld [vmem:[%s1 + $0x1f0] sm:$0xf]
    %v143 = vld [vmem:[%s1 + $0x1f4] sm:$0xf]
    %v144 = vld [vmem:[%s1 + $0x1f8] sm:$0xf]
    %v145 = vld [vmem:[%s1 + $0x1fc] sm:$0xf]
    %v146 = vld [vmem:[%s1 + $0x200] sm:$0xf]
    %v147 = vld [vmem:[%s1 + $0x204] sm:$0xf]
    %v148 = vld [vmem:[%s1 + $0x208] sm:$0xf]
    %v149 = vld [vmem:[%s1 + $0x20c] sm:$0xf]
    %v150 = vld [vmem:[%s1 + $0x210] sm:$0xf]
    %v151 = vld [vmem:[%s1 + $0x214] sm:$0xf]
    %v152 = vld [vmem:[%s1 + $0x218] sm:$0xf]
    %v153 = vld [vmem:[%s1 + $0x21c] sm:$0xf]
    %v154 = vld [vmem:[%s1 + $0x220] sm:$0xf]
    %v155 = vld [vmem:[%s1 + $0x224] sm:$0xf]
    %v156 = vld [vmem:[%s1 + $0x228] sm:$0xf]
    %v157 = vld [vmem:[%s1 + $0x22c] sm:$0xf]
    %v158 = vld [vmem:[%s1 + $0x230] sm:$0xf]
    %v159 = vld [vmem:[%s1 + $0x234] sm:$0xf]
    %v160 = vld [vmem:[%s1 + $0x238] sm:$0xf]
    %v161 = vld [vmem:[%s1 + $0x23c] sm:$0xf]
    %v162 = vld [vmem:[%s1 + $0x240] sm:$0xf]
    %v163 = vld [vmem:[%s1 + $0x244] sm:$0xf]
    %v164 = vld [vmem:[%s1 + $0x248] sm:$0xf]
    %v165 = vld [vmem:[%s1 + $0x24c] sm:$0xf]
    %v166 = vld [vmem:[%s1 + $0x250] sm:$0xf]
    %v167 = vld [vmem:[%s1 + $0x254] sm:$0xf]
    %v168 = vld [vmem:[%s1 + $0x258] sm:$0xf]
    %v169 = vld [vmem:[%s1 + $0x25c] sm:$0xf]
    %v170 = vld [vmem:[%s1 + $0x260] sm:$0xf]
    %v171 = vld [vmem:[%s1 + $0x264] sm:$0xf]
    %v172 = vld [vmem:[%s1 + $0x268] sm:$0xf]
    %v173 = vld [vmem:[%s1 + $0x26c] sm:$0xf]
    %v174 = vld [vmem:[%s1 + $0x270] sm:$0xf]
    %v175 = vld [vmem:[%s1 + $0x274] sm:$0xf]
    %v176 = vld [vmem:[%s1 + $0x278] sm:$0xf]
    %v177 = vld [vmem:[%s1 + $0x27c] sm:$0xf]
    %v178 = vld [vmem:[%s1 + $0x280] sm:$0xf]
    %v179 = vld [vmem:[%s1 + $0x284] sm:$0xf]
    %v180 = vld [vmem:[%s1 + $0x288] sm:$0xf]
    %v181 = vld [vmem:[%s1 + $0x28c] sm:$0xf]
    %v182 = vld [vmem:[%s1 + $0x290] sm:$0xf]
    %v183 = vld [vmem:[%s1 + $0x294] sm:$0xf]
    %v184 = vld [vmem:[%s1 + $0x298] sm:$0xf]
    %v185 = vld [vmem:[%s1 + $0x29c] sm:$0xf]
    %v186 = vld [vmem:[%s1 + $0x2a0] sm:$0xf]
    %v187 = vld [vmem:[%s1 + $0x2a4] sm:$0xf]
    %v188 = vld [vmem:[%s1 + $0x2a8] sm:$0xf]
    %v189 = vld [vmem:[%s1 + $0x2ac] sm:$0xf]
    %v190 = vld [vmem:[%s1 + $0x2b0] sm:$0xf]
    %v191 = vld [vmem:[%s1 + $0x2b4] sm:$0xf]
    %v192 = vld [vmem:[%s1 + $0x2b8] sm:$0xf]
    %v193 = vld [vmem:[%s1 + $0x2bc] sm:$0xf]
    %v194 = vld [vmem:[%s1 + $0x2c0] sm:$0xf]
    %v195 = vld [vmem:[%s1 + $0x2c4] sm:$0xf]
    %v196 = vld [vmem:[%s1 + $0x2c8] sm:$0xf]
    %v197 = vld [vmem:[%s1 + $0x2cc] sm:$0xf]
    %v198 = vld [vmem:[%s1 + $0x2d0] sm:$0xf]
    %v199 = vld [vmem:[%s1 + $0x2d4] sm:$0xf]
    %v200 = vld [vmem:[%s1 + $0x2d8] sm:$0xf]
    %v201 = vld [vmem:[%s1 + $0x2dc] sm:$0xf]
    %v202 = vld [vmem:[%s1 + $0x2e0] sm:$0xf]
    %v203 = vld [vmem:[%s1 + $0x2e4] sm:$0xf]
    %v204 = vld [vmem:[%s1 + $0x2e8] sm:$0xf]
    %v205 = vld [vmem:[%s1 + $0x2ec] sm:$0xf]
    %v206 = vld [vmem:[%s1 + $0x2f0] sm:$0xf]
    %v207 = vld [vmem:[%s1 + $0x2f4] sm:$0xf]
    %v208 = vld [vmem:[%s1 + $0x2f8] sm:$0xf]
    %v209 = vld [vmem:[%s1 + $0x2fc] sm:$0xf]
    %v210 = vld [vmem:[%s1 + $0x300] sm:$0xf]
    %v211 = vld [vmem:[%s1 + $0x304] sm:$0xf]
    %v212 = vld [vmem:[%s1 + $0x308] sm:$0xf]
    %v213 = vld [vmem:[%s1 + $0x30c] sm:$0xf]
    %v214 = vld [vmem:[%s1 + $0x310] sm:$0xf]
    %v215 = vld [vmem:[%s1 + $0x314] sm:$0xf]
    %v216 = vld [vmem:[%s1 + $0x318] sm:$0xf]
    %v217 = vld [vmem:[%s1 + $0x31c] sm:$0xf]
    %v218 = vld [vmem:[%s1 + $0x320] sm:$0xf]
    %v219 = vld [vmem:[%s1 + $0x324] sm:$0xf]
    %v220 = vld [vmem:[%s1 + $0x328] sm:$0xf]
    %v221 = vld [vmem:[%s1 + $0x32c] sm:$0xf]
    %v222 = vld [vmem:[%s1 + $0x330] sm:$0xf]
    %v223 = vld [vmem:[%s1 + $0x334] sm:$0xf]
    %v224 = vld [vmem:[%s1 + $0x338] sm:$0xf]
    %v225 = vld [vmem:[%s1 + $0x33c] sm:$0xf]
    %v226 = vld [vmem:[%s1 + $0x340] sm:$0xf]
    %v227 = vld [vmem:[%s1 + $0x344] sm:$0xf]
    %v228 = vld [vmem:[%s1 + $0x348] sm:$0xf]
    %v229 = vld [vmem:[%s1 + $0x34c] sm:$0xf]
    %v230 = vld [vmem:[%s1 + $0x350] sm:$0xf]
    %v231 = vld [vmem:[%s1 + $0x354] sm:$0xf]
    %v232 = vld [vmem:[%s1 + $0x358] sm:$0xf]
    %v233 = vld [vmem:[%s1 + $0x35c] sm:$0xf]
    %v234 = vld [vmem:[%s1 + $0x360] sm:$0xf]
    %v235 = vld [vmem:[%s1 + $0x364] sm:$0xf]
    %v236 = vld [vmem:[%s1 + $0x368] sm:$0xf]
    %v237 = vld [vmem:[%s1 + $0x36c] sm:$0xf]
    %v238 = vld [vmem:[%s1 + $0x370] sm:$0xf]
    %v239 = vld [vmem:[%s1 + $0x374] sm:$0xf]
    %v240 = vld [vmem:[%s1 + $0x378] sm:$0xf]
    %v241 = vld [vmem:[%s1 + $0x37c] sm:$0xf]
    %v242 = vld [vmem:[%s1 + $0x380] sm:$0xf]
    %v243 = vld [vmem:[%s1 + $0x384] sm:$0xf]
    %v244 = vld [vmem:[%s1 + $0x388] sm:$0xf]
    %v245 = vld [vmem:[%s1 + $0x38c] sm:$0xf]
    %v246 = vld [vmem:[%s1 + $0x390] sm:$0xf]
    %v247 = vld [vmem:[%s1 + $0x394] sm:$0xf]
    %v248 = vld [vmem:[%s1 + $0x398] sm:$0xf]
    %v249 = vld [vmem:[%s1 + $0x39c] sm:$0xf]
    %v250 = vld [vmem:[%s1 + $0x3a0] sm:$0xf]
    %v251 = vld [vmem:[%s1 + $0x3a4] sm:$0xf]
    %v252 = vld [vmem:[%s1 + $0x3a8] sm:$0xf]
    %v253 = vld [vmem:[%s1 + $0x3ac] sm:$0xf]
    %v254 = vld [vmem:[%s1 + $0x3b0] sm:$0xf]
    %v255 = vld [vmem:[%s1 + $0x3b4] sm:$0xf]
    %v256 = vld [vmem:[%s1 + $0x3b8] sm:$0xf]
    %v257 = vld [vmem:[%s1 + $0x3bc] sm:$0xf]
    %v258 = vld [vmem:[%s1 + $0x3c0] sm:$0xf]
    %v259 = vld [vmem:[%s1 + $0x3c4] sm:$0xf]
    %v260 = vld [vmem:[%s1 + $0x3c8] sm:$0xf]
    %v261 = vld [vmem:[%s1 + $0x3cc] sm:$0xf]
    %v262 = vld [vmem:[%s1 + $0x3d0] sm:$0xf]
    %v263 = vld [vmem:[%s1 + $0x3d4] sm:$0xf]
    %v264 = vld [vmem:[%s1 + $0x3d8] sm:$0xf]
    %v265 = vld [vmem:[%s1 + $0x3dc] sm:$0xf]
    %v266 = vld [vmem:[%s1 + $0x3e0] sm:$0xf]
    %v267 = vld [vmem:[%s1 + $0x3e4] sm:$0xf]
    %v268 = vld [vmem:[%s1 + $0x3e8] sm:$0xf]
    %v269 = vld [vmem:[%s1 + $0x3ec] sm:$0xf]
    %v270 = vld [vmem:[%s1 + $0x3f0] sm:$0xf]
    %v271 = vld [vmem:[%s1 + $0x3f4] sm:$0xf]
    %v272 = vld [vmem:[%s1 + $0x3f8] sm:$0xf]
    %v273 = vld [vmem:[%s1 + $0x3fc] sm:$0xf]
    %v274 = vld [vmem:[%s2] sm:$0x1]
    %v276 = vlaneseq
    %v277 = vshrl.u32 %v276, 7
    %v278 = vsub.s32 0, %v277
    %v279 = vrot.slane %v274, %v278
    %v283 = vcombine.high %v16, %v16
    %v285 = vunpack.c.l.s4 1966171168
    %v286 = vunpack.c.0.s8 %v285
    %v287 = vlaneseq
    %v288 = vshrl.u32 %v287, 7
    %v289 = vsub.s32 %v286, %v288
    %v290 = vrot.slane %v16, %v289
    %v292 = vunpack.c.l.s4 1966171168
    %v293 = vunpack.c.0.s8 %v292
    %v294 = vlaneseq
    %v295 = vshrl.u32 %v294, 7
    %v296 = vsub.s32 %v293, %v295
    %v297 = vrot.slane %v283, %v296
    %v298 = vcombine.high %v290, %v290
    %v299 = vcombine.high %v297, %v297
    %v301 = vunpack.c.l.s4 1966171168
    %v302 = vunpack.c.0.s8 %v301
    %v303 = vlaneseq
    %v304 = vshrl.u32 %v303, 7
    %v305 = vsub.s32 %v302, %v304
    %v306 = vrot.slane %v290, %v305
    %v308 = vunpack.c.l.s4 1966171168
    %v309 = vunpack.c.0.s8 %v308
    %v310 = vlaneseq
    %v311 = vshrl.u32 %v310, 7
    %v312 = vsub.s32 %v309, %v311
    %v313 = vrot.slane %v297, %v312
    %v315 = vunpack.c.l.s4 1966171168
    %v316 = vunpack.c.0.s8 %v315
    %v317 = vlaneseq
    %v318 = vshrl.u32 %v317, 7
    %v319 = vsub.s32 %v316, %v318
    %v320 = vrot.slane %v298, %v319
    %v322 = vunpack.c.l.s4 1966171168
    %v323 = vunpack.c.0.s8 %v322
    %v324 = vlaneseq
    %v325 = vshrl.u32 %v324, 7
    %v326 = vsub.s32 %v323, %v325
    %v327 = vrot.slane %v299, %v326
    %v328 = vcombine.high %v306, %v306
    %v329 = vcombine.high %v313, %v313
    %v330 = vcombine.high %v320, %v320
    %v331 = vcombine.high %v327, %v327
    %v332 = vcombine.high %v17, %v17
    %v334 = vunpack.c.l.s4 1966171168
    %v335 = vunpack.c.0.s8 %v334
    %v336 = vlaneseq
    %v337 = vshrl.u32 %v336, 7
    %v338 = vsub.s32 %v335, %v337
    %v339 = vrot.slane %v17, %v338
    %v341 = vunpack.c.l.s4 1966171168
    %v342 = vunpack.c.0.s8 %v341
    %v343 = vlaneseq
    %v344 = vshrl.u32 %v343, 7
    %v345 = vsub.s32 %v342, %v344
    %v346 = vrot.slane %v332, %v345
    %v347 = vcombine.high %v339, %v339
    %v348 = vcombine.high %v346, %v346
    %v350 = vunpack.c.l.s4 1966171168
    %v351 = vunpack.c.0.s8 %v350
    %v352 = vlaneseq
    %v353 = vshrl.u32 %v352, 7
    %v354 = vsub.s32 %v351, %v353
    %v355 = vrot.slane %v339, %v354
    %v357 = vunpack.c.l.s4 1966171168
    %v358 = vunpack.c.0.s8 %v357
    %v359 = vlaneseq
    %v360 = vshrl.u32 %v359, 7
    %v361 = vsub.s32 %v358, %v360
    %v362 = vrot.slane %v346, %v361
    %v364 = vunpack.c.l.s4 1966171168
    %v365 = vunpack.c.0.s8 %v364
    %v366 = vlaneseq
    %v367 = vshrl.u32 %v366, 7
    %v368 = vsub.s32 %v365, %v367
    %v369 = vrot.slane %v347, %v368
    %v371 = vunpack.c.l.s4 1966171168
    %v372 = vunpack.c.0.s8 %v371
    %v373 = vlaneseq
    %v374 = vshrl.u32 %v373, 7
    %v375 = vsub.s32 %v372, %v374
    %v376 = vrot.slane %v348, %v375
    %v377 = vcombine.high %v355, %v355
    %v378 = vcombine.high %v362, %v362
    %v379 = vcombine.high %v369, %v369
    %v380 = vcombine.high %v376, %v376
    %v653 = vunpack.c.l.b16 %v18
    %v654 = vunpack.c.l.b16 %v19
    %v655 = vunpack.c.l.b16 %v20
    %v656 = vunpack.c.l.b16 %v21
    %v657 = vunpack.c.l.b16 %v22
    %v658 = vunpack.c.l.b16 %v23
    %v659 = vunpack.c.l.b16 %v24
    %v660 = vunpack.c.l.b16 %v25
    %v661 = vunpack.c.l.b16 %v26
    %v662 = vunpack.c.l.b16 %v27
    %v663 = vunpack.c.l.b16 %v28
    %v664 = vunpack.c.l.b16 %v29
    %v665 = vunpack.c.l.b16 %v30
    %v666 = vunpack.c.l.b16 %v31
    %v667 = vunpack.c.l.b16 %v32
    %v668 = vunpack.c.l.b16 %v33
    %v669 = vunpack.c.l.b16 %v34
    %v670 = vunpack.c.l.b16 %v35
    %v671 = vunpack.c.l.b16 %v36
    %v672 = vunpack.c.l.b16 %v37
    %v673 = vunpack.c.l.b16 %v38
    %v674 = vunpack.c.l.b16 %v39
    %v675 = vunpack.c.l.b16 %v40
    %v676 = vunpack.c.l.b16 %v41
    %v677 = vunpack.c.l.b16 %v42
    %v678 = vunpack.c.l.b16 %v43
    %v679 = vunpack.c.l.b16 %v44
    %v680 = vunpack.c.l.b16 %v45
    %v681 = vunpack.c.l.b16 %v46
    %v682 = vunpack.c.l.b16 %v47
    %v683 = vunpack.c.l.b16 %v48
    %v684 = vunpack.c.l.b16 %v49
    %v685 = vunpack.c.l.b16 %v50
    %v686 = vunpack.c.l.b16 %v51
    %v687 = vunpack.c.l.b16 %v52
    %v688 = vunpack.c.l.b16 %v53
    %v689 = vunpack.c.l.b16 %v54
    %v690 = vunpack.c.l.b16 %v55
    %v691 = vunpack.c.l.b16 %v56
    %v692 = vunpack.c.l.b16 %v57
    %v693 = vunpack.c.l.b16 %v58
    %v694 = vunpack.c.l.b16 %v59
    %v695 = vunpack.c.l.b16 %v60
    %v696 = vunpack.c.l.b16 %v61
    %v697 = vunpack.c.l.b16 %v62
    %v698 = vunpack.c.l.b16 %v63
    %v699 = vunpack.c.l.b16 %v64
    %v700 = vunpack.c.l.b16 %v65
    %v701 = vunpack.c.l.b16 %v66
    %v702 = vunpack.c.l.b16 %v67
    %v703 = vunpack.c.l.b16 %v68
    %v704 = vunpack.c.l.b16 %v69
    %v705 = vunpack.c.l.b16 %v70
    %v706 = vunpack.c.l.b16 %v71
    %v707 = vunpack.c.l.b16 %v72
    %v708 = vunpack.c.l.b16 %v73
    %v709 = vunpack.c.l.b16 %v74
    %v710 = vunpack.c.l.b16 %v75
    %v711 = vunpack.c.l.b16 %v76
    %v712 = vunpack.c.l.b16 %v77
    %v713 = vunpack.c.l.b16 %v78
    %v714 = vunpack.c.l.b16 %v79
    %v715 = vunpack.c.l.b16 %v80
    %v716 = vunpack.c.l.b16 %v81
    %v717 = vunpack.c.l.b16 %v82
    %v718 = vunpack.c.l.b16 %v83
    %v719 = vunpack.c.l.b16 %v84
    %v720 = vunpack.c.l.b16 %v85
    %v721 = vunpack.c.l.b16 %v86
    %v722 = vunpack.c.l.b16 %v87
    %v723 = vunpack.c.l.b16 %v88
    %v724 = vunpack.c.l.b16 %v89
    %v725 = vunpack.c.l.b16 %v90
    %v726 = vunpack.c.l.b16 %v91
    %v727 = vunpack.c.l.b16 %v92
    %v728 = vunpack.c.l.b16 %v93
    %v729 = vunpack.c.l.b16 %v94
    %v730 = vunpack.c.l.b16 %v95
    %v731 = vunpack.c.l.b16 %v96
    %v732 = vunpack.c.l.b16 %v97
    %v733 = vunpack.c.l.b16 %v98
    %v734 = vunpack.c.l.b16 %v99
    %v735 = vunpack.c.l.b16 %v100
    %v736 = vunpack.c.l.b16 %v101
    %v737 = vunpack.c.l.b16 %v102
    %v738 = vunpack.c.l.b16 %v103
    %v739 = vunpack.c.l.b16 %v104
    %v740 = vunpack.c.l.b16 %v105
    %v741 = vunpack.c.l.b16 %v106
    %v742 = vunpack.c.l.b16 %v107
    %v743 = vunpack.c.l.b16 %v108
    %v744 = vunpack.c.l.b16 %v109
    %v745 = vunpack.c.l.b16 %v110
    %v746 = vunpack.c.l.b16 %v111
    %v747 = vunpack.c.l.b16 %v112
    %v748 = vunpack.c.l.b16 %v113
    %v749 = vunpack.c.l.b16 %v114
    %v750 = vunpack.c.l.b16 %v115
    %v751 = vunpack.c.l.b16 %v116
    %v752 = vunpack.c.l.b16 %v117
    %v753 = vunpack.c.l.b16 %v118
    %v754 = vunpack.c.l.b16 %v119
    %v755 = vunpack.c.l.b16 %v120
    %v756 = vunpack.c.l.b16 %v121
    %v757 = vunpack.c.l.b16 %v122
    %v758 = vunpack.c.l.b16 %v123
    %v759 = vunpack.c.l.b16 %v124
    %v760 = vunpack.c.l.b16 %v125
    %v761 = vunpack.c.l.b16 %v126
    %v762 = vunpack.c.l.b16 %v127
    %v763 = vunpack.c.l.b16 %v128
    %v764 = vunpack.c.l.b16 %v129
    %v765 = vunpack.c.l.b16 %v130
    %v766 = vunpack.c.l.b16 %v131
    %v767 = vunpack.c.l.b16 %v132
    %v768 = vunpack.c.l.b16 %v133
    %v769 = vunpack.c.l.b16 %v134
    %v770 = vunpack.c.l.b16 %v135
    %v771 = vunpack.c.l.b16 %v136
    %v772 = vunpack.c.l.b16 %v137
    %v773 = vunpack.c.l.b16 %v138
    %v774 = vunpack.c.l.b16 %v139
    %v775 = vunpack.c.l.b16 %v140
    %v776 = vunpack.c.l.b16 %v141
    %v777 = vunpack.c.l.b16 %v142
    %v778 = vunpack.c.l.b16 %v143
    %v779 = vunpack.c.l.b16 %v144
    %v780 = vunpack.c.l.b16 %v145
    %v781 = vunpack.c.l.b16 %v146
    %v782 = vunpack.c.l.b16 %v147
    %v783 = vunpack.c.l.b16 %v148
    %v784 = vunpack.c.l.b16 %v149
    %v785 = vunpack.c.l.b16 %v150
    %v786 = vunpack.c.l.b16 %v151
    %v787 = vunpack.c.l.b16 %v152
    %v788 = vunpack.c.l.b16 %v153
    %v789 = vunpack.c.l.b16 %v154
    %v790 = vunpack.c.l.b16 %v155
    %v791 = vunpack.c.l.b16 %v156
    %v792 = vunpack.c.l.b16 %v157
    %v793 = vunpack.c.l.b16 %v158
    %v794 = vunpack.c.l.b16 %v159
    %v795 = vunpack.c.l.b16 %v160
    %v796 = vunpack.c.l.b16 %v161
    %v797 = vunpack.c.l.b16 %v162
    %v798 = vunpack.c.l.b16 %v163
    %v799 = vunpack.c.l.b16 %v164
    %v800 = vunpack.c.l.b16 %v165
    %v801 = vunpack.c.l.b16 %v166
    %v802 = vunpack.c.l.b16 %v167
    %v803 = vunpack.c.l.b16 %v168
    %v804 = vunpack.c.l.b16 %v169
    %v805 = vunpack.c.l.b16 %v170
    %v806 = vunpack.c.l.b16 %v171
    %v807 = vunpack.c.l.b16 %v172
    %v808 = vunpack.c.l.b16 %v173
    %v809 = vunpack.c.l.b16 %v174
    %v810 = vunpack.c.l.b16 %v175
    %v811 = vunpack.c.l.b16 %v176
    %v812 = vunpack.c.l.b16 %v177
    %v813 = vunpack.c.l.b16 %v178
    %v814 = vunpack.c.l.b16 %v179
    %v815 = vunpack.c.l.b16 %v180
    %v816 = vunpack.c.l.b16 %v181
    %v817 = vunpack.c.l.b16 %v182
    %v818 = vunpack.c.l.b16 %v183
    %v819 = vunpack.c.l.b16 %v184
    %v820 = vunpack.c.l.b16 %v185
    %v821 = vunpack.c.l.b16 %v186
    %v822 = vunpack.c.l.b16 %v187
    %v823 = vunpack.c.l.b16 %v188
    %v824 = vunpack.c.l.b16 %v189
    %v825 = vunpack.c.l.b16 %v190
    %v826 = vunpack.c.l.b16 %v191
    %v827 = vunpack.c.l.b16 %v192
    %v828 = vunpack.c.l.b16 %v193
    %v829 = vunpack.c.l.b16 %v194
    %v830 = vunpack.c.l.b16 %v195
    %v831 = vunpack.c.l.b16 %v196
    %v832 = vunpack.c.l.b16 %v197
    %v833 = vunpack.c.l.b16 %v198
    %v834 = vunpack.c.l.b16 %v199
    %v835 = vunpack.c.l.b16 %v200
    %v836 = vunpack.c.l.b16 %v201
    %v837 = vunpack.c.l.b16 %v202
    %v838 = vunpack.c.l.b16 %v203
    %v839 = vunpack.c.l.b16 %v204
    %v840 = vunpack.c.l.b16 %v205
    %v841 = vunpack.c.l.b16 %v206
    %v842 = vunpack.c.l.b16 %v207
    %v843 = vunpack.c.l.b16 %v208
    %v844 = vunpack.c.l.b16 %v209
    %v845 = vunpack.c.l.b16 %v210
    %v846 = vunpack.c.l.b16 %v211
    %v847 = vunpack.c.l.b16 %v212
    %v848 = vunpack.c.l.b16 %v213
    %v849 = vunpack.c.l.b16 %v214
    %v850 = vunpack.c.l.b16 %v215
    %v851 = vunpack.c.l.b16 %v216
    %v852 = vunpack.c.l.b16 %v217
    %v853 = vunpack.c.l.b16 %v218
    %v854 = vunpack.c.l.b16 %v219
    %v855 = vunpack.c.l.b16 %v220
    %v856 = vunpack.c.l.b16 %v221
    %v857 = vunpack.c.l.b16 %v222
    %v858 = vunpack.c.l.b16 %v223
    %v859 = vunpack.c.l.b16 %v224
    %v860 = vunpack.c.l.b16 %v225
    %v861 = vunpack.c.l.b16 %v226
    %v862 = vunpack.c.l.b16 %v227
    %v863 = vunpack.c.l.b16 %v228
    %v864 = vunpack.c.l.b16 %v229
    %v865 = vunpack.c.l.b16 %v230
    %v866 = vunpack.c.l.b16 %v231
    %v867 = vunpack.c.l.b16 %v232
    %v868 = vunpack.c.l.b16 %v233
    %v869 = vunpack.c.l.b16 %v234
    %v870 = vunpack.c.l.b16 %v235
    %v871 = vunpack.c.l.b16 %v236
    %v872 = vunpack.c.l.b16 %v237
    %v873 = vunpack.c.l.b16 %v238
    %v874 = vunpack.c.l.b16 %v239
    %v875 = vunpack.c.l.b16 %v240
    %v876 = vunpack.c.l.b16 %v241
    %v877 = vunpack.c.l.b16 %v242
    %v878 = vunpack.c.l.b16 %v243
    %v879 = vunpack.c.l.b16 %v244
    %v880 = vunpack.c.l.b16 %v245
    %v881 = vunpack.c.l.b16 %v246
    %v882 = vunpack.c.l.b16 %v247
    %v883 = vunpack.c.l.b16 %v248
    %v884 = vunpack.c.l.b16 %v249
    %v885 = vunpack.c.l.b16 %v250
    %v886 = vunpack.c.l.b16 %v251
    %v887 = vunpack.c.l.b16 %v252
    %v888 = vunpack.c.l.b16 %v253
    %v889 = vunpack.c.l.b16 %v254
    %v890 = vunpack.c.l.b16 %v255
    %v891 = vunpack.c.l.b16 %v256
    %v892 = vunpack.c.l.b16 %v257
    %v893 = vunpack.c.l.b16 %v258
    %v894 = vunpack.c.l.b16 %v259
    %v895 = vunpack.c.l.b16 %v260
    %v896 = vunpack.c.l.b16 %v261
    %v897 = vunpack.c.l.b16 %v262
    %v898 = vunpack.c.l.b16 %v263
    %v899 = vunpack.c.l.b16 %v264
    %v900 = vunpack.c.l.b16 %v265
    %v901 = vunpack.c.l.b16 %v266
    %v902 = vunpack.c.l.b16 %v267
    %v903 = vunpack.c.l.b16 %v268
    %v904 = vunpack.c.l.b16 %v269
    %v905 = vunpack.c.l.b16 %v270
    %v906 = vunpack.c.l.b16 %v271
    %v907 = vunpack.c.l.b16 %v272
    %v908 = vunpack.c.l.b16 %v273
    %v909 = vpack.c.b16 %v654, %v653
    %v910 = vpack.c.b16 %v656, %v655
    %v911 = vpack.c.b16 %v658, %v657
    %v912 = vpack.c.b16 %v660, %v659
    %v913 = vpack.c.b16 %v662, %v661
    %v914 = vpack.c.b16 %v664, %v663
    %v915 = vpack.c.b16 %v666, %v665
    %v916 = vpack.c.b16 %v668, %v667
    %v917 = vpack.c.b16 %v670, %v669
    %v918 = vpack.c.b16 %v672, %v671
    %v919 = vpack.c.b16 %v674, %v673
    %v920 = vpack.c.b16 %v676, %v675
    %v921 = vpack.c.b16 %v678, %v677
    %v922 = vpack.c.b16 %v680, %v679
    %v923 = vpack.c.b16 %v682, %v681
    %v924 = vpack.c.b16 %v684, %v683
    %v925 = vpack.c.b16 %v686, %v685
    %v926 = vpack.c.b16 %v688, %v687
    %v927 = vpack.c.b16 %v690, %v689
    %v928 = vpack.c.b16 %v692, %v691
    %v929 = vpack.c.b16 %v694, %v693
    %v930 = vpack.c.b16 %v696, %v695
    %v931 = vpack.c.b16 %v698, %v697
    %v932 = vpack.c.b16 %v700, %v699
    %v933 = vpack.c.b16 %v702, %v701
    %v934 = vpack.c.b16 %v704, %v703
    %v935 = vpack.c.b16 %v706, %v705
    %v936 = vpack.c.b16 %v708, %v707
    %v937 = vpack.c.b16 %v710, %v709
    %v938 = vpack.c.b16 %v712, %v711
    %v939 = vpack.c.b16 %v714, %v713
    %v940 = vpack.c.b16 %v716, %v715
    %v941 = vpack.c.b16 %v718, %v717
    %v942 = vpack.c.b16 %v720, %v719
    %v943 = vpack.c.b16 %v722, %v721
    %v944 = vpack.c.b16 %v724, %v723
    %v945 = vpack.c.b16 %v726, %v725
    %v946 = vpack.c.b16 %v728, %v727
    %v947 = vpack.c.b16 %v730, %v729
    %v948 = vpack.c.b16 %v732, %v731
    %v949 = vpack.c.b16 %v734, %v733
    %v950 = vpack.c.b16 %v736, %v735
    %v951 = vpack.c.b16 %v738, %v737
    %v952 = vpack.c.b16 %v740, %v739
    %v953 = vpack.c.b16 %v742, %v741
    %v954 = vpack.c.b16 %v744, %v743
    %v955 = vpack.c.b16 %v746, %v745
    %v956 = vpack.c.b16 %v748, %v747
    %v957 = vpack.c.b16 %v750, %v749
    %v958 = vpack.c.b16 %v752, %v751
    %v959 = vpack.c.b16 %v754, %v753
    %v960 = vpack.c.b16 %v756, %v755
    %v961 = vpack.c.b16 %v758, %v757
    %v962 = vpack.c.b16 %v760, %v759
    %v963 = vpack.c.b16 %v762, %v761
    %v964 = vpack.c.b16 %v764, %v763
    %v965 = vpack.c.b16 %v766, %v765
    %v966 = vpack.c.b16 %v768, %v767
    %v967 = vpack.c.b16 %v770, %v769
    %v968 = vpack.c.b16 %v772, %v771
    %v969 = vpack.c.b16 %v774, %v773
    %v970 = vpack.c.b16 %v776, %v775
    %v971 = vpack.c.b16 %v778, %v777
    %v972 = vpack.c.b16 %v780, %v779
    %v973 = vpack.c.b16 %v782, %v781
    %v974 = vpack.c.b16 %v784, %v783
    %v975 = vpack.c.b16 %v786, %v785
    %v976 = vpack.c.b16 %v788, %v787
    %v977 = vpack.c.b16 %v790, %v789
    %v978 = vpack.c.b16 %v792, %v791
    %v979 = vpack.c.b16 %v794, %v793
    %v980 = vpack.c.b16 %v796, %v795
    %v981 = vpack.c.b16 %v798, %v797
    %v982 = vpack.c.b16 %v800, %v799
    %v983 = vpack.c.b16 %v802, %v801
    %v984 = vpack.c.b16 %v804, %v803
    %v985 = vpack.c.b16 %v806, %v805
    %v986 = vpack.c.b16 %v808, %v807
    %v987 = vpack.c.b16 %v810, %v809
    %v988 = vpack.c.b16 %v812, %v811
    %v989 = vpack.c.b16 %v814, %v813
    %v990 = vpack.c.b16 %v816, %v815
    %v991 = vpack.c.b16 %v818, %v817
    %v992 = vpack.c.b16 %v820, %v819
    %v993 = vpack.c.b16 %v822, %v821
    %v994 = vpack.c.b16 %v824, %v823
    %v995 = vpack.c.b16 %v826, %v825
    %v996 = vpack.c.b16 %v828, %v827
    %v997 = vpack.c.b16 %v830, %v829
    %v998 = vpack.c.b16 %v832, %v831
    %v999 = vpack.c.b16 %v834, %v833
    %v1000 = vpack.c.b16 %v836, %v835
    %v1001 = vpack.c.b16 %v838, %v837
    %v1002 = vpack.c.b16 %v840, %v839
    %v1003 = vpack.c.b16 %v842, %v841
    %v1004 = vpack.c.b16 %v844, %v843
    %v1005 = vpack.c.b16 %v846, %v845
    %v1006 = vpack.c.b16 %v848, %v847
    %v1007 = vpack.c.b16 %v850, %v849
    %v1008 = vpack.c.b16 %v852, %v851
    %v1009 = vpack.c.b16 %v854, %v853
    %v1010 = vpack.c.b16 %v856, %v855
    %v1011 = vpack.c.b16 %v858, %v857
    %v1012 = vpack.c.b16 %v860, %v859
    %v1013 = vpack.c.b16 %v862, %v861
    %v1014 = vpack.c.b16 %v864, %v863
    %v1015 = vpack.c.b16 %v866, %v865
    %v1016 = vpack.c.b16 %v868, %v867
    %v1017 = vpack.c.b16 %v870, %v869
    %v1018 = vpack.c.b16 %v872, %v871
    %v1019 = vpack.c.b16 %v874, %v873
    %v1020 = vpack.c.b16 %v876, %v875
    %v1021 = vpack.c.b16 %v878, %v877
    %v1022 = vpack.c.b16 %v880, %v879
    %v1023 = vpack.c.b16 %v882, %v881
    %v1024 = vpack.c.b16 %v884, %v883
    %v1025 = vpack.c.b16 %v886, %v885
    %v1026 = vpack.c.b16 %v888, %v887
    %v1027 = vpack.c.b16 %v890, %v889
    %v1028 = vpack.c.b16 %v892, %v891
    %v1029 = vpack.c.b16 %v894, %v893
    %v1030 = vpack.c.b16 %v896, %v895
    %v1031 = vpack.c.b16 %v898, %v897
    %v1032 = vpack.c.b16 %v900, %v899
    %v1033 = vpack.c.b16 %v902, %v901
    %v1034 = vpack.c.b16 %v904, %v903
    %v1035 = vpack.c.b16 %v906, %v905
    %v1036 = vpack.c.b16 %v908, %v907
    %1165 = vmatprep.subr.bf16.mxu0 0
    %1166 = vmatpush1.bf16.msra.mxu0 %v916
    %1167 = vmatprep.subr.bf16.mxu0 0
    %1168 = vmatpush1.bf16.msra.mxu0 %v915
    %1169 = vmatprep.subr.bf16.mxu0 0
    %1170 = vmatpush1.bf16.msra.mxu0 %v914
    %1171 = vmatprep.subr.bf16.mxu0 0
    %1172 = vmatpush1.bf16.msra.mxu0 %v913
    %1173 = vmatprep.subr.bf16.mxu0 0
    %1174 = vmatpush1.bf16.msra.mxu0 %v912
    %1175 = vmatprep.subr.bf16.mxu0 0
    %1176 = vmatpush1.bf16.msra.mxu0 %v911
    %1177 = vmatprep.subr.bf16.mxu0 0
    %1178 = vmatpush1.bf16.msra.mxu0 %v910
    %1179 = vmatprep.subr.bf16.mxu0 0
    %1180 = vmatpush1.bf16.msra.mxu0 %v909
    %1181 = vmatprep.subr.bf16.mxu0 0
    %1182 = vmatpush2.bf16.msra.mxu0 %v924
    %1183 = vmatprep.subr.bf16.mxu0 0
    %1184 = vmatpush2.bf16.msra.mxu0 %v923
    %1185 = vmatprep.subr.bf16.mxu0 0
    %1186 = vmatpush2.bf16.msra.mxu0 %v922
    %1187 = vmatprep.subr.bf16.mxu0 0
    %1188 = vmatpush2.bf16.msra.mxu0 %v921
    %1189 = vmatprep.subr.bf16.mxu0 0
    %1190 = vmatpush2.bf16.msra.mxu0 %v920
    %1191 = vmatprep.subr.bf16.mxu0 0
    %1192 = vmatpush2.bf16.msra.mxu0 %v919
    %1193 = vmatprep.subr.bf16.mxu0 0
    %1194 = vmatpush2.bf16.msra.mxu0 %v918
    %1195 = vmatprep.subr.bf16.mxu0 0
    %1196 = vmatpush2.bf16.msra.mxu0 %v917
    %1197 = vmatprep.mubr.bf16.mxu0 %v320
    %1198 = vmatmul.mubr.bf16.gmra.mxu0 %v306
    %v1199 = vpop.f32.mrf.mxu0
    %v1200 = vadd.f32 %v279, %v1199
    %v1201 = vpop.f32.mrf.mxu0
    %v1202 = vpop.f32.mrf.mxu0
    %v1203 = vpop.f32.mrf.mxu0
    %1204 = vdwg.mxu0
    %1205 = vmatprep.subr.bf16.mxu0 0
    %1206 = vmatpush1.bf16.msra.mxu0 %v932
    %1207 = vmatprep.subr.bf16.mxu0 0
    %1208 = vmatpush1.bf16.msra.mxu0 %v931
    %1209 = vmatprep.subr.bf16.mxu0 0
    %1210 = vmatpush1.bf16.msra.mxu0 %v930
    %1211 = vmatprep.subr.bf16.mxu0 0
    %1212 = vmatpush1.bf16.msra.mxu0 %v929
    %1213 = vmatprep.subr.bf16.mxu0 0
    %1214 = vmatpush1.bf16.msra.mxu0 %v928
    %1215 = vmatprep.subr.bf16.mxu0 0
    %1216 = vmatpush1.bf16.msra.mxu0 %v927
    %1217 = vmatprep.subr.bf16.mxu0 0
    %1218 = vmatpush1.bf16.msra.mxu0 %v926
    %1219 = vmatprep.subr.bf16.mxu0 0
    %1220 = vmatpush1.bf16.msra.mxu0 %v925
    %1221 = vmatprep.subr.bf16.mxu0 0
    %1222 = vmatpush2.bf16.msra.mxu0 %v940
    %1223 = vmatprep.subr.bf16.mxu0 0
    %1224 = vmatpush2.bf16.msra.mxu0 %v939
    %1225 = vmatprep.subr.bf16.mxu0 0
    %1226 = vmatpush2.bf16.msra.mxu0 %v938
    %1227 = vmatprep.subr.bf16.mxu0 0
    %1228 = vmatpush2.bf16.msra.mxu0 %v937
    %1229 = vmatprep.subr.bf16.mxu0 0
    %1230 = vmatpush2.bf16.msra.mxu0 %v936
    %1231 = vmatprep.subr.bf16.mxu0 0
    %1232 = vmatpush2.bf16.msra.mxu0 %v935
    %1233 = vmatprep.subr.bf16.mxu0 0
    %1234 = vmatpush2.bf16.msra.mxu0 %v934
    %1235 = vmatprep.subr.bf16.mxu0 0
    %1236 = vmatpush2.bf16.msra.mxu0 %v933
    %1237 = vmatprep.mubr.bf16.mxu0 %v330
    %1238 = vmatmul.mubr.bf16.gmra.mxu0 %v328
    %v1239 = vpop.f32.mrf.mxu0
    %v1240 = vadd.f32 %v1200, %v1239
    %v1241 = vpop.f32.mrf.mxu0
    %v1242 = vpop.f32.mrf.mxu0
    %v1243 = vpop.f32.mrf.mxu0
    %1244 = vdwg.mxu0
    %1245 = vmatprep.subr.bf16.mxu0 0
    %1246 = vmatpush1.bf16.msra.mxu0 %v948
    %1247 = vmatprep.subr.bf16.mxu0 0
    %1248 = vmatpush1.bf16.msra.mxu0 %v947
    %1249 = vmatprep.subr.bf16.mxu0 0
    %1250 = vmatpush1.bf16.msra.mxu0 %v946
    %1251 = vmatprep.subr.bf16.mxu0 0
    %1252 = vmatpush1.bf16.msra.mxu0 %v945
    %1253 = vmatprep.subr.bf16.mxu0 0
    %1254 = vmatpush1.bf16.msra.mxu0 %v944
    %1255 = vmatprep.subr.bf16.mxu0 0
    %1256 = vmatpush1.bf16.msra.mxu0 %v943
    %1257 = vmatprep.subr.bf16.mxu0 0
    %1258 = vmatpush1.bf16.msra.mxu0 %v942
    %1259 = vmatprep.subr.bf16.mxu0 0
    %1260 = vmatpush1.bf16.msra.mxu0 %v941
    %1261 = vmatprep.subr.bf16.mxu0 0
    %1262 = vmatpush2.bf16.msra.mxu0 %v956
    %1263 = vmatprep.subr.bf16.mxu0 0
    %1264 = vmatpush2.bf16.msra.mxu0 %v955
    %1265 = vmatprep.subr.bf16.mxu0 0
    %1266 = vmatpush2.bf16.msra.mxu0 %v954
    %1267 = vmatprep.subr.bf16.mxu0 0
    %1268 = vmatpush2.bf16.msra.mxu0 %v953
    %1269 = vmatprep.subr.bf16.mxu0 0
    %1270 = vmatpush2.bf16.msra.mxu0 %v952
    %1271 = vmatprep.subr.bf16.mxu0 0
    %1272 = vmatpush2.bf16.msra.mxu0 %v951
    %1273 = vmatprep.subr.bf16.mxu0 0
    %1274 = vmatpush2.bf16.msra.mxu0 %v950
    %1275 = vmatprep.subr.bf16.mxu0 0
    %1276 = vmatpush2.bf16.msra.mxu0 %v949
    %1277 = vmatprep.mubr.bf16.mxu0 %v327
    %1278 = vmatmul.mubr.bf16.gmra.mxu0 %v313
    %v1279 = vpop.f32.mrf.mxu0
    %v1280 = vadd.f32 %v1240, %v1279
    %v1281 = vpop.f32.mrf.mxu0
    %v1282 = vpop.f32.mrf.mxu0
    %v1283 = vpop.f32.mrf.mxu0
    %1284 = vdwg.mxu0
    %1285 = vmatprep.subr.bf16.mxu0 0
    %1286 = vmatpush1.bf16.msra.mxu0 %v964
    %1287 = vmatprep.subr.bf16.mxu0 0
    %1288 = vmatpush1.bf16.msra.mxu0 %v963
    %1289 = vmatprep.subr.bf16.mxu0 0
    %1290 = vmatpush1.bf16.msra.mxu0 %v962
    %1291 = vmatprep.subr.bf16.mxu0 0
    %1292 = vmatpush1.bf16.msra.mxu0 %v961
    %1293 = vmatprep.subr.bf16.mxu0 0
    %1294 = vmatpush1.bf16.msra.mxu0 %v960
    %1295 = vmatprep.subr.bf16.mxu0 0
    %1296 = vmatpush1.bf16.msra.mxu0 %v959
    %1297 = vmatprep.subr.bf16.mxu0 0
    %1298 = vmatpush1.bf16.msra.mxu0 %v958
    %1299 = vmatprep.subr.bf16.mxu0 0
    %1300 = vmatpush1.bf16.msra.mxu0 %v957
    %1301 = vmatprep.subr.bf16.mxu0 0
    %1302 = vmatpush2.bf16.msra.mxu0 %v972
    %1303 = vmatprep.subr.bf16.mxu0 0
    %1304 = vmatpush2.bf16.msra.mxu0 %v971
    %1305 = vmatprep.subr.bf16.mxu0 0
    %1306 = vmatpush2.bf16.msra.mxu0 %v970
    %1307 = vmatprep.subr.bf16.mxu0 0
    %1308 = vmatpush2.bf16.msra.mxu0 %v969
    %1309 = vmatprep.subr.bf16.mxu0 0
    %1310 = vmatpush2.bf16.msra.mxu0 %v968
    %1311 = vmatprep.subr.bf16.mxu0 0
    %1312 = vmatpush2.bf16.msra.mxu0 %v967
    %1313 = vmatprep.subr.bf16.mxu0 0
    %1314 = vmatpush2.bf16.msra.mxu0 %v966
    %1315 = vmatprep.subr.bf16.mxu0 0
    %1316 = vmatpush2.bf16.msra.mxu0 %v965
    %1317 = vmatprep.mubr.bf16.mxu0 %v331
    %1318 = vmatmul.mubr.bf16.gmra.mxu0 %v329
    %v1319 = vpop.f32.mrf.mxu0
    %v1320 = vadd.f32 %v1280, %v1319
    %v1321 = vpop.f32.mrf.mxu0
    %v1322 = vpop.f32.mrf.mxu0
    %v1323 = vpop.f32.mrf.mxu0
    %1324 = vdwg.mxu0
    %1325 = vmatprep.subr.bf16.mxu0 0
    %1326 = vmatpush1.bf16.msra.mxu0 %v980
    %1327 = vmatprep.subr.bf16.mxu0 0
    %1328 = vmatpush1.bf16.msra.mxu0 %v979
    %1329 = vmatprep.subr.bf16.mxu0 0
    %1330 = vmatpush1.bf16.msra.mxu0 %v978
    %1331 = vmatprep.subr.bf16.mxu0 0
    %1332 = vmatpush1.bf16.msra.mxu0 %v977
    %1333 = vmatprep.subr.bf16.mxu0 0
    %1334 = vmatpush1.bf16.msra.mxu0 %v976
    %1335 = vmatprep.subr.bf16.mxu0 0
    %1336 = vmatpush1.bf16.msra.mxu0 %v975
    %1337 = vmatprep.subr.bf16.mxu0 0
    %1338 = vmatpush1.bf16.msra.mxu0 %v974
    %1339 = vmatprep.subr.bf16.mxu0 0
    %1340 = vmatpush1.bf16.msra.mxu0 %v973
    %1341 = vmatprep.subr.bf16.mxu0 0
    %1342 = vmatpush2.bf16.msra.mxu0 %v988
    %1343 = vmatprep.subr.bf16.mxu0 0
    %1344 = vmatpush2.bf16.msra.mxu0 %v987
    %1345 = vmatprep.subr.bf16.mxu0 0
    %1346 = vmatpush2.bf16.msra.mxu0 %v986
    %1347 = vmatprep.subr.bf16.mxu0 0
    %1348 = vmatpush2.bf16.msra.mxu0 %v985
    %1349 = vmatprep.subr.bf16.mxu0 0
    %1350 = vmatpush2.bf16.msra.mxu0 %v984
    %1351 = vmatprep.subr.bf16.mxu0 0
    %1352 = vmatpush2.bf16.msra.mxu0 %v983
    %1353 = vmatprep.subr.bf16.mxu0 0
    %1354 = vmatpush2.bf16.msra.mxu0 %v982
    %1355 = vmatprep.subr.bf16.mxu0 0
    %1356 = vmatpush2.bf16.msra.mxu0 %v981
    %1357 = vmatprep.mubr.bf16.mxu0 %v369
    %1358 = vmatmul.mubr.bf16.gmra.mxu0 %v355
    %v1359 = vpop.f32.mrf.mxu0
    %v1360 = vadd.f32 %v1320, %v1359
    %v1361 = vpop.f32.mrf.mxu0
    %v1362 = vpop.f32.mrf.mxu0
    %v1363 = vpop.f32.mrf.mxu0
    %1364 = vdwg.mxu0
    %1365 = vmatprep.subr.bf16.mxu0 0
    %1366 = vmatpush1.bf16.msra.mxu0 %v996
    %1367 = vmatprep.subr.bf16.mxu0 0
    %1368 = vmatpush1.bf16.msra.mxu0 %v995
    %1369 = vmatprep.subr.bf16.mxu0 0
    %1370 = vmatpush1.bf16.msra.mxu0 %v994
    %1371 = vmatprep.subr.bf16.mxu0 0
    %1372 = vmatpush1.bf16.msra.mxu0 %v993
    %1373 = vmatprep.subr.bf16.mxu0 0
    %1374 = vmatpush1.bf16.msra.mxu0 %v992
    %1375 = vmatprep.subr.bf16.mxu0 0
    %1376 = vmatpush1.bf16.msra.mxu0 %v991
    %1377 = vmatprep.subr.bf16.mxu0 0
    %1378 = vmatpush1.bf16.msra.mxu0 %v990
    %1379 = vmatprep.subr.bf16.mxu0 0
    %1380 = vmatpush1.bf16.msra.mxu0 %v989
    %1381 = vmatprep.subr.bf16.mxu0 0
    %1382 = vmatpush2.bf16.msra.mxu0 %v1004
    %1383 = vmatprep.subr.bf16.mxu0 0
    %1384 = vmatpush2.bf16.msra.mxu0 %v1003
    %1385 = vmatprep.subr.bf16.mxu0 0
    %1386 = vmatpush2.bf16.msra.mxu0 %v1002
    %1387 = vmatprep.subr.bf16.mxu0 0
    %1388 = vmatpush2.bf16.msra.mxu0 %v1001
    %1389 = vmatprep.subr.bf16.mxu0 0
    %1390 = vmatpush2.bf16.msra.mxu0 %v1000
    %1391 = vmatprep.subr.bf16.mxu0 0
    %1392 = vmatpush2.bf16.msra.mxu0 %v999
    %1393 = vmatprep.subr.bf16.mxu0 0
    %1394 = vmatpush2.bf16.msra.mxu0 %v998
    %1395 = vmatprep.subr.bf16.mxu0 0
    %1396 = vmatpush2.bf16.msra.mxu0 %v997
    %1397 = vmatprep.mubr.bf16.mxu0 %v379
    %1398 = vmatmul.mubr.bf16.gmra.mxu0 %v377
    %v1399 = vpop.f32.mrf.mxu0
    %v1400 = vadd.f32 %v1360, %v1399
    %v1401 = vpop.f32.mrf.mxu0
    %v1402 = vpop.f32.mrf.mxu0
    %v1403 = vpop.f32.mrf.mxu0
    %1404 = vdwg.mxu0
    %1405 = vmatprep.subr.bf16.mxu0 0
    %1406 = vmatpush1.bf16.msra.mxu0 %v1012
    %1407 = vmatprep.subr.bf16.mxu0 0
    %1408 = vmatpush1.bf16.msra.mxu0 %v1011
    %1409 = vmatprep.subr.bf16.mxu0 0
    %1410 = vmatpush1.bf16.msra.mxu0 %v1010
    %1411 = vmatprep.subr.bf16.mxu0 0
    %1412 = vmatpush1.bf16.msra.mxu0 %v1009
    %1413 = vmatprep.subr.bf16.mxu0 0
    %1414 = vmatpush1.bf16.msra.mxu0 %v1008
    %1415 = vmatprep.subr.bf16.mxu0 0
    %1416 = vmatpush1.bf16.msra.mxu0 %v1007
    %1417 = vmatprep.subr.bf16.mxu0 0
    %1418 = vmatpush1.bf16.msra.mxu0 %v1006
    %1419 = vmatprep.subr.bf16.mxu0 0
    %1420 = vmatpush1.bf16.msra.mxu0 %v1005
    %1421 = vmatprep.subr.bf16.mxu0 0
    %1422 = vmatpush2.bf16.msra.mxu0 %v1020
    %1423 = vmatprep.subr.bf16.mxu0 0
    %1424 = vmatpush2.bf16.msra.mxu0 %v1019
    %1425 = vmatprep.subr.bf16.mxu0 0
    %1426 = vmatpush2.bf16.msra.mxu0 %v1018
    %1427 = vmatprep.subr.bf16.mxu0 0
    %1428 = vmatpush2.bf16.msra.mxu0 %v1017
    %1429 = vmatprep.subr.bf16.mxu0 0
    %1430 = vmatpush2.bf16.msra.mxu0 %v1016
    %1431 = vmatprep.subr.bf16.mxu0 0
    %1432 = vmatpush2.bf16.msra.mxu0 %v1015
    %1433 = vmatprep.subr.bf16.mxu0 0
    %1434 = vmatpush2.bf16.msra.mxu0 %v1014
    %1435 = vmatprep.subr.bf16.mxu0 0
    %1436 = vmatpush2.bf16.msra.mxu0 %v1013
    %1437 = vmatprep.mubr.bf16.mxu0 %v376
    %1438 = vmatmul.mubr.bf16.gmra.mxu0 %v362
    %v1439 = vpop.f32.mrf.mxu0
    %v1440 = vadd.f32 %v1400, %v1439
    %v1441 = vpop.f32.mrf.mxu0
    %v1442 = vpop.f32.mrf.mxu0
    %v1443 = vpop.f32.mrf.mxu0
    %1444 = vdwg.mxu0
    %1445 = vmatprep.subr.bf16.mxu0 0
    %1446 = vmatpush1.bf16.msra.mxu0 %v1028
    %1447 = vmatprep.subr.bf16.mxu0 0
    %1448 = vmatpush1.bf16.msra.mxu0 %v1027
    %1449 = vmatprep.subr.bf16.mxu0 0
    %1450 = vmatpush1.bf16.msra.mxu0 %v1026
    %1451 = vmatprep.subr.bf16.mxu0 0
    %1452 = vmatpush1.bf16.msra.mxu0 %v1025
    %1453 = vmatprep.subr.bf16.mxu0 0
    %1454 = vmatpush1.bf16.msra.mxu0 %v1024
    %1455 = vmatprep.subr.bf16.mxu0 0
    %1456 = vmatpush1.bf16.msra.mxu0 %v1023
    %1457 = vmatprep.subr.bf16.mxu0 0
    %1458 = vmatpush1.bf16.msra.mxu0 %v1022
    %1459 = vmatprep.subr.bf16.mxu0 0
    %1460 = vmatpush1.bf16.msra.mxu0 %v1021
    %1461 = vmatprep.subr.bf16.mxu0 0
    %1462 = vmatpush2.bf16.msra.mxu0 %v1036
    %1463 = vmatprep.subr.bf16.mxu0 0
    %1464 = vmatpush2.bf16.msra.mxu0 %v1035
    %1465 = vmatprep.subr.bf16.mxu0 0
    %1466 = vmatpush2.bf16.msra.mxu0 %v1034
    %1467 = vmatprep.subr.bf16.mxu0 0
    %1468 = vmatpush2.bf16.msra.mxu0 %v1033
    %1469 = vmatprep.subr.bf16.mxu0 0
    %1470 = vmatpush2.bf16.msra.mxu0 %v1032
    %1471 = vmatprep.subr.bf16.mxu0 0
    %1472 = vmatpush2.bf16.msra.mxu0 %v1031
    %1473 = vmatprep.subr.bf16.mxu0 0
    %1474 = vmatpush2.bf16.msra.mxu0 %v1030
    %1475 = vmatprep.subr.bf16.mxu0 0
    %1476 = vmatpush2.bf16.msra.mxu0 %v1029
    %1477 = vmatprep.mubr.bf16.mxu0 %v380
    %1478 = vmatmul.mubr.bf16.gmra.mxu0 %v378
    %v1479 = vpop.f32.mrf.mxu0
    %v1480 = vadd.f32 %v1440, %v1479
    %v1481 = vpop.f32.mrf.mxu0
    %v1482 = vpop.f32.mrf.mxu0
    %v1483 = vpop.f32.mrf.mxu0
    %1484 = vdwg.mxu0
    %vm1485 = vcmask 1041408
    %v1486 = vsel %vm1485, %v1480, -inf
    %1487 = vmax.xlane.f32.xlu0 %v1486
    %v1488 = vpop.xlane.xlu0 %1487
    %v1489 = vsub.f32 %v1480, %v1488
    %v1490 = vmul.f32 %v1489, 1.442695
    %v1491 = vpow.pop %v1490
    %v1492 = vsel %vm1485, %v1491, 0.0
    %1493 = vadd.xlane.f32.xlu0 %v1492
    %v1494 = vpop.xlane.xlu0 %1493
    %v1495 = vlog2.pop %v1494
    %v1496 = vmul.f32 %v1495, 0.6931472
    %v1497 = vadd.f32 %v1496, %v1488
    %v1498 = vsub.f32 %v1480, %v1497
    %1499 = vst [vmem:[#allocation2] sm:$0x3] %v1498
    // Predicated region
    $region14: #{_lambda_.15} parent=1 // pred_check
      _
    $region15: #{_lambda_.15} parent=1 // pred_check_branch
      %1501 = sbr.rel (0) target = $region17
    $region16: #{_lambda_.15} parent=1 // pred_region
      %s1503 = ssub.s32 32, 32
      %1504 = vsyncadd [#allocation3], %s1503
      %s1506 = sshll.u32 [#allocation2], 4
      %s1507 = int_to_ptr.vmem [resolvable:$true] %s1506
      %1509 = dma.vmem_to_hbm [thread:$0]  %s1507, 32, %s3, [#allocation3]
    $region17: #{_lambda_.15} parent=1 // pred_fallthru
      _
    // Predicated region
    $region18: #{_lambda_.15} parent=1 // pred_check
      _
    $region19: #{_lambda_.15} parent=1 // pred_check_branch
      %1511 = sbr.rel (0) target = $region21
    $region20: #{_lambda_.15} parent=1 // pred_region
      %1512 = dma.done [#allocation3], 32
    $region21: #{_lambda_.15} parent=1 // pred_fallthru
      _
    %1513 = vsyncpa [#allocation3], 1

</llo_original>
